<compile_context>
chip_gen: v6e
topology: v6e:2x2x1
jax: 0.10.0
libtpu: 0.0.40
codegen_flags: <defaults>
</compile_context>

<pallas_src>
import jax
import jax.numpy as jnp
from jax import lax
from jax.experimental import pallas as pl
from jax.experimental.pallas import tpu as pltpu


# ---------------------------------------------------------------------------
# Fused forward kernel (one batch block of BB images, everything in VMEM)
# ---------------------------------------------------------------------------
def simple_cnn_kernel(x_ref, b1m_ref, bias1_ref, b2m_ref, bias2_ref,
                      w1_ref, bfc1_ref, w2_ref, bfc2_ref, o_ref, qpad_ref):
    """
    x_ref    : (BB, 32, 3*32*Cin) bf16  ky-shifted, W-in-lanes raw input
    b1m_ref  : (3*32*Cin, 1024)   bf16  conv1 band matrix (out col = (w%2,w//2,co))
    bias1_ref: (1, 1024)          f32
    b2m_ref  : (3, 512, 1024)     bf16  conv2 band matrices, one per ky
    bias2_ref: (1, 1024)          f32
    w1_ref   : (8, 512, 128)      bf16  fc1 weights, permuted to pooled layout
    bfc1_ref : (1, 128)           f32
    w2_ref   : (128, C)           bf16
    bfc2_ref : (1, C)             f32
    o_ref    : (BB, C)            f32   logits
    qpad_ref : (BB, 18, 512)      bf16  scratch: H-zero-padded conv2 input
    """
    BB = o_ref.shape[0]

    # ---- conv1 (3x3 'same') as ONE matmul, K = 3*32*Cin --------------------
    lhs1 = x_ref[...].reshape(BB * 32, x_ref.shape[2])
    acc1 = jnp.dot(lhs1, b1m_ref[...], preferred_element_type=jnp.float32)
    y1 = jnp.maximum(acc1 + bias1_ref[...], 0.0)                 # (BB*32, 1024) f32

    # ---- maxpool1 2x2: H via row pairs, W via the two 512-lane halves ------
    y1r = y1.reshape(BB, 16, 2, 1024)
    hp1 = jnp.maximum(y1r[:, :, 0, :], y1r[:, :, 1, :])          # (BB, 16, 1024)
    q1 = jnp.maximum(hp1[:, :, :512], hp1[:, :, 512:])           # (BB, 16, 512) col = wo*32+c

    # H-zero-padded copy in VMEM scratch for conv2's ky taps
    qpad_ref[:, 0:1, :] = jnp.zeros((BB, 1, 512), qpad_ref.dtype)
    qpad_ref[:, 17:18, :] = jnp.zeros((BB, 1, 512), qpad_ref.dtype)
    qpad_ref[:, 1:17, :] = q1.astype(qpad_ref.dtype)

    # ---- conv2 (3x3 'same'): 3 banded matmuls (one per ky), K = 512 each ---
    acc2 = jnp.zeros((BB * 16, 1024), jnp.float32)
    for ky in range(3):
        lhs2 = qpad_ref[:, ky:ky + 16, :].reshape(BB * 16, 512)
        acc2 = acc2 + jnp.dot(lhs2, b2m_ref[ky], preferred_element_type=jnp.float32)
    y2 = jnp.maximum(acc2 + bias2_ref[...], 0.0)                 # (BB*16, 1024)

    # ---- maxpool2 ----------------------------------------------------------
    y2r = y2.reshape(BB, 8, 2, 1024)
    hp2 = jnp.maximum(y2r[:, :, 0, :], y2r[:, :, 1, :])          # (BB, 8, 1024)
    p2 = jnp.maximum(hp2[:, :, :512], hp2[:, :, 512:]).astype(jnp.bfloat16)  # (BB,8,512)

    # ---- fc1 (4096 -> 128) + ReLU: one small dot per pooled row ------------
    accf = jnp.zeros((BB, 128), jnp.float32)
    for h8 in range(8):
        accf = accf + jnp.dot(p2[:, h8, :], w1_ref[h8], preferred_element_type=jnp.float32)
    h = jnp.maximum(accf + bfc1_ref[...], 0.0)

    # ---- fc2 (128 -> num_classes) ------------------------------------------
    logits = jnp.dot(h.astype(jnp.bfloat16), w2_ref[...],
                     preferred_element_type=jnp.float32) + bfc2_ref[...]
    o_ref[...] = logits.astype(o_ref.dtype)


# ---------------------------------------------------------------------------
# Weight packing: banded conv matrices + permuted fc1 (done once, outside jit)
# ---------------------------------------------------------------------------
def _conv_band(wk, S):
    """3x3 'same' conv along W as a banded matmul.

    wk: (3, 3, Cin, Cout) f32.  Returns (3, S*Cin, S*Cout) with K index = (p, ci)
    (input column, input channel) and output column ordered (w%2, w//2, co) so the
    2x2 maxpool's W direction is a max of the two contiguous 512-lane halves.
    Zero 'same' padding along W is encoded by the band's validity mask.
    """
    _, _, Cin, Cout = wk.shape
    p = jnp.arange(S)[:, None]                      # input column
    w = jnp.arange(S)[None, :]                      # output column
    kx = p - w + 1
    valid = (kx >= 0) & (kx < 3)
    g = wk[:, jnp.clip(kx, 0, 2), :, :]             # (3, S, S, Cin, Cout)
    g = jnp.where(valid[None, :, :, None, None], g, 0.0)
    g = jnp.transpose(g, (0, 1, 3, 2, 4))           # (3, S, Cin, S, Cout)
    g = g.reshape(3, S, Cin, S // 2, 2, Cout)       # split w = 2*wo + parity
    g = jnp.transpose(g, (0, 1, 2, 4, 3, 5))        # (..., parity, wo, co)
    return g.reshape(3, S * Cin, S * Cout)


def init_params(key, num_classes=10, in_channels=1):
    """Canonical PyTorch-style params (f32, HWIO convs, (in,out) linears)."""
    ks = jax.random.split(key, 8)

    def u(k, shape, fan_in):
        b = 1.0 / float(fan_in) ** 0.5
        return jax.random.uniform(k, shape, jnp.float32, -b, b)

    return {
        "conv1_w": u(ks[0], (3, 3, in_channels, 32), in_channels * 9),
        "conv1_b": u(ks[1], (32,), in_channels * 9),
        "conv2_w": u(ks[2], (3, 3, 32, 64), 32 * 9),
        "conv2_b": u(ks[3], (64,), 32 * 9),
        "fc1_w": u(ks[4], (64 * 8 * 8, 128), 64 * 8 * 8),   # rows = PyTorch NCHW-flatten order
        "fc1_b": u(ks[5], (128,), 64 * 8 * 8),
        "fc2_w": u(ks[6], (128, num_classes), 128),
        "fc2_b": u(ks[7], (num_classes,), 128),
    }


def pack_params(params):
    """Convert canonical params into the kernel's resident-VMEM layouts (call once)."""
    C = params["fc2_b"].shape[0]
    b1 = _conv_band(params["conv1_w"], 32)                       # (3, 32*Cin, 1024)
    b2 = _conv_band(params["conv2_w"], 16)                       # (3, 512, 1024)
    # fc1 rows: PyTorch flat index co*64 + ho*8 + wo  ->  kernel index [ho, wo*64 + co]
    fc1 = params["fc1_w"].reshape(64, 8, 8, 128).transpose(1, 2, 0, 3).reshape(8, 512, 128)
    return {
        "conv1_band": b1.reshape(-1, 1024).astype(jnp.bfloat16),
        "conv1_bias": jnp.tile(params["conv1_b"], 32).reshape(1, 1024).astype(jnp.float32),
        "conv2_band": b2.astype(jnp.bfloat16),
        "conv2_bias": jnp.tile(params["conv2_b"], 16).reshape(1, 1024).astype(jnp.float32),
        "fc1_w": fc1.astype(jnp.bfloat16),
        "fc1_b": params["fc1_b"].reshape(1, 128).astype(jnp.float32),
        "fc2_w": params["fc2_w"].astype(jnp.bfloat16),
        "fc2_b": params["fc2_b"].reshape(1, C).astype(jnp.float32),
    }


# ---------------------------------------------------------------------------
# Forward wrapper
# ---------------------------------------------------------------------------
def simple_cnn_forward(kp, x_nchw, *, block_batch=16):
    """x_nchw: (N, Cin, 32, 32) f32 -> logits (N, num_classes) f32."""
    N, Cin, H, W = x_nchw.shape
    assert (H, W) == (32, 32), "classifier requires 32x32 input (64*8*8 flatten)"
    C = kp["fc2_b"].shape[-1]

    BB = min(block_batch, N)
    Np = ((N + BB - 1) // BB) * BB

    # NHWC, W*Cin packed into lanes; raw input only (~2 KB/img) gets the ky-shift concat.
    x = jnp.transpose(x_nchw, (0, 2, 3, 1)).reshape(N, 32, 32 * Cin).astype(jnp.bfloat16)
    if Np != N:
        x = jnp.pad(x, ((0, Np - N), (0, 0), (0, 0)))
    xp = jnp.pad(x, ((0, 0), (1, 1), (0, 0)))                     # zero 'same' pad along H
    xcat = jnp.concatenate([xp[:, k:k + 32, :] for k in range(3)], axis=-1)  # (Np,32,96*Cin)

    K1 = 3 * 32 * Cin
    out = pl.pallas_call(
        simple_cnn_kernel,
        out_shape=jax.ShapeDtypeStruct((Np, C), jnp.float32),
        grid=(Np // BB,),
        in_specs=[
            pl.BlockSpec((BB, 32, K1), lambda n: (n, 0, 0)),      # input block (varies)
            pl.BlockSpec((K1, 1024), lambda n: (0, 0)),           # conv1 band (resident)
            pl.BlockSpec((1, 1024), lambda n: (0, 0)),
            pl.BlockSpec((3, 512, 1024), lambda n: (0, 0, 0)),    # conv2 bands (resident)
            pl.BlockSpec((1, 1024), lambda n: (0, 0)),
            pl.BlockSpec((8, 512, 128), lambda n: (0, 0, 0)),     # fc1 (resident)
            pl.BlockSpec((1, 128), lambda n: (0, 0)),
            pl.BlockSpec((128, C), lambda n: (0, 0)),
            pl.BlockSpec((1, C), lambda n: (0, 0)),
        ],
        out_specs=pl.BlockSpec((BB, C), lambda n: (n, 0)),
        scratch_shapes=[pltpu.VMEM((BB, 18, 512), jnp.bfloat16)],
        compiler_params=pltpu.CompilerParams(
            dimension_semantics=("parallel",),
            vmem_limit_bytes=48 * 1024 * 1024,                    # < v7x's 64 MiB physical
        ),
    )(xcat, kp["conv1_band"], kp["conv1_bias"], kp["conv2_band"], kp["conv2_bias"],
      kp["fc1_w"], kp["fc1_b"], kp["fc2_w"], kp["fc2_b"])
    return out[:N] if Np != N else out


# ---------------------------------------------------------------------------
# Pure-JAX reference (PyTorch semantics) for validation
# ---------------------------------------------------------------------------
def reference_forward(params, x):
    dn = ("NCHW", "HWIO", "NCHW")
    y = lax.conv_general_dilated(x, params["conv1_w"], (1, 1), "SAME", dimension_numbers=dn)
    y = jnp.maximum(y + params["conv1_b"].reshape(1, -1, 1, 1), 0.0)
    y = lax.reduce_window(y, -jnp.inf, lax.max, (1, 1, 2, 2), (1, 1, 2, 2), "VALID")
    y = lax.conv_general_dilated(y, params["conv2_w"], (1, 1), "SAME", dimension_numbers=dn)
    y = jnp.maximum(y + params["conv2_b"].reshape(1, -1, 1, 1), 0.0)
    y = lax.reduce_window(y, -jnp.inf, lax.max, (1, 1, 2, 2), (1, 1, 2, 2), "VALID")
    y = y.reshape(y.shape[0], -1)                                 # NCHW flatten (PyTorch)
    y = jnp.maximum(y @ params["fc1_w"] + params["fc1_b"], 0.0)
    return y @ params["fc2_w"] + params["fc2_b"]


if __name__ == "__main__":
    key = jax.random.PRNGKey(0)
    pkey, xkey = jax.random.split(key)
    params = init_params(pkey, num_classes=10, in_channels=1)
    packed = pack_params(params)

    # 32x32 spatial is required by the classifier (64 * 8 * 8 after two 2x2 pools).
    x = jax.random.normal(xkey, (2, 1, 32, 32), jnp.float32)      # NCHW like PyTorch

    out = jax.jit(simple_cnn_forward)(packed, x)
    out = jax.block_until_ready(out)

    assert out.shape == (2, 10) and out.dtype == jnp.float32
    assert bool(jnp.all(jnp.isfinite(out)))
    ref = reference_forward(params, x)
    assert float(jnp.max(jnp.abs(out - ref))) < 0.08, "kernel deviates from reference"
    print("KERNEL_OK")
</pallas_src>

<mosaic_0001>
module attributes {stable_mosaic.version = 11 : i64} {
  func.func @simple_cnn_kernel(%arg0: i32, %arg1: memref<2x32x96xbf16, #tpu.memory_space<vmem>>, %arg2: memref<96x1024xbf16, #tpu.memory_space<vmem>>, %arg3: memref<1x1024xf32, #tpu.memory_space<vmem>>, %arg4: memref<3x512x1024xbf16, #tpu.memory_space<vmem>>, %arg5: memref<1x1024xf32, #tpu.memory_space<vmem>>, %arg6: memref<8x512x128xbf16, #tpu.memory_space<vmem>>, %arg7: memref<1x128xf32, #tpu.memory_space<vmem>>, %arg8: memref<128x10xbf16, #tpu.memory_space<vmem>>, %arg9: memref<1x10xf32, #tpu.memory_space<vmem>>, %arg10: memref<2x10xf32, #tpu.memory_space<vmem>>, %arg11: memref<2x18x512xbf16, #tpu.memory_space<vmem>>) attributes {dimension_semantics = [#tpu.dimension_semantics<parallel>], iteration_bounds = array<i64: 1>, scalar_prefetch = 0 : i64, scratch_operands = 1 : i64, tpu.core_type = #tpu.core_type<tc>, window_params = [{transform_indices = @transform_0, window_bounds = array<i64: 2, 32, 96>}, {pipeline_mode = #tpu.pipeline_mode<synchronous>, transform_indices = @transform_1, window_bounds = array<i64: 96, 1024>}, {pipeline_mode = #tpu.pipeline_mode<synchronous>, transform_indices = @transform_2, window_bounds = array<i64: 1, 1024>}, {pipeline_mode = #tpu.pipeline_mode<synchronous>, transform_indices = @transform_3, window_bounds = array<i64: 3, 512, 1024>}, {pipeline_mode = #tpu.pipeline_mode<synchronous>, transform_indices = @transform_4, window_bounds = array<i64: 1, 1024>}, {pipeline_mode = #tpu.pipeline_mode<synchronous>, transform_indices = @transform_5, window_bounds = array<i64: 8, 512, 128>}, {pipeline_mode = #tpu.pipeline_mode<synchronous>, transform_indices = @transform_6, window_bounds = array<i64: 1, 128>}, {pipeline_mode = #tpu.pipeline_mode<synchronous>, transform_indices = @transform_7, window_bounds = array<i64: 128, 10>}, {pipeline_mode = #tpu.pipeline_mode<synchronous>, transform_indices = @transform_8, window_bounds = array<i64: 1, 10>}, {transform_indices = @transform_9, window_bounds = array<i64: 2, 10>}]} {
    %c0 = arith.constant 0 : index
    %c0_0 = arith.constant 0 : index
    %c0_1 = arith.constant 0 : index
    %0 = vector.load %arg1[%c0, %c0_0, %c0_1] : memref<2x32x96xbf16, #tpu.memory_space<vmem>>, vector<2x32x96xbf16>
    %1 = vector.shape_cast %0 : vector<2x32x96xbf16> to vector<64x96xbf16>
    %c0_2 = arith.constant 0 : index
    %c0_3 = arith.constant 0 : index
    %2 = vector.load %arg2[%c0_2, %c0_3] : memref<96x1024xbf16, #tpu.memory_space<vmem>>, vector<96x1024xbf16>
    %cst = arith.constant dense<0.000000e+00> : vector<64x1024xf32>
    %3 = tpu.matmul %1, %2, %cst {dimension_numbers = #tpu.dot_dimension_numbers<[1], [0], [0], [1], [0, 0, 1, 1], [], []>} : vector<64x96xbf16>, vector<96x1024xbf16>, vector<64x1024xf32> -> vector<64x1024xf32>
    %c0_4 = arith.constant 0 : index
    %c0_5 = arith.constant 0 : index
    %4 = vector.load %arg3[%c0_4, %c0_5] : memref<1x1024xf32, #tpu.memory_space<vmem>>, vector<1x1024xf32>
    %5 = vector.broadcast %4 : vector<1x1024xf32> to vector<64x1024xf32>
    %6 = arith.addf %3, %5 : vector<64x1024xf32>
    %cst_6 = arith.constant 0.000000e+00 : f32
    %7 = vector.broadcast %cst_6 : f32 to vector<64x1024xf32>
    %8 = arith.maximumf %6, %7 : vector<64x1024xf32>
    %9 = vector.shape_cast %8 : vector<64x1024xf32> to vector<2x16x2x1024xf32>
    %10 = vector.extract_strided_slice %9 {offsets = [0, 0, 0, 0], sizes = [2, 16, 1, 1024], strides = [1, 1, 1, 1]} : vector<2x16x2x1024xf32> to vector<2x16x1x1024xf32>
    %11 = vector.shape_cast %10 : vector<2x16x1x1024xf32> to vector<2x16x1024xf32>
    %12 = vector.extract_strided_slice %9 {offsets = [0, 0, 1, 0], sizes = [2, 16, 1, 1024], strides = [1, 1, 1, 1]} : vector<2x16x2x1024xf32> to vector<2x16x1x1024xf32>
    %13 = vector.shape_cast %12 : vector<2x16x1x1024xf32> to vector<2x16x1024xf32>
    %14 = arith.maximumf %11, %13 : vector<2x16x1024xf32>
    %15 = vector.extract_strided_slice %14 {offsets = [0, 0, 0], sizes = [2, 16, 512], strides = [1, 1, 1]} : vector<2x16x1024xf32> to vector<2x16x512xf32>
    %16 = vector.extract_strided_slice %14 {offsets = [0, 0, 512], sizes = [2, 16, 512], strides = [1, 1, 1]} : vector<2x16x1024xf32> to vector<2x16x512xf32>
    %17 = arith.maximumf %15, %16 : vector<2x16x512xf32>
    %cst_7 = arith.constant 0.000000e+00 : bf16
    %18 = vector.broadcast %cst_7 : bf16 to vector<2x1x512xbf16>
    %c0_8 = arith.constant 0 : index
    %c0_9 = arith.constant 0 : index
    %c0_10 = arith.constant 0 : index
    %19 = vector.load %arg11[%c0_8, %c0_9, %c0_10] : memref<2x18x512xbf16, #tpu.memory_space<vmem>>, vector<2x1x512xbf16>
    tpu.vector_store %arg11[%c0_8, %c0_9, %c0_10], %18 {strides = array<i32>} : memref<2x18x512xbf16, #tpu.memory_space<vmem>>, vector<2x1x512xbf16>,
    %cst_11 = arith.constant 0.000000e+00 : bf16
    %20 = vector.broadcast %cst_11 : bf16 to vector<2x1x512xbf16>
    %c0_12 = arith.constant 0 : index
    %c17 = arith.constant 17 : index
    %c0_13 = arith.constant 0 : index
    %21 = vector.load %arg11[%c0_12, %c17, %c0_13] : memref<2x18x512xbf16, #tpu.memory_space<vmem>>, vector<2x1x512xbf16>
    tpu.vector_store %arg11[%c0_12, %c17, %c0_13], %20 {strides = array<i32>} : memref<2x18x512xbf16, #tpu.memory_space<vmem>>, vector<2x1x512xbf16>,
    %22 = arith.truncf %17 : vector<2x16x512xf32> to vector<2x16x512xbf16>
    %c0_14 = arith.constant 0 : index
    %c1 = arith.constant 1 : index
    %c0_15 = arith.constant 0 : index
    %23 = vector.load %arg11[%c0_14, %c1, %c0_15] : memref<2x18x512xbf16, #tpu.memory_space<vmem>>, vector<2x16x512xbf16>
    tpu.vector_store %arg11[%c0_14, %c1, %c0_15], %22 {strides = array<i32>} : memref<2x18x512xbf16, #tpu.memory_space<vmem>>, vector<2x16x512xbf16>,
    %cst_16 = arith.constant 0.000000e+00 : f32
    %24 = vector.broadcast %cst_16 : f32 to vector<32x1024xf32>
    %c0_17 = arith.constant 0 : index
    %c0_18 = arith.constant 0 : index
    %c0_19 = arith.constant 0 : index
    %25 = vector.load %arg11[%c0_17, %c0_18, %c0_19] : memref<2x18x512xbf16, #tpu.memory_space<vmem>>, vector<2x16x512xbf16>
    %26 = vector.shape_cast %25 : vector<2x16x512xbf16> to vector<32x512xbf16>
    %c0_20 = arith.constant 0 : index
    %c0_21 = arith.constant 0 : index
    %c0_22 = arith.constant 0 : index
    %27 = vector.load %arg4[%c0_20, %c0_21, %c0_22] : memref<3x512x1024xbf16, #tpu.memory_space<vmem>>, vector<1x512x1024xbf16>
    %28 = vector.shape_cast %27 : vector<1x512x1024xbf16> to vector<512x1024xbf16>
    %cst_23 = arith.constant dense<0.000000e+00> : vector<32x1024xf32>
    %29 = tpu.matmul %26, %28, %cst_23 {dimension_numbers = #tpu.dot_dimension_numbers<[1], [0], [0], [1], [0, 0, 1, 1], [], []>} : vector<32x512xbf16>, vector<512x1024xbf16>, vector<32x1024xf32> -> vector<32x1024xf32>
    %30 = arith.addf %24, %29 : vector<32x1024xf32>
    %c0_24 = arith.constant 0 : index
    %c1_25 = arith.constant 1 : index
    %c0_26 = arith.constant 0 : index
    %31 = vector.load %arg11[%c0_24, %c1_25, %c0_26] : memref<2x18x512xbf16, #tpu.memory_space<vmem>>, vector<2x16x512xbf16>
    %32 = vector.shape_cast %31 : vector<2x16x512xbf16> to vector<32x512xbf16>
    %c1_27 = arith.constant 1 : index
    %c0_28 = arith.constant 0 : index
    %c0_29 = arith.constant 0 : index
    %33 = vector.load %arg4[%c1_27, %c0_28, %c0_29] : memref<3x512x1024xbf16, #tpu.memory_space<vmem>>, vector<1x512x1024xbf16>
    %34 = vector.shape_cast %33 : vector<1x512x1024xbf16> to vector<512x1024xbf16>
    %cst_30 = arith.constant dense<0.000000e+00> : vector<32x1024xf32>
    %35 = tpu.matmul %32, %34, %cst_30 {dimension_numbers = #tpu.dot_dimension_numbers<[1], [0], [0], [1], [0, 0, 1, 1], [], []>} : vector<32x512xbf16>, vector<512x1024xbf16>, vector<32x1024xf32> -> vector<32x1024xf32>
    %36 = arith.addf %30, %35 : vector<32x1024xf32>
    %c0_31 = arith.constant 0 : index
    %c2 = arith.constant 2 : index
    %c0_32 = arith.constant 0 : index
    %37 = vector.load %arg11[%c0_31, %c2, %c0_32] : memref<2x18x512xbf16, #tpu.memory_space<vmem>>, vector<2x16x512xbf16>
    %38 = vector.shape_cast %37 : vector<2x16x512xbf16> to vector<32x512xbf16>
    %c2_33 = arith.constant 2 : index
    %c0_34 = arith.constant 0 : index
    %c0_35 = arith.constant 0 : index
    %39 = vector.load %arg4[%c2_33, %c0_34, %c0_35] : memref<3x512x1024xbf16, #tpu.memory_space<vmem>>, vector<1x512x1024xbf16>
    %40 = vector.shape_cast %39 : vector<1x512x1024xbf16> to vector<512x1024xbf16>
    %cst_36 = arith.constant dense<0.000000e+00> : vector<32x1024xf32>
    %41 = tpu.matmul %38, %40, %cst_36 {dimension_numbers = #tpu.dot_dimension_numbers<[1], [0], [0], [1], [0, 0, 1, 1], [], []>} : vector<32x512xbf16>, vector<512x1024xbf16>, vector<32x1024xf32> -> vector<32x1024xf32>
    %42 = arith.addf %36, %41 : vector<32x1024xf32>
    %c0_37 = arith.constant 0 : index
    %c0_38 = arith.constant 0 : index
    %43 = vector.load %arg5[%c0_37, %c0_38] : memref<1x1024xf32, #tpu.memory_space<vmem>>, vector<1x1024xf32>
    %44 = vector.broadcast %43 : vector<1x1024xf32> to vector<32x1024xf32>
    %45 = arith.addf %42, %44 : vector<32x1024xf32>
    %cst_39 = arith.constant 0.000000e+00 : f32
    %46 = vector.broadcast %cst_39 : f32 to vector<32x1024xf32>
    %47 = arith.maximumf %45, %46 : vector<32x1024xf32>
    %48 = vector.shape_cast %47 : vector<32x1024xf32> to vector<2x8x2x1024xf32>
    %49 = vector.extract_strided_slice %48 {offsets = [0, 0, 0, 0], sizes = [2, 8, 1, 1024], strides = [1, 1, 1, 1]} : vector<2x8x2x1024xf32> to vector<2x8x1x1024xf32>
    %50 = vector.shape_cast %49 : vector<2x8x1x1024xf32> to vector<2x8x1024xf32>
    %51 = vector.extract_strided_slice %48 {offsets = [0, 0, 1, 0], sizes = [2, 8, 1, 1024], strides = [1, 1, 1, 1]} : vector<2x8x2x1024xf32> to vector<2x8x1x1024xf32>
    %52 = vector.shape_cast %51 : vector<2x8x1x1024xf32> to vector<2x8x1024xf32>
    %53 = arith.maximumf %50, %52 : vector<2x8x1024xf32>
    %54 = vector.extract_strided_slice %53 {offsets = [0, 0, 0], sizes = [2, 8, 512], strides = [1, 1, 1]} : vector<2x8x1024xf32> to vector<2x8x512xf32>
    %55 = vector.extract_strided_slice %53 {offsets = [0, 0, 512], sizes = [2, 8, 512], strides = [1, 1, 1]} : vector<2x8x1024xf32> to vector<2x8x512xf32>
    %56 = arith.maximumf %54, %55 : vector<2x8x512xf32>
    %57 = arith.truncf %56 : vector<2x8x512xf32> to vector<2x8x512xbf16>
    %cst_40 = arith.constant 0.000000e+00 : f32
    %58 = vector.broadcast %cst_40 : f32 to vector<2x128xf32>
    %59 = vector.extract_strided_slice %57 {offsets = [0, 0, 0], sizes = [2, 1, 512], strides = [1, 1, 1]} : vector<2x8x512xbf16> to vector<2x1x512xbf16>
    %60 = vector.shape_cast %59 : vector<2x1x512xbf16> to vector<2x512xbf16>
    %c0_41 = arith.constant 0 : index
    %c0_42 = arith.constant 0 : index
    %c0_43 = arith.constant 0 : index
    %61 = vector.load %arg6[%c0_41, %c0_42, %c0_43] : memref<8x512x128xbf16, #tpu.memory_space<vmem>>, vector<1x512x128xbf16>
    %62 = vector.shape_cast %61 : vector<1x512x128xbf16> to vector<512x128xbf16>
    %cst_44 = arith.constant dense<0.000000e+00> : vector<2x128xf32>
    %63 = tpu.matmul %60, %62, %cst_44 {dimension_numbers = #tpu.dot_dimension_numbers<[1], [0], [0], [1], [0, 0, 1, 1], [], []>} : vector<2x512xbf16>, vector<512x128xbf16>, vector<2x128xf32> -> vector<2x128xf32>
    %64 = arith.addf %58, %63 : vector<2x128xf32>
    %65 = vector.extract_strided_slice %57 {offsets = [0, 1, 0], sizes = [2, 1, 512], strides = [1, 1, 1]} : vector<2x8x512xbf16> to vector<2x1x512xbf16>
    %66 = vector.shape_cast %65 : vector<2x1x512xbf16> to vector<2x512xbf16>
    %c1_45 = arith.constant 1 : index
    %c0_46 = arith.constant 0 : index
    %c0_47 = arith.constant 0 : index
    %67 = vector.load %arg6[%c1_45, %c0_46, %c0_47] : memref<8x512x128xbf16, #tpu.memory_space<vmem>>, vector<1x512x128xbf16>
    %68 = vector.shape_cast %67 : vector<1x512x128xbf16> to vector<512x128xbf16>
    %cst_48 = arith.constant dense<0.000000e+00> : vector<2x128xf32>
    %69 = tpu.matmul %66, %68, %cst_48 {dimension_numbers = #tpu.dot_dimension_numbers<[1], [0], [0], [1], [0, 0, 1, 1], [], []>} : vector<2x512xbf16>, vector<512x128xbf16>, vector<2x128xf32> -> vector<2x128xf32>
    %70 = arith.addf %64, %69 : vector<2x128xf32>
    %71 = vector.extract_strided_slice %57 {offsets = [0, 2, 0], sizes = [2, 1, 512], strides = [1, 1, 1]} : vector<2x8x512xbf16> to vector<2x1x512xbf16>
    %72 = vector.shape_cast %71 : vector<2x1x512xbf16> to vector<2x512xbf16>
    %c2_49 = arith.constant 2 : index
    %c0_50 = arith.constant 0 : index
    %c0_51 = arith.constant 0 : index
    %73 = vector.load %arg6[%c2_49, %c0_50, %c0_51] : memref<8x512x128xbf16, #tpu.memory_space<vmem>>, vector<1x512x128xbf16>
    %74 = vector.shape_cast %73 : vector<1x512x128xbf16> to vector<512x128xbf16>
    %cst_52 = arith.constant dense<0.000000e+00> : vector<2x128xf32>
    %75 = tpu.matmul %72, %74, %cst_52 {dimension_numbers = #tpu.dot_dimension_numbers<[1], [0], [0], [1], [0, 0, 1, 1], [], []>} : vector<2x512xbf16>, vector<512x128xbf16>, vector<2x128xf32> -> vector<2x128xf32>
    %76 = arith.addf %70, %75 : vector<2x128xf32>
    %77 = vector.extract_strided_slice %57 {offsets = [0, 3, 0], sizes = [2, 1, 512], strides = [1, 1, 1]} : vector<2x8x512xbf16> to vector<2x1x512xbf16>
    %78 = vector.shape_cast %77 : vector<2x1x512xbf16> to vector<2x512xbf16>
    %c3 = arith.constant 3 : index
    %c0_53 = arith.constant 0 : index
    %c0_54 = arith.constant 0 : index
    %79 = vector.load %arg6[%c3, %c0_53, %c0_54] : memref<8x512x128xbf16, #tpu.memory_space<vmem>>, vector<1x512x128xbf16>
    %80 = vector.shape_cast %79 : vector<1x512x128xbf16> to vector<512x128xbf16>
    %cst_55 = arith.constant dense<0.000000e+00> : vector<2x128xf32>
    %81 = tpu.matmul %78, %80, %cst_55 {dimension_numbers = #tpu.dot_dimension_numbers<[1], [0], [0], [1], [0, 0, 1, 1], [], []>} : vector<2x512xbf16>, vector<512x128xbf16>, vector<2x128xf32> -> vector<2x128xf32>
    %82 = arith.addf %76, %81 : vector<2x128xf32>
    %83 = vector.extract_strided_slice %57 {offsets = [0, 4, 0], sizes = [2, 1, 512], strides = [1, 1, 1]} : vector<2x8x512xbf16> to vector<2x1x512xbf16>
    %84 = vector.shape_cast %83 : vector<2x1x512xbf16> to vector<2x512xbf16>
    %c4 = arith.constant 4 : index
    %c0_56 = arith.constant 0 : index
    %c0_57 = arith.constant 0 : index
    %85 = vector.load %arg6[%c4, %c0_56, %c0_57] : memref<8x512x128xbf16, #tpu.memory_space<vmem>>, vector<1x512x128xbf16>
    %86 = vector.shape_cast %85 : vector<1x512x128xbf16> to vector<512x128xbf16>
    %cst_58 = arith.constant dense<0.000000e+00> : vector<2x128xf32>
    %87 = tpu.matmul %84, %86, %cst_58 {dimension_numbers = #tpu.dot_dimension_numbers<[1], [0], [0], [1], [0, 0, 1, 1], [], []>} : vector<2x512xbf16>, vector<512x128xbf16>, vector<2x128xf32> -> vector<2x128xf32>
    %88 = arith.addf %82, %87 : vector<2x128xf32>
    %89 = vector.extract_strided_slice %57 {offsets = [0, 5, 0], sizes = [2, 1, 512], strides = [1, 1, 1]} : vector<2x8x512xbf16> to vector<2x1x512xbf16>
    %90 = vector.shape_cast %89 : vector<2x1x512xbf16> to vector<2x512xbf16>
    %c5 = arith.constant 5 : index
    %c0_59 = arith.constant 0 : index
    %c0_60 = arith.constant 0 : index
    %91 = vector.load %arg6[%c5, %c0_59, %c0_60] : memref<8x512x128xbf16, #tpu.memory_space<vmem>>, vector<1x512x128xbf16>
    %92 = vector.shape_cast %91 : vector<1x512x128xbf16> to vector<512x128xbf16>
    %cst_61 = arith.constant dense<0.000000e+00> : vector<2x128xf32>
    %93 = tpu.matmul %90, %92, %cst_61 {dimension_numbers = #tpu.dot_dimension_numbers<[1], [0], [0], [1], [0, 0, 1, 1], [], []>} : vector<2x512xbf16>, vector<512x128xbf16>, vector<2x128xf32> -> vector<2x128xf32>
    %94 = arith.addf %88, %93 : vector<2x128xf32>
    %95 = vector.extract_strided_slice %57 {offsets = [0, 6, 0], sizes = [2, 1, 512], strides = [1, 1, 1]} : vector<2x8x512xbf16> to vector<2x1x512xbf16>
    %96 = vector.shape_cast %95 : vector<2x1x512xbf16> to vector<2x512xbf16>
    %c6 = arith.constant 6 : index
    %c0_62 = arith.constant 0 : index
    %c0_63 = arith.constant 0 : index
    %97 = vector.load %arg6[%c6, %c0_62, %c0_63] : memref<8x512x128xbf16, #tpu.memory_space<vmem>>, vector<1x512x128xbf16>
    %98 = vector.shape_cast %97 : vector<1x512x128xbf16> to vector<512x128xbf16>
    %cst_64 = arith.constant dense<0.000000e+00> : vector<2x128xf32>
    %99 = tpu.matmul %96, %98, %cst_64 {dimension_numbers = #tpu.dot_dimension_numbers<[1], [0], [0], [1], [0, 0, 1, 1], [], []>} : vector<2x512xbf16>, vector<512x128xbf16>, vector<2x128xf32> -> vector<2x128xf32>
    %100 = arith.addf %94, %99 : vector<2x128xf32>
    %101 = vector.extract_strided_slice %57 {offsets = [0, 7, 0], sizes = [2, 1, 512], strides = [1, 1, 1]} : vector<2x8x512xbf16> to vector<2x1x512xbf16>
    %102 = vector.shape_cast %101 : vector<2x1x512xbf16> to vector<2x512xbf16>
    %c7 = arith.constant 7 : index
    %c0_65 = arith.constant 0 : index
    %c0_66 = arith.constant 0 : index
    %103 = vector.load %arg6[%c7, %c0_65, %c0_66] : memref<8x512x128xbf16, #tpu.memory_space<vmem>>, vector<1x512x128xbf16>
    %104 = vector.shape_cast %103 : vector<1x512x128xbf16> to vector<512x128xbf16>
    %cst_67 = arith.constant dense<0.000000e+00> : vector<2x128xf32>
    %105 = tpu.matmul %102, %104, %cst_67 {dimension_numbers = #tpu.dot_dimension_numbers<[1], [0], [0], [1], [0, 0, 1, 1], [], []>} : vector<2x512xbf16>, vector<512x128xbf16>, vector<2x128xf32> -> vector<2x128xf32>
    %106 = arith.addf %100, %105 : vector<2x128xf32>
    %c0_68 = arith.constant 0 : index
    %c0_69 = arith.constant 0 : index
    %107 = vector.load %arg7[%c0_68, %c0_69] : memref<1x128xf32, #tpu.memory_space<vmem>>, vector<1x128xf32>
    %108 = vector.broadcast %107 : vector<1x128xf32> to vector<2x128xf32>
    %109 = arith.addf %106, %108 : vector<2x128xf32>
    %cst_70 = arith.constant 0.000000e+00 : f32
    %110 = vector.broadcast %cst_70 : f32 to vector<2x128xf32>
    %111 = arith.maximumf %109, %110 : vector<2x128xf32>
    %112 = arith.truncf %111 : vector<2x128xf32> to vector<2x128xbf16>
    %c0_71 = arith.constant 0 : index
    %c0_72 = arith.constant 0 : index
    %113 = vector.load %arg8[%c0_71, %c0_72] : memref<128x10xbf16, #tpu.memory_space<vmem>>, vector<128x10xbf16>
    %cst_73 = arith.constant dense<0.000000e+00> : vector<2x10xf32>
    %114 = tpu.matmul %112, %113, %cst_73 {dimension_numbers = #tpu.dot_dimension_numbers<[1], [0], [0], [1], [0, 0, 1, 1], [], []>} : vector<2x128xbf16>, vector<128x10xbf16>, vector<2x10xf32> -> vector<2x10xf32>
    %c0_74 = arith.constant 0 : index
    %c0_75 = arith.constant 0 : index
    %115 = vector.load %arg9[%c0_74, %c0_75] : memref<1x10xf32, #tpu.memory_space<vmem>>, vector<1x10xf32>
    %116 = vector.broadcast %115 : vector<1x10xf32> to vector<2x10xf32>
    %117 = arith.addf %114, %116 : vector<2x10xf32>
    %c0_76 = arith.constant 0 : index
    %c0_77 = arith.constant 0 : index
    %118 = vector.load %arg10[%c0_76, %c0_77] : memref<2x10xf32, #tpu.memory_space<vmem>>, vector<2x10xf32>
    tpu.vector_store %arg10[%c0_76, %c0_77], %117 {strides = array<i32>} : memref<2x10xf32, #tpu.memory_space<vmem>>, vector<2x10xf32>,
    return
  }
  func.func @transform_0(%arg0: i32) -> (i32, i32, i32) {
    %c0_i32 = arith.constant 0 : i32
    %c0_i32_0 = arith.constant 0 : i32
    %c0_i32_1 = arith.constant 0 : i32
    return %arg0, %c0_i32, %c0_i32_0 : i32, i32, i32
  }
  func.func @transform_1(%arg0: i32) -> (i32, i32) {
    %c0_i32 = arith.constant 0 : i32
    %c0_i32_0 = arith.constant 0 : i32
    %c0_i32_1 = arith.constant 0 : i32
    return %c0_i32, %c0_i32_0 : i32, i32
  }
  func.func @transform_2(%arg0: i32) -> (i32, i32) {
    %c0_i32 = arith.constant 0 : i32
    %c0_i32_0 = arith.constant 0 : i32
    %c0_i32_1 = arith.constant 0 : i32
    return %c0_i32, %c0_i32_0 : i32, i32
  }
  func.func @transform_3(%arg0: i32) -> (i32, i32, i32) {
    %c0_i32 = arith.constant 0 : i32
    %c0_i32_0 = arith.constant 0 : i32
    %c0_i32_1 = arith.constant 0 : i32
    %c0_i32_2 = arith.constant 0 : i32
    return %c0_i32, %c0_i32_0, %c0_i32_1 : i32, i32, i32
  }
  func.func @transform_4(%arg0: i32) -> (i32, i32) {
    %c0_i32 = arith.constant 0 : i32
    %c0_i32_0 = arith.constant 0 : i32
    %c0_i32_1 = arith.constant 0 : i32
    return %c0_i32, %c0_i32_0 : i32, i32
  }
  func.func @transform_5(%arg0: i32) -> (i32, i32, i32) {
    %c0_i32 = arith.constant 0 : i32
    %c0_i32_0 = arith.constant 0 : i32
    %c0_i32_1 = arith.constant 0 : i32
    %c0_i32_2 = arith.constant 0 : i32
    return %c0_i32, %c0_i32_0, %c0_i32_1 : i32, i32, i32
  }
  func.func @transform_6(%arg0: i32) -> (i32, i32) {
    %c0_i32 = arith.constant 0 : i32
    %c0_i32_0 = arith.constant 0 : i32
    %c0_i32_1 = arith.constant 0 : i32
    return %c0_i32, %c0_i32_0 : i32, i32
  }
  func.func @transform_7(%arg0: i32) -> (i32, i32) {
    %c0_i32 = arith.constant 0 : i32
    %c0_i32_0 = arith.constant 0 : i32
    %c0_i32_1 = arith.constant 0 : i32
    return %c0_i32, %c0_i32_0 : i32, i32
  }
  func.func @transform_8(%arg0: i32) -> (i32, i32) {
    %c0_i32 = arith.constant 0 : i32
    %c0_i32_0 = arith.constant 0 : i32
    %c0_i32_1 = arith.constant 0 : i32
    return %c0_i32, %c0_i32_0 : i32, i32
  }
  func.func @transform_9(%arg0: i32) -> (i32, i32) {
    %c0_i32 = arith.constant 0 : i32
    %c0_i32_0 = arith.constant 0 : i32
    return %arg0, %c0_i32 : i32, i32
  }
}

</mosaic_0001>

<llo_original>
// kernel: simple_cnn_forward.1
$region0: #{simple_cnn_forward.1}
  #allocation0 [shape = 'u32[]', space=smem, size = 0x4, offset = 0x4, fixed_abs, tag = 'smem constant byte address 0x4 - core index']
  #allocation1 [shape = 'u32[144,128]{1,0:T(1,128)}', space=vmem, size = 0x12000, scoped, tag = 'internal scratch']
  #allocation2 [shape = 'bf16[2,18,512]{2,1,0:T(8,128)(2,1)}', space=vmem, size = 0xc000, scoped, tag = 'scratch operand']
  %s0 = inlined_call_operand.vmem [shape: bf16[2,32,96], index: 0, kind: input, shape index: {}]
  %s1 = inlined_call_operand.hbm [shape: bf16[96,1024], index: 1, kind: input, shape index: {}]
  %s2 = inlined_call_operand.hbm [shape: f32[1,1024], index: 2, kind: input, shape index: {}]
  %s3 = inlined_call_operand.hbm [shape: bf16[3,512,1024], index: 3, kind: input, shape index: {}]
  %s4 = inlined_call_operand.hbm [shape: f32[1,1024], index: 4, kind: input, shape index: {}]
  %s5 = inlined_call_operand.hbm [shape: bf16[8,512,128], index: 5, kind: input, shape index: {}]
  %s6 = inlined_call_operand.hbm [shape: f32[1,128], index: 6, kind: input, shape index: {}]
  %s7 = inlined_call_operand.vmem [shape: bf16[128,10], index: 7, kind: input, shape index: {}]
  %s8 = inlined_call_operand.hbm [shape: f32[1,10], index: 8, kind: input, shape index: {}]
  %s9 = inlined_call_operand.hbm [shape: f32[2,10], index: 9, kind: output, shape index: {}]
  %s10 = sld [smem:[#allocation0]]
  $region74: #{simple_cnn_forward.1} parent=0
    _
  %s12 = ssub.s32 1, %s10
  %s13 = scalar_select 0, %s12, %s10
  $region1: #{simple_cnn_forward.1} parent=0
    #allocation3 [shape = 'u8[196608]{0}', space=vmem, size = 0x30000, scoped, tag = 'input window, operand 1, single buffered']
    #allocation4 [shape = 's32[1]{0}', space=sflag, size = 0x4, scoped, tag = 'scoped memory for simple_cnn_forward.1']
    #allocation5 [shape = 's32[1]{0}', space=sflag, size = 0x4, scoped, tag = 'scoped memory for simple_cnn_forward.1']
    #allocation6 [shape = 'u8[4096]{0}', space=vmem, size = 0x1000, scoped, tag = 'input window, operand 2, single buffered']
    #allocation7 [shape = 's32[1]{0}', space=sflag, size = 0x4, scoped, tag = 'scoped memory for simple_cnn_forward.1']
    #allocation8 [shape = 'u8[3145728]{0}', space=vmem, size = 0x300000, scoped, tag = 'input window, operand 3, single buffered']
    #allocation9 [shape = 'u8[4096]{0}', space=vmem, size = 0x1000, scoped, tag = 'input window, operand 4, single buffered']
    #allocation10 [shape = 's32[1]{0}', space=sflag, size = 0x4, scoped, tag = 'scoped memory for simple_cnn_forward.1']
    #allocation11 [shape = 'u8[1048576]{0}', space=vmem, size = 0x100000, scoped, tag = 'input window, operand 5, single buffered']
    #allocation12 [shape = 'u8[512]{0}', space=vmem, size = 0x400, scoped, tag = 'input window, operand 6, single buffered']
    #allocation13 [shape = 's32[1]{0}', space=sflag, size = 0x4, scoped, tag = 'scoped memory for simple_cnn_forward.1']
    #allocation14 [shape = 'u8[512]{0}', space=vmem, size = 0x400, scoped, tag = 'input window, operand 8, single buffered']
    #allocation15 [shape = 'u8[1024]{0}', space=vmem, size = 0x400, scoped, tag = 'output window, operand 0, single buffered']
    %14 = vsyncpa [#allocation4], 0
    %15 = vsyncpa [#allocation7], 0
    %16 = vsyncpa [#allocation10], 0
    %17 = vsyncpa [#allocation13], 0
    %18 = vsyncpa [#allocation5], 0
    // Predicated region
    $region2: #{simple_cnn_forward.1} parent=1 // pred_check
      _
    $region3: #{simple_cnn_forward.1} parent=1 // pred_check_branch
      %20 = sbr.rel (0) target = $region5
    $region4: #{simple_cnn_forward.1} parent=1 // pred_region
      _
    $region5: #{simple_cnn_forward.1} parent=1 // pred_fallthru
      _
    // Predicated region
    $region6: #{simple_cnn_forward.1} parent=1 // pred_check
      _
    $region7: #{simple_cnn_forward.1} parent=1 // pred_check_branch
      %22 = sbr.rel (0) target = $region9
    $region8: #{simple_cnn_forward.1} parent=1 // pred_region
      %s24 = ssub.s32 6144, 6144
      %25 = vsyncadd [#allocation4], %s24
      %s26 = sshll.u32 [#allocation3], 4
      %s27 = int_to_ptr.vmem [resolvable:$true] %s26
      %32 = dma.hbm_to_vmem [thread:$0]  %s1, 6144, %s27, [#allocation4], 512, 512, 32
    $region9: #{simple_cnn_forward.1} parent=1 // pred_fallthru
      _
    // Predicated region
    $region10: #{simple_cnn_forward.1} parent=1 // pred_check
      _
    $region11: #{simple_cnn_forward.1} parent=1 // pred_check_branch
      %34 = sbr.rel (0) target = $region13
    $region12: #{simple_cnn_forward.1} parent=1 // pred_region
      %s36 = ssub.s32 128, 128
      %37 = vsyncadd [#allocation7], %s36
      %s39 = sshll.u32 [#allocation6], 4
      %s40 = int_to_ptr.vmem [resolvable:$true] %s39
      %42 = dma.hbm_to_vmem [thread:$0]  %s2, 128, %s40, [#allocation7]
    $region13: #{simple_cnn_forward.1} parent=1 // pred_fallthru
      _
    // Predicated region
    $region14: #{simple_cnn_forward.1} parent=1 // pred_check
      _
    $region15: #{simple_cnn_forward.1} parent=1 // pred_check_branch
      %44 = sbr.rel (0) target = $region17
    $region16: #{simple_cnn_forward.1} parent=1 // pred_region
      %s46 = ssub.s32 98304, 98304
      %47 = vsyncadd [#allocation7], %s46
      %s48 = sshll.u32 [#allocation8], 4
      %s49 = int_to_ptr.vmem [resolvable:$true] %s48
      %54 = dma.hbm_to_vmem [thread:$0]  %s3, 98304, %s49, [#allocation7], 512, 512, 32
    $region17: #{simple_cnn_forward.1} parent=1 // pred_fallthru
      _
    // Predicated region
    $region18: #{simple_cnn_forward.1} parent=1 // pred_check
      _
    $region19: #{simple_cnn_forward.1} parent=1 // pred_check_branch
      %56 = sbr.rel (0) target = $region21
    $region20: #{simple_cnn_forward.1} parent=1 // pred_region
      %s58 = ssub.s32 128, 128
      %59 = vsyncadd [#allocation10], %s58
      %s61 = sshll.u32 [#allocation9], 4
      %s62 = int_to_ptr.vmem [resolvable:$true] %s61
      %64 = dma.hbm_to_vmem [thread:$0]  %s4, 128, %s62, [#allocation10]
    $region21: #{simple_cnn_forward.1} parent=1 // pred_fallthru
      _
    // Predicated region
    $region22: #{simple_cnn_forward.1} parent=1 // pred_check
      _
    $region23: #{simple_cnn_forward.1} parent=1 // pred_check_branch
      %66 = sbr.rel (0) target = $region25
    $region24: #{simple_cnn_forward.1} parent=1 // pred_region
      %s68 = ssub.s32 32768, 32768
      %69 = vsyncadd [#allocation10], %s68
      %s70 = sshll.u32 [#allocation11], 4
      %s71 = int_to_ptr.vmem [resolvable:$true] %s70
      %76 = dma.hbm_to_vmem [thread:$0]  %s5, 32768, %s71, [#allocation10], 64, 64, 4
    $region25: #{simple_cnn_forward.1} parent=1 // pred_fallthru
      _
    // Predicated region
    $region26: #{simple_cnn_forward.1} parent=1 // pred_check
      _
    $region27: #{simple_cnn_forward.1} parent=1 // pred_check_branch
      %78 = sbr.rel (0) target = $region29
    $region28: #{simple_cnn_forward.1} parent=1 // pred_region
      %s80 = ssub.s32 16, 16
      %81 = vsyncadd [#allocation13], %s80
      %s83 = sshll.u32 [#allocation12], 4
      %s84 = int_to_ptr.vmem [resolvable:$true] %s83
      %86 = dma.hbm_to_vmem [thread:$0]  %s6, 16, %s84, [#allocation13]
    $region29: #{simple_cnn_forward.1} parent=1 // pred_fallthru
      _
    // Predicated region
    $region30: #{simple_cnn_forward.1} parent=1 // pred_check
      _
    $region31: #{simple_cnn_forward.1} parent=1 // pred_check_branch
      %88 = sbr.rel (0) target = $region33
    $region32: #{simple_cnn_forward.1} parent=1 // pred_region
      _
    $region33: #{simple_cnn_forward.1} parent=1 // pred_fallthru
      _
    // Predicated region
    $region34: #{simple_cnn_forward.1} parent=1 // pred_check
      _
    $region35: #{simple_cnn_forward.1} parent=1 // pred_check_branch
      %90 = sbr.rel (0) target = $region37
    $region36: #{simple_cnn_forward.1} parent=1 // pred_region
      %s92 = ssub.s32 16, 16
      %93 = vsyncadd [#allocation13], %s92
      %s95 = sshll.u32 [#allocation14], 4
      %s96 = int_to_ptr.vmem [resolvable:$true] %s95
      %98 = dma.hbm_to_vmem [thread:$0]  %s8, 16, %s96, [#allocation13]
    $region37: #{simple_cnn_forward.1} parent=1 // pred_fallthru
      _
    // Predicated region
    $region38: #{simple_cnn_forward.1} parent=1 // pred_check
      _
    $region39: #{simple_cnn_forward.1} parent=1 // pred_check_branch
      %100 = sbr.rel (0) target = $region41
    $region40: #{simple_cnn_forward.1} parent=1 // pred_region
      %101 = dma.done [#allocation4], 6144
    $region41: #{simple_cnn_forward.1} parent=1 // pred_fallthru
      _
    // Predicated region
    $region42: #{simple_cnn_forward.1} parent=1 // pred_check
      _
    $region43: #{simple_cnn_forward.1} parent=1 // pred_check_branch
      %103 = sbr.rel (0) target = $region45
    $region44: #{simple_cnn_forward.1} parent=1 // pred_region
      %104 = dma.done [#allocation7], 128
    $region45: #{simple_cnn_forward.1} parent=1 // pred_fallthru
      _
    // Predicated region
    $region46: #{simple_cnn_forward.1} parent=1 // pred_check
      _
    $region47: #{simple_cnn_forward.1} parent=1 // pred_check_branch
      %106 = sbr.rel (0) target = $region49
    $region48: #{simple_cnn_forward.1} parent=1 // pred_region
      %107 = dma.done [#allocation7], 98304
    $region49: #{simple_cnn_forward.1} parent=1 // pred_fallthru
      _
    // Predicated region
    $region50: #{simple_cnn_forward.1} parent=1 // pred_check
      _
    $region51: #{simple_cnn_forward.1} parent=1 // pred_check_branch
      %109 = sbr.rel (0) target = $region53
    $region52: #{simple_cnn_forward.1} parent=1 // pred_region
      %110 = dma.done [#allocation10], 128
    $region53: #{simple_cnn_forward.1} parent=1 // pred_fallthru
      _
    // Predicated region
    $region54: #{simple_cnn_forward.1} parent=1 // pred_check
      _
    $region55: #{simple_cnn_forward.1} parent=1 // pred_check_branch
      %112 = sbr.rel (0) target = $region57
    $region56: #{simple_cnn_forward.1} parent=1 // pred_region
      %113 = dma.done [#allocation10], 32768
    $region57: #{simple_cnn_forward.1} parent=1 // pred_fallthru
      _
    // Predicated region
    $region58: #{simple_cnn_forward.1} parent=1 // pred_check
      _
    $region59: #{simple_cnn_forward.1} parent=1 // pred_check_branch
      %115 = sbr.rel (0) target = $region61
    $region60: #{simple_cnn_forward.1} parent=1 // pred_region
      %116 = dma.done [#allocation13], 16
    $region61: #{simple_cnn_forward.1} parent=1 // pred_fallthru
      _
    // Predicated region
    $region62: #{simple_cnn_forward.1} parent=1 // pred_check
      _
    $region63: #{simple_cnn_forward.1} parent=1 // pred_check_branch
      %118 = sbr.rel (0) target = $region65
    $region64: #{simple_cnn_forward.1} parent=1 // pred_region
      %119 = dma.done [#allocation13], 16
    $region65: #{simple_cnn_forward.1} parent=1 // pred_fallthru
      _
    %v121 = vld [vmem:[%s0] sm:$0xf]
    %v122 = vld [vmem:[%s0 + $0x4] sm:$0xf]
    %v123 = vld [vmem:[%s0 + $0x8] sm:$0xf]
    %v124 = vld [vmem:[%s0 + $0xc] sm:$0xf]
    %v125 = vld [vmem:[%s0 + $0x10] sm:$0xf]
    %v126 = vld [vmem:[%s0 + $0x14] sm:$0xf]
    %v127 = vld [vmem:[%s0 + $0x18] sm:$0xf]
    %v128 = vld [vmem:[%s0 + $0x1c] sm:$0xf]
    %v129 = vld [vmem:[#allocation3] sm:$0xff]
    %v130 = vld [vmem:[#allocation3 + $0x8] sm:$0xff]
    %v131 = vld [vmem:[#allocation3 + $0x10] sm:$0xff]
    %v132 = vld [vmem:[#allocation3 + $0x18] sm:$0xff]
    %v133 = vld [vmem:[#allocation3 + $0x20] sm:$0xff]
    %v134 = vld [vmem:[#allocation3 + $0x28] sm:$0xff]
    %v135 = vld [vmem:[#allocation3 + $0x30] sm:$0xff]
    %v136 = vld [vmem:[#allocation3 + $0x38] sm:$0xff]
    %v137 = vld [vmem:[#allocation3 + $0x40] sm:$0xff]
    %v138 = vld [vmem:[#allocation3 + $0x48] sm:$0xff]
    %v139 = vld [vmem:[#allocation3 + $0x50] sm:$0xff]
    %v140 = vld [vmem:[#allocation3 + $0x58] sm:$0xff]
    %v141 = vld [vmem:[#allocation3 + $0x60] sm:$0xff]
    %v142 = vld [vmem:[#allocation3 + $0x68] sm:$0xff]
    %v143 = vld [vmem:[#allocation3 + $0x70] sm:$0xff]
    %v144 = vld [vmem:[#allocation3 + $0x78] sm:$0xff]
    %v145 = vld [vmem:[#allocation3 + $0x80] sm:$0xff]
    %v146 = vld [vmem:[#allocation3 + $0x88] sm:$0xff]
    %v147 = vld [vmem:[#allocation3 + $0x90] sm:$0xff]
    %v148 = vld [vmem:[#allocation3 + $0x98] sm:$0xff]
    %v149 = vld [vmem:[#allocation3 + $0xa0] sm:$0xff]
    %v150 = vld [vmem:[#allocation3 + $0xa8] sm:$0xff]
    %v151 = vld [vmem:[#allocation3 + $0xb0] sm:$0xff]
    %v152 = vld [vmem:[#allocation3 + $0xb8] sm:$0xff]
    %v153 = vld [vmem:[#allocation3 + $0xc0] sm:$0xff]
    %v154 = vld [vmem:[#allocation3 + $0xc8] sm:$0xff]
    %v155 = vld [vmem:[#allocation3 + $0xd0] sm:$0xff]
    %v156 = vld [vmem:[#allocation3 + $0xd8] sm:$0xff]
    %v157 = vld [vmem:[#allocation3 + $0xe0] sm:$0xff]
    %v158 = vld [vmem:[#allocation3 + $0xe8] sm:$0xff]
    %v159 = vld [vmem:[#allocation3 + $0xf0] sm:$0xff]
    %v160 = vld [vmem:[#allocation3 + $0xf8] sm:$0xff]
    %v161 = vld [vmem:[#allocation3 + $0x100] sm:$0xff]
    %v162 = vld [vmem:[#allocation3 + $0x108] sm:$0xff]
    %v163 = vld [vmem:[#allocation3 + $0x110] sm:$0xff]
    %v164 = vld [vmem:[#allocation3 + $0x118] sm:$0xff]
    %v165 = vld [vmem:[#allocation3 + $0x120] sm:$0xff]
    %v166 = vld [vmem:[#allocation3 + $0x128] sm:$0xff]
    %v167 = vld [vmem:[#allocation3 + $0x130] sm:$0xff]
    %v168 = vld [vmem:[#allocation3 + $0x138] sm:$0xff]
    %v169 = vld [vmem:[#allocation3 + $0x140] sm:$0xff]
    %v170 = vld [vmem:[#allocation3 + $0x148] sm:$0xff]
    %v171 = vld [vmem:[#allocation3 + $0x150] sm:$0xff]
    %v172 = vld [vmem:[#allocation3 + $0x158] sm:$0xff]
    %v173 = vld [vmem:[#allocation3 + $0x160] sm:$0xff]
    %v174 = vld [vmem:[#allocation3 + $0x168] sm:$0xff]
    %v175 = vld [vmem:[#allocation3 + $0x170] sm:$0xff]
    %v176 = vld [vmem:[#allocation3 + $0x178] sm:$0xff]
    %v177 = vld [vmem:[#allocation6] sm:$0xff]
    %v179 = vlaneseq
    %v180 = vshrl.u32 %v179, 7
    %v181 = vsub.s32 0, %v180
    %v182 = vrot.slane %v177, %v181
    %v183 = vlaneseq
    %v184 = vshrl.u32 %v183, 7
    %v185 = vsub.s32 1, %v184
    %v186 = vrot.slane %v177, %v185
    %v187 = vlaneseq
    %v188 = vshrl.u32 %v187, 7
    %v189 = vsub.s32 2, %v188
    %v190 = vrot.slane %v177, %v189
    %v191 = vlaneseq
    %v192 = vshrl.u32 %v191, 7
    %v193 = vsub.s32 3, %v192
    %v194 = vrot.slane %v177, %v193
    %v195 = vlaneseq
    %v196 = vshrl.u32 %v195, 7
    %v197 = vsub.s32 4, %v196
    %v198 = vrot.slane %v177, %v197
    %v199 = vlaneseq
    %v200 = vshrl.u32 %v199, 7
    %v201 = vsub.s32 5, %v200
    %v202 = vrot.slane %v177, %v201
    %v203 = vlaneseq
    %v204 = vshrl.u32 %v203, 7
    %v205 = vsub.s32 6, %v204
    %v206 = vrot.slane %v177, %v205
    %v207 = vlaneseq
    %v208 = vshrl.u32 %v207, 7
    %v209 = vsub.s32 7, %v208
    %v210 = vrot.slane %v177, %v209
    %v227 = vunpack.c.l.b16 %v121
    %v228 = vunpack.c.l.b16 %v122
    %v229 = vunpack.c.l.b16 %v123
    %v230 = vunpack.c.l.b16 %v124
    %v231 = vunpack.c.l.b16 %v125
    %v232 = vunpack.c.l.b16 %v126
    %v233 = vunpack.c.l.b16 %v127
    %v234 = vunpack.c.l.b16 %v128
    %v235 = vpack.c.b16 %v228, %v227
    %v236 = vpack.c.b16 %v230, %v229
    %v237 = vpack.c.b16 %v232, %v231
    %v238 = vpack.c.b16 %v234, %v233
    %v287 = vunpack.c.l.b16 %v129
    %v288 = vunpack.c.h.b16 %v129
    %v289 = vunpack.c.l.b16 %v130
    %v290 = vunpack.c.h.b16 %v130
    %v291 = vunpack.c.l.b16 %v131
    %v292 = vunpack.c.h.b16 %v131
    %v293 = vunpack.c.l.b16 %v132
    %v294 = vunpack.c.h.b16 %v132
    %v295 = vunpack.c.l.b16 %v133
    %v296 = vunpack.c.h.b16 %v133
    %v297 = vunpack.c.l.b16 %v134
    %v298 = vunpack.c.h.b16 %v134
    %v299 = vunpack.c.l.b16 %v135
    %v300 = vunpack.c.h.b16 %v135
    %v301 = vunpack.c.l.b16 %v136
    %v302 = vunpack.c.h.b16 %v136
    %v303 = vunpack.c.l.b16 %v137
    %v304 = vunpack.c.h.b16 %v137
    %v305 = vunpack.c.l.b16 %v138
    %v306 = vunpack.c.h.b16 %v138
    %v307 = vunpack.c.l.b16 %v139
    %v308 = vunpack.c.h.b16 %v139
    %v309 = vunpack.c.l.b16 %v140
    %v310 = vunpack.c.h.b16 %v140
    %v311 = vunpack.c.l.b16 %v141
    %v312 = vunpack.c.h.b16 %v141
    %v313 = vunpack.c.l.b16 %v142
    %v314 = vunpack.c.h.b16 %v142
    %v315 = vunpack.c.l.b16 %v143
    %v316 = vunpack.c.h.b16 %v143
    %v317 = vunpack.c.l.b16 %v144
    %v318 = vunpack.c.h.b16 %v144
    %v319 = vunpack.c.l.b16 %v145
    %v320 = vunpack.c.h.b16 %v145
    %v321 = vunpack.c.l.b16 %v146
    %v322 = vunpack.c.h.b16 %v146
    %v323 = vunpack.c.l.b16 %v147
    %v324 = vunpack.c.h.b16 %v147
    %v325 = vunpack.c.l.b16 %v148
    %v326 = vunpack.c.h.b16 %v148
    %v327 = vunpack.c.l.b16 %v149
    %v328 = vunpack.c.h.b16 %v149
    %v329 = vunpack.c.l.b16 %v150
    %v330 = vunpack.c.h.b16 %v150
    %v331 = vunpack.c.l.b16 %v151
    %v332 = vunpack.c.h.b16 %v151
    %v333 = vunpack.c.l.b16 %v152
    %v334 = vunpack.c.h.b16 %v152
    %v335 = vunpack.c.l.b16 %v153
    %v336 = vunpack.c.h.b16 %v153
    %v337 = vunpack.c.l.b16 %v154
    %v338 = vunpack.c.h.b16 %v154
    %v339 = vunpack.c.l.b16 %v155
    %v340 = vunpack.c.h.b16 %v155
    %v341 = vunpack.c.l.b16 %v156
    %v342 = vunpack.c.h.b16 %v156
    %v343 = vunpack.c.l.b16 %v157
    %v344 = vunpack.c.h.b16 %v157
    %v345 = vunpack.c.l.b16 %v158
    %v346 = vunpack.c.h.b16 %v158
    %v347 = vunpack.c.l.b16 %v159
    %v348 = vunpack.c.h.b16 %v159
    %v349 = vunpack.c.l.b16 %v160
    %v350 = vunpack.c.h.b16 %v160
    %v351 = vunpack.c.l.b16 %v161
    %v352 = vunpack.c.h.b16 %v161
    %v353 = vunpack.c.l.b16 %v162
    %v354 = vunpack.c.h.b16 %v162
    %v355 = vunpack.c.l.b16 %v163
    %v356 = vunpack.c.h.b16 %v163
    %v357 = vunpack.c.l.b16 %v164
    %v358 = vunpack.c.h.b16 %v164
    %v359 = vunpack.c.l.b16 %v165
    %v360 = vunpack.c.h.b16 %v165
    %v361 = vunpack.c.l.b16 %v166
    %v362 = vunpack.c.h.b16 %v166
    %v363 = vunpack.c.l.b16 %v167
    %v364 = vunpack.c.h.b16 %v167
    %v365 = vunpack.c.l.b16 %v168
    %v366 = vunpack.c.h.b16 %v168
    %v367 = vunpack.c.l.b16 %v169
    %v368 = vunpack.c.h.b16 %v169
    %v369 = vunpack.c.l.b16 %v170
    %v370 = vunpack.c.h.b16 %v170
    %v371 = vunpack.c.l.b16 %v171
    %v372 = vunpack.c.h.b16 %v171
    %v373 = vunpack.c.l.b16 %v172
    %v374 = vunpack.c.h.b16 %v172
    %v375 = vunpack.c.l.b16 %v173
    %v376 = vunpack.c.h.b16 %v173
    %v377 = vunpack.c.l.b16 %v174
    %v378 = vunpack.c.h.b16 %v174
    %v379 = vunpack.c.l.b16 %v175
    %v380 = vunpack.c.h.b16 %v175
    %v381 = vunpack.c.l.b16 %v176
    %v382 = vunpack.c.h.b16 %v176
    %v383 = vpack.c.b16 %v295, %v287
    %v384 = vpack.c.b16 %v296, %v288
    %v385 = vpack.c.b16 %v297, %v289
    %v386 = vpack.c.b16 %v298, %v290
    %v387 = vpack.c.b16 %v299, %v291
    %v388 = vpack.c.b16 %v300, %v292
    %v389 = vpack.c.b16 %v301, %v293
    %v390 = vpack.c.b16 %v302, %v294
    %v391 = vpack.c.b16 %v311, %v303
    %v392 = vpack.c.b16 %v312, %v304
    %v393 = vpack.c.b16 %v313, %v305
    %v394 = vpack.c.b16 %v314, %v306
    %v395 = vpack.c.b16 %v315, %v307
    %v396 = vpack.c.b16 %v316, %v308
    %v397 = vpack.c.b16 %v317, %v309
    %v398 = vpack.c.b16 %v318, %v310
    %v399 = vpack.c.b16 %v327, %v319
    %v400 = vpack.c.b16 %v328, %v320
    %v401 = vpack.c.b16 %v329, %v321
    %v402 = vpack.c.b16 %v330, %v322
    %v403 = vpack.c.b16 %v331, %v323
    %v404 = vpack.c.b16 %v332, %v324
    %v405 = vpack.c.b16 %v333, %v325
    %v406 = vpack.c.b16 %v334, %v326
    %v407 = vpack.c.b16 %v343, %v335
    %v408 = vpack.c.b16 %v344, %v336
    %v409 = vpack.c.b16 %v345, %v337
    %v410 = vpack.c.b16 %v346, %v338
    %v411 = vpack.c.b16 %v347, %v339
    %v412 = vpack.c.b16 %v348, %v340
    %v413 = vpack.c.b16 %v349, %v341
    %v414 = vpack.c.b16 %v350, %v342
    %v415 = vpack.c.b16 %v359, %v351
    %v416 = vpack.c.b16 %v360, %v352
    %v417 = vpack.c.b16 %v361, %v353
    %v418 = vpack.c.b16 %v362, %v354
    %v419 = vpack.c.b16 %v363, %v355
    %v420 = vpack.c.b16 %v364, %v356
    %v421 = vpack.c.b16 %v365, %v357
    %v422 = vpack.c.b16 %v366, %v358
    %v423 = vpack.c.b16 %v375, %v367
    %v424 = vpack.c.b16 %v376, %v368
    %v425 = vpack.c.b16 %v377, %v369
    %v426 = vpack.c.b16 %v378, %v370
    %v427 = vpack.c.b16 %v379, %v371
    %v428 = vpack.c.b16 %v380, %v372
    %v429 = vpack.c.b16 %v381, %v373
    %v430 = vpack.c.b16 %v382, %v374
    %vm479 = vcmask 785408
    %v481 = vsel %vm479, %v235, 0
    %v484 = vsel %vm479, %v236, 0
    %v487 = vsel %vm479, %v237, 0
    %v490 = vsel %vm479, %v238, 0
    %492 = vmatprep.subr.bf16.mxu0 0
    %493 = vmatpush1.bf16.msra.mxu0 0
    %494 = vmatprep.subr.bf16.mxu0 0
    %495 = vmatpush1.bf16.msra.mxu0 0
    %496 = vmatprep.subr.bf16.mxu0 %v424
    %497 = vmatpush1.bf16.msra.mxu0 %v423
    %498 = vmatprep.subr.bf16.mxu0 %v416
    %499 = vmatpush1.bf16.msra.mxu0 %v415
    %500 = vmatprep.subr.bf16.mxu0 %v408
    %501 = vmatpush1.bf16.msra.mxu0 %v407
    %502 = vmatprep.subr.bf16.mxu0 %v400
    %503 = vmatpush1.bf16.msra.mxu0 %v399
    %504 = vmatprep.subr.bf16.mxu0 %v392
    %505 = vmatpush1.bf16.msra.mxu0 %v391
    %506 = vmatprep.subr.bf16.mxu0 %v384
    %507 = vmatpush1.bf16.msra.mxu0 %v383
    %508 = vmatprep.subr.bf16.mxu0 0
    %509 = vmatpush2.bf16.msra.mxu0 0
    %510 = vmatprep.subr.bf16.mxu0 0
    %511 = vmatpush2.bf16.msra.mxu0 0
    %512 = vmatprep.subr.bf16.mxu0 0
    %513 = vmatpush2.bf16.msra.mxu0 0
    %514 = vmatprep.subr.bf16.mxu0 0
    %515 = vmatpush2.bf16.msra.mxu0 0
    %516 = vmatprep.subr.bf16.mxu0 0
    %517 = vmatpush2.bf16.msra.mxu0 0
    %518 = vmatprep.subr.bf16.mxu0 0
    %519 = vmatpush2.bf16.msra.mxu0 0
    %520 = vmatprep.subr.bf16.mxu0 0
    %521 = vmatpush2.bf16.msra.mxu0 0
    %522 = vmatprep.subr.bf16.mxu0 0
    %523 = vmatpush2.bf16.msra.mxu0 0
    %524 = vmatprep.mubr.bf16.mxu0 0
    %525 = vmatmul.mubr.bf16.gmra.mxu0 %v481
    %v526 = vpop.f32.mrf.mxu0
    %v527 = vadd.f32 %v182, %v526
    %v528 = vpop.f32.mrf.mxu0
    %v529 = vadd.f32 %v186, %v528
    %v530 = vpop.f32.mrf.mxu0
    %v531 = vadd.f32 %v182, %v530
    %v532 = vpop.f32.mrf.mxu0
    %v533 = vadd.f32 %v186, %v532
    %534 = vmatprep.mubr.bf16.mxu0 0
    %535 = vmatmul.mubr.bf16.gmra.mxu0 %v484
    %v536 = vpop.f32.mrf.mxu0
    %v537 = vadd.f32 %v182, %v536
    %v538 = vpop.f32.mrf.mxu0
    %v539 = vadd.f32 %v186, %v538
    %v540 = vpop.f32.mrf.mxu0
    %v541 = vadd.f32 %v182, %v540
    %v542 = vpop.f32.mrf.mxu0
    %v543 = vadd.f32 %v186, %v542
    %544 = vmatprep.mubr.bf16.mxu0 0
    %545 = vmatmul.mubr.bf16.gmra.mxu0 %v487
    %v546 = vpop.f32.mrf.mxu0
    %v547 = vadd.f32 %v182, %v546
    %v548 = vpop.f32.mrf.mxu0
    %v549 = vadd.f32 %v186, %v548
    %v550 = vpop.f32.mrf.mxu0
    %v551 = vadd.f32 %v182, %v550
    %v552 = vpop.f32.mrf.mxu0
    %v553 = vadd.f32 %v186, %v552
    %554 = vmatprep.mubr.bf16.mxu0 0
    %555 = vmatmul.mubr.bf16.gmra.mxu0 %v490
    %v556 = vpop.f32.mrf.mxu0
    %v557 = vadd.f32 %v182, %v556
    %v558 = vpop.f32.mrf.mxu0
    %v559 = vadd.f32 %v186, %v558
    %v560 = vpop.f32.mrf.mxu0
    %v561 = vadd.f32 %v182, %v560
    %v562 = vpop.f32.mrf.mxu0
    %v563 = vadd.f32 %v186, %v562
    %564 = vdwg.mxu0
    %565 = vmatprep.subr.bf16.mxu0 0
    %566 = vmatpush1.bf16.msra.mxu0 0
    %567 = vmatprep.subr.bf16.mxu0 0
    %568 = vmatpush1.bf16.msra.mxu0 0
    %569 = vmatprep.subr.bf16.mxu0 %v426
    %570 = vmatpush1.bf16.msra.mxu0 %v425
    %571 = vmatprep.subr.bf16.mxu0 %v418
    %572 = vmatpush1.bf16.msra.mxu0 %v417
    %573 = vmatprep.subr.bf16.mxu0 %v410
    %574 = vmatpush1.bf16.msra.mxu0 %v409
    %575 = vmatprep.subr.bf16.mxu0 %v402
    %576 = vmatpush1.bf16.msra.mxu0 %v401
    %577 = vmatprep.subr.bf16.mxu0 %v394
    %578 = vmatpush1.bf16.msra.mxu0 %v393
    %579 = vmatprep.subr.bf16.mxu0 %v386
    %580 = vmatpush1.bf16.msra.mxu0 %v385
    %581 = vmatprep.subr.bf16.mxu0 0
    %582 = vmatpush2.bf16.msra.mxu0 0
    %583 = vmatprep.subr.bf16.mxu0 0
    %584 = vmatpush2.bf16.msra.mxu0 0
    %585 = vmatprep.subr.bf16.mxu0 0
    %586 = vmatpush2.bf16.msra.mxu0 0
    %587 = vmatprep.subr.bf16.mxu0 0
    %588 = vmatpush2.bf16.msra.mxu0 0
    %589 = vmatprep.subr.bf16.mxu0 0
    %590 = vmatpush2.bf16.msra.mxu0 0
    %591 = vmatprep.subr.bf16.mxu0 0
    %592 = vmatpush2.bf16.msra.mxu0 0
    %593 = vmatprep.subr.bf16.mxu0 0
    %594 = vmatpush2.bf16.msra.mxu0 0
    %595 = vmatprep.subr.bf16.mxu0 0
    %596 = vmatpush2.bf16.msra.mxu0 0
    %597 = vmatprep.mubr.bf16.mxu0 0
    %598 = vmatmul.mubr.bf16.gmra.mxu0 %v481
    %v599 = vpop.f32.mrf.mxu0
    %v600 = vadd.f32 %v190, %v599
    %v601 = vpop.f32.mrf.mxu0
    %v602 = vadd.f32 %v194, %v601
    %v603 = vpop.f32.mrf.mxu0
    %v604 = vadd.f32 %v190, %v603
    %v605 = vpop.f32.mrf.mxu0
    %v606 = vadd.f32 %v194, %v605
    %607 = vmatprep.mubr.bf16.mxu0 0
    %608 = vmatmul.mubr.bf16.gmra.mxu0 %v484
    %v609 = vpop.f32.mrf.mxu0
    %v610 = vadd.f32 %v190, %v609
    %v611 = vpop.f32.mrf.mxu0
    %v612 = vadd.f32 %v194, %v611
    %v613 = vpop.f32.mrf.mxu0
    %v614 = vadd.f32 %v190, %v613
    %v615 = vpop.f32.mrf.mxu0
    %v616 = vadd.f32 %v194, %v615
    %617 = vmatprep.mubr.bf16.mxu0 0
    %618 = vmatmul.mubr.bf16.gmra.mxu0 %v487
    %v619 = vpop.f32.mrf.mxu0
    %v620 = vadd.f32 %v190, %v619
    %v621 = vpop.f32.mrf.mxu0
    %v622 = vadd.f32 %v194, %v621
    %v623 = vpop.f32.mrf.mxu0
    %v624 = vadd.f32 %v190, %v623
    %v625 = vpop.f32.mrf.mxu0
    %v626 = vadd.f32 %v194, %v625
    %627 = vmatprep.mubr.bf16.mxu0 0
    %628 = vmatmul.mubr.bf16.gmra.mxu0 %v490
    %v629 = vpop.f32.mrf.mxu0
    %v630 = vadd.f32 %v190, %v629
    %v631 = vpop.f32.mrf.mxu0
    %v632 = vadd.f32 %v194, %v631
    %v633 = vpop.f32.mrf.mxu0
    %v634 = vadd.f32 %v190, %v633
    %v635 = vpop.f32.mrf.mxu0
    %v636 = vadd.f32 %v194, %v635
    %637 = vdwg.mxu0
    %638 = vmatprep.subr.bf16.mxu0 0
    %639 = vmatpush1.bf16.msra.mxu0 0
    %640 = vmatprep.subr.bf16.mxu0 0
    %641 = vmatpush1.bf16.msra.mxu0 0
    %642 = vmatprep.subr.bf16.mxu0 %v428
    %643 = vmatpush1.bf16.msra.mxu0 %v427
    %644 = vmatprep.subr.bf16.mxu0 %v420
    %645 = vmatpush1.bf16.msra.mxu0 %v419
    %646 = vmatprep.subr.bf16.mxu0 %v412
    %647 = vmatpush1.bf16.msra.mxu0 %v411
    %648 = vmatprep.subr.bf16.mxu0 %v404
    %649 = vmatpush1.bf16.msra.mxu0 %v403
    %650 = vmatprep.subr.bf16.mxu0 %v396
    %651 = vmatpush1.bf16.msra.mxu0 %v395
    %652 = vmatprep.subr.bf16.mxu0 %v388
    %653 = vmatpush1.bf16.msra.mxu0 %v387
    %654 = vmatprep.subr.bf16.mxu0 0
    %655 = vmatpush2.bf16.msra.mxu0 0
    %656 = vmatprep.subr.bf16.mxu0 0
    %657 = vmatpush2.bf16.msra.mxu0 0
    %658 = vmatprep.subr.bf16.mxu0 0
    %659 = vmatpush2.bf16.msra.mxu0 0
    %660 = vmatprep.subr.bf16.mxu0 0
    %661 = vmatpush2.bf16.msra.mxu0 0
    %662 = vmatprep.subr.bf16.mxu0 0
    %663 = vmatpush2.bf16.msra.mxu0 0
    %664 = vmatprep.subr.bf16.mxu0 0
    %665 = vmatpush2.bf16.msra.mxu0 0
    %666 = vmatprep.subr.bf16.mxu0 0
    %667 = vmatpush2.bf16.msra.mxu0 0
    %668 = vmatprep.subr.bf16.mxu0 0
    %669 = vmatpush2.bf16.msra.mxu0 0
    %670 = vmatprep.mubr.bf16.mxu0 0
    %671 = vmatmul.mubr.bf16.gmra.mxu0 %v481
    %v672 = vpop.f32.mrf.mxu0
    %v673 = vadd.f32 %v198, %v672
    %v674 = vpop.f32.mrf.mxu0
    %v675 = vadd.f32 %v202, %v674
    %v676 = vpop.f32.mrf.mxu0
    %v677 = vadd.f32 %v198, %v676
    %v678 = vpop.f32.mrf.mxu0
    %v679 = vadd.f32 %v202, %v678
    %680 = vmatprep.mubr.bf16.mxu0 0
    %681 = vmatmul.mubr.bf16.gmra.mxu0 %v484
    %v682 = vpop.f32.mrf.mxu0
    %v683 = vadd.f32 %v198, %v682
    %v684 = vpop.f32.mrf.mxu0
    %v685 = vadd.f32 %v202, %v684
    %v686 = vpop.f32.mrf.mxu0
    %v687 = vadd.f32 %v198, %v686
    %v688 = vpop.f32.mrf.mxu0
    %v689 = vadd.f32 %v202, %v688
    %690 = vmatprep.mubr.bf16.mxu0 0
    %691 = vmatmul.mubr.bf16.gmra.mxu0 %v487
    %v692 = vpop.f32.mrf.mxu0
    %v693 = vadd.f32 %v198, %v692
    %v694 = vpop.f32.mrf.mxu0
    %v695 = vadd.f32 %v202, %v694
    %v696 = vpop.f32.mrf.mxu0
    %v697 = vadd.f32 %v198, %v696
    %v698 = vpop.f32.mrf.mxu0
    %v699 = vadd.f32 %v202, %v698
    %700 = vmatprep.mubr.bf16.mxu0 0
    %701 = vmatmul.mubr.bf16.gmra.mxu0 %v490
    %v702 = vpop.f32.mrf.mxu0
    %v703 = vadd.f32 %v198, %v702
    %v704 = vpop.f32.mrf.mxu0
    %v705 = vadd.f32 %v202, %v704
    %v706 = vpop.f32.mrf.mxu0
    %v707 = vadd.f32 %v198, %v706
    %v708 = vpop.f32.mrf.mxu0
    %v709 = vadd.f32 %v202, %v708
    %710 = vdwg.mxu0
    %711 = vmatprep.subr.bf16.mxu0 0
    %712 = vmatpush1.bf16.msra.mxu0 0
    %713 = vmatprep.subr.bf16.mxu0 0
    %714 = vmatpush1.bf16.msra.mxu0 0
    %715 = vmatprep.subr.bf16.mxu0 %v430
    %716 = vmatpush1.bf16.msra.mxu0 %v429
    %717 = vmatprep.subr.bf16.mxu0 %v422
    %718 = vmatpush1.bf16.msra.mxu0 %v421
    %719 = vmatprep.subr.bf16.mxu0 %v414
    %720 = vmatpush1.bf16.msra.mxu0 %v413
    %721 = vmatprep.subr.bf16.mxu0 %v406
    %722 = vmatpush1.bf16.msra.mxu0 %v405
    %723 = vmatprep.subr.bf16.mxu0 %v398
    %724 = vmatpush1.bf16.msra.mxu0 %v397
    %725 = vmatprep.subr.bf16.mxu0 %v390
    %726 = vmatpush1.bf16.msra.mxu0 %v389
    %727 = vmatprep.subr.bf16.mxu0 0
    %728 = vmatpush2.bf16.msra.mxu0 0
    %729 = vmatprep.subr.bf16.mxu0 0
    %730 = vmatpush2.bf16.msra.mxu0 0
    %731 = vmatprep.subr.bf16.mxu0 0
    %732 = vmatpush2.bf16.msra.mxu0 0
    %733 = vmatprep.subr.bf16.mxu0 0
    %734 = vmatpush2.bf16.msra.mxu0 0
    %735 = vmatprep.subr.bf16.mxu0 0
    %736 = vmatpush2.bf16.msra.mxu0 0
    %737 = vmatprep.subr.bf16.mxu0 0
    %738 = vmatpush2.bf16.msra.mxu0 0
    %739 = vmatprep.subr.bf16.mxu0 0
    %740 = vmatpush2.bf16.msra.mxu0 0
    %741 = vmatprep.subr.bf16.mxu0 0
    %742 = vmatpush2.bf16.msra.mxu0 0
    %743 = vmatprep.mubr.bf16.mxu0 0
    %744 = vmatmul.mubr.bf16.gmra.mxu0 %v481
    %v745 = vpop.f32.mrf.mxu0
    %v746 = vadd.f32 %v206, %v745
    %v747 = vpop.f32.mrf.mxu0
    %v748 = vadd.f32 %v210, %v747
    %v749 = vpop.f32.mrf.mxu0
    %v750 = vadd.f32 %v206, %v749
    %v751 = vpop.f32.mrf.mxu0
    %v752 = vadd.f32 %v210, %v751
    %753 = vmatprep.mubr.bf16.mxu0 0
    %754 = vmatmul.mubr.bf16.gmra.mxu0 %v484
    %v755 = vpop.f32.mrf.mxu0
    %v756 = vadd.f32 %v206, %v755
    %v757 = vpop.f32.mrf.mxu0
    %v758 = vadd.f32 %v210, %v757
    %v759 = vpop.f32.mrf.mxu0
    %v760 = vadd.f32 %v206, %v759
    %v761 = vpop.f32.mrf.mxu0
    %v762 = vadd.f32 %v210, %v761
    %763 = vmatprep.mubr.bf16.mxu0 0
    %764 = vmatmul.mubr.bf16.gmra.mxu0 %v487
    %v765 = vpop.f32.mrf.mxu0
    %v766 = vadd.f32 %v206, %v765
    %v767 = vpop.f32.mrf.mxu0
    %v768 = vadd.f32 %v210, %v767
    %v769 = vpop.f32.mrf.mxu0
    %v770 = vadd.f32 %v206, %v769
    %v771 = vpop.f32.mrf.mxu0
    %v772 = vadd.f32 %v210, %v771
    %773 = vmatprep.mubr.bf16.mxu0 0
    %774 = vmatmul.mubr.bf16.gmra.mxu0 %v490
    %v775 = vpop.f32.mrf.mxu0
    %v776 = vadd.f32 %v206, %v775
    %v777 = vpop.f32.mrf.mxu0
    %v778 = vadd.f32 %v210, %v777
    %v779 = vpop.f32.mrf.mxu0
    %v780 = vadd.f32 %v206, %v779
    %v781 = vpop.f32.mrf.mxu0
    %v782 = vadd.f32 %v210, %v781
    %783 = vdwg.mxu0
    %v784 = vmax.f32 %v527, 0.0
    %v785 = vmax.f32 %v529, 0.0
    %v786 = vmax.f32 %v600, 0.0
    %v787 = vmax.f32 %v602, 0.0
    %v788 = vmax.f32 %v673, 0.0
    %v789 = vmax.f32 %v675, 0.0
    %v790 = vmax.f32 %v746, 0.0
    %v791 = vmax.f32 %v748, 0.0
    %v792 = vmax.f32 %v531, 0.0
    %v793 = vmax.f32 %v533, 0.0
    %v794 = vmax.f32 %v604, 0.0
    %v795 = vmax.f32 %v606, 0.0
    %v796 = vmax.f32 %v677, 0.0
    %v797 = vmax.f32 %v679, 0.0
    %v798 = vmax.f32 %v750, 0.0
    %v799 = vmax.f32 %v752, 0.0
    %v800 = vmax.f32 %v537, 0.0
    %v801 = vmax.f32 %v539, 0.0
    %v802 = vmax.f32 %v610, 0.0
    %v803 = vmax.f32 %v612, 0.0
    %v804 = vmax.f32 %v683, 0.0
    %v805 = vmax.f32 %v685, 0.0
    %v806 = vmax.f32 %v756, 0.0
    %v807 = vmax.f32 %v758, 0.0
    %v808 = vmax.f32 %v541, 0.0
    %v809 = vmax.f32 %v543, 0.0
    %v810 = vmax.f32 %v614, 0.0
    %v811 = vmax.f32 %v616, 0.0
    %v812 = vmax.f32 %v687, 0.0
    %v813 = vmax.f32 %v689, 0.0
    %v814 = vmax.f32 %v760, 0.0
    %v815 = vmax.f32 %v762, 0.0
    %v816 = vmax.f32 %v547, 0.0
    %v817 = vmax.f32 %v549, 0.0
    %v818 = vmax.f32 %v620, 0.0
    %v819 = vmax.f32 %v622, 0.0
    %v820 = vmax.f32 %v693, 0.0
    %v821 = vmax.f32 %v695, 0.0
    %v822 = vmax.f32 %v766, 0.0
    %v823 = vmax.f32 %v768, 0.0
    %v824 = vmax.f32 %v551, 0.0
    %v825 = vmax.f32 %v553, 0.0
    %v826 = vmax.f32 %v624, 0.0
    %v827 = vmax.f32 %v626, 0.0
    %v828 = vmax.f32 %v697, 0.0
    %v829 = vmax.f32 %v699, 0.0
    %v830 = vmax.f32 %v770, 0.0
    %v831 = vmax.f32 %v772, 0.0
    %v832 = vmax.f32 %v557, 0.0
    %v833 = vmax.f32 %v559, 0.0
    %v834 = vmax.f32 %v630, 0.0
    %v835 = vmax.f32 %v632, 0.0
    %v836 = vmax.f32 %v703, 0.0
    %v837 = vmax.f32 %v705, 0.0
    %v838 = vmax.f32 %v776, 0.0
    %v839 = vmax.f32 %v778, 0.0
    %v840 = vmax.f32 %v561, 0.0
    %v841 = vmax.f32 %v563, 0.0
    %v842 = vmax.f32 %v634, 0.0
    %v843 = vmax.f32 %v636, 0.0
    %v844 = vmax.f32 %v707, 0.0
    %v845 = vmax.f32 %v709, 0.0
    %v846 = vmax.f32 %v780, 0.0
    %v847 = vmax.f32 %v782, 0.0
    %v912 = vcombine.low %v784, %v785
    %v913 = vcombine.high %v784, %v785
    %v914 = vcombine.low %v786, %v787
    %v915 = vcombine.high %v786, %v787
    %v917 = vunpack.c.l.s4 1983009808
    %v918 = vunpack.c.0.s8 %v917
    %v919 = vlaneseq
    %v920 = vshrl.u32 %v919, 7
    %v921 = vsub.s32 %v918, %v920
    %v922 = vrot.slane %v912, %v921
    %v924 = vunpack.c.l.s4 1983009808
    %v925 = vunpack.c.0.s8 %v924
    %v926 = vlaneseq
    %v927 = vshrl.u32 %v926, 7
    %v928 = vsub.s32 %v925, %v927
    %v929 = vrot.slane %v913, %v928
    %v931 = vunpack.c.l.s4 1983009808
    %v932 = vunpack.c.0.s8 %v931
    %v933 = vlaneseq
    %v934 = vshrl.u32 %v933, 7
    %v935 = vsub.s32 %v932, %v934
    %v936 = vrot.slane %v914, %v935
    %v938 = vunpack.c.l.s4 1983009808
    %v939 = vunpack.c.0.s8 %v938
    %v940 = vlaneseq
    %v941 = vshrl.u32 %v940, 7
    %v942 = vsub.s32 %v939, %v941
    %v943 = vrot.slane %v915, %v942
    %v944 = vcombine.low %v922, %v936
    %v945 = vcombine.high %v922, %v936
    %v946 = vcombine.low %v929, %v943
    %v947 = vcombine.high %v929, %v943
    %v948 = vcombine.low %v788, %v789
    %v949 = vcombine.high %v788, %v789
    %v950 = vcombine.low %v790, %v791
    %v951 = vcombine.high %v790, %v791
    %v953 = vunpack.c.l.s4 1983009808
    %v954 = vunpack.c.0.s8 %v953
    %v955 = vlaneseq
    %v956 = vshrl.u32 %v955, 7
    %v957 = vsub.s32 %v954, %v956
    %v958 = vrot.slane %v948, %v957
    %v960 = vunpack.c.l.s4 1983009808
    %v961 = vunpack.c.0.s8 %v960
    %v962 = vlaneseq
    %v963 = vshrl.u32 %v962, 7
    %v964 = vsub.s32 %v961, %v963
    %v965 = vrot.slane %v949, %v964
    %v967 = vunpack.c.l.s4 1983009808
    %v968 = vunpack.c.0.s8 %v967
    %v969 = vlaneseq
    %v970 = vshrl.u32 %v969, 7
    %v971 = vsub.s32 %v968, %v970
    %v972 = vrot.slane %v950, %v971
    %v974 = vunpack.c.l.s4 1983009808
    %v975 = vunpack.c.0.s8 %v974
    %v976 = vlaneseq
    %v977 = vshrl.u32 %v976, 7
    %v978 = vsub.s32 %v975, %v977
    %v979 = vrot.slane %v951, %v978
    %v980 = vcombine.low %v958, %v972
    %v981 = vcombine.high %v958, %v972
    %v982 = vcombine.low %v965, %v979
    %v983 = vcombine.high %v965, %v979
    %v984 = vcombine.low %v792, %v793
    %v985 = vcombine.high %v792, %v793
    %v986 = vcombine.low %v794, %v795
    %v987 = vcombine.high %v794, %v795
    %v989 = vunpack.c.l.s4 1983009808
    %v990 = vunpack.c.0.s8 %v989
    %v991 = vlaneseq
    %v992 = vshrl.u32 %v991, 7
    %v993 = vsub.s32 %v990, %v992
    %v994 = vrot.slane %v984, %v993
    %v996 = vunpack.c.l.s4 1983009808
    %v997 = vunpack.c.0.s8 %v996
    %v998 = vlaneseq
    %v999 = vshrl.u32 %v998, 7
    %v1000 = vsub.s32 %v997, %v999
    %v1001 = vrot.slane %v985, %v1000
    %v1003 = vunpack.c.l.s4 1983009808
    %v1004 = vunpack.c.0.s8 %v1003
    %v1005 = vlaneseq
    %v1006 = vshrl.u32 %v1005, 7
    %v1007 = vsub.s32 %v1004, %v1006
    %v1008 = vrot.slane %v986, %v1007
    %v1010 = vunpack.c.l.s4 1983009808
    %v1011 = vunpack.c.0.s8 %v1010
    %v1012 = vlaneseq
    %v1013 = vshrl.u32 %v1012, 7
    %v1014 = vsub.s32 %v1011, %v1013
    %v1015 = vrot.slane %v987, %v1014
    %v1016 = vcombine.low %v994, %v1008
    %v1017 = vcombine.high %v994, %v1008
    %v1018 = vcombine.low %v1001, %v1015
    %v1019 = vcombine.high %v1001, %v1015
    %v1020 = vcombine.low %v796, %v797
    %v1021 = vcombine.high %v796, %v797
    %v1022 = vcombine.low %v798, %v799
    %v1023 = vcombine.high %v798, %v799
    %v1025 = vunpack.c.l.s4 1983009808
    %v1026 = vunpack.c.0.s8 %v1025
    %v1027 = vlaneseq
    %v1028 = vshrl.u32 %v1027, 7
    %v1029 = vsub.s32 %v1026, %v1028
    %v1030 = vrot.slane %v1020, %v1029
    %v1032 = vunpack.c.l.s4 1983009808
    %v1033 = vunpack.c.0.s8 %v1032
    %v1034 = vlaneseq
    %v1035 = vshrl.u32 %v1034, 7
    %v1036 = vsub.s32 %v1033, %v1035
    %v1037 = vrot.slane %v1021, %v1036
    %v1039 = vunpack.c.l.s4 1983009808
    %v1040 = vunpack.c.0.s8 %v1039
    %v1041 = vlaneseq
    %v1042 = vshrl.u32 %v1041, 7
    %v1043 = vsub.s32 %v1040, %v1042
    %v1044 = vrot.slane %v1022, %v1043
    %v1046 = vunpack.c.l.s4 1983009808
    %v1047 = vunpack.c.0.s8 %v1046
    %v1048 = vlaneseq
    %v1049 = vshrl.u32 %v1048, 7
    %v1050 = vsub.s32 %v1047, %v1049
    %v1051 = vrot.slane %v1023, %v1050
    %v1052 = vcombine.low %v1030, %v1044
    %v1053 = vcombine.high %v1030, %v1044
    %v1054 = vcombine.low %v1037, %v1051
    %v1055 = vcombine.high %v1037, %v1051
    %v1056 = vcombine.low %v800, %v801
    %v1057 = vcombine.high %v800, %v801
    %v1058 = vcombine.low %v802, %v803
    %v1059 = vcombine.high %v802, %v803
    %v1061 = vunpack.c.l.s4 1983009808
    %v1062 = vunpack.c.0.s8 %v1061
    %v1063 = vlaneseq
    %v1064 = vshrl.u32 %v1063, 7
    %v1065 = vsub.s32 %v1062, %v1064
    %v1066 = vrot.slane %v1056, %v1065
    %v1068 = vunpack.c.l.s4 1983009808
    %v1069 = vunpack.c.0.s8 %v1068
    %v1070 = vlaneseq
    %v1071 = vshrl.u32 %v1070, 7
    %v1072 = vsub.s32 %v1069, %v1071
    %v1073 = vrot.slane %v1057, %v1072
    %v1075 = vunpack.c.l.s4 1983009808
    %v1076 = vunpack.c.0.s8 %v1075
    %v1077 = vlaneseq
    %v1078 = vshrl.u32 %v1077, 7
    %v1079 = vsub.s32 %v1076, %v1078
    %v1080 = vrot.slane %v1058, %v1079
    %v1082 = vunpack.c.l.s4 1983009808
    %v1083 = vunpack.c.0.s8 %v1082
    %v1084 = vlaneseq
    %v1085 = vshrl.u32 %v1084, 7
    %v1086 = vsub.s32 %v1083, %v1085
    %v1087 = vrot.slane %v1059, %v1086
    %v1088 = vcombine.low %v1066, %v1080
    %v1089 = vcombine.high %v1066, %v1080
    %v1090 = vcombine.low %v1073, %v1087
    %v1091 = vcombine.high %v1073, %v1087
    %v1092 = vcombine.low %v804, %v805
    %v1093 = vcombine.high %v804, %v805
    %v1094 = vcombine.low %v806, %v807
    %v1095 = vcombine.high %v806, %v807
    %v1097 = vunpack.c.l.s4 1983009808
    %v1098 = vunpack.c.0.s8 %v1097
    %v1099 = vlaneseq
    %v1100 = vshrl.u32 %v1099, 7
    %v1101 = vsub.s32 %v1098, %v1100
    %v1102 = vrot.slane %v1092, %v1101
    %v1104 = vunpack.c.l.s4 1983009808
    %v1105 = vunpack.c.0.s8 %v1104
    %v1106 = vlaneseq
    %v1107 = vshrl.u32 %v1106, 7
    %v1108 = vsub.s32 %v1105, %v1107
    %v1109 = vrot.slane %v1093, %v1108
    %v1111 = vunpack.c.l.s4 1983009808
    %v1112 = vunpack.c.0.s8 %v1111
    %v1113 = vlaneseq
    %v1114 = vshrl.u32 %v1113, 7
    %v1115 = vsub.s32 %v1112, %v1114
    %v1116 = vrot.slane %v1094, %v1115
    %v1118 = vunpack.c.l.s4 1983009808
    %v1119 = vunpack.c.0.s8 %v1118
    %v1120 = vlaneseq
    %v1121 = vshrl.u32 %v1120, 7
    %v1122 = vsub.s32 %v1119, %v1121
    %v1123 = vrot.slane %v1095, %v1122
    %v1124 = vcombine.low %v1102, %v1116
    %v1125 = vcombine.high %v1102, %v1116
    %v1126 = vcombine.low %v1109, %v1123
    %v1127 = vcombine.high %v1109, %v1123
    %v1128 = vcombine.low %v808, %v809
    %v1129 = vcombine.high %v808, %v809
    %v1130 = vcombine.low %v810, %v811
    %v1131 = vcombine.high %v810, %v811
    %v1133 = vunpack.c.l.s4 1983009808
    %v1134 = vunpack.c.0.s8 %v1133
    %v1135 = vlaneseq
    %v1136 = vshrl.u32 %v1135, 7
    %v1137 = vsub.s32 %v1134, %v1136
    %v1138 = vrot.slane %v1128, %v1137
    %v1140 = vunpack.c.l.s4 1983009808
    %v1141 = vunpack.c.0.s8 %v1140
    %v1142 = vlaneseq
    %v1143 = vshrl.u32 %v1142, 7
    %v1144 = vsub.s32 %v1141, %v1143
    %v1145 = vrot.slane %v1129, %v1144
    %v1147 = vunpack.c.l.s4 1983009808
    %v1148 = vunpack.c.0.s8 %v1147
    %v1149 = vlaneseq
    %v1150 = vshrl.u32 %v1149, 7
    %v1151 = vsub.s32 %v1148, %v1150
    %v1152 = vrot.slane %v1130, %v1151
    %v1154 = vunpack.c.l.s4 1983009808
    %v1155 = vunpack.c.0.s8 %v1154
    %v1156 = vlaneseq
    %v1157 = vshrl.u32 %v1156, 7
    %v1158 = vsub.s32 %v1155, %v1157
    %v1159 = vrot.slane %v1131, %v1158
    %v1160 = vcombine.low %v1138, %v1152
    %v1161 = vcombine.high %v1138, %v1152
    %v1162 = vcombine.low %v1145, %v1159
    %v1163 = vcombine.high %v1145, %v1159
    %v1164 = vcombine.low %v812, %v813
    %v1165 = vcombine.high %v812, %v813
    %v1166 = vcombine.low %v814, %v815
    %v1167 = vcombine.high %v814, %v815
    %v1169 = vunpack.c.l.s4 1983009808
    %v1170 = vunpack.c.0.s8 %v1169
    %v1171 = vlaneseq
    %v1172 = vshrl.u32 %v1171, 7
    %v1173 = vsub.s32 %v1170, %v1172
    %v1174 = vrot.slane %v1164, %v1173
    %v1176 = vunpack.c.l.s4 1983009808
    %v1177 = vunpack.c.0.s8 %v1176
    %v1178 = vlaneseq
    %v1179 = vshrl.u32 %v1178, 7
    %v1180 = vsub.s32 %v1177, %v1179
    %v1181 = vrot.slane %v1165, %v1180
    %v1183 = vunpack.c.l.s4 1983009808
    %v1184 = vunpack.c.0.s8 %v1183
    %v1185 = vlaneseq
    %v1186 = vshrl.u32 %v1185, 7
    %v1187 = vsub.s32 %v1184, %v1186
    %v1188 = vrot.slane %v1166, %v1187
    %v1190 = vunpack.c.l.s4 1983009808
    %v1191 = vunpack.c.0.s8 %v1190
    %v1192 = vlaneseq
    %v1193 = vshrl.u32 %v1192, 7
    %v1194 = vsub.s32 %v1191, %v1193
    %v1195 = vrot.slane %v1167, %v1194
    %v1196 = vcombine.low %v1174, %v1188
    %v1197 = vcombine.high %v1174, %v1188
    %v1198 = vcombine.low %v1181, %v1195
    %v1199 = vcombine.high %v1181, %v1195
    %v1200 = vcombine.low %v816, %v817
    %v1201 = vcombine.high %v816, %v817
    %v1202 = vcombine.low %v818, %v819
    %v1203 = vcombine.high %v818, %v819
    %v1205 = vunpack.c.l.s4 1983009808
    %v1206 = vunpack.c.0.s8 %v1205
    %v1207 = vlaneseq
    %v1208 = vshrl.u32 %v1207, 7
    %v1209 = vsub.s32 %v1206, %v1208
    %v1210 = vrot.slane %v1200, %v1209
    %v1212 = vunpack.c.l.s4 1983009808
    %v1213 = vunpack.c.0.s8 %v1212
    %v1214 = vlaneseq
    %v1215 = vshrl.u32 %v1214, 7
    %v1216 = vsub.s32 %v1213, %v1215
    %v1217 = vrot.slane %v1201, %v1216
    %v1219 = vunpack.c.l.s4 1983009808
    %v1220 = vunpack.c.0.s8 %v1219
    %v1221 = vlaneseq
    %v1222 = vshrl.u32 %v1221, 7
    %v1223 = vsub.s32 %v1220, %v1222
    %v1224 = vrot.slane %v1202, %v1223
    %v1226 = vunpack.c.l.s4 1983009808
    %v1227 = vunpack.c.0.s8 %v1226
    %v1228 = vlaneseq
    %v1229 = vshrl.u32 %v1228, 7
    %v1230 = vsub.s32 %v1227, %v1229
    %v1231 = vrot.slane %v1203, %v1230
    %v1232 = vcombine.low %v1210, %v1224
    %v1233 = vcombine.high %v1210, %v1224
    %v1234 = vcombine.low %v1217, %v1231
    %v1235 = vcombine.high %v1217, %v1231
    %v1236 = vcombine.low %v820, %v821
    %v1237 = vcombine.high %v820, %v821
    %v1238 = vcombine.low %v822, %v823
    %v1239 = vcombine.high %v822, %v823
    %v1241 = vunpack.c.l.s4 1983009808
    %v1242 = vunpack.c.0.s8 %v1241
    %v1243 = vlaneseq
    %v1244 = vshrl.u32 %v1243, 7
    %v1245 = vsub.s32 %v1242, %v1244
    %v1246 = vrot.slane %v1236, %v1245
    %v1248 = vunpack.c.l.s4 1983009808
    %v1249 = vunpack.c.0.s8 %v1248
    %v1250 = vlaneseq
    %v1251 = vshrl.u32 %v1250, 7
    %v1252 = vsub.s32 %v1249, %v1251
    %v1253 = vrot.slane %v1237, %v1252
    %v1255 = vunpack.c.l.s4 1983009808
    %v1256 = vunpack.c.0.s8 %v1255
    %v1257 = vlaneseq
    %v1258 = vshrl.u32 %v1257, 7
    %v1259 = vsub.s32 %v1256, %v1258
    %v1260 = vrot.slane %v1238, %v1259
    %v1262 = vunpack.c.l.s4 1983009808
    %v1263 = vunpack.c.0.s8 %v1262
    %v1264 = vlaneseq
    %v1265 = vshrl.u32 %v1264, 7
    %v1266 = vsub.s32 %v1263, %v1265
    %v1267 = vrot.slane %v1239, %v1266
    %v1268 = vcombine.low %v1246, %v1260
    %v1269 = vcombine.high %v1246, %v1260
    %v1270 = vcombine.low %v1253, %v1267
    %v1271 = vcombine.high %v1253, %v1267
    %v1272 = vcombine.low %v824, %v825
    %v1273 = vcombine.high %v824, %v825
    %v1274 = vcombine.low %v826, %v827
    %v1275 = vcombine.high %v826, %v827
    %v1277 = vunpack.c.l.s4 1983009808
    %v1278 = vunpack.c.0.s8 %v1277
    %v1279 = vlaneseq
    %v1280 = vshrl.u32 %v1279, 7
    %v1281 = vsub.s32 %v1278, %v1280
    %v1282 = vrot.slane %v1272, %v1281
    %v1284 = vunpack.c.l.s4 1983009808
    %v1285 = vunpack.c.0.s8 %v1284
    %v1286 = vlaneseq
    %v1287 = vshrl.u32 %v1286, 7
    %v1288 = vsub.s32 %v1285, %v1287
    %v1289 = vrot.slane %v1273, %v1288
    %v1291 = vunpack.c.l.s4 1983009808
    %v1292 = vunpack.c.0.s8 %v1291
    %v1293 = vlaneseq
    %v1294 = vshrl.u32 %v1293, 7
    %v1295 = vsub.s32 %v1292, %v1294
    %v1296 = vrot.slane %v1274, %v1295
    %v1298 = vunpack.c.l.s4 1983009808
    %v1299 = vunpack.c.0.s8 %v1298
    %v1300 = vlaneseq
    %v1301 = vshrl.u32 %v1300, 7
    %v1302 = vsub.s32 %v1299, %v1301
    %v1303 = vrot.slane %v1275, %v1302
    %v1304 = vcombine.low %v1282, %v1296
    %v1305 = vcombine.high %v1282, %v1296
    %v1306 = vcombine.low %v1289, %v1303
    %v1307 = vcombine.high %v1289, %v1303
    %v1308 = vcombine.low %v828, %v829
    %v1309 = vcombine.high %v828, %v829
    %v1310 = vcombine.low %v830, %v831
    %v1311 = vcombine.high %v830, %v831
    %v1313 = vunpack.c.l.s4 1983009808
    %v1314 = vunpack.c.0.s8 %v1313
    %v1315 = vlaneseq
    %v1316 = vshrl.u32 %v1315, 7
    %v1317 = vsub.s32 %v1314, %v1316
    %v1318 = vrot.slane %v1308, %v1317
    %v1320 = vunpack.c.l.s4 1983009808
    %v1321 = vunpack.c.0.s8 %v1320
    %v1322 = vlaneseq
    %v1323 = vshrl.u32 %v1322, 7
    %v1324 = vsub.s32 %v1321, %v1323
    %v1325 = vrot.slane %v1309, %v1324
    %v1327 = vunpack.c.l.s4 1983009808
    %v1328 = vunpack.c.0.s8 %v1327
    %v1329 = vlaneseq
    %v1330 = vshrl.u32 %v1329, 7
    %v1331 = vsub.s32 %v1328, %v1330
    %v1332 = vrot.slane %v1310, %v1331
    %v1334 = vunpack.c.l.s4 1983009808
    %v1335 = vunpack.c.0.s8 %v1334
    %v1336 = vlaneseq
    %v1337 = vshrl.u32 %v1336, 7
    %v1338 = vsub.s32 %v1335, %v1337
    %v1339 = vrot.slane %v1311, %v1338
    %v1340 = vcombine.low %v1318, %v1332
    %v1341 = vcombine.high %v1318, %v1332
    %v1342 = vcombine.low %v1325, %v1339
    %v1343 = vcombine.high %v1325, %v1339
    %v1344 = vcombine.low %v832, %v833
    %v1345 = vcombine.high %v832, %v833
    %v1346 = vcombine.low %v834, %v835
    %v1347 = vcombine.high %v834, %v835
    %v1349 = vunpack.c.l.s4 1983009808
    %v1350 = vunpack.c.0.s8 %v1349
    %v1351 = vlaneseq
    %v1352 = vshrl.u32 %v1351, 7
    %v1353 = vsub.s32 %v1350, %v1352
    %v1354 = vrot.slane %v1344, %v1353
    %v1356 = vunpack.c.l.s4 1983009808
    %v1357 = vunpack.c.0.s8 %v1356
    %v1358 = vlaneseq
    %v1359 = vshrl.u32 %v1358, 7
    %v1360 = vsub.s32 %v1357, %v1359
    %v1361 = vrot.slane %v1345, %v1360
    %v1363 = vunpack.c.l.s4 1983009808
    %v1364 = vunpack.c.0.s8 %v1363
    %v1365 = vlaneseq
    %v1366 = vshrl.u32 %v1365, 7
    %v1367 = vsub.s32 %v1364, %v1366
    %v1368 = vrot.slane %v1346, %v1367
    %v1370 = vunpack.c.l.s4 1983009808
    %v1371 = vunpack.c.0.s8 %v1370
    %v1372 = vlaneseq
    %v1373 = vshrl.u32 %v1372, 7
    %v1374 = vsub.s32 %v1371, %v1373
    %v1375 = vrot.slane %v1347, %v1374
    %v1376 = vcombine.low %v1354, %v1368
    %v1377 = vcombine.high %v1354, %v1368
    %v1378 = vcombine.low %v1361, %v1375
    %v1379 = vcombine.high %v1361, %v1375
    %v1380 = vcombine.low %v836, %v837
    %v1381 = vcombine.high %v836, %v837
    %v1382 = vcombine.low %v838, %v839
    %v1383 = vcombine.high %v838, %v839
    %v1385 = vunpack.c.l.s4 1983009808
    %v1386 = vunpack.c.0.s8 %v1385
    %v1387 = vlaneseq
    %v1388 = vshrl.u32 %v1387, 7
    %v1389 = vsub.s32 %v1386, %v1388
    %v1390 = vrot.slane %v1380, %v1389
    %v1392 = vunpack.c.l.s4 1983009808
    %v1393 = vunpack.c.0.s8 %v1392
    %v1394 = vlaneseq
    %v1395 = vshrl.u32 %v1394, 7
    %v1396 = vsub.s32 %v1393, %v1395
    %v1397 = vrot.slane %v1381, %v1396
    %v1399 = vunpack.c.l.s4 1983009808
    %v1400 = vunpack.c.0.s8 %v1399
    %v1401 = vlaneseq
    %v1402 = vshrl.u32 %v1401, 7
    %v1403 = vsub.s32 %v1400, %v1402
    %v1404 = vrot.slane %v1382, %v1403
    %v1406 = vunpack.c.l.s4 1983009808
    %v1407 = vunpack.c.0.s8 %v1406
    %v1408 = vlaneseq
    %v1409 = vshrl.u32 %v1408, 7
    %v1410 = vsub.s32 %v1407, %v1409
    %v1411 = vrot.slane %v1383, %v1410
    %v1412 = vcombine.low %v1390, %v1404
    %v1413 = vcombine.high %v1390, %v1404
    %v1414 = vcombine.low %v1397, %v1411
    %v1415 = vcombine.high %v1397, %v1411
    %v1416 = vcombine.low %v840, %v841
    %v1417 = vcombine.high %v840, %v841
    %v1418 = vcombine.low %v842, %v843
    %v1419 = vcombine.high %v842, %v843
    %v1421 = vunpack.c.l.s4 1983009808
    %v1422 = vunpack.c.0.s8 %v1421
    %v1423 = vlaneseq
    %v1424 = vshrl.u32 %v1423, 7
    %v1425 = vsub.s32 %v1422, %v1424
    %v1426 = vrot.slane %v1416, %v1425
    %v1428 = vunpack.c.l.s4 1983009808
    %v1429 = vunpack.c.0.s8 %v1428
    %v1430 = vlaneseq
    %v1431 = vshrl.u32 %v1430, 7
    %v1432 = vsub.s32 %v1429, %v1431
    %v1433 = vrot.slane %v1417, %v1432
    %v1435 = vunpack.c.l.s4 1983009808
    %v1436 = vunpack.c.0.s8 %v1435
    %v1437 = vlaneseq
    %v1438 = vshrl.u32 %v1437, 7
    %v1439 = vsub.s32 %v1436, %v1438
    %v1440 = vrot.slane %v1418, %v1439
    %v1442 = vunpack.c.l.s4 1983009808
    %v1443 = vunpack.c.0.s8 %v1442
    %v1444 = vlaneseq
    %v1445 = vshrl.u32 %v1444, 7
    %v1446 = vsub.s32 %v1443, %v1445
    %v1447 = vrot.slane %v1419, %v1446
    %v1448 = vcombine.low %v1426, %v1440
    %v1449 = vcombine.high %v1426, %v1440
    %v1450 = vcombine.low %v1433, %v1447
    %v1451 = vcombine.high %v1433, %v1447
    %v1452 = vcombine.low %v844, %v845
    %v1453 = vcombine.high %v844, %v845
    %v1454 = vcombine.low %v846, %v847
    %v1455 = vcombine.high %v846, %v847
    %v1457 = vunpack.c.l.s4 1983009808
    %v1458 = vunpack.c.0.s8 %v1457
    %v1459 = vlaneseq
    %v1460 = vshrl.u32 %v1459, 7
    %v1461 = vsub.s32 %v1458, %v1460
    %v1462 = vrot.slane %v1452, %v1461
    %v1464 = vunpack.c.l.s4 1983009808
    %v1465 = vunpack.c.0.s8 %v1464
    %v1466 = vlaneseq
    %v1467 = vshrl.u32 %v1466, 7
    %v1468 = vsub.s32 %v1465, %v1467
    %v1469 = vrot.slane %v1453, %v1468
    %v1471 = vunpack.c.l.s4 1983009808
    %v1472 = vunpack.c.0.s8 %v1471
    %v1473 = vlaneseq
    %v1474 = vshrl.u32 %v1473, 7
    %v1475 = vsub.s32 %v1472, %v1474
    %v1476 = vrot.slane %v1454, %v1475
    %v1478 = vunpack.c.l.s4 1983009808
    %v1479 = vunpack.c.0.s8 %v1478
    %v1480 = vlaneseq
    %v1481 = vshrl.u32 %v1480, 7
    %v1482 = vsub.s32 %v1479, %v1481
    %v1483 = vrot.slane %v1455, %v1482
    %v1484 = vcombine.low %v1462, %v1476
    %v1485 = vcombine.high %v1462, %v1476
    %v1486 = vcombine.low %v1469, %v1483
    %v1487 = vcombine.high %v1469, %v1483
    %v1552 = vrot.slane %v944, 7
    %v1553 = vrot.slane %v1552, 2
    %v1554 = vrot.slane %v980, 7
    %v1555 = vrot.slane %v1554, 2
    %v1556 = vrot.slane %v945, 7
    %v1557 = vrot.slane %v1556, 2
    %v1558 = vrot.slane %v981, 7
    %v1559 = vrot.slane %v1558, 2
    %v1560 = vrot.slane %v946, 7
    %v1561 = vrot.slane %v1560, 2
    %v1562 = vrot.slane %v982, 7
    %v1563 = vrot.slane %v1562, 2
    %v1564 = vrot.slane %v947, 7
    %v1565 = vrot.slane %v1564, 2
    %v1566 = vrot.slane %v983, 7
    %v1567 = vrot.slane %v1566, 2
    %v1568 = vrot.slane %v1016, 7
    %v1569 = vrot.slane %v1568, 2
    %v1570 = vrot.slane %v1052, 7
    %v1571 = vrot.slane %v1570, 2
    %v1572 = vrot.slane %v1017, 7
    %v1573 = vrot.slane %v1572, 2
    %v1574 = vrot.slane %v1053, 7
    %v1575 = vrot.slane %v1574, 2
    %v1576 = vrot.slane %v1018, 7
    %v1577 = vrot.slane %v1576, 2
    %v1578 = vrot.slane %v1054, 7
    %v1579 = vrot.slane %v1578, 2
    %v1580 = vrot.slane %v1019, 7
    %v1581 = vrot.slane %v1580, 2
    %v1582 = vrot.slane %v1055, 7
    %v1583 = vrot.slane %v1582, 2
    %v1584 = vrot.slane %v1088, 7
    %v1585 = vrot.slane %v1584, 2
    %v1586 = vrot.slane %v1124, 7
    %v1587 = vrot.slane %v1586, 2
    %v1588 = vrot.slane %v1089, 7
    %v1589 = vrot.slane %v1588, 2
    %v1590 = vrot.slane %v1125, 7
    %v1591 = vrot.slane %v1590, 2
    %v1592 = vrot.slane %v1090, 7
    %v1593 = vrot.slane %v1592, 2
    %v1594 = vrot.slane %v1126, 7
    %v1595 = vrot.slane %v1594, 2
    %v1596 = vrot.slane %v1091, 7
    %v1597 = vrot.slane %v1596, 2
    %v1598 = vrot.slane %v1127, 7
    %v1599 = vrot.slane %v1598, 2
    %v1600 = vrot.slane %v1160, 7
    %v1601 = vrot.slane %v1600, 2
    %v1602 = vrot.slane %v1196, 7
    %v1603 = vrot.slane %v1602, 2
    %v1604 = vrot.slane %v1161, 7
    %v1605 = vrot.slane %v1604, 2
    %v1606 = vrot.slane %v1197, 7
    %v1607 = vrot.slane %v1606, 2
    %v1608 = vrot.slane %v1162, 7
    %v1609 = vrot.slane %v1608, 2
    %v1610 = vrot.slane %v1198, 7
    %v1611 = vrot.slane %v1610, 2
    %v1612 = vrot.slane %v1163, 7
    %v1613 = vrot.slane %v1612, 2
    %v1614 = vrot.slane %v1199, 7
    %v1615 = vrot.slane %v1614, 2
    %v1616 = vrot.slane %v1232, 7
    %v1617 = vrot.slane %v1616, 2
    %v1618 = vrot.slane %v1268, 7
    %v1619 = vrot.slane %v1618, 2
    %v1620 = vrot.slane %v1233, 7
    %v1621 = vrot.slane %v1620, 2
    %v1622 = vrot.slane %v1269, 7
    %v1623 = vrot.slane %v1622, 2
    %v1624 = vrot.slane %v1234, 7
    %v1625 = vrot.slane %v1624, 2
    %v1626 = vrot.slane %v1270, 7
    %v1627 = vrot.slane %v1626, 2
    %v1628 = vrot.slane %v1235, 7
    %v1629 = vrot.slane %v1628, 2
    %v1630 = vrot.slane %v1271, 7
    %v1631 = vrot.slane %v1630, 2
    %v1632 = vrot.slane %v1304, 7
    %v1633 = vrot.slane %v1632, 2
    %v1634 = vrot.slane %v1340, 7
    %v1635 = vrot.slane %v1634, 2
    %v1636 = vrot.slane %v1305, 7
    %v1637 = vrot.slane %v1636, 2
    %v1638 = vrot.slane %v1341, 7
    %v1639 = vrot.slane %v1638, 2
    %v1640 = vrot.slane %v1306, 7
    %v1641 = vrot.slane %v1640, 2
    %v1642 = vrot.slane %v1342, 7
    %v1643 = vrot.slane %v1642, 2
    %v1644 = vrot.slane %v1307, 7
    %v1645 = vrot.slane %v1644, 2
    %v1646 = vrot.slane %v1343, 7
    %v1647 = vrot.slane %v1646, 2
    %v1648 = vrot.slane %v1376, 7
    %v1649 = vrot.slane %v1648, 2
    %v1650 = vrot.slane %v1412, 7
    %v1651 = vrot.slane %v1650, 2
    %v1652 = vrot.slane %v1377, 7
    %v1653 = vrot.slane %v1652, 2
    %v1654 = vrot.slane %v1413, 7
    %v1655 = vrot.slane %v1654, 2
    %v1656 = vrot.slane %v1378, 7
    %v1657 = vrot.slane %v1656, 2
    %v1658 = vrot.slane %v1414, 7
    %v1659 = vrot.slane %v1658, 2
    %v1660 = vrot.slane %v1379, 7
    %v1661 = vrot.slane %v1660, 2
    %v1662 = vrot.slane %v1415, 7
    %v1663 = vrot.slane %v1662, 2
    %v1664 = vrot.slane %v1448, 7
    %v1665 = vrot.slane %v1664, 2
    %v1666 = vrot.slane %v1484, 7
    %v1667 = vrot.slane %v1666, 2
    %v1668 = vrot.slane %v1449, 7
    %v1669 = vrot.slane %v1668, 2
    %v1670 = vrot.slane %v1485, 7
    %v1671 = vrot.slane %v1670, 2
    %v1672 = vrot.slane %v1450, 7
    %v1673 = vrot.slane %v1672, 2
    %v1674 = vrot.slane %v1486, 7
    %v1675 = vrot.slane %v1674, 2
    %v1676 = vrot.slane %v1451, 7
    %v1677 = vrot.slane %v1676, 2
    %v1678 = vrot.slane %v1487, 7
    %v1679 = vrot.slane %v1678, 2
    %v1744 = vmax.f32 %v944, %v1553
    %v1745 = vmax.f32 %v980, %v1555
    %v1746 = vmax.f32 %v945, %v1557
    %v1747 = vmax.f32 %v981, %v1559
    %v1748 = vmax.f32 %v946, %v1561
    %v1749 = vmax.f32 %v982, %v1563
    %v1750 = vmax.f32 %v947, %v1565
    %v1751 = vmax.f32 %v983, %v1567
    %v1752 = vmax.f32 %v1016, %v1569
    %v1753 = vmax.f32 %v1052, %v1571
    %v1754 = vmax.f32 %v1017, %v1573
    %v1755 = vmax.f32 %v1053, %v1575
    %v1756 = vmax.f32 %v1018, %v1577
    %v1757 = vmax.f32 %v1054, %v1579
    %v1758 = vmax.f32 %v1019, %v1581
    %v1759 = vmax.f32 %v1055, %v1583
    %v1760 = vmax.f32 %v1088, %v1585
    %v1761 = vmax.f32 %v1124, %v1587
    %v1762 = vmax.f32 %v1089, %v1589
    %v1763 = vmax.f32 %v1125, %v1591
    %v1764 = vmax.f32 %v1090, %v1593
    %v1765 = vmax.f32 %v1126, %v1595
    %v1766 = vmax.f32 %v1091, %v1597
    %v1767 = vmax.f32 %v1127, %v1599
    %v1768 = vmax.f32 %v1160, %v1601
    %v1769 = vmax.f32 %v1196, %v1603
    %v1770 = vmax.f32 %v1161, %v1605
    %v1771 = vmax.f32 %v1197, %v1607
    %v1772 = vmax.f32 %v1162, %v1609
    %v1773 = vmax.f32 %v1198, %v1611
    %v1774 = vmax.f32 %v1163, %v1613
    %v1775 = vmax.f32 %v1199, %v1615
    %v1776 = vmax.f32 %v1232, %v1617
    %v1777 = vmax.f32 %v1268, %v1619
    %v1778 = vmax.f32 %v1233, %v1621
    %v1779 = vmax.f32 %v1269, %v1623
    %v1780 = vmax.f32 %v1234, %v1625
    %v1781 = vmax.f32 %v1270, %v1627
    %v1782 = vmax.f32 %v1235, %v1629
    %v1783 = vmax.f32 %v1271, %v1631
    %v1784 = vmax.f32 %v1304, %v1633
    %v1785 = vmax.f32 %v1340, %v1635
    %v1786 = vmax.f32 %v1305, %v1637
    %v1787 = vmax.f32 %v1341, %v1639
    %v1788 = vmax.f32 %v1306, %v1641
    %v1789 = vmax.f32 %v1342, %v1643
    %v1790 = vmax.f32 %v1307, %v1645
    %v1791 = vmax.f32 %v1343, %v1647
    %v1792 = vmax.f32 %v1376, %v1649
    %v1793 = vmax.f32 %v1412, %v1651
    %v1794 = vmax.f32 %v1377, %v1653
    %v1795 = vmax.f32 %v1413, %v1655
    %v1796 = vmax.f32 %v1378, %v1657
    %v1797 = vmax.f32 %v1414, %v1659
    %v1798 = vmax.f32 %v1379, %v1661
    %v1799 = vmax.f32 %v1415, %v1663
    %v1800 = vmax.f32 %v1448, %v1665
    %v1801 = vmax.f32 %v1484, %v1667
    %v1802 = vmax.f32 %v1449, %v1669
    %v1803 = vmax.f32 %v1485, %v1671
    %v1804 = vmax.f32 %v1450, %v1673
    %v1805 = vmax.f32 %v1486, %v1675
    %v1806 = vmax.f32 %v1451, %v1677
    %v1807 = vmax.f32 %v1487, %v1679
    %v1808 = vmax.f32 %v1744, %v1745
    %v1809 = vmax.f32 %v1746, %v1747
    %v1810 = vmax.f32 %v1748, %v1749
    %v1811 = vmax.f32 %v1750, %v1751
    %v1812 = vmax.f32 %v1752, %v1753
    %v1813 = vmax.f32 %v1754, %v1755
    %v1814 = vmax.f32 %v1756, %v1757
    %v1815 = vmax.f32 %v1758, %v1759
    %v1816 = vmax.f32 %v1760, %v1761
    %v1817 = vmax.f32 %v1762, %v1763
    %v1818 = vmax.f32 %v1764, %v1765
    %v1819 = vmax.f32 %v1766, %v1767
    %v1820 = vmax.f32 %v1768, %v1769
    %v1821 = vmax.f32 %v1770, %v1771
    %v1822 = vmax.f32 %v1772, %v1773
    %v1823 = vmax.f32 %v1774, %v1775
    %v1824 = vmax.f32 %v1776, %v1777
    %v1825 = vmax.f32 %v1778, %v1779
    %v1826 = vmax.f32 %v1780, %v1781
    %v1827 = vmax.f32 %v1782, %v1783
    %v1828 = vmax.f32 %v1784, %v1785
    %v1829 = vmax.f32 %v1786, %v1787
    %v1830 = vmax.f32 %v1788, %v1789
    %v1831 = vmax.f32 %v1790, %v1791
    %v1832 = vmax.f32 %v1792, %v1793
    %v1833 = vmax.f32 %v1794, %v1795
    %v1834 = vmax.f32 %v1796, %v1797
    %v1835 = vmax.f32 %v1798, %v1799
    %v1836 = vmax.f32 %v1800, %v1801
    %v1837 = vmax.f32 %v1802, %v1803
    %v1838 = vmax.f32 %v1804, %v1805
    %v1839 = vmax.f32 %v1806, %v1807
    %vm1840 = vcmask 1040384
    %vm1841 = vsmask.f32 256
    %vm1842 = vmand %vm1840, %vm1841
    %vm1843 = vcmask 1044484
    %vm1844 = vsmask.f32 4352
    %vm1845 = vmand %vm1843, %vm1844
    %vm1846 = vmor %vm1845, %vm1842
    %v1847 = vld [vmem:[#allocation2] sm:$0x11]
    %v1848 = vsel %vm1846, 0, %v1847
    %1849 = vst [vmem:[#allocation2] sm:$0x11] %v1848
    %v1850 = vld [vmem:[#allocation2 + $0x8] sm:$0x11]
    %v1851 = vsel %vm1846, 0, %v1850
    %1852 = vst [vmem:[#allocation2 + $0x8] sm:$0x11] %v1851
    %v1853 = vld [vmem:[#allocation2 + $0x30] sm:$0x11]
    %v1854 = vsel %vm1846, 0, %v1853
    %1855 = vst [vmem:[#allocation2 + $0x30] sm:$0x11] %v1854
    %v1856 = vld [vmem:[#allocation2 + $0x38] sm:$0x11]
    %v1857 = vsel %vm1846, 0, %v1856
    %1858 = vst [vmem:[#allocation2 + $0x38] sm:$0x11] %v1857
    %vm1859 = vsmask.f32 7938
    %vm1860 = vmand %vm1840, %vm1859
    %vm1861 = vsmask.f32 7954
    %vm1862 = vmand %vm1843, %vm1861
    %vm1863 = vmor %vm1862, %vm1860
    %v1864 = vld [vmem:[#allocation2 + $0x20] sm:$0x11]
    %v1865 = vsel %vm1863, 0, %v1864
    %1866 = vst [vmem:[#allocation2 + $0x20] sm:$0x11] %v1865
    %v1867 = vld [vmem:[#allocation2 + $0x28] sm:$0x11]
    %v1868 = vsel %vm1863, 0, %v1867
    %1869 = vst [vmem:[#allocation2 + $0x28] sm:$0x11] %v1868
    %v1870 = vld [vmem:[#allocation2 + $0x50] sm:$0x11]
    %v1871 = vsel %vm1863, 0, %v1870
    %1872 = vst [vmem:[#allocation2 + $0x50] sm:$0x11] %v1871
    %v1873 = vld [vmem:[#allocation2 + $0x58] sm:$0x11]
    %v1874 = vsel %vm1863, 0, %v1873
    %1875 = vst [vmem:[#allocation2 + $0x58] sm:$0x11] %v1874
    %v1908 = vlaneseq
    %v1909 = vshrl.u32 %v1908, 7
    %v1910 = vsub.s32 0, %v1909
    %v1911 = vrot.slane %v1808, %v1910
    %v1912 = vlaneseq
    %v1913 = vshrl.u32 %v1912, 7
    %v1914 = vsub.s32 2, %v1913
    %v1915 = vrot.slane %v1808, %v1914
    %v1916 = vlaneseq
    %v1917 = vshrl.u32 %v1916, 7
    %v1918 = vsub.s32 4, %v1917
    %v1919 = vrot.slane %v1808, %v1918
    %v1920 = vlaneseq
    %v1921 = vshrl.u32 %v1920, 7
    %v1922 = vsub.s32 6, %v1921
    %v1923 = vrot.slane %v1808, %v1922
    %v1924 = vlaneseq
    %v1925 = vshrl.u32 %v1924, 7
    %v1926 = vsub.s32 0, %v1925
    %v1927 = vrot.slane %v1809, %v1926
    %v1928 = vlaneseq
    %v1929 = vshrl.u32 %v1928, 7
    %v1930 = vsub.s32 2, %v1929
    %v1931 = vrot.slane %v1809, %v1930
    %v1932 = vlaneseq
    %v1933 = vshrl.u32 %v1932, 7
    %v1934 = vsub.s32 4, %v1933
    %v1935 = vrot.slane %v1809, %v1934
    %v1936 = vlaneseq
    %v1937 = vshrl.u32 %v1936, 7
    %v1938 = vsub.s32 6, %v1937
    %v1939 = vrot.slane %v1809, %v1938
    %v1940 = vlaneseq
    %v1941 = vshrl.u32 %v1940, 7
    %v1942 = vsub.s32 0, %v1941
    %v1943 = vrot.slane %v1810, %v1942
    %v1944 = vlaneseq
    %v1945 = vshrl.u32 %v1944, 7
    %v1946 = vsub.s32 2, %v1945
    %v1947 = vrot.slane %v1810, %v1946
    %v1948 = vlaneseq
    %v1949 = vshrl.u32 %v1948, 7
    %v1950 = vsub.s32 4, %v1949
    %v1951 = vrot.slane %v1810, %v1950
    %v1952 = vlaneseq
    %v1953 = vshrl.u32 %v1952, 7
    %v1954 = vsub.s32 6, %v1953
    %v1955 = vrot.slane %v1810, %v1954
    %v1956 = vlaneseq
    %v1957 = vshrl.u32 %v1956, 7
    %v1958 = vsub.s32 0, %v1957
    %v1959 = vrot.slane %v1811, %v1958
    %v1960 = vlaneseq
    %v1961 = vshrl.u32 %v1960, 7
    %v1962 = vsub.s32 2, %v1961
    %v1963 = vrot.slane %v1811, %v1962
    %v1964 = vlaneseq
    %v1965 = vshrl.u32 %v1964, 7
    %v1966 = vsub.s32 4, %v1965
    %v1967 = vrot.slane %v1811, %v1966
    %v1968 = vlaneseq
    %v1969 = vshrl.u32 %v1968, 7
    %v1970 = vsub.s32 6, %v1969
    %v1971 = vrot.slane %v1811, %v1970
    %v1972 = vlaneseq
    %v1973 = vshrl.u32 %v1972, 7
    %v1974 = vsub.s32 0, %v1973
    %v1975 = vrot.slane %v1812, %v1974
    %v1976 = vlaneseq
    %v1977 = vshrl.u32 %v1976, 7
    %v1978 = vsub.s32 2, %v1977
    %v1979 = vrot.slane %v1812, %v1978
    %v1980 = vlaneseq
    %v1981 = vshrl.u32 %v1980, 7
    %v1982 = vsub.s32 4, %v1981
    %v1983 = vrot.slane %v1812, %v1982
    %v1984 = vlaneseq
    %v1985 = vshrl.u32 %v1984, 7
    %v1986 = vsub.s32 6, %v1985
    %v1987 = vrot.slane %v1812, %v1986
    %v1988 = vlaneseq
    %v1989 = vshrl.u32 %v1988, 7
    %v1990 = vsub.s32 0, %v1989
    %v1991 = vrot.slane %v1813, %v1990
    %v1992 = vlaneseq
    %v1993 = vshrl.u32 %v1992, 7
    %v1994 = vsub.s32 2, %v1993
    %v1995 = vrot.slane %v1813, %v1994
    %v1996 = vlaneseq
    %v1997 = vshrl.u32 %v1996, 7
    %v1998 = vsub.s32 4, %v1997
    %v1999 = vrot.slane %v1813, %v1998
    %v2000 = vlaneseq
    %v2001 = vshrl.u32 %v2000, 7
    %v2002 = vsub.s32 6, %v2001
    %v2003 = vrot.slane %v1813, %v2002
    %v2004 = vlaneseq
    %v2005 = vshrl.u32 %v2004, 7
    %v2006 = vsub.s32 0, %v2005
    %v2007 = vrot.slane %v1814, %v2006
    %v2008 = vlaneseq
    %v2009 = vshrl.u32 %v2008, 7
    %v2010 = vsub.s32 2, %v2009
    %v2011 = vrot.slane %v1814, %v2010
    %v2012 = vlaneseq
    %v2013 = vshrl.u32 %v2012, 7
    %v2014 = vsub.s32 4, %v2013
    %v2015 = vrot.slane %v1814, %v2014
    %v2016 = vlaneseq
    %v2017 = vshrl.u32 %v2016, 7
    %v2018 = vsub.s32 6, %v2017
    %v2019 = vrot.slane %v1814, %v2018
    %v2020 = vlaneseq
    %v2021 = vshrl.u32 %v2020, 7
    %v2022 = vsub.s32 0, %v2021
    %v2023 = vrot.slane %v1815, %v2022
    %v2024 = vlaneseq
    %v2025 = vshrl.u32 %v2024, 7
    %v2026 = vsub.s32 2, %v2025
    %v2027 = vrot.slane %v1815, %v2026
    %v2028 = vlaneseq
    %v2029 = vshrl.u32 %v2028, 7
    %v2030 = vsub.s32 4, %v2029
    %v2031 = vrot.slane %v1815, %v2030
    %v2032 = vlaneseq
    %v2033 = vshrl.u32 %v2032, 7
    %v2034 = vsub.s32 6, %v2033
    %v2035 = vrot.slane %v1815, %v2034
    %v2036 = vlaneseq
    %v2037 = vshrl.u32 %v2036, 7
    %v2038 = vsub.s32 0, %v2037
    %v2039 = vrot.slane %v1816, %v2038
    %v2040 = vlaneseq
    %v2041 = vshrl.u32 %v2040, 7
    %v2042 = vsub.s32 2, %v2041
    %v2043 = vrot.slane %v1816, %v2042
    %v2044 = vlaneseq
    %v2045 = vshrl.u32 %v2044, 7
    %v2046 = vsub.s32 4, %v2045
    %v2047 = vrot.slane %v1816, %v2046
    %v2048 = vlaneseq
    %v2049 = vshrl.u32 %v2048, 7
    %v2050 = vsub.s32 6, %v2049
    %v2051 = vrot.slane %v1816, %v2050
    %v2052 = vlaneseq
    %v2053 = vshrl.u32 %v2052, 7
    %v2054 = vsub.s32 0, %v2053
    %v2055 = vrot.slane %v1817, %v2054
    %v2056 = vlaneseq
    %v2057 = vshrl.u32 %v2056, 7
    %v2058 = vsub.s32 2, %v2057
    %v2059 = vrot.slane %v1817, %v2058
    %v2060 = vlaneseq
    %v2061 = vshrl.u32 %v2060, 7
    %v2062 = vsub.s32 4, %v2061
    %v2063 = vrot.slane %v1817, %v2062
    %v2064 = vlaneseq
    %v2065 = vshrl.u32 %v2064, 7
    %v2066 = vsub.s32 6, %v2065
    %v2067 = vrot.slane %v1817, %v2066
    %v2068 = vlaneseq
    %v2069 = vshrl.u32 %v2068, 7
    %v2070 = vsub.s32 0, %v2069
    %v2071 = vrot.slane %v1818, %v2070
    %v2072 = vlaneseq
    %v2073 = vshrl.u32 %v2072, 7
    %v2074 = vsub.s32 2, %v2073
    %v2075 = vrot.slane %v1818, %v2074
    %v2076 = vlaneseq
    %v2077 = vshrl.u32 %v2076, 7
    %v2078 = vsub.s32 4, %v2077
    %v2079 = vrot.slane %v1818, %v2078
    %v2080 = vlaneseq
    %v2081 = vshrl.u32 %v2080, 7
    %v2082 = vsub.s32 6, %v2081
    %v2083 = vrot.slane %v1818, %v2082
    %v2084 = vlaneseq
    %v2085 = vshrl.u32 %v2084, 7
    %v2086 = vsub.s32 0, %v2085
    %v2087 = vrot.slane %v1819, %v2086
    %v2088 = vlaneseq
    %v2089 = vshrl.u32 %v2088, 7
    %v2090 = vsub.s32 2, %v2089
    %v2091 = vrot.slane %v1819, %v2090
    %v2092 = vlaneseq
    %v2093 = vshrl.u32 %v2092, 7
    %v2094 = vsub.s32 4, %v2093
    %v2095 = vrot.slane %v1819, %v2094
    %v2096 = vlaneseq
    %v2097 = vshrl.u32 %v2096, 7
    %v2098 = vsub.s32 6, %v2097
    %v2099 = vrot.slane %v1819, %v2098
    %v2100 = vlaneseq
    %v2101 = vshrl.u32 %v2100, 7
    %v2102 = vsub.s32 0, %v2101
    %v2103 = vrot.slane %v1820, %v2102
    %v2104 = vlaneseq
    %v2105 = vshrl.u32 %v2104, 7
    %v2106 = vsub.s32 2, %v2105
    %v2107 = vrot.slane %v1820, %v2106
    %v2108 = vlaneseq
    %v2109 = vshrl.u32 %v2108, 7
    %v2110 = vsub.s32 4, %v2109
    %v2111 = vrot.slane %v1820, %v2110
    %v2112 = vlaneseq
    %v2113 = vshrl.u32 %v2112, 7
    %v2114 = vsub.s32 6, %v2113
    %v2115 = vrot.slane %v1820, %v2114
    %v2116 = vlaneseq
    %v2117 = vshrl.u32 %v2116, 7
    %v2118 = vsub.s32 0, %v2117
    %v2119 = vrot.slane %v1821, %v2118
    %v2120 = vlaneseq
    %v2121 = vshrl.u32 %v2120, 7
    %v2122 = vsub.s32 2, %v2121
    %v2123 = vrot.slane %v1821, %v2122
    %v2124 = vlaneseq
    %v2125 = vshrl.u32 %v2124, 7
    %v2126 = vsub.s32 4, %v2125
    %v2127 = vrot.slane %v1821, %v2126
    %v2128 = vlaneseq
    %v2129 = vshrl.u32 %v2128, 7
    %v2130 = vsub.s32 6, %v2129
    %v2131 = vrot.slane %v1821, %v2130
    %v2132 = vlaneseq
    %v2133 = vshrl.u32 %v2132, 7
    %v2134 = vsub.s32 0, %v2133
    %v2135 = vrot.slane %v1822, %v2134
    %v2136 = vlaneseq
    %v2137 = vshrl.u32 %v2136, 7
    %v2138 = vsub.s32 2, %v2137
    %v2139 = vrot.slane %v1822, %v2138
    %v2140 = vlaneseq
    %v2141 = vshrl.u32 %v2140, 7
    %v2142 = vsub.s32 4, %v2141
    %v2143 = vrot.slane %v1822, %v2142
    %v2144 = vlaneseq
    %v2145 = vshrl.u32 %v2144, 7
    %v2146 = vsub.s32 6, %v2145
    %v2147 = vrot.slane %v1822, %v2146
    %v2148 = vlaneseq
    %v2149 = vshrl.u32 %v2148, 7
    %v2150 = vsub.s32 0, %v2149
    %v2151 = vrot.slane %v1823, %v2150
    %v2152 = vlaneseq
    %v2153 = vshrl.u32 %v2152, 7
    %v2154 = vsub.s32 2, %v2153
    %v2155 = vrot.slane %v1823, %v2154
    %v2156 = vlaneseq
    %v2157 = vshrl.u32 %v2156, 7
    %v2158 = vsub.s32 4, %v2157
    %v2159 = vrot.slane %v1823, %v2158
    %v2160 = vlaneseq
    %v2161 = vshrl.u32 %v2160, 7
    %v2162 = vsub.s32 6, %v2161
    %v2163 = vrot.slane %v1823, %v2162
    %v2164 = vlaneseq
    %v2165 = vshrl.u32 %v2164, 7
    %v2166 = vsub.s32 0, %v2165
    %v2167 = vrot.slane %v1824, %v2166
    %v2168 = vlaneseq
    %v2169 = vshrl.u32 %v2168, 7
    %v2170 = vsub.s32 2, %v2169
    %v2171 = vrot.slane %v1824, %v2170
    %v2172 = vlaneseq
    %v2173 = vshrl.u32 %v2172, 7
    %v2174 = vsub.s32 4, %v2173
    %v2175 = vrot.slane %v1824, %v2174
    %v2176 = vlaneseq
    %v2177 = vshrl.u32 %v2176, 7
    %v2178 = vsub.s32 6, %v2177
    %v2179 = vrot.slane %v1824, %v2178
    %v2180 = vlaneseq
    %v2181 = vshrl.u32 %v2180, 7
    %v2182 = vsub.s32 0, %v2181
    %v2183 = vrot.slane %v1825, %v2182
    %v2184 = vlaneseq
    %v2185 = vshrl.u32 %v2184, 7
    %v2186 = vsub.s32 2, %v2185
    %v2187 = vrot.slane %v1825, %v2186
    %v2188 = vlaneseq
    %v2189 = vshrl.u32 %v2188, 7
    %v2190 = vsub.s32 4, %v2189
    %v2191 = vrot.slane %v1825, %v2190
    %v2192 = vlaneseq
    %v2193 = vshrl.u32 %v2192, 7
    %v2194 = vsub.s32 6, %v2193
    %v2195 = vrot.slane %v1825, %v2194
    %v2196 = vlaneseq
    %v2197 = vshrl.u32 %v2196, 7
    %v2198 = vsub.s32 0, %v2197
    %v2199 = vrot.slane %v1826, %v2198
    %v2200 = vlaneseq
    %v2201 = vshrl.u32 %v2200, 7
    %v2202 = vsub.s32 2, %v2201
    %v2203 = vrot.slane %v1826, %v2202
    %v2204 = vlaneseq
    %v2205 = vshrl.u32 %v2204, 7
    %v2206 = vsub.s32 4, %v2205
    %v2207 = vrot.slane %v1826, %v2206
    %v2208 = vlaneseq
    %v2209 = vshrl.u32 %v2208, 7
    %v2210 = vsub.s32 6, %v2209
    %v2211 = vrot.slane %v1826, %v2210
    %v2212 = vlaneseq
    %v2213 = vshrl.u32 %v2212, 7
    %v2214 = vsub.s32 0, %v2213
    %v2215 = vrot.slane %v1827, %v2214
    %v2216 = vlaneseq
    %v2217 = vshrl.u32 %v2216, 7
    %v2218 = vsub.s32 2, %v2217
    %v2219 = vrot.slane %v1827, %v2218
    %v2220 = vlaneseq
    %v2221 = vshrl.u32 %v2220, 7
    %v2222 = vsub.s32 4, %v2221
    %v2223 = vrot.slane %v1827, %v2222
    %v2224 = vlaneseq
    %v2225 = vshrl.u32 %v2224, 7
    %v2226 = vsub.s32 6, %v2225
    %v2227 = vrot.slane %v1827, %v2226
    %v2228 = vlaneseq
    %v2229 = vshrl.u32 %v2228, 7
    %v2230 = vsub.s32 0, %v2229
    %v2231 = vrot.slane %v1828, %v2230
    %v2232 = vlaneseq
    %v2233 = vshrl.u32 %v2232, 7
    %v2234 = vsub.s32 2, %v2233
    %v2235 = vrot.slane %v1828, %v2234
    %v2236 = vlaneseq
    %v2237 = vshrl.u32 %v2236, 7
    %v2238 = vsub.s32 4, %v2237
    %v2239 = vrot.slane %v1828, %v2238
    %v2240 = vlaneseq
    %v2241 = vshrl.u32 %v2240, 7
    %v2242 = vsub.s32 6, %v2241
    %v2243 = vrot.slane %v1828, %v2242
    %v2244 = vlaneseq
    %v2245 = vshrl.u32 %v2244, 7
    %v2246 = vsub.s32 0, %v2245
    %v2247 = vrot.slane %v1829, %v2246
    %v2248 = vlaneseq
    %v2249 = vshrl.u32 %v2248, 7
    %v2250 = vsub.s32 2, %v2249
    %v2251 = vrot.slane %v1829, %v2250
    %v2252 = vlaneseq
    %v2253 = vshrl.u32 %v2252, 7
    %v2254 = vsub.s32 4, %v2253
    %v2255 = vrot.slane %v1829, %v2254
    %v2256 = vlaneseq
    %v2257 = vshrl.u32 %v2256, 7
    %v2258 = vsub.s32 6, %v2257
    %v2259 = vrot.slane %v1829, %v2258
    %v2260 = vlaneseq
    %v2261 = vshrl.u32 %v2260, 7
    %v2262 = vsub.s32 0, %v2261
    %v2263 = vrot.slane %v1830, %v2262
    %v2264 = vlaneseq
    %v2265 = vshrl.u32 %v2264, 7
    %v2266 = vsub.s32 2, %v2265
    %v2267 = vrot.slane %v1830, %v2266
    %v2268 = vlaneseq
    %v2269 = vshrl.u32 %v2268, 7
    %v2270 = vsub.s32 4, %v2269
    %v2271 = vrot.slane %v1830, %v2270
    %v2272 = vlaneseq
    %v2273 = vshrl.u32 %v2272, 7
    %v2274 = vsub.s32 6, %v2273
    %v2275 = vrot.slane %v1830, %v2274
    %v2276 = vlaneseq
    %v2277 = vshrl.u32 %v2276, 7
    %v2278 = vsub.s32 0, %v2277
    %v2279 = vrot.slane %v1831, %v2278
    %v2280 = vlaneseq
    %v2281 = vshrl.u32 %v2280, 7
    %v2282 = vsub.s32 2, %v2281
    %v2283 = vrot.slane %v1831, %v2282
    %v2284 = vlaneseq
    %v2285 = vshrl.u32 %v2284, 7
    %v2286 = vsub.s32 4, %v2285
    %v2287 = vrot.slane %v1831, %v2286
    %v2288 = vlaneseq
    %v2289 = vshrl.u32 %v2288, 7
    %v2290 = vsub.s32 6, %v2289
    %v2291 = vrot.slane %v1831, %v2290
    %v2292 = vlaneseq
    %v2293 = vshrl.u32 %v2292, 7
    %v2294 = vsub.s32 0, %v2293
    %v2295 = vrot.slane %v1832, %v2294
    %v2296 = vlaneseq
    %v2297 = vshrl.u32 %v2296, 7
    %v2298 = vsub.s32 2, %v2297
    %v2299 = vrot.slane %v1832, %v2298
    %v2300 = vlaneseq
    %v2301 = vshrl.u32 %v2300, 7
    %v2302 = vsub.s32 4, %v2301
    %v2303 = vrot.slane %v1832, %v2302
    %v2304 = vlaneseq
    %v2305 = vshrl.u32 %v2304, 7
    %v2306 = vsub.s32 6, %v2305
    %v2307 = vrot.slane %v1832, %v2306
    %v2308 = vlaneseq
    %v2309 = vshrl.u32 %v2308, 7
    %v2310 = vsub.s32 0, %v2309
    %v2311 = vrot.slane %v1833, %v2310
    %v2312 = vlaneseq
    %v2313 = vshrl.u32 %v2312, 7
    %v2314 = vsub.s32 2, %v2313
    %v2315 = vrot.slane %v1833, %v2314
    %v2316 = vlaneseq
    %v2317 = vshrl.u32 %v2316, 7
    %v2318 = vsub.s32 4, %v2317
    %v2319 = vrot.slane %v1833, %v2318
    %v2320 = vlaneseq
    %v2321 = vshrl.u32 %v2320, 7
    %v2322 = vsub.s32 6, %v2321
    %v2323 = vrot.slane %v1833, %v2322
    %v2324 = vlaneseq
    %v2325 = vshrl.u32 %v2324, 7
    %v2326 = vsub.s32 0, %v2325
    %v2327 = vrot.slane %v1834, %v2326
    %v2328 = vlaneseq
    %v2329 = vshrl.u32 %v2328, 7
    %v2330 = vsub.s32 2, %v2329
    %v2331 = vrot.slane %v1834, %v2330
    %v2332 = vlaneseq
    %v2333 = vshrl.u32 %v2332, 7
    %v2334 = vsub.s32 4, %v2333
    %v2335 = vrot.slane %v1834, %v2334
    %v2336 = vlaneseq
    %v2337 = vshrl.u32 %v2336, 7
    %v2338 = vsub.s32 6, %v2337
    %v2339 = vrot.slane %v1834, %v2338
    %v2340 = vlaneseq
    %v2341 = vshrl.u32 %v2340, 7
    %v2342 = vsub.s32 0, %v2341
    %v2343 = vrot.slane %v1835, %v2342
    %v2344 = vlaneseq
    %v2345 = vshrl.u32 %v2344, 7
    %v2346 = vsub.s32 2, %v2345
    %v2347 = vrot.slane %v1835, %v2346
    %v2348 = vlaneseq
    %v2349 = vshrl.u32 %v2348, 7
    %v2350 = vsub.s32 4, %v2349
    %v2351 = vrot.slane %v1835, %v2350
    %v2352 = vlaneseq
    %v2353 = vshrl.u32 %v2352, 7
    %v2354 = vsub.s32 6, %v2353
    %v2355 = vrot.slane %v1835, %v2354
    %v2356 = vlaneseq
    %v2357 = vshrl.u32 %v2356, 7
    %v2358 = vsub.s32 0, %v2357
    %v2359 = vrot.slane %v1836, %v2358
    %v2360 = vlaneseq
    %v2361 = vshrl.u32 %v2360, 7
    %v2362 = vsub.s32 2, %v2361
    %v2363 = vrot.slane %v1836, %v2362
    %v2364 = vlaneseq
    %v2365 = vshrl.u32 %v2364, 7
    %v2366 = vsub.s32 4, %v2365
    %v2367 = vrot.slane %v1836, %v2366
    %v2368 = vlaneseq
    %v2369 = vshrl.u32 %v2368, 7
    %v2370 = vsub.s32 6, %v2369
    %v2371 = vrot.slane %v1836, %v2370
    %v2372 = vlaneseq
    %v2373 = vshrl.u32 %v2372, 7
    %v2374 = vsub.s32 0, %v2373
    %v2375 = vrot.slane %v1837, %v2374
    %v2376 = vlaneseq
    %v2377 = vshrl.u32 %v2376, 7
    %v2378 = vsub.s32 2, %v2377
    %v2379 = vrot.slane %v1837, %v2378
    %v2380 = vlaneseq
    %v2381 = vshrl.u32 %v2380, 7
    %v2382 = vsub.s32 4, %v2381
    %v2383 = vrot.slane %v1837, %v2382
    %v2384 = vlaneseq
    %v2385 = vshrl.u32 %v2384, 7
    %v2386 = vsub.s32 6, %v2385
    %v2387 = vrot.slane %v1837, %v2386
    %v2388 = vlaneseq
    %v2389 = vshrl.u32 %v2388, 7
    %v2390 = vsub.s32 0, %v2389
    %v2391 = vrot.slane %v1838, %v2390
    %v2392 = vlaneseq
    %v2393 = vshrl.u32 %v2392, 7
    %v2394 = vsub.s32 2, %v2393
    %v2395 = vrot.slane %v1838, %v2394
    %v2396 = vlaneseq
    %v2397 = vshrl.u32 %v2396, 7
    %v2398 = vsub.s32 4, %v2397
    %v2399 = vrot.slane %v1838, %v2398
    %v2400 = vlaneseq
    %v2401 = vshrl.u32 %v2400, 7
    %v2402 = vsub.s32 6, %v2401
    %v2403 = vrot.slane %v1838, %v2402
    %v2404 = vlaneseq
    %v2405 = vshrl.u32 %v2404, 7
    %v2406 = vsub.s32 0, %v2405
    %v2407 = vrot.slane %v1839, %v2406
    %v2408 = vlaneseq
    %v2409 = vshrl.u32 %v2408, 7
    %v2410 = vsub.s32 2, %v2409
    %v2411 = vrot.slane %v1839, %v2410
    %v2412 = vlaneseq
    %v2413 = vshrl.u32 %v2412, 7
    %v2414 = vsub.s32 4, %v2413
    %v2415 = vrot.slane %v1839, %v2414
    %v2416 = vlaneseq
    %v2417 = vshrl.u32 %v2416, 7
    %v2418 = vsub.s32 6, %v2417
    %v2419 = vrot.slane %v1839, %v2418
    %v2548 = vpack.c.bf16 %v1911, %v1911
    %v2549 = vpack.c.bf16 %v1915, %v1915
    %v2550 = vpack.c.bf16 %v1919, %v1919
    %v2551 = vpack.c.bf16 %v1923, %v1923
    %v2552 = vpack.c.bf16 %v1927, %v1927
    %v2553 = vpack.c.bf16 %v1931, %v1931
    %v2554 = vpack.c.bf16 %v1935, %v1935
    %v2555 = vpack.c.bf16 %v1939, %v1939
    %v2556 = vpack.c.bf16 %v1943, %v1943
    %v2557 = vpack.c.bf16 %v1947, %v1947
    %v2558 = vpack.c.bf16 %v1951, %v1951
    %v2559 = vpack.c.bf16 %v1955, %v1955
    %v2560 = vpack.c.bf16 %v1959, %v1959
    %v2561 = vpack.c.bf16 %v1963, %v1963
    %v2562 = vpack.c.bf16 %v1967, %v1967
    %v2563 = vpack.c.bf16 %v1971, %v1971
    %v2564 = vpack.c.bf16 %v1975, %v1975
    %v2565 = vpack.c.bf16 %v1979, %v1979
    %v2566 = vpack.c.bf16 %v1983, %v1983
    %v2567 = vpack.c.bf16 %v1987, %v1987
    %v2568 = vpack.c.bf16 %v1991, %v1991
    %v2569 = vpack.c.bf16 %v1995, %v1995
    %v2570 = vpack.c.bf16 %v1999, %v1999
    %v2571 = vpack.c.bf16 %v2003, %v2003
    %v2572 = vpack.c.bf16 %v2007, %v2007
    %v2573 = vpack.c.bf16 %v2011, %v2011
    %v2574 = vpack.c.bf16 %v2015, %v2015
    %v2575 = vpack.c.bf16 %v2019, %v2019
    %v2576 = vpack.c.bf16 %v2023, %v2023
    %v2577 = vpack.c.bf16 %v2027, %v2027
    %v2578 = vpack.c.bf16 %v2031, %v2031
    %v2579 = vpack.c.bf16 %v2035, %v2035
    %v2580 = vpack.c.bf16 %v2039, %v2039
    %v2581 = vpack.c.bf16 %v2043, %v2043
    %v2582 = vpack.c.bf16 %v2047, %v2047
    %v2583 = vpack.c.bf16 %v2051, %v2051
    %v2584 = vpack.c.bf16 %v2055, %v2055
    %v2585 = vpack.c.bf16 %v2059, %v2059
    %v2586 = vpack.c.bf16 %v2063, %v2063
    %v2587 = vpack.c.bf16 %v2067, %v2067
    %v2588 = vpack.c.bf16 %v2071, %v2071
    %v2589 = vpack.c.bf16 %v2075, %v2075
    %v2590 = vpack.c.bf16 %v2079, %v2079
    %v2591 = vpack.c.bf16 %v2083, %v2083
    %v2592 = vpack.c.bf16 %v2087, %v2087
    %v2593 = vpack.c.bf16 %v2091, %v2091
    %v2594 = vpack.c.bf16 %v2095, %v2095
    %v2595 = vpack.c.bf16 %v2099, %v2099
    %v2596 = vpack.c.bf16 %v2103, %v2103
    %v2597 = vpack.c.bf16 %v2107, %v2107
    %v2598 = vpack.c.bf16 %v2111, %v2111
    %v2599 = vpack.c.bf16 %v2115, %v2115
    %v2600 = vpack.c.bf16 %v2119, %v2119
    %v2601 = vpack.c.bf16 %v2123, %v2123
    %v2602 = vpack.c.bf16 %v2127, %v2127
    %v2603 = vpack.c.bf16 %v2131, %v2131
    %v2604 = vpack.c.bf16 %v2135, %v2135
    %v2605 = vpack.c.bf16 %v2139, %v2139
    %v2606 = vpack.c.bf16 %v2143, %v2143
    %v2607 = vpack.c.bf16 %v2147, %v2147
    %v2608 = vpack.c.bf16 %v2151, %v2151
    %v2609 = vpack.c.bf16 %v2155, %v2155
    %v2610 = vpack.c.bf16 %v2159, %v2159
    %v2611 = vpack.c.bf16 %v2163, %v2163
    %v2612 = vpack.c.bf16 %v2167, %v2167
    %v2613 = vpack.c.bf16 %v2171, %v2171
    %v2614 = vpack.c.bf16 %v2175, %v2175
    %v2615 = vpack.c.bf16 %v2179, %v2179
    %v2616 = vpack.c.bf16 %v2183, %v2183
    %v2617 = vpack.c.bf16 %v2187, %v2187
    %v2618 = vpack.c.bf16 %v2191, %v2191
    %v2619 = vpack.c.bf16 %v2195, %v2195
    %v2620 = vpack.c.bf16 %v2199, %v2199
    %v2621 = vpack.c.bf16 %v2203, %v2203
    %v2622 = vpack.c.bf16 %v2207, %v2207
    %v2623 = vpack.c.bf16 %v2211, %v2211
    %v2624 = vpack.c.bf16 %v2215, %v2215
    %v2625 = vpack.c.bf16 %v2219, %v2219
    %v2626 = vpack.c.bf16 %v2223, %v2223
    %v2627 = vpack.c.bf16 %v2227, %v2227
    %v2628 = vpack.c.bf16 %v2231, %v2231
    %v2629 = vpack.c.bf16 %v2235, %v2235
    %v2630 = vpack.c.bf16 %v2239, %v2239
    %v2631 = vpack.c.bf16 %v2243, %v2243
    %v2632 = vpack.c.bf16 %v2247, %v2247
    %v2633 = vpack.c.bf16 %v2251, %v2251
    %v2634 = vpack.c.bf16 %v2255, %v2255
    %v2635 = vpack.c.bf16 %v2259, %v2259
    %v2636 = vpack.c.bf16 %v2263, %v2263
    %v2637 = vpack.c.bf16 %v2267, %v2267
    %v2638 = vpack.c.bf16 %v2271, %v2271
    %v2639 = vpack.c.bf16 %v2275, %v2275
    %v2640 = vpack.c.bf16 %v2279, %v2279
    %v2641 = vpack.c.bf16 %v2283, %v2283
    %v2642 = vpack.c.bf16 %v2287, %v2287
    %v2643 = vpack.c.bf16 %v2291, %v2291
    %v2644 = vpack.c.bf16 %v2295, %v2295
    %v2645 = vpack.c.bf16 %v2299, %v2299
    %v2646 = vpack.c.bf16 %v2303, %v2303
    %v2647 = vpack.c.bf16 %v2307, %v2307
    %v2648 = vpack.c.bf16 %v2311, %v2311
    %v2649 = vpack.c.bf16 %v2315, %v2315
    %v2650 = vpack.c.bf16 %v2319, %v2319
    %v2651 = vpack.c.bf16 %v2323, %v2323
    %v2652 = vpack.c.bf16 %v2327, %v2327
    %v2653 = vpack.c.bf16 %v2331, %v2331
    %v2654 = vpack.c.bf16 %v2335, %v2335
    %v2655 = vpack.c.bf16 %v2339, %v2339
    %v2656 = vpack.c.bf16 %v2343, %v2343
    %v2657 = vpack.c.bf16 %v2347, %v2347
    %v2658 = vpack.c.bf16 %v2351, %v2351
    %v2659 = vpack.c.bf16 %v2355, %v2355
    %v2660 = vpack.c.bf16 %v2359, %v2359
    %v2661 = vpack.c.bf16 %v2363, %v2363
    %v2662 = vpack.c.bf16 %v2367, %v2367
    %v2663 = vpack.c.bf16 %v2371, %v2371
    %v2664 = vpack.c.bf16 %v2375, %v2375
    %v2665 = vpack.c.bf16 %v2379, %v2379
    %v2666 = vpack.c.bf16 %v2383, %v2383
    %v2667 = vpack.c.bf16 %v2387, %v2387
    %v2668 = vpack.c.bf16 %v2391, %v2391
    %v2669 = vpack.c.bf16 %v2395, %v2395
    %v2670 = vpack.c.bf16 %v2399, %v2399
    %v2671 = vpack.c.bf16 %v2403, %v2403
    %v2672 = vpack.c.bf16 %v2407, %v2407
    %v2673 = vpack.c.bf16 %v2411, %v2411
    %v2674 = vpack.c.bf16 %v2415, %v2415
    %v2675 = vpack.c.bf16 %v2419, %v2419
    %v2804 = vunpack.c.l.b16 %v2548
    %v2805 = vunpack.c.l.b16 %v2549
    %v2806 = vunpack.c.l.b16 %v2550
    %v2807 = vunpack.c.l.b16 %v2551
    %v2808 = vunpack.c.l.b16 %v2552
    %v2809 = vunpack.c.l.b16 %v2553
    %v2810 = vunpack.c.l.b16 %v2554
    %v2811 = vunpack.c.l.b16 %v2555
    %v2812 = vunpack.c.l.b16 %v2556
    %v2813 = vunpack.c.l.b16 %v2557
    %v2814 = vunpack.c.l.b16 %v2558
    %v2815 = vunpack.c.l.b16 %v2559
    %v2816 = vunpack.c.l.b16 %v2560
    %v2817 = vunpack.c.l.b16 %v2561
    %v2818 = vunpack.c.l.b16 %v2562
    %v2819 = vunpack.c.l.b16 %v2563
    %v2820 = vunpack.c.l.b16 %v2564
    %v2821 = vunpack.c.l.b16 %v2565
    %v2822 = vunpack.c.l.b16 %v2566
    %v2823 = vunpack.c.l.b16 %v2567
    %v2824 = vunpack.c.l.b16 %v2568
    %v2825 = vunpack.c.l.b16 %v2569
    %v2826 = vunpack.c.l.b16 %v2570
    %v2827 = vunpack.c.l.b16 %v2571
    %v2828 = vunpack.c.l.b16 %v2572
    %v2829 = vunpack.c.l.b16 %v2573
    %v2830 = vunpack.c.l.b16 %v2574
    %v2831 = vunpack.c.l.b16 %v2575
    %v2832 = vunpack.c.l.b16 %v2576
    %v2833 = vunpack.c.l.b16 %v2577
    %v2834 = vunpack.c.l.b16 %v2578
    %v2835 = vunpack.c.l.b16 %v2579
    %v2836 = vunpack.c.l.b16 %v2580
    %v2837 = vunpack.c.l.b16 %v2581
    %v2838 = vunpack.c.l.b16 %v2582
    %v2839 = vunpack.c.l.b16 %v2583
    %v2840 = vunpack.c.l.b16 %v2584
    %v2841 = vunpack.c.l.b16 %v2585
    %v2842 = vunpack.c.l.b16 %v2586
    %v2843 = vunpack.c.l.b16 %v2587
    %v2844 = vunpack.c.l.b16 %v2588
    %v2845 = vunpack.c.l.b16 %v2589
    %v2846 = vunpack.c.l.b16 %v2590
    %v2847 = vunpack.c.l.b16 %v2591
    %v2848 = vunpack.c.l.b16 %v2592
    %v2849 = vunpack.c.l.b16 %v2593
    %v2850 = vunpack.c.l.b16 %v2594
    %v2851 = vunpack.c.l.b16 %v2595
    %v2852 = vunpack.c.l.b16 %v2596
    %v2853 = vunpack.c.l.b16 %v2597
    %v2854 = vunpack.c.l.b16 %v2598
    %v2855 = vunpack.c.l.b16 %v2599
    %v2856 = vunpack.c.l.b16 %v2600
    %v2857 = vunpack.c.l.b16 %v2601
    %v2858 = vunpack.c.l.b16 %v2602
    %v2859 = vunpack.c.l.b16 %v2603
    %v2860 = vunpack.c.l.b16 %v2604
    %v2861 = vunpack.c.l.b16 %v2605
    %v2862 = vunpack.c.l.b16 %v2606
    %v2863 = vunpack.c.l.b16 %v2607
    %v2864 = vunpack.c.l.b16 %v2608
    %v2865 = vunpack.c.l.b16 %v2609
    %v2866 = vunpack.c.l.b16 %v2610
    %v2867 = vunpack.c.l.b16 %v2611
    %v2868 = vunpack.c.l.b16 %v2612
    %v2869 = vunpack.c.l.b16 %v2613
    %v2870 = vunpack.c.l.b16 %v2614
    %v2871 = vunpack.c.l.b16 %v2615
    %v2872 = vunpack.c.l.b16 %v2616
    %v2873 = vunpack.c.l.b16 %v2617
    %v2874 = vunpack.c.l.b16 %v2618
    %v2875 = vunpack.c.l.b16 %v2619
    %v2876 = vunpack.c.l.b16 %v2620
    %v2877 = vunpack.c.l.b16 %v2621
    %v2878 = vunpack.c.l.b16 %v2622
    %v2879 = vunpack.c.l.b16 %v2623
    %v2880 = vunpack.c.l.b16 %v2624
    %v2881 = vunpack.c.l.b16 %v2625
    %v2882 = vunpack.c.l.b16 %v2626
    %v2883 = vunpack.c.l.b16 %v2627
    %v2884 = vunpack.c.l.b16 %v2628
    %v2885 = vunpack.c.l.b16 %v2629
    %v2886 = vunpack.c.l.b16 %v2630
    %v2887 = vunpack.c.l.b16 %v2631
    %v2888 = vunpack.c.l.b16 %v2632
    %v2889 = vunpack.c.l.b16 %v2633
    %v2890 = vunpack.c.l.b16 %v2634
    %v2891 = vunpack.c.l.b16 %v2635
    %v2892 = vunpack.c.l.b16 %v2636
    %v2893 = vunpack.c.l.b16 %v2637
    %v2894 = vunpack.c.l.b16 %v2638
    %v2895 = vunpack.c.l.b16 %v2639
    %v2896 = vunpack.c.l.b16 %v2640
    %v2897 = vunpack.c.l.b16 %v2641
    %v2898 = vunpack.c.l.b16 %v2642
    %v2899 = vunpack.c.l.b16 %v2643
    %v2900 = vunpack.c.l.b16 %v2644
    %v2901 = vunpack.c.l.b16 %v2645
    %v2902 = vunpack.c.l.b16 %v2646
    %v2903 = vunpack.c.l.b16 %v2647
    %v2904 = vunpack.c.l.b16 %v2648
    %v2905 = vunpack.c.l.b16 %v2649
    %v2906 = vunpack.c.l.b16 %v2650
    %v2907 = vunpack.c.l.b16 %v2651
    %v2908 = vunpack.c.l.b16 %v2652
    %v2909 = vunpack.c.l.b16 %v2653
    %v2910 = vunpack.c.l.b16 %v2654
    %v2911 = vunpack.c.l.b16 %v2655
    %v2912 = vunpack.c.l.b16 %v2656
    %v2913 = vunpack.c.l.b16 %v2657
    %v2914 = vunpack.c.l.b16 %v2658
    %v2915 = vunpack.c.l.b16 %v2659
    %v2916 = vunpack.c.l.b16 %v2660
    %v2917 = vunpack.c.l.b16 %v2661
    %v2918 = vunpack.c.l.b16 %v2662
    %v2919 = vunpack.c.l.b16 %v2663
    %v2920 = vunpack.c.l.b16 %v2664
    %v2921 = vunpack.c.l.b16 %v2665
    %v2922 = vunpack.c.l.b16 %v2666
    %v2923 = vunpack.c.l.b16 %v2667
    %v2924 = vunpack.c.l.b16 %v2668
    %v2925 = vunpack.c.l.b16 %v2669
    %v2926 = vunpack.c.l.b16 %v2670
    %v2927 = vunpack.c.l.b16 %v2671
    %v2928 = vunpack.c.l.b16 %v2672
    %v2929 = vunpack.c.l.b16 %v2673
    %v2930 = vunpack.c.l.b16 %v2674
    %v2931 = vunpack.c.l.b16 %v2675
    %v2932 = vpack.c.b16 %v2805, %v2804
    %v2933 = vpack.c.b16 %v2807, %v2806
    %v2934 = vpack.c.b16 %v2809, %v2808
    %v2935 = vpack.c.b16 %v2811, %v2810
    %v2936 = vpack.c.b16 %v2813, %v2812
    %v2937 = vpack.c.b16 %v2815, %v2814
    %v2938 = vpack.c.b16 %v2817, %v2816
    %v2939 = vpack.c.b16 %v2819, %v2818
    %v2940 = vpack.c.b16 %v2821, %v2820
    %v2941 = vpack.c.b16 %v2823, %v2822
    %v2942 = vpack.c.b16 %v2825, %v2824
    %v2943 = vpack.c.b16 %v2827, %v2826
    %v2944 = vpack.c.b16 %v2829, %v2828
    %v2945 = vpack.c.b16 %v2831, %v2830
    %v2946 = vpack.c.b16 %v2833, %v2832
    %v2947 = vpack.c.b16 %v2835, %v2834
    %v2948 = vpack.c.b16 %v2837, %v2836
    %v2949 = vpack.c.b16 %v2839, %v2838
    %v2950 = vpack.c.b16 %v2841, %v2840
    %v2951 = vpack.c.b16 %v2843, %v2842
    %v2952 = vpack.c.b16 %v2845, %v2844
    %v2953 = vpack.c.b16 %v2847, %v2846
    %v2954 = vpack.c.b16 %v2849, %v2848
    %v2955 = vpack.c.b16 %v2851, %v2850
    %v2956 = vpack.c.b16 %v2853, %v2852
    %v2957 = vpack.c.b16 %v2855, %v2854
    %v2958 = vpack.c.b16 %v2857, %v2856
    %v2959 = vpack.c.b16 %v2859, %v2858
    %v2960 = vpack.c.b16 %v2861, %v2860
    %v2961 = vpack.c.b16 %v2863, %v2862
    %v2962 = vpack.c.b16 %v2865, %v2864
    %v2963 = vpack.c.b16 %v2867, %v2866
    %v2964 = vpack.c.b16 %v2869, %v2868
    %v2965 = vpack.c.b16 %v2871, %v2870
    %v2966 = vpack.c.b16 %v2873, %v2872
    %v2967 = vpack.c.b16 %v2875, %v2874
    %v2968 = vpack.c.b16 %v2877, %v2876
    %v2969 = vpack.c.b16 %v2879, %v2878
    %v2970 = vpack.c.b16 %v2881, %v2880
    %v2971 = vpack.c.b16 %v2883, %v2882
    %v2972 = vpack.c.b16 %v2885, %v2884
    %v2973 = vpack.c.b16 %v2887, %v2886
    %v2974 = vpack.c.b16 %v2889, %v2888
    %v2975 = vpack.c.b16 %v2891, %v2890
    %v2976 = vpack.c.b16 %v2893, %v2892
    %v2977 = vpack.c.b16 %v2895, %v2894
    %v2978 = vpack.c.b16 %v2897, %v2896
    %v2979 = vpack.c.b16 %v2899, %v2898
    %v2980 = vpack.c.b16 %v2901, %v2900
    %v2981 = vpack.c.b16 %v2903, %v2902
    %v2982 = vpack.c.b16 %v2905, %v2904
    %v2983 = vpack.c.b16 %v2907, %v2906
    %v2984 = vpack.c.b16 %v2909, %v2908
    %v2985 = vpack.c.b16 %v2911, %v2910
    %v2986 = vpack.c.b16 %v2913, %v2912
    %v2987 = vpack.c.b16 %v2915, %v2914
    %v2988 = vpack.c.b16 %v2917, %v2916
    %v2989 = vpack.c.b16 %v2919, %v2918
    %v2990 = vpack.c.b16 %v2921, %v2920
    %v2991 = vpack.c.b16 %v2923, %v2922
    %v2992 = vpack.c.b16 %v2925, %v2924
    %v2993 = vpack.c.b16 %v2927, %v2926
    %v2994 = vpack.c.b16 %v2929, %v2928
    %v2995 = vpack.c.b16 %v2931, %v2930
    %v2996 = vunpack.c.l.b16 %v2932
    %v2997 = vunpack.c.h.b16 %v2932
    %v2998 = vunpack.c.l.b16 %v2933
    %v2999 = vunpack.c.h.b16 %v2933
    %v3000 = vunpack.c.l.b16 %v2934
    %v3001 = vunpack.c.h.b16 %v2934
    %v3002 = vunpack.c.l.b16 %v2935
    %v3003 = vunpack.c.h.b16 %v2935
    %v3004 = vunpack.c.l.b16 %v2936
    %v3005 = vunpack.c.h.b16 %v2936
    %v3006 = vunpack.c.l.b16 %v2937
    %v3007 = vunpack.c.h.b16 %v2937
    %v3008 = vunpack.c.l.b16 %v2938
    %v3009 = vunpack.c.h.b16 %v2938
    %v3010 = vunpack.c.l.b16 %v2939
    %v3011 = vunpack.c.h.b16 %v2939
    %v3012 = vunpack.c.l.b16 %v2940
    %v3013 = vunpack.c.h.b16 %v2940
    %v3014 = vunpack.c.l.b16 %v2941
    %v3015 = vunpack.c.h.b16 %v2941
    %v3016 = vunpack.c.l.b16 %v2942
    %v3017 = vunpack.c.h.b16 %v2942
    %v3018 = vunpack.c.l.b16 %v2943
    %v3019 = vunpack.c.h.b16 %v2943
    %v3020 = vunpack.c.l.b16 %v2944
    %v3021 = vunpack.c.h.b16 %v2944
    %v3022 = vunpack.c.l.b16 %v2945
    %v3023 = vunpack.c.h.b16 %v2945
    %v3024 = vunpack.c.l.b16 %v2946
    %v3025 = vunpack.c.h.b16 %v2946
    %v3026 = vunpack.c.l.b16 %v2947
    %v3027 = vunpack.c.h.b16 %v2947
    %v3028 = vunpack.c.l.b16 %v2948
    %v3029 = vunpack.c.h.b16 %v2948
    %v3030 = vunpack.c.l.b16 %v2949
    %v3031 = vunpack.c.h.b16 %v2949
    %v3032 = vunpack.c.l.b16 %v2950
    %v3033 = vunpack.c.h.b16 %v2950
    %v3034 = vunpack.c.l.b16 %v2951
    %v3035 = vunpack.c.h.b16 %v2951
    %v3036 = vunpack.c.l.b16 %v2952
    %v3037 = vunpack.c.h.b16 %v2952
    %v3038 = vunpack.c.l.b16 %v2953
    %v3039 = vunpack.c.h.b16 %v2953
    %v3040 = vunpack.c.l.b16 %v2954
    %v3041 = vunpack.c.h.b16 %v2954
    %v3042 = vunpack.c.l.b16 %v2955
    %v3043 = vunpack.c.h.b16 %v2955
    %v3044 = vunpack.c.l.b16 %v2956
    %v3045 = vunpack.c.h.b16 %v2956
    %v3046 = vunpack.c.l.b16 %v2957
    %v3047 = vunpack.c.h.b16 %v2957
    %v3048 = vunpack.c.l.b16 %v2958
    %v3049 = vunpack.c.h.b16 %v2958
    %v3050 = vunpack.c.l.b16 %v2959
    %v3051 = vunpack.c.h.b16 %v2959
    %v3052 = vunpack.c.l.b16 %v2960
    %v3053 = vunpack.c.h.b16 %v2960
    %v3054 = vunpack.c.l.b16 %v2961
    %v3055 = vunpack.c.h.b16 %v2961
    %v3056 = vunpack.c.l.b16 %v2962
    %v3057 = vunpack.c.h.b16 %v2962
    %v3058 = vunpack.c.l.b16 %v2963
    %v3059 = vunpack.c.h.b16 %v2963
    %v3060 = vunpack.c.l.b16 %v2964
    %v3061 = vunpack.c.h.b16 %v2964
    %v3062 = vunpack.c.l.b16 %v2965
    %v3063 = vunpack.c.h.b16 %v2965
    %v3064 = vunpack.c.l.b16 %v2966
    %v3065 = vunpack.c.h.b16 %v2966
    %v3066 = vunpack.c.l.b16 %v2967
    %v3067 = vunpack.c.h.b16 %v2967
    %v3068 = vunpack.c.l.b16 %v2968
    %v3069 = vunpack.c.h.b16 %v2968
    %v3070 = vunpack.c.l.b16 %v2969
    %v3071 = vunpack.c.h.b16 %v2969
    %v3072 = vunpack.c.l.b16 %v2970
    %v3073 = vunpack.c.h.b16 %v2970
    %v3074 = vunpack.c.l.b16 %v2971
    %v3075 = vunpack.c.h.b16 %v2971
    %v3076 = vunpack.c.l.b16 %v2972
    %v3077 = vunpack.c.h.b16 %v2972
    %v3078 = vunpack.c.l.b16 %v2973
    %v3079 = vunpack.c.h.b16 %v2973
    %v3080 = vunpack.c.l.b16 %v2974
    %v3081 = vunpack.c.h.b16 %v2974
    %v3082 = vunpack.c.l.b16 %v2975
    %v3083 = vunpack.c.h.b16 %v2975
    %v3084 = vunpack.c.l.b16 %v2976
    %v3085 = vunpack.c.h.b16 %v2976
    %v3086 = vunpack.c.l.b16 %v2977
    %v3087 = vunpack.c.h.b16 %v2977
    %v3088 = vunpack.c.l.b16 %v2978
    %v3089 = vunpack.c.h.b16 %v2978
    %v3090 = vunpack.c.l.b16 %v2979
    %v3091 = vunpack.c.h.b16 %v2979
    %v3092 = vunpack.c.l.b16 %v2980
    %v3093 = vunpack.c.h.b16 %v2980
    %v3094 = vunpack.c.l.b16 %v2981
    %v3095 = vunpack.c.h.b16 %v2981
    %v3096 = vunpack.c.l.b16 %v2982
    %v3097 = vunpack.c.h.b16 %v2982
    %v3098 = vunpack.c.l.b16 %v2983
    %v3099 = vunpack.c.h.b16 %v2983
    %v3100 = vunpack.c.l.b16 %v2984
    %v3101 = vunpack.c.h.b16 %v2984
    %v3102 = vunpack.c.l.b16 %v2985
    %v3103 = vunpack.c.h.b16 %v2985
    %v3104 = vunpack.c.l.b16 %v2986
    %v3105 = vunpack.c.h.b16 %v2986
    %v3106 = vunpack.c.l.b16 %v2987
    %v3107 = vunpack.c.h.b16 %v2987
    %v3108 = vunpack.c.l.b16 %v2988
    %v3109 = vunpack.c.h.b16 %v2988
    %v3110 = vunpack.c.l.b16 %v2989
    %v3111 = vunpack.c.h.b16 %v2989
    %v3112 = vunpack.c.l.b16 %v2990
    %v3113 = vunpack.c.h.b16 %v2990
    %v3114 = vunpack.c.l.b16 %v2991
    %v3115 = vunpack.c.h.b16 %v2991
    %v3116 = vunpack.c.l.b16 %v2992
    %v3117 = vunpack.c.h.b16 %v2992
    %v3118 = vunpack.c.l.b16 %v2993
    %v3119 = vunpack.c.h.b16 %v2993
    %v3120 = vunpack.c.l.b16 %v2994
    %v3121 = vunpack.c.h.b16 %v2994
    %v3122 = vunpack.c.l.b16 %v2995
    %v3123 = vunpack.c.h.b16 %v2995
    %v3124 = vrot.slane %v2996, 7
    %v3125 = vrot.slane %v3000, 6
    %vm3126 = vcmask 1042434
    %v3127 = vsel %vm3126, %v3125, %v3124
    %v3128 = vrot.slane %v3004, 5
    %vm3129 = vcmask 1043459
    %v3130 = vsel %vm3129, %v3128, %v3127
    %v3131 = vrot.slane %v3008, 4
    %vm3132 = vcmask 1044484
    %v3133 = vsel %vm3132, %v3131, %v3130
    %v3134 = vrot.slane %v3012, 3
    %vm3135 = vcmask 1045509
    %v3136 = vsel %vm3135, %v3134, %v3133
    %v3137 = vrot.slane %v3016, 2
    %vm3138 = vcmask 1046534
    %v3139 = vsel %vm3138, %v3137, %v3136
    %v3140 = vrot.slane %v3020, 1
    %vm3141 = vcmask 1047559
    %v3142 = vsel %vm3141, %v3140, %v3139
    %v3143 = vrot.slane %v2997, 7
    %v3144 = vrot.slane %v3001, 6
    %v3145 = vsel %vm3126, %v3144, %v3143
    %v3146 = vrot.slane %v3005, 5
    %v3147 = vsel %vm3129, %v3146, %v3145
    %v3148 = vrot.slane %v3009, 4
    %v3149 = vsel %vm3132, %v3148, %v3147
    %v3150 = vrot.slane %v3013, 3
    %v3151 = vsel %vm3135, %v3150, %v3149
    %v3152 = vrot.slane %v3017, 2
    %v3153 = vsel %vm3138, %v3152, %v3151
    %v3154 = vrot.slane %v3021, 1
    %v3155 = vsel %vm3141, %v3154, %v3153
    %v3156 = vrot.slane %v2998, 7
    %v3157 = vrot.slane %v3002, 6
    %v3158 = vsel %vm3126, %v3157, %v3156
    %v3159 = vrot.slane %v3006, 5
    %v3160 = vsel %vm3129, %v3159, %v3158
    %v3161 = vrot.slane %v3010, 4
    %v3162 = vsel %vm3132, %v3161, %v3160
    %v3163 = vrot.slane %v3014, 3
    %v3164 = vsel %vm3135, %v3163, %v3162
    %v3165 = vrot.slane %v3018, 2
    %v3166 = vsel %vm3138, %v3165, %v3164
    %v3167 = vrot.slane %v3022, 1
    %v3168 = vsel %vm3141, %v3167, %v3166
    %v3169 = vrot.slane %v2999, 7
    %v3170 = vrot.slane %v3003, 6
    %v3171 = vsel %vm3126, %v3170, %v3169
    %v3172 = vrot.slane %v3007, 5
    %v3173 = vsel %vm3129, %v3172, %v3171
    %v3174 = vrot.slane %v3011, 4
    %v3175 = vsel %vm3132, %v3174, %v3173
    %v3176 = vrot.slane %v3015, 3
    %v3177 = vsel %vm3135, %v3176, %v3175
    %v3178 = vrot.slane %v3019, 2
    %v3179 = vsel %vm3138, %v3178, %v3177
    %v3180 = vrot.slane %v3023, 1
    %v3181 = vsel %vm3141, %v3180, %v3179
    %v3182 = vrot.slane %v3028, 7
    %vm3183 = vcmask 1041409
    %v3184 = vsel %vm3183, %v3182, %v3024
    %v3185 = vrot.slane %v3032, 6
    %v3186 = vsel %vm3126, %v3185, %v3184
    %v3187 = vrot.slane %v3036, 5
    %v3188 = vsel %vm3129, %v3187, %v3186
    %v3189 = vrot.slane %v3040, 4
    %v3190 = vsel %vm3132, %v3189, %v3188
    %v3191 = vrot.slane %v3044, 3
    %v3192 = vsel %vm3135, %v3191, %v3190
    %v3193 = vrot.slane %v3048, 2
    %v3194 = vsel %vm3138, %v3193, %v3192
    %v3195 = vrot.slane %v3052, 1
    %v3196 = vsel %vm3141, %v3195, %v3194
    %v3197 = vrot.slane %v3029, 7
    %v3198 = vsel %vm3183, %v3197, %v3025
    %v3199 = vrot.slane %v3033, 6
    %v3200 = vsel %vm3126, %v3199, %v3198
    %v3201 = vrot.slane %v3037, 5
    %v3202 = vsel %vm3129, %v3201, %v3200
    %v3203 = vrot.slane %v3041, 4
    %v3204 = vsel %vm3132, %v3203, %v3202
    %v3205 = vrot.slane %v3045, 3
    %v3206 = vsel %vm3135, %v3205, %v3204
    %v3207 = vrot.slane %v3049, 2
    %v3208 = vsel %vm3138, %v3207, %v3206
    %v3209 = vrot.slane %v3053, 1
    %v3210 = vsel %vm3141, %v3209, %v3208
    %v3211 = vrot.slane %v3030, 7
    %v3212 = vsel %vm3183, %v3211, %v3026
    %v3213 = vrot.slane %v3034, 6
    %v3214 = vsel %vm3126, %v3213, %v3212
    %v3215 = vrot.slane %v3038, 5
    %v3216 = vsel %vm3129, %v3215, %v3214
    %v3217 = vrot.slane %v3042, 4
    %v3218 = vsel %vm3132, %v3217, %v3216
    %v3219 = vrot.slane %v3046, 3
    %v3220 = vsel %vm3135, %v3219, %v3218
    %v3221 = vrot.slane %v3050, 2
    %v3222 = vsel %vm3138, %v3221, %v3220
    %v3223 = vrot.slane %v3054, 1
    %v3224 = vsel %vm3141, %v3223, %v3222
    %v3225 = vrot.slane %v3031, 7
    %v3226 = vsel %vm3183, %v3225, %v3027
    %v3227 = vrot.slane %v3035, 6
    %v3228 = vsel %vm3126, %v3227, %v3226
    %v3229 = vrot.slane %v3039, 5
    %v3230 = vsel %vm3129, %v3229, %v3228
    %v3231 = vrot.slane %v3043, 4
    %v3232 = vsel %vm3132, %v3231, %v3230
    %v3233 = vrot.slane %v3047, 3
    %v3234 = vsel %vm3135, %v3233, %v3232
    %v3235 = vrot.slane %v3051, 2
    %v3236 = vsel %vm3138, %v3235, %v3234
    %v3237 = vrot.slane %v3055, 1
    %v3238 = vsel %vm3141, %v3237, %v3236
    %v3239 = vrot.slane %v3060, 7
    %v3240 = vrot.slane %v3064, 6
    %v3241 = vsel %vm3126, %v3240, %v3239
    %v3242 = vrot.slane %v3068, 5
    %v3243 = vsel %vm3129, %v3242, %v3241
    %v3244 = vrot.slane %v3072, 4
    %v3245 = vsel %vm3132, %v3244, %v3243
    %v3246 = vrot.slane %v3076, 3
    %v3247 = vsel %vm3135, %v3246, %v3245
    %v3248 = vrot.slane %v3080, 2
    %v3249 = vsel %vm3138, %v3248, %v3247
    %v3250 = vrot.slane %v3084, 1
    %v3251 = vsel %vm3141, %v3250, %v3249
    %v3252 = vrot.slane %v3061, 7
    %v3253 = vrot.slane %v3065, 6
    %v3254 = vsel %vm3126, %v3253, %v3252
    %v3255 = vrot.slane %v3069, 5
    %v3256 = vsel %vm3129, %v3255, %v3254
    %v3257 = vrot.slane %v3073, 4
    %v3258 = vsel %vm3132, %v3257, %v3256
    %v3259 = vrot.slane %v3077, 3
    %v3260 = vsel %vm3135, %v3259, %v3258
    %v3261 = vrot.slane %v3081, 2
    %v3262 = vsel %vm3138, %v3261, %v3260
    %v3263 = vrot.slane %v3085, 1
    %v3264 = vsel %vm3141, %v3263, %v3262
    %v3265 = vrot.slane %v3062, 7
    %v3266 = vrot.slane %v3066, 6
    %v3267 = vsel %vm3126, %v3266, %v3265
    %v3268 = vrot.slane %v3070, 5
    %v3269 = vsel %vm3129, %v3268, %v3267
    %v3270 = vrot.slane %v3074, 4
    %v3271 = vsel %vm3132, %v3270, %v3269
    %v3272 = vrot.slane %v3078, 3
    %v3273 = vsel %vm3135, %v3272, %v3271
    %v3274 = vrot.slane %v3082, 2
    %v3275 = vsel %vm3138, %v3274, %v3273
    %v3276 = vrot.slane %v3086, 1
    %v3277 = vsel %vm3141, %v3276, %v3275
    %v3278 = vrot.slane %v3063, 7
    %v3279 = vrot.slane %v3067, 6
    %v3280 = vsel %vm3126, %v3279, %v3278
    %v3281 = vrot.slane %v3071, 5
    %v3282 = vsel %vm3129, %v3281, %v3280
    %v3283 = vrot.slane %v3075, 4
    %v3284 = vsel %vm3132, %v3283, %v3282
    %v3285 = vrot.slane %v3079, 3
    %v3286 = vsel %vm3135, %v3285, %v3284
    %v3287 = vrot.slane %v3083, 2
    %v3288 = vsel %vm3138, %v3287, %v3286
    %v3289 = vrot.slane %v3087, 1
    %v3290 = vsel %vm3141, %v3289, %v3288
    %v3291 = vrot.slane %v3092, 7
    %v3292 = vsel %vm3183, %v3291, %v3088
    %v3293 = vrot.slane %v3096, 6
    %v3294 = vsel %vm3126, %v3293, %v3292
    %v3295 = vrot.slane %v3100, 5
    %v3296 = vsel %vm3129, %v3295, %v3294
    %v3297 = vrot.slane %v3104, 4
    %v3298 = vsel %vm3132, %v3297, %v3296
    %v3299 = vrot.slane %v3108, 3
    %v3300 = vsel %vm3135, %v3299, %v3298
    %v3301 = vrot.slane %v3112, 2
    %v3302 = vsel %vm3138, %v3301, %v3300
    %v3303 = vrot.slane %v3116, 1
    %v3304 = vsel %vm3141, %v3303, %v3302
    %v3305 = vrot.slane %v3093, 7
    %v3306 = vsel %vm3183, %v3305, %v3089
    %v3307 = vrot.slane %v3097, 6
    %v3308 = vsel %vm3126, %v3307, %v3306
    %v3309 = vrot.slane %v3101, 5
    %v3310 = vsel %vm3129, %v3309, %v3308
    %v3311 = vrot.slane %v3105, 4
    %v3312 = vsel %vm3132, %v3311, %v3310
    %v3313 = vrot.slane %v3109, 3
    %v3314 = vsel %vm3135, %v3313, %v3312
    %v3315 = vrot.slane %v3113, 2
    %v3316 = vsel %vm3138, %v3315, %v3314
    %v3317 = vrot.slane %v3117, 1
    %v3318 = vsel %vm3141, %v3317, %v3316
    %v3319 = vrot.slane %v3094, 7
    %v3320 = vsel %vm3183, %v3319, %v3090
    %v3321 = vrot.slane %v3098, 6
    %v3322 = vsel %vm3126, %v3321, %v3320
    %v3323 = vrot.slane %v3102, 5
    %v3324 = vsel %vm3129, %v3323, %v3322
    %v3325 = vrot.slane %v3106, 4
    %v3326 = vsel %vm3132, %v3325, %v3324
    %v3327 = vrot.slane %v3110, 3
    %v3328 = vsel %vm3135, %v3327, %v3326
    %v3329 = vrot.slane %v3114, 2
    %v3330 = vsel %vm3138, %v3329, %v3328
    %v3331 = vrot.slane %v3118, 1
    %v3332 = vsel %vm3141, %v3331, %v3330
    %v3333 = vrot.slane %v3095, 7
    %v3334 = vsel %vm3183, %v3333, %v3091
    %v3335 = vrot.slane %v3099, 6
    %v3336 = vsel %vm3126, %v3335, %v3334
    %v3337 = vrot.slane %v3103, 5
    %v3338 = vsel %vm3129, %v3337, %v3336
    %v3339 = vrot.slane %v3107, 4
    %v3340 = vsel %vm3132, %v3339, %v3338
    %v3341 = vrot.slane %v3111, 3
    %v3342 = vsel %vm3135, %v3341, %v3340
    %v3343 = vrot.slane %v3115, 2
    %v3344 = vsel %vm3138, %v3343, %v3342
    %v3345 = vrot.slane %v3119, 1
    %v3346 = vsel %vm3141, %v3345, %v3344
    %v3347 = vpack.c.b16 %v3155, %v3142
    %v3348 = vpack.c.b16 %v3181, %v3168
    %v3349 = vpack.c.b16 %v3210, %v3196
    %v3350 = vpack.c.b16 %v3238, %v3224
    %v3351 = vpack.c.b16 %v3057, %v3056
    %v3352 = vpack.c.b16 %v3059, %v3058
    %v3353 = vpack.c.b16 %v3264, %v3251
    %v3354 = vpack.c.b16 %v3290, %v3277
    %v3355 = vpack.c.b16 %v3318, %v3304
    %v3356 = vpack.c.b16 %v3346, %v3332
    %v3357 = vpack.c.b16 %v3121, %v3120
    %v3358 = vpack.c.b16 %v3123, %v3122
    %vm3371 = vcmask 1043456
    %vm3372 = vmand %vm3371, %vm1859
    %vm3373 = vcmask 1047556
    %vm3374 = vmand %vm3373, %vm1861
    %vm3375 = vmor %vm3374, %vm3372
    %v3376 = vld [vmem:[#allocation2] sm:$0xff]
    %v3377 = vsel %vm3375, %v3347, %v3376
    %3378 = vst [vmem:[#allocation2] sm:$0xff] %v3377
    %v3379 = vld [vmem:[#allocation2 + $0x8] sm:$0xff]
    %v3380 = vsel %vm3375, %v3348, %v3379
    %3381 = vst [vmem:[#allocation2 + $0x8] sm:$0xff] %v3380
    %3382 = vst [vmem:[#allocation2 + $0x10] sm:$0xff] %v3349
    %3383 = vst [vmem:[#allocation2 + $0x18] sm:$0xff] %v3350
    %v3384 = vld [vmem:[#allocation2 + $0x20] sm:$0x11]
    %v3385 = vsel %vm1846, %v3351, %v3384
    %3386 = vst [vmem:[#allocation2 + $0x20] sm:$0x11] %v3385
    %v3387 = vld [vmem:[#allocation2 + $0x28] sm:$0x11]
    %v3388 = vsel %vm1846, %v3352, %v3387
    %3389 = vst [vmem:[#allocation2 + $0x28] sm:$0x11] %v3388
    %v3390 = vld [vmem:[#allocation2 + $0x30] sm:$0xff]
    %v3391 = vsel %vm3375, %v3353, %v3390
    %3392 = vst [vmem:[#allocation2 + $0x30] sm:$0xff] %v3391
    %v3393 = vld [vmem:[#allocation2 + $0x38] sm:$0xff]
    %v3394 = vsel %vm3375, %v3354, %v3393
    %3395 = vst [vmem:[#allocation2 + $0x38] sm:$0xff] %v3394
    %3396 = vst [vmem:[#allocation2 + $0x40] sm:$0xff] %v3355
    %3397 = vst [vmem:[#allocation2 + $0x48] sm:$0xff] %v3356
    %v3398 = vld [vmem:[#allocation2 + $0x50] sm:$0x11]
    %v3399 = vsel %vm1846, %v3357, %v3398
    %3400 = vst [vmem:[#allocation2 + $0x50] sm:$0x11] %v3399
    %v3401 = vld [vmem:[#allocation2 + $0x58] sm:$0x11]
    %v3402 = vsel %vm1846, %v3358, %v3401
    %3403 = vst [vmem:[#allocation2 + $0x58] sm:$0x11] %v3402
    %v3404 = vld [vmem:[#allocation2] sm:$0xff]
    %v3405 = vld [vmem:[#allocation2 + $0x8] sm:$0xff]
    %v3406 = vld [vmem:[#allocation2 + $0x10] sm:$0xff]
    %v3407 = vld [vmem:[#allocation2 + $0x18] sm:$0xff]
    %v3408 = vld [vmem:[#allocation2 + $0x30] sm:$0xff]
    %v3409 = vld [vmem:[#allocation2 + $0x38] sm:$0xff]
    %v3410 = vld [vmem:[#allocation2 + $0x40] sm:$0xff]
    %v3411 = vld [vmem:[#allocation2 + $0x48] sm:$0xff]
    %v3412 = vld [vmem:[#allocation8] sm:$0xff]
    %v3413 = vld [vmem:[#allocation8 + $0x8] sm:$0xff]
    %v3414 = vld [vmem:[#allocation8 + $0x10] sm:$0xff]
    %v3415 = vld [vmem:[#allocation8 + $0x18] sm:$0xff]
    %v3416 = vld [vmem:[#allocation8 + $0x20] sm:$0xff]
    %v3417 = vld [vmem:[#allocation8 + $0x28] sm:$0xff]
    %v3418 = vld [vmem:[#allocation8 + $0x30] sm:$0xff]
    %v3419 = vld [vmem:[#allocation8 + $0x38] sm:$0xff]
    %v3420 = vld [vmem:[#allocation8 + $0x40] sm:$0xff]
    %v3421 = vld [vmem:[#allocation8 + $0x48] sm:$0xff]
    %v3422 = vld [vmem:[#allocation8 + $0x50] sm:$0xff]
    %v3423 = vld [vmem:[#allocation8 + $0x58] sm:$0xff]
    %v3424 = vld [vmem:[#allocation8 + $0x60] sm:$0xff]
    %v3425 = vld [vmem:[#allocation8 + $0x68] sm:$0xff]
    %v3426 = vld [vmem:[#allocation8 + $0x70] sm:$0xff]
    %v3427 = vld [vmem:[#allocation8 + $0x78] sm:$0xff]
    %v3428 = vld [vmem:[#allocation8 + $0x80] sm:$0xff]
    %v3429 = vld [vmem:[#allocation8 + $0x88] sm:$0xff]
    %v3430 = vld [vmem:[#allocation8 + $0x90] sm:$0xff]
    %v3431 = vld [vmem:[#allocation8 + $0x98] sm:$0xff]
    %v3432 = vld [vmem:[#allocation8 + $0xa0] sm:$0xff]
    %v3433 = vld [vmem:[#allocation8 + $0xa8] sm:$0xff]
    %v3434 = vld [vmem:[#allocation8 + $0xb0] sm:$0xff]
    %v3435 = vld [vmem:[#allocation8 + $0xb8] sm:$0xff]
    %v3436 = vld [vmem:[#allocation8 + $0xc0] sm:$0xff]
    %v3437 = vld [vmem:[#allocation8 + $0xc8] sm:$0xff]
    %v3438 = vld [vmem:[#allocation8 + $0xd0] sm:$0xff]
    %v3439 = vld [vmem:[#allocation8 + $0xd8] sm:$0xff]
    %v3440 = vld [vmem:[#allocation8 + $0xe0] sm:$0xff]
    %v3441 = vld [vmem:[#allocation8 + $0xe8] sm:$0xff]
    %v3442 = vld [vmem:[#allocation8 + $0xf0] sm:$0xff]
    %v3443 = vld [vmem:[#allocation8 + $0xf8] sm:$0xff]
    %v3444 = vld [vmem:[#allocation8 + $0x100] sm:$0xff]
    %v3445 = vld [vmem:[#allocation8 + $0x108] sm:$0xff]
    %v3446 = vld [vmem:[#allocation8 + $0x110] sm:$0xff]
    %v3447 = vld [vmem:[#allocation8 + $0x118] sm:$0xff]
    %v3448 = vld [vmem:[#allocation8 + $0x120] sm:$0xff]
    %v3449 = vld [vmem:[#allocation8 + $0x128] sm:$0xff]
    %v3450 = vld [vmem:[#allocation8 + $0x130] sm:$0xff]
    %v3451 = vld [vmem:[#allocation8 + $0x138] sm:$0xff]
    %v3452 = vld [vmem:[#allocation8 + $0x140] sm:$0xff]
    %v3453 = vld [vmem:[#allocation8 + $0x148] sm:$0xff]
    %v3454 = vld [vmem:[#allocation8 + $0x150] sm:$0xff]
    %v3455 = vld [vmem:[#allocation8 + $0x158] sm:$0xff]
    %v3456 = vld [vmem:[#allocation8 + $0x160] sm:$0xff]
    %v3457 = vld [vmem:[#allocation8 + $0x168] sm:$0xff]
    %v3458 = vld [vmem:[#allocation8 + $0x170] sm:$0xff]
    %v3459 = vld [vmem:[#allocation8 + $0x178] sm:$0xff]
    %v3460 = vld [vmem:[#allocation8 + $0x180] sm:$0xff]
    %v3461 = vld [vmem:[#allocation8 + $0x188] sm:$0xff]
    %v3462 = vld [vmem:[#allocation8 + $0x190] sm:$0xff]
    %v3463 = vld [vmem:[#allocation8 + $0x198] sm:$0xff]
    %v3464 = vld [vmem:[#allocation8 + $0x1a0] sm:$0xff]
    %v3465 = vld [vmem:[#allocation8 + $0x1a8] sm:$0xff]
    %v3466 = vld [vmem:[#allocation8 + $0x1b0] sm:$0xff]
    %v3467 = vld [vmem:[#allocation8 + $0x1b8] sm:$0xff]
    %v3468 = vld [vmem:[#allocation8 + $0x1c0] sm:$0xff]
    %v3469 = vld [vmem:[#allocation8 + $0x1c8] sm:$0xff]
    %v3470 = vld [vmem:[#allocation8 + $0x1d0] sm:$0xff]
    %v3471 = vld [vmem:[#allocation8 + $0x1d8] sm:$0xff]
    %v3472 = vld [vmem:[#allocation8 + $0x1e0] sm:$0xff]
    %v3473 = vld [vmem:[#allocation8 + $0x1e8] sm:$0xff]
    %v3474 = vld [vmem:[#allocation8 + $0x1f0] sm:$0xff]
    %v3475 = vld [vmem:[#allocation8 + $0x1f8] sm:$0xff]
    %v3476 = vld [vmem:[#allocation8 + $0x200] sm:$0xff]
    %v3477 = vld [vmem:[#allocation8 + $0x208] sm:$0xff]
    %v3478 = vld [vmem:[#allocation8 + $0x210] sm:$0xff]
    %v3479 = vld [vmem:[#allocation8 + $0x218] sm:$0xff]
    %v3480 = vld [vmem:[#allocation8 + $0x220] sm:$0xff]
    %v3481 = vld [vmem:[#allocation8 + $0x228] sm:$0xff]
    %v3482 = vld [vmem:[#allocation8 + $0x230] sm:$0xff]
    %v3483 = vld [vmem:[#allocation8 + $0x238] sm:$0xff]
    %v3484 = vld [vmem:[#allocation8 + $0x240] sm:$0xff]
    %v3485 = vld [vmem:[#allocation8 + $0x248] sm:$0xff]
    %v3486 = vld [vmem:[#allocation8 + $0x250] sm:$0xff]
    %v3487 = vld [vmem:[#allocation8 + $0x258] sm:$0xff]
    %v3488 = vld [vmem:[#allocation8 + $0x260] sm:$0xff]
    %v3489 = vld [vmem:[#allocation8 + $0x268] sm:$0xff]
    %v3490 = vld [vmem:[#allocation8 + $0x270] sm:$0xff]
    %v3491 = vld [vmem:[#allocation8 + $0x278] sm:$0xff]
    %v3492 = vld [vmem:[#allocation8 + $0x280] sm:$0xff]
    %v3493 = vld [vmem:[#allocation8 + $0x288] sm:$0xff]
    %v3494 = vld [vmem:[#allocation8 + $0x290] sm:$0xff]
    %v3495 = vld [vmem:[#allocation8 + $0x298] sm:$0xff]
    %v3496 = vld [vmem:[#allocation8 + $0x2a0] sm:$0xff]
    %v3497 = vld [vmem:[#allocation8 + $0x2a8] sm:$0xff]
    %v3498 = vld [vmem:[#allocation8 + $0x2b0] sm:$0xff]
    %v3499 = vld [vmem:[#allocation8 + $0x2b8] sm:$0xff]
    %v3500 = vld [vmem:[#allocation8 + $0x2c0] sm:$0xff]
    %v3501 = vld [vmem:[#allocation8 + $0x2c8] sm:$0xff]
    %v3502 = vld [vmem:[#allocation8 + $0x2d0] sm:$0xff]
    %v3503 = vld [vmem:[#allocation8 + $0x2d8] sm:$0xff]
    %v3504 = vld [vmem:[#allocation8 + $0x2e0] sm:$0xff]
    %v3505 = vld [vmem:[#allocation8 + $0x2e8] sm:$0xff]
    %v3506 = vld [vmem:[#allocation8 + $0x2f0] sm:$0xff]
    %v3507 = vld [vmem:[#allocation8 + $0x2f8] sm:$0xff]
    %v3508 = vld [vmem:[#allocation8 + $0x300] sm:$0xff]
    %v3509 = vld [vmem:[#allocation8 + $0x308] sm:$0xff]
    %v3510 = vld [vmem:[#allocation8 + $0x310] sm:$0xff]
    %v3511 = vld [vmem:[#allocation8 + $0x318] sm:$0xff]
    %v3512 = vld [vmem:[#allocation8 + $0x320] sm:$0xff]
    %v3513 = vld [vmem:[#allocation8 + $0x328] sm:$0xff]
    %v3514 = vld [vmem:[#allocation8 + $0x330] sm:$0xff]
    %v3515 = vld [vmem:[#allocation8 + $0x338] sm:$0xff]
    %v3516 = vld [vmem:[#allocation8 + $0x340] sm:$0xff]
    %v3517 = vld [vmem:[#allocation8 + $0x348] sm:$0xff]
    %v3518 = vld [vmem:[#allocation8 + $0x350] sm:$0xff]
    %v3519 = vld [vmem:[#allocation8 + $0x358] sm:$0xff]
    %v3520 = vld [vmem:[#allocation8 + $0x360] sm:$0xff]
    %v3521 = vld [vmem:[#allocation8 + $0x368] sm:$0xff]
    %v3522 = vld [vmem:[#allocation8 + $0x370] sm:$0xff]
    %v3523 = vld [vmem:[#allocation8 + $0x378] sm:$0xff]
    %v3524 = vld [vmem:[#allocation8 + $0x380] sm:$0xff]
    %v3525 = vld [vmem:[#allocation8 + $0x388] sm:$0xff]
    %v3526 = vld [vmem:[#allocation8 + $0x390] sm:$0xff]
    %v3527 = vld [vmem:[#allocation8 + $0x398] sm:$0xff]
    %v3528 = vld [vmem:[#allocation8 + $0x3a0] sm:$0xff]
    %v3529 = vld [vmem:[#allocation8 + $0x3a8] sm:$0xff]
    %v3530 = vld [vmem:[#allocation8 + $0x3b0] sm:$0xff]
    %v3531 = vld [vmem:[#allocation8 + $0x3b8] sm:$0xff]
    %v3532 = vld [vmem:[#allocation8 + $0x3c0] sm:$0xff]
    %v3533 = vld [vmem:[#allocation8 + $0x3c8] sm:$0xff]
    %v3534 = vld [vmem:[#allocation8 + $0x3d0] sm:$0xff]
    %v3535 = vld [vmem:[#allocation8 + $0x3d8] sm:$0xff]
    %v3536 = vld [vmem:[#allocation8 + $0x3e0] sm:$0xff]
    %v3537 = vld [vmem:[#allocation8 + $0x3e8] sm:$0xff]
    %v3538 = vld [vmem:[#allocation8 + $0x3f0] sm:$0xff]
    %v3539 = vld [vmem:[#allocation8 + $0x3f8] sm:$0xff]
    %v3540 = vld [vmem:[#allocation8 + $0x400] sm:$0xff]
    %v3541 = vld [vmem:[#allocation8 + $0x408] sm:$0xff]
    %v3542 = vld [vmem:[#allocation8 + $0x410] sm:$0xff]
    %v3543 = vld [vmem:[#allocation8 + $0x418] sm:$0xff]
    %v3544 = vld [vmem:[#allocation8 + $0x420] sm:$0xff]
    %v3545 = vld [vmem:[#allocation8 + $0x428] sm:$0xff]
    %v3546 = vld [vmem:[#allocation8 + $0x430] sm:$0xff]
    %v3547 = vld [vmem:[#allocation8 + $0x438] sm:$0xff]
    %v3548 = vld [vmem:[#allocation8 + $0x440] sm:$0xff]
    %v3549 = vld [vmem:[#allocation8 + $0x448] sm:$0xff]
    %v3550 = vld [vmem:[#allocation8 + $0x450] sm:$0xff]
    %v3551 = vld [vmem:[#allocation8 + $0x458] sm:$0xff]
    %v3552 = vld [vmem:[#allocation8 + $0x460] sm:$0xff]
    %v3553 = vld [vmem:[#allocation8 + $0x468] sm:$0xff]
    %v3554 = vld [vmem:[#allocation8 + $0x470] sm:$0xff]
    %v3555 = vld [vmem:[#allocation8 + $0x478] sm:$0xff]
    %v3556 = vld [vmem:[#allocation8 + $0x480] sm:$0xff]
    %v3557 = vld [vmem:[#allocation8 + $0x488] sm:$0xff]
    %v3558 = vld [vmem:[#allocation8 + $0x490] sm:$0xff]
    %v3559 = vld [vmem:[#allocation8 + $0x498] sm:$0xff]
    %v3560 = vld [vmem:[#allocation8 + $0x4a0] sm:$0xff]
    %v3561 = vld [vmem:[#allocation8 + $0x4a8] sm:$0xff]
    %v3562 = vld [vmem:[#allocation8 + $0x4b0] sm:$0xff]
    %v3563 = vld [vmem:[#allocation8 + $0x4b8] sm:$0xff]
    %v3564 = vld [vmem:[#allocation8 + $0x4c0] sm:$0xff]
    %v3565 = vld [vmem:[#allocation8 + $0x4c8] sm:$0xff]
    %v3566 = vld [vmem:[#allocation8 + $0x4d0] sm:$0xff]
    %v3567 = vld [vmem:[#allocation8 + $0x4d8] sm:$0xff]
    %v3568 = vld [vmem:[#allocation8 + $0x4e0] sm:$0xff]
    %v3569 = vld [vmem:[#allocation8 + $0x4e8] sm:$0xff]
    %v3570 = vld [vmem:[#allocation8 + $0x4f0] sm:$0xff]
    %v3571 = vld [vmem:[#allocation8 + $0x4f8] sm:$0xff]
    %v3572 = vld [vmem:[#allocation8 + $0x500] sm:$0xff]
    %v3573 = vld [vmem:[#allocation8 + $0x508] sm:$0xff]
    %v3574 = vld [vmem:[#allocation8 + $0x510] sm:$0xff]
    %v3575 = vld [vmem:[#allocation8 + $0x518] sm:$0xff]
    %v3576 = vld [vmem:[#allocation8 + $0x520] sm:$0xff]
    %v3577 = vld [vmem:[#allocation8 + $0x528] sm:$0xff]
    %v3578 = vld [vmem:[#allocation8 + $0x530] sm:$0xff]
    %v3579 = vld [vmem:[#allocation8 + $0x538] sm:$0xff]
    %v3580 = vld [vmem:[#allocation8 + $0x540] sm:$0xff]
    %v3581 = vld [vmem:[#allocation8 + $0x548] sm:$0xff]
    %v3582 = vld [vmem:[#allocation8 + $0x550] sm:$0xff]
    %v3583 = vld [vmem:[#allocation8 + $0x558] sm:$0xff]
    %v3584 = vld [vmem:[#allocation8 + $0x560] sm:$0xff]
    %v3585 = vld [vmem:[#allocation8 + $0x568] sm:$0xff]
    %v3586 = vld [vmem:[#allocation8 + $0x570] sm:$0xff]
    %v3587 = vld [vmem:[#allocation8 + $0x578] sm:$0xff]
    %v3588 = vld [vmem:[#allocation8 + $0x580] sm:$0xff]
    %v3589 = vld [vmem:[#allocation8 + $0x588] sm:$0xff]
    %v3590 = vld [vmem:[#allocation8 + $0x590] sm:$0xff]
    %v3591 = vld [vmem:[#allocation8 + $0x598] sm:$0xff]
    %v3592 = vld [vmem:[#allocation8 + $0x5a0] sm:$0xff]
    %v3593 = vld [vmem:[#allocation8 + $0x5a8] sm:$0xff]
    %v3594 = vld [vmem:[#allocation8 + $0x5b0] sm:$0xff]
    %v3595 = vld [vmem:[#allocation8 + $0x5b8] sm:$0xff]
    %v3596 = vld [vmem:[#allocation8 + $0x5c0] sm:$0xff]
    %v3597 = vld [vmem:[#allocation8 + $0x5c8] sm:$0xff]
    %v3598 = vld [vmem:[#allocation8 + $0x5d0] sm:$0xff]
    %v3599 = vld [vmem:[#allocation8 + $0x5d8] sm:$0xff]
    %v3600 = vld [vmem:[#allocation8 + $0x5e0] sm:$0xff]
    %v3601 = vld [vmem:[#allocation8 + $0x5e8] sm:$0xff]
    %v3602 = vld [vmem:[#allocation8 + $0x5f0] sm:$0xff]
    %v3603 = vld [vmem:[#allocation8 + $0x5f8] sm:$0xff]
    %v3604 = vld [vmem:[#allocation8 + $0x600] sm:$0xff]
    %v3605 = vld [vmem:[#allocation8 + $0x608] sm:$0xff]
    %v3606 = vld [vmem:[#allocation8 + $0x610] sm:$0xff]
    %v3607 = vld [vmem:[#allocation8 + $0x618] sm:$0xff]
    %v3608 = vld [vmem:[#allocation8 + $0x620] sm:$0xff]
    %v3609 = vld [vmem:[#allocation8 + $0x628] sm:$0xff]
    %v3610 = vld [vmem:[#allocation8 + $0x630] sm:$0xff]
    %v3611 = vld [vmem:[#allocation8 + $0x638] sm:$0xff]
    %v3612 = vld [vmem:[#allocation8 + $0x640] sm:$0xff]
    %v3613 = vld [vmem:[#allocation8 + $0x648] sm:$0xff]
    %v3614 = vld [vmem:[#allocation8 + $0x650] sm:$0xff]
    %v3615 = vld [vmem:[#allocation8 + $0x658] sm:$0xff]
    %v3616 = vld [vmem:[#allocation8 + $0x660] sm:$0xff]
    %v3617 = vld [vmem:[#allocation8 + $0x668] sm:$0xff]
    %v3618 = vld [vmem:[#allocation8 + $0x670] sm:$0xff]
    %v3619 = vld [vmem:[#allocation8 + $0x678] sm:$0xff]
    %v3620 = vld [vmem:[#allocation8 + $0x680] sm:$0xff]
    %v3621 = vld [vmem:[#allocation8 + $0x688] sm:$0xff]
    %v3622 = vld [vmem:[#allocation8 + $0x690] sm:$0xff]
    %v3623 = vld [vmem:[#allocation8 + $0x698] sm:$0xff]
    %v3624 = vld [vmem:[#allocation8 + $0x6a0] sm:$0xff]
    %v3625 = vld [vmem:[#allocation8 + $0x6a8] sm:$0xff]
    %v3626 = vld [vmem:[#allocation8 + $0x6b0] sm:$0xff]
    %v3627 = vld [vmem:[#allocation8 + $0x6b8] sm:$0xff]
    %v3628 = vld [vmem:[#allocation8 + $0x6c0] sm:$0xff]
    %v3629 = vld [vmem:[#allocation8 + $0x6c8] sm:$0xff]
    %v3630 = vld [vmem:[#allocation8 + $0x6d0] sm:$0xff]
    %v3631 = vld [vmem:[#allocation8 + $0x6d8] sm:$0xff]
    %v3632 = vld [vmem:[#allocation8 + $0x6e0] sm:$0xff]
    %v3633 = vld [vmem:[#allocation8 + $0x6e8] sm:$0xff]
    %v3634 = vld [vmem:[#allocation8 + $0x6f0] sm:$0xff]
    %v3635 = vld [vmem:[#allocation8 + $0x6f8] sm:$0xff]
    %v3636 = vld [vmem:[#allocation8 + $0x700] sm:$0xff]
    %v3637 = vld [vmem:[#allocation8 + $0x708] sm:$0xff]
    %v3638 = vld [vmem:[#allocation8 + $0x710] sm:$0xff]
    %v3639 = vld [vmem:[#allocation8 + $0x718] sm:$0xff]
    %v3640 = vld [vmem:[#allocation8 + $0x720] sm:$0xff]
    %v3641 = vld [vmem:[#allocation8 + $0x728] sm:$0xff]
    %v3642 = vld [vmem:[#allocation8 + $0x730] sm:$0xff]
    %v3643 = vld [vmem:[#allocation8 + $0x738] sm:$0xff]
    %v3644 = vld [vmem:[#allocation8 + $0x740] sm:$0xff]
    %v3645 = vld [vmem:[#allocation8 + $0x748] sm:$0xff]
    %v3646 = vld [vmem:[#allocation8 + $0x750] sm:$0xff]
    %v3647 = vld [vmem:[#allocation8 + $0x758] sm:$0xff]
    %v3648 = vld [vmem:[#allocation8 + $0x760] sm:$0xff]
    %v3649 = vld [vmem:[#allocation8 + $0x768] sm:$0xff]
    %v3650 = vld [vmem:[#allocation8 + $0x770] sm:$0xff]
    %v3651 = vld [vmem:[#allocation8 + $0x778] sm:$0xff]
    %v3652 = vld [vmem:[#allocation8 + $0x780] sm:$0xff]
    %v3653 = vld [vmem:[#allocation8 + $0x788] sm:$0xff]
    %v3654 = vld [vmem:[#allocation8 + $0x790] sm:$0xff]
    %v3655 = vld [vmem:[#allocation8 + $0x798] sm:$0xff]
    %v3656 = vld [vmem:[#allocation8 + $0x7a0] sm:$0xff]
    %v3657 = vld [vmem:[#allocation8 + $0x7a8] sm:$0xff]
    %v3658 = vld [vmem:[#allocation8 + $0x7b0] sm:$0xff]
    %v3659 = vld [vmem:[#allocation8 + $0x7b8] sm:$0xff]
    %v3660 = vld [vmem:[#allocation8 + $0x7c0] sm:$0xff]
    %v3661 = vld [vmem:[#allocation8 + $0x7c8] sm:$0xff]
    %v3662 = vld [vmem:[#allocation8 + $0x7d0] sm:$0xff]
    %v3663 = vld [vmem:[#allocation8 + $0x7d8] sm:$0xff]
    %v3664 = vld [vmem:[#allocation8 + $0x7e0] sm:$0xff]
    %v3665 = vld [vmem:[#allocation8 + $0x7e8] sm:$0xff]
    %v3666 = vld [vmem:[#allocation8 + $0x7f0] sm:$0xff]
    %v3667 = vld [vmem:[#allocation8 + $0x7f8] sm:$0xff]
    %v3668 = vld [vmem:[#allocation2 + $0x20] sm:$0x11]
    %v3669 = vld [vmem:[#allocation2 + $0x28] sm:$0x11]
    %v3670 = vld [vmem:[#allocation2 + $0x50] sm:$0x11]
    %v3671 = vld [vmem:[#allocation2 + $0x58] sm:$0x11]
    %vm3672 = vsmask.f32 3328
    %vm3673 = vsmask.f32 7440
    %vm3674 = vmor %vm3672, %vm3673
    %v3676 = vshrl.u32 %v3404, 16
    %v3678 = vrot.slane %v3676, 4
    %v3679 = vshll.u32 %v3404, 16
    %v3681 = vrot.slane %v3679, 5
    %v3682 = vor.u32 %v3678, %v3681
    %v3683 = vrot.slane %v3682, 4
    %v3685 = vshll.u32 %v3406, 16
    %v3687 = vrot.slane %v3685, 5
    %v3688 = vsel %vm3674, %v3683, %v3687
    %v3690 = vshrl.u32 %v3405, 16
    %v3692 = vrot.slane %v3690, 4
    %v3693 = vshll.u32 %v3405, 16
    %v3695 = vrot.slane %v3693, 5
    %v3696 = vor.u32 %v3692, %v3695
    %v3697 = vrot.slane %v3696, 4
    %v3699 = vshll.u32 %v3407, 16
    %v3701 = vrot.slane %v3699, 5
    %v3702 = vsel %vm3674, %v3697, %v3701
    %v3703 = vshrl.u32 %v3406, 16
    %v3705 = vrot.slane %v3703, 4
    %v3706 = vor.u32 %v3705, %v3687
    %v3707 = vrot.slane %v3706, 4
    %v3709 = vshll.u32 %v3668, 16
    %v3711 = vrot.slane %v3709, 5
    %v3712 = vsel %vm3674, %v3707, %v3711
    %v3713 = vshrl.u32 %v3407, 16
    %v3715 = vrot.slane %v3713, 4
    %v3716 = vor.u32 %v3715, %v3701
    %v3717 = vrot.slane %v3716, 4
    %v3719 = vshll.u32 %v3669, 16
    %v3721 = vrot.slane %v3719, 5
    %v3722 = vsel %vm3674, %v3717, %v3721
    %v3724 = vshrl.u32 %v3408, 16
    %v3726 = vrot.slane %v3724, 4
    %v3727 = vshll.u32 %v3408, 16
    %v3729 = vrot.slane %v3727, 5
    %v3730 = vor.u32 %v3726, %v3729
    %v3731 = vrot.slane %v3730, 4
    %v3733 = vshll.u32 %v3410, 16
    %v3735 = vrot.slane %v3733, 5
    %v3736 = vsel %vm3674, %v3731, %v3735
    %v3738 = vshrl.u32 %v3409, 16
    %v3740 = vrot.slane %v3738, 4
    %v3741 = vshll.u32 %v3409, 16
    %v3743 = vrot.slane %v3741, 5
    %v3744 = vor.u32 %v3740, %v3743
    %v3745 = vrot.slane %v3744, 4
    %v3747 = vshll.u32 %v3411, 16
    %v3749 = vrot.slane %v3747, 5
    %v3750 = vsel %vm3674, %v3745, %v3749
    %v3751 = vshrl.u32 %v3410, 16
    %v3753 = vrot.slane %v3751, 4
    %v3754 = vor.u32 %v3753, %v3735
    %v3755 = vrot.slane %v3754, 4
    %v3757 = vshll.u32 %v3670, 16
    %v3759 = vrot.slane %v3757, 5
    %v3760 = vsel %vm3674, %v3755, %v3759
    %v3761 = vshrl.u32 %v3411, 16
    %v3763 = vrot.slane %v3761, 4
    %v3764 = vor.u32 %v3763, %v3749
    %v3765 = vrot.slane %v3764, 4
    %v3767 = vshll.u32 %v3671, 16
    %v3769 = vrot.slane %v3767, 5
    %v3770 = vsel %vm3674, %v3765, %v3769
    %s3771 = scalar_lea.vmem [#allocation8], 2048
    %v3772 = vld [vmem:[%s3771] sm:$0xff]
    %v3773 = vld [vmem:[%s3771 + $0x8] sm:$0xff]
    %v3774 = vld [vmem:[%s3771 + $0x10] sm:$0xff]
    %v3775 = vld [vmem:[%s3771 + $0x18] sm:$0xff]
    %v3776 = vld [vmem:[%s3771 + $0x20] sm:$0xff]
    %v3777 = vld [vmem:[%s3771 + $0x28] sm:$0xff]
    %v3778 = vld [vmem:[%s3771 + $0x30] sm:$0xff]
    %v3779 = vld [vmem:[%s3771 + $0x38] sm:$0xff]
    %v3780 = vld [vmem:[%s3771 + $0x40] sm:$0xff]
    %v3781 = vld [vmem:[%s3771 + $0x48] sm:$0xff]
    %v3782 = vld [vmem:[%s3771 + $0x50] sm:$0xff]
    %v3783 = vld [vmem:[%s3771 + $0x58] sm:$0xff]
    %v3784 = vld [vmem:[%s3771 + $0x60] sm:$0xff]
    %v3785 = vld [vmem:[%s3771 + $0x68] sm:$0xff]
    %v3786 = vld [vmem:[%s3771 + $0x70] sm:$0xff]
    %v3787 = vld [vmem:[%s3771 + $0x78] sm:$0xff]
    %v3788 = vld [vmem:[%s3771 + $0x80] sm:$0xff]
    %v3789 = vld [vmem:[%s3771 + $0x88] sm:$0xff]
    %v3790 = vld [vmem:[%s3771 + $0x90] sm:$0xff]
    %v3791 = vld [vmem:[%s3771 + $0x98] sm:$0xff]
    %v3792 = vld [vmem:[%s3771 + $0xa0] sm:$0xff]
    %v3793 = vld [vmem:[%s3771 + $0xa8] sm:$0xff]
    %v3794 = vld [vmem:[%s3771 + $0xb0] sm:$0xff]
    %v3795 = vld [vmem:[%s3771 + $0xb8] sm:$0xff]
    %v3796 = vld [vmem:[%s3771 + $0xc0] sm:$0xff]
    %v3797 = vld [vmem:[%s3771 + $0xc8] sm:$0xff]
    %v3798 = vld [vmem:[%s3771 + $0xd0] sm:$0xff]
    %v3799 = vld [vmem:[%s3771 + $0xd8] sm:$0xff]
    %v3800 = vld [vmem:[%s3771 + $0xe0] sm:$0xff]
    %v3801 = vld [vmem:[%s3771 + $0xe8] sm:$0xff]
    %v3802 = vld [vmem:[%s3771 + $0xf0] sm:$0xff]
    %v3803 = vld [vmem:[%s3771 + $0xf8] sm:$0xff]
    %v3804 = vld [vmem:[%s3771 + $0x100] sm:$0xff]
    %v3805 = vld [vmem:[%s3771 + $0x108] sm:$0xff]
    %v3806 = vld [vmem:[%s3771 + $0x110] sm:$0xff]
    %v3807 = vld [vmem:[%s3771 + $0x118] sm:$0xff]
    %v3808 = vld [vmem:[%s3771 + $0x120] sm:$0xff]
    %v3809 = vld [vmem:[%s3771 + $0x128] sm:$0xff]
    %v3810 = vld [vmem:[%s3771 + $0x130] sm:$0xff]
    %v3811 = vld [vmem:[%s3771 + $0x138] sm:$0xff]
    %v3812 = vld [vmem:[%s3771 + $0x140] sm:$0xff]
    %v3813 = vld [vmem:[%s3771 + $0x148] sm:$0xff]
    %v3814 = vld [vmem:[%s3771 + $0x150] sm:$0xff]
    %v3815 = vld [vmem:[%s3771 + $0x158] sm:$0xff]
    %v3816 = vld [vmem:[%s3771 + $0x160] sm:$0xff]
    %v3817 = vld [vmem:[%s3771 + $0x168] sm:$0xff]
    %v3818 = vld [vmem:[%s3771 + $0x170] sm:$0xff]
    %v3819 = vld [vmem:[%s3771 + $0x178] sm:$0xff]
    %v3820 = vld [vmem:[%s3771 + $0x180] sm:$0xff]
    %v3821 = vld [vmem:[%s3771 + $0x188] sm:$0xff]
    %v3822 = vld [vmem:[%s3771 + $0x190] sm:$0xff]
    %v3823 = vld [vmem:[%s3771 + $0x198] sm:$0xff]
    %v3824 = vld [vmem:[%s3771 + $0x1a0] sm:$0xff]
    %v3825 = vld [vmem:[%s3771 + $0x1a8] sm:$0xff]
    %v3826 = vld [vmem:[%s3771 + $0x1b0] sm:$0xff]
    %v3827 = vld [vmem:[%s3771 + $0x1b8] sm:$0xff]
    %v3828 = vld [vmem:[%s3771 + $0x1c0] sm:$0xff]
    %v3829 = vld [vmem:[%s3771 + $0x1c8] sm:$0xff]
    %v3830 = vld [vmem:[%s3771 + $0x1d0] sm:$0xff]
    %v3831 = vld [vmem:[%s3771 + $0x1d8] sm:$0xff]
    %v3832 = vld [vmem:[%s3771 + $0x1e0] sm:$0xff]
    %v3833 = vld [vmem:[%s3771 + $0x1e8] sm:$0xff]
    %v3834 = vld [vmem:[%s3771 + $0x1f0] sm:$0xff]
    %v3835 = vld [vmem:[%s3771 + $0x1f8] sm:$0xff]
    %v3836 = vld [vmem:[%s3771 + $0x200] sm:$0xff]
    %v3837 = vld [vmem:[%s3771 + $0x208] sm:$0xff]
    %v3838 = vld [vmem:[%s3771 + $0x210] sm:$0xff]
    %v3839 = vld [vmem:[%s3771 + $0x218] sm:$0xff]
    %v3840 = vld [vmem:[%s3771 + $0x220] sm:$0xff]
    %v3841 = vld [vmem:[%s3771 + $0x228] sm:$0xff]
    %v3842 = vld [vmem:[%s3771 + $0x230] sm:$0xff]
    %v3843 = vld [vmem:[%s3771 + $0x238] sm:$0xff]
    %v3844 = vld [vmem:[%s3771 + $0x240] sm:$0xff]
    %v3845 = vld [vmem:[%s3771 + $0x248] sm:$0xff]
    %v3846 = vld [vmem:[%s3771 + $0x250] sm:$0xff]
    %v3847 = vld [vmem:[%s3771 + $0x258] sm:$0xff]
    %v3848 = vld [vmem:[%s3771 + $0x260] sm:$0xff]
    %v3849 = vld [vmem:[%s3771 + $0x268] sm:$0xff]
    %v3850 = vld [vmem:[%s3771 + $0x270] sm:$0xff]
    %v3851 = vld [vmem:[%s3771 + $0x278] sm:$0xff]
    %v3852 = vld [vmem:[%s3771 + $0x280] sm:$0xff]
    %v3853 = vld [vmem:[%s3771 + $0x288] sm:$0xff]
    %v3854 = vld [vmem:[%s3771 + $0x290] sm:$0xff]
    %v3855 = vld [vmem:[%s3771 + $0x298] sm:$0xff]
    %v3856 = vld [vmem:[%s3771 + $0x2a0] sm:$0xff]
    %v3857 = vld [vmem:[%s3771 + $0x2a8] sm:$0xff]
    %v3858 = vld [vmem:[%s3771 + $0x2b0] sm:$0xff]
    %v3859 = vld [vmem:[%s3771 + $0x2b8] sm:$0xff]
    %v3860 = vld [vmem:[%s3771 + $0x2c0] sm:$0xff]
    %v3861 = vld [vmem:[%s3771 + $0x2c8] sm:$0xff]
    %v3862 = vld [vmem:[%s3771 + $0x2d0] sm:$0xff]
    %v3863 = vld [vmem:[%s3771 + $0x2d8] sm:$0xff]
    %v3864 = vld [vmem:[%s3771 + $0x2e0] sm:$0xff]
    %v3865 = vld [vmem:[%s3771 + $0x2e8] sm:$0xff]
    %v3866 = vld [vmem:[%s3771 + $0x2f0] sm:$0xff]
    %v3867 = vld [vmem:[%s3771 + $0x2f8] sm:$0xff]
    %v3868 = vld [vmem:[%s3771 + $0x300] sm:$0xff]
    %v3869 = vld [vmem:[%s3771 + $0x308] sm:$0xff]
    %v3870 = vld [vmem:[%s3771 + $0x310] sm:$0xff]
    %v3871 = vld [vmem:[%s3771 + $0x318] sm:$0xff]
    %v3872 = vld [vmem:[%s3771 + $0x320] sm:$0xff]
    %v3873 = vld [vmem:[%s3771 + $0x328] sm:$0xff]
    %v3874 = vld [vmem:[%s3771 + $0x330] sm:$0xff]
    %v3875 = vld [vmem:[%s3771 + $0x338] sm:$0xff]
    %v3876 = vld [vmem:[%s3771 + $0x340] sm:$0xff]
    %v3877 = vld [vmem:[%s3771 + $0x348] sm:$0xff]
    %v3878 = vld [vmem:[%s3771 + $0x350] sm:$0xff]
    %v3879 = vld [vmem:[%s3771 + $0x358] sm:$0xff]
    %v3880 = vld [vmem:[%s3771 + $0x360] sm:$0xff]
    %v3881 = vld [vmem:[%s3771 + $0x368] sm:$0xff]
    %v3882 = vld [vmem:[%s3771 + $0x370] sm:$0xff]
    %v3883 = vld [vmem:[%s3771 + $0x378] sm:$0xff]
    %v3884 = vld [vmem:[%s3771 + $0x380] sm:$0xff]
    %v3885 = vld [vmem:[%s3771 + $0x388] sm:$0xff]
    %v3886 = vld [vmem:[%s3771 + $0x390] sm:$0xff]
    %v3887 = vld [vmem:[%s3771 + $0x398] sm:$0xff]
    %v3888 = vld [vmem:[%s3771 + $0x3a0] sm:$0xff]
    %v3889 = vld [vmem:[%s3771 + $0x3a8] sm:$0xff]
    %v3890 = vld [vmem:[%s3771 + $0x3b0] sm:$0xff]
    %v3891 = vld [vmem:[%s3771 + $0x3b8] sm:$0xff]
    %v3892 = vld [vmem:[%s3771 + $0x3c0] sm:$0xff]
    %v3893 = vld [vmem:[%s3771 + $0x3c8] sm:$0xff]
    %v3894 = vld [vmem:[%s3771 + $0x3d0] sm:$0xff]
    %v3895 = vld [vmem:[%s3771 + $0x3d8] sm:$0xff]
    %v3896 = vld [vmem:[%s3771 + $0x3e0] sm:$0xff]
    %v3897 = vld [vmem:[%s3771 + $0x3e8] sm:$0xff]
    %v3898 = vld [vmem:[%s3771 + $0x3f0] sm:$0xff]
    %v3899 = vld [vmem:[%s3771 + $0x3f8] sm:$0xff]
    %v3900 = vld [vmem:[%s3771 + $0x400] sm:$0xff]
    %v3901 = vld [vmem:[%s3771 + $0x408] sm:$0xff]
    %v3902 = vld [vmem:[%s3771 + $0x410] sm:$0xff]
    %v3903 = vld [vmem:[%s3771 + $0x418] sm:$0xff]
    %v3904 = vld [vmem:[%s3771 + $0x420] sm:$0xff]
    %v3905 = vld [vmem:[%s3771 + $0x428] sm:$0xff]
    %v3906 = vld [vmem:[%s3771 + $0x430] sm:$0xff]
    %v3907 = vld [vmem:[%s3771 + $0x438] sm:$0xff]
    %v3908 = vld [vmem:[%s3771 + $0x440] sm:$0xff]
    %v3909 = vld [vmem:[%s3771 + $0x448] sm:$0xff]
    %v3910 = vld [vmem:[%s3771 + $0x450] sm:$0xff]
    %v3911 = vld [vmem:[%s3771 + $0x458] sm:$0xff]
    %v3912 = vld [vmem:[%s3771 + $0x460] sm:$0xff]
    %v3913 = vld [vmem:[%s3771 + $0x468] sm:$0xff]
    %v3914 = vld [vmem:[%s3771 + $0x470] sm:$0xff]
    %v3915 = vld [vmem:[%s3771 + $0x478] sm:$0xff]
    %v3916 = vld [vmem:[%s3771 + $0x480] sm:$0xff]
    %v3917 = vld [vmem:[%s3771 + $0x488] sm:$0xff]
    %v3918 = vld [vmem:[%s3771 + $0x490] sm:$0xff]
    %v3919 = vld [vmem:[%s3771 + $0x498] sm:$0xff]
    %v3920 = vld [vmem:[%s3771 + $0x4a0] sm:$0xff]
    %v3921 = vld [vmem:[%s3771 + $0x4a8] sm:$0xff]
    %v3922 = vld [vmem:[%s3771 + $0x4b0] sm:$0xff]
    %v3923 = vld [vmem:[%s3771 + $0x4b8] sm:$0xff]
    %v3924 = vld [vmem:[%s3771 + $0x4c0] sm:$0xff]
    %v3925 = vld [vmem:[%s3771 + $0x4c8] sm:$0xff]
    %v3926 = vld [vmem:[%s3771 + $0x4d0] sm:$0xff]
    %v3927 = vld [vmem:[%s3771 + $0x4d8] sm:$0xff]
    %v3928 = vld [vmem:[%s3771 + $0x4e0] sm:$0xff]
    %v3929 = vld [vmem:[%s3771 + $0x4e8] sm:$0xff]
    %v3930 = vld [vmem:[%s3771 + $0x4f0] sm:$0xff]
    %v3931 = vld [vmem:[%s3771 + $0x4f8] sm:$0xff]
    %v3932 = vld [vmem:[%s3771 + $0x500] sm:$0xff]
    %v3933 = vld [vmem:[%s3771 + $0x508] sm:$0xff]
    %v3934 = vld [vmem:[%s3771 + $0x510] sm:$0xff]
    %v3935 = vld [vmem:[%s3771 + $0x518] sm:$0xff]
    %v3936 = vld [vmem:[%s3771 + $0x520] sm:$0xff]
    %v3937 = vld [vmem:[%s3771 + $0x528] sm:$0xff]
    %v3938 = vld [vmem:[%s3771 + $0x530] sm:$0xff]
    %v3939 = vld [vmem:[%s3771 + $0x538] sm:$0xff]
    %v3940 = vld [vmem:[%s3771 + $0x540] sm:$0xff]
    %v3941 = vld [vmem:[%s3771 + $0x548] sm:$0xff]
    %v3942 = vld [vmem:[%s3771 + $0x550] sm:$0xff]
    %v3943 = vld [vmem:[%s3771 + $0x558] sm:$0xff]
    %v3944 = vld [vmem:[%s3771 + $0x560] sm:$0xff]
    %v3945 = vld [vmem:[%s3771 + $0x568] sm:$0xff]
    %v3946 = vld [vmem:[%s3771 + $0x570] sm:$0xff]
    %v3947 = vld [vmem:[%s3771 + $0x578] sm:$0xff]
    %v3948 = vld [vmem:[%s3771 + $0x580] sm:$0xff]
    %v3949 = vld [vmem:[%s3771 + $0x588] sm:$0xff]
    %v3950 = vld [vmem:[%s3771 + $0x590] sm:$0xff]
    %v3951 = vld [vmem:[%s3771 + $0x598] sm:$0xff]
    %v3952 = vld [vmem:[%s3771 + $0x5a0] sm:$0xff]
    %v3953 = vld [vmem:[%s3771 + $0x5a8] sm:$0xff]
    %v3954 = vld [vmem:[%s3771 + $0x5b0] sm:$0xff]
    %v3955 = vld [vmem:[%s3771 + $0x5b8] sm:$0xff]
    %v3956 = vld [vmem:[%s3771 + $0x5c0] sm:$0xff]
    %v3957 = vld [vmem:[%s3771 + $0x5c8] sm:$0xff]
    %v3958 = vld [vmem:[%s3771 + $0x5d0] sm:$0xff]
    %v3959 = vld [vmem:[%s3771 + $0x5d8] sm:$0xff]
    %v3960 = vld [vmem:[%s3771 + $0x5e0] sm:$0xff]
    %v3961 = vld [vmem:[%s3771 + $0x5e8] sm:$0xff]
    %v3962 = vld [vmem:[%s3771 + $0x5f0] sm:$0xff]
    %v3963 = vld [vmem:[%s3771 + $0x5f8] sm:$0xff]
    %v3964 = vld [vmem:[%s3771 + $0x600] sm:$0xff]
    %v3965 = vld [vmem:[%s3771 + $0x608] sm:$0xff]
    %v3966 = vld [vmem:[%s3771 + $0x610] sm:$0xff]
    %v3967 = vld [vmem:[%s3771 + $0x618] sm:$0xff]
    %v3968 = vld [vmem:[%s3771 + $0x620] sm:$0xff]
    %v3969 = vld [vmem:[%s3771 + $0x628] sm:$0xff]
    %v3970 = vld [vmem:[%s3771 + $0x630] sm:$0xff]
    %v3971 = vld [vmem:[%s3771 + $0x638] sm:$0xff]
    %v3972 = vld [vmem:[%s3771 + $0x640] sm:$0xff]
    %v3973 = vld [vmem:[%s3771 + $0x648] sm:$0xff]
    %v3974 = vld [vmem:[%s3771 + $0x650] sm:$0xff]
    %v3975 = vld [vmem:[%s3771 + $0x658] sm:$0xff]
    %v3976 = vld [vmem:[%s3771 + $0x660] sm:$0xff]
    %v3977 = vld [vmem:[%s3771 + $0x668] sm:$0xff]
    %v3978 = vld [vmem:[%s3771 + $0x670] sm:$0xff]
    %v3979 = vld [vmem:[%s3771 + $0x678] sm:$0xff]
    %v3980 = vld [vmem:[%s3771 + $0x680] sm:$0xff]
    %v3981 = vld [vmem:[%s3771 + $0x688] sm:$0xff]
    %v3982 = vld [vmem:[%s3771 + $0x690] sm:$0xff]
    %v3983 = vld [vmem:[%s3771 + $0x698] sm:$0xff]
    %v3984 = vld [vmem:[%s3771 + $0x6a0] sm:$0xff]
    %v3985 = vld [vmem:[%s3771 + $0x6a8] sm:$0xff]
    %v3986 = vld [vmem:[%s3771 + $0x6b0] sm:$0xff]
    %v3987 = vld [vmem:[%s3771 + $0x6b8] sm:$0xff]
    %v3988 = vld [vmem:[%s3771 + $0x6c0] sm:$0xff]
    %v3989 = vld [vmem:[%s3771 + $0x6c8] sm:$0xff]
    %v3990 = vld [vmem:[%s3771 + $0x6d0] sm:$0xff]
    %v3991 = vld [vmem:[%s3771 + $0x6d8] sm:$0xff]
    %v3992 = vld [vmem:[%s3771 + $0x6e0] sm:$0xff]
    %v3993 = vld [vmem:[%s3771 + $0x6e8] sm:$0xff]
    %v3994 = vld [vmem:[%s3771 + $0x6f0] sm:$0xff]
    %v3995 = vld [vmem:[%s3771 + $0x6f8] sm:$0xff]
    %v3996 = vld [vmem:[%s3771 + $0x700] sm:$0xff]
    %v3997 = vld [vmem:[%s3771 + $0x708] sm:$0xff]
    %v3998 = vld [vmem:[%s3771 + $0x710] sm:$0xff]
    %v3999 = vld [vmem:[%s3771 + $0x718] sm:$0xff]
    %v4000 = vld [vmem:[%s3771 + $0x720] sm:$0xff]
    %v4001 = vld [vmem:[%s3771 + $0x728] sm:$0xff]
    %v4002 = vld [vmem:[%s3771 + $0x730] sm:$0xff]
    %v4003 = vld [vmem:[%s3771 + $0x738] sm:$0xff]
    %v4004 = vld [vmem:[%s3771 + $0x740] sm:$0xff]
    %v4005 = vld [vmem:[%s3771 + $0x748] sm:$0xff]
    %v4006 = vld [vmem:[%s3771 + $0x750] sm:$0xff]
    %v4007 = vld [vmem:[%s3771 + $0x758] sm:$0xff]
    %v4008 = vld [vmem:[%s3771 + $0x760] sm:$0xff]
    %v4009 = vld [vmem:[%s3771 + $0x768] sm:$0xff]
    %v4010 = vld [vmem:[%s3771 + $0x770] sm:$0xff]
    %v4011 = vld [vmem:[%s3771 + $0x778] sm:$0xff]
    %v4012 = vld [vmem:[%s3771 + $0x780] sm:$0xff]
    %v4013 = vld [vmem:[%s3771 + $0x788] sm:$0xff]
    %v4014 = vld [vmem:[%s3771 + $0x790] sm:$0xff]
    %v4015 = vld [vmem:[%s3771 + $0x798] sm:$0xff]
    %v4016 = vld [vmem:[%s3771 + $0x7a0] sm:$0xff]
    %v4017 = vld [vmem:[%s3771 + $0x7a8] sm:$0xff]
    %v4018 = vld [vmem:[%s3771 + $0x7b0] sm:$0xff]
    %v4019 = vld [vmem:[%s3771 + $0x7b8] sm:$0xff]
    %v4020 = vld [vmem:[%s3771 + $0x7c0] sm:$0xff]
    %v4021 = vld [vmem:[%s3771 + $0x7c8] sm:$0xff]
    %v4022 = vld [vmem:[%s3771 + $0x7d0] sm:$0xff]
    %v4023 = vld [vmem:[%s3771 + $0x7d8] sm:$0xff]
    %v4024 = vld [vmem:[%s3771 + $0x7e0] sm:$0xff]
    %v4025 = vld [vmem:[%s3771 + $0x7e8] sm:$0xff]
    %v4026 = vld [vmem:[%s3771 + $0x7f0] sm:$0xff]
    %v4027 = vld [vmem:[%s3771 + $0x7f8] sm:$0xff]
    %v4028 = vunpack.c.l.b16 %v3688
    %v4029 = vunpack.c.h.b16 %v3688
    %v4030 = vunpack.c.l.b16 %v3702
    %v4031 = vunpack.c.h.b16 %v3702
    %v4032 = vunpack.c.l.b16 %v3712
    %v4033 = vunpack.c.h.b16 %v3712
    %v4034 = vunpack.c.l.b16 %v3722
    %v4035 = vunpack.c.h.b16 %v3722
    %v4036 = vunpack.c.l.b16 %v3736
    %v4037 = vunpack.c.h.b16 %v3736
    %v4038 = vunpack.c.l.b16 %v3750
    %v4039 = vunpack.c.h.b16 %v3750
    %v4040 = vunpack.c.l.b16 %v3760
    %v4041 = vunpack.c.h.b16 %v3760
    %v4042 = vunpack.c.l.b16 %v3770
    %v4043 = vunpack.c.h.b16 %v3770
    %v4044 = vpack.c.b16 %v4032, %v4028
    %v4045 = vpack.c.b16 %v4033, %v4029
    %v4046 = vpack.c.b16 %v4034, %v4030
    %v4047 = vpack.c.b16 %v4035, %v4031
    %v4048 = vpack.c.b16 %v4040, %v4036
    %v4049 = vpack.c.b16 %v4041, %v4037
    %v4050 = vpack.c.b16 %v4042, %v4038
    %v4051 = vpack.c.b16 %v4043, %v4039
    %v4316 = vunpack.c.l.b16 %v3772
    %v4317 = vunpack.c.h.b16 %v3772
    %v4318 = vunpack.c.l.b16 %v3773
    %v4319 = vunpack.c.h.b16 %v3773
    %v4320 = vunpack.c.l.b16 %v3774
    %v4321 = vunpack.c.h.b16 %v3774
    %v4322 = vunpack.c.l.b16 %v3775
    %v4323 = vunpack.c.h.b16 %v3775
    %v4324 = vunpack.c.l.b16 %v3776
    %v4325 = vunpack.c.h.b16 %v3776
    %v4326 = vunpack.c.l.b16 %v3777
    %v4327 = vunpack.c.h.b16 %v3777
    %v4328 = vunpack.c.l.b16 %v3778
    %v4329 = vunpack.c.h.b16 %v3778
    %v4330 = vunpack.c.l.b16 %v3779
    %v4331 = vunpack.c.h.b16 %v3779
    %v4332 = vunpack.c.l.b16 %v3780
    %v4333 = vunpack.c.h.b16 %v3780
    %v4334 = vunpack.c.l.b16 %v3781
    %v4335 = vunpack.c.h.b16 %v3781
    %v4336 = vunpack.c.l.b16 %v3782
    %v4337 = vunpack.c.h.b16 %v3782
    %v4338 = vunpack.c.l.b16 %v3783
    %v4339 = vunpack.c.h.b16 %v3783
    %v4340 = vunpack.c.l.b16 %v3784
    %v4341 = vunpack.c.h.b16 %v3784
    %v4342 = vunpack.c.l.b16 %v3785
    %v4343 = vunpack.c.h.b16 %v3785
    %v4344 = vunpack.c.l.b16 %v3786
    %v4345 = vunpack.c.h.b16 %v3786
    %v4346 = vunpack.c.l.b16 %v3787
    %v4347 = vunpack.c.h.b16 %v3787
    %v4348 = vunpack.c.l.b16 %v3788
    %v4349 = vunpack.c.h.b16 %v3788
    %v4350 = vunpack.c.l.b16 %v3789
    %v4351 = vunpack.c.h.b16 %v3789
    %v4352 = vunpack.c.l.b16 %v3790
    %v4353 = vunpack.c.h.b16 %v3790
    %v4354 = vunpack.c.l.b16 %v3791
    %v4355 = vunpack.c.h.b16 %v3791
    %v4356 = vunpack.c.l.b16 %v3792
    %v4357 = vunpack.c.h.b16 %v3792
    %v4358 = vunpack.c.l.b16 %v3793
    %v4359 = vunpack.c.h.b16 %v3793
    %v4360 = vunpack.c.l.b16 %v3794
    %v4361 = vunpack.c.h.b16 %v3794
    %v4362 = vunpack.c.l.b16 %v3795
    %v4363 = vunpack.c.h.b16 %v3795
    %v4364 = vunpack.c.l.b16 %v3796
    %v4365 = vunpack.c.h.b16 %v3796
    %v4366 = vunpack.c.l.b16 %v3797
    %v4367 = vunpack.c.h.b16 %v3797
    %v4368 = vunpack.c.l.b16 %v3798
    %v4369 = vunpack.c.h.b16 %v3798
    %v4370 = vunpack.c.l.b16 %v3799
    %v4371 = vunpack.c.h.b16 %v3799
    %v4372 = vunpack.c.l.b16 %v3800
    %v4373 = vunpack.c.h.b16 %v3800
    %v4374 = vunpack.c.l.b16 %v3801
    %v4375 = vunpack.c.h.b16 %v3801
    %v4376 = vunpack.c.l.b16 %v3802
    %v4377 = vunpack.c.h.b16 %v3802
    %v4378 = vunpack.c.l.b16 %v3803
    %v4379 = vunpack.c.h.b16 %v3803
    %v4380 = vunpack.c.l.b16 %v3804
    %v4381 = vunpack.c.h.b16 %v3804
    %v4382 = vunpack.c.l.b16 %v3805
    %v4383 = vunpack.c.h.b16 %v3805
    %v4384 = vunpack.c.l.b16 %v3806
    %v4385 = vunpack.c.h.b16 %v3806
    %v4386 = vunpack.c.l.b16 %v3807
    %v4387 = vunpack.c.h.b16 %v3807
    %v4388 = vunpack.c.l.b16 %v3808
    %v4389 = vunpack.c.h.b16 %v3808
    %v4390 = vunpack.c.l.b16 %v3809
    %v4391 = vunpack.c.h.b16 %v3809
    %v4392 = vunpack.c.l.b16 %v3810
    %v4393 = vunpack.c.h.b16 %v3810
    %v4394 = vunpack.c.l.b16 %v3811
    %v4395 = vunpack.c.h.b16 %v3811
    %v4396 = vunpack.c.l.b16 %v3812
    %v4397 = vunpack.c.h.b16 %v3812
    %v4398 = vunpack.c.l.b16 %v3813
    %v4399 = vunpack.c.h.b16 %v3813
    %v4400 = vunpack.c.l.b16 %v3814
    %v4401 = vunpack.c.h.b16 %v3814
    %v4402 = vunpack.c.l.b16 %v3815
    %v4403 = vunpack.c.h.b16 %v3815
    %v4404 = vunpack.c.l.b16 %v3816
    %v4405 = vunpack.c.h.b16 %v3816
    %v4406 = vunpack.c.l.b16 %v3817
    %v4407 = vunpack.c.h.b16 %v3817
    %v4408 = vunpack.c.l.b16 %v3818
    %v4409 = vunpack.c.h.b16 %v3818
    %v4410 = vunpack.c.l.b16 %v3819
    %v4411 = vunpack.c.h.b16 %v3819
    %v4412 = vunpack.c.l.b16 %v3820
    %v4413 = vunpack.c.h.b16 %v3820
    %v4414 = vunpack.c.l.b16 %v3821
    %v4415 = vunpack.c.h.b16 %v3821
    %v4416 = vunpack.c.l.b16 %v3822
    %v4417 = vunpack.c.h.b16 %v3822
    %v4418 = vunpack.c.l.b16 %v3823
    %v4419 = vunpack.c.h.b16 %v3823
    %v4420 = vunpack.c.l.b16 %v3824
    %v4421 = vunpack.c.h.b16 %v3824
    %v4422 = vunpack.c.l.b16 %v3825
    %v4423 = vunpack.c.h.b16 %v3825
    %v4424 = vunpack.c.l.b16 %v3826
    %v4425 = vunpack.c.h.b16 %v3826
    %v4426 = vunpack.c.l.b16 %v3827
    %v4427 = vunpack.c.h.b16 %v3827
    %v4428 = vunpack.c.l.b16 %v3828
    %v4429 = vunpack.c.h.b16 %v3828
    %v4430 = vunpack.c.l.b16 %v3829
    %v4431 = vunpack.c.h.b16 %v3829
    %v4432 = vunpack.c.l.b16 %v3830
    %v4433 = vunpack.c.h.b16 %v3830
    %v4434 = vunpack.c.l.b16 %v3831
    %v4435 = vunpack.c.h.b16 %v3831
    %v4436 = vunpack.c.l.b16 %v3832
    %v4437 = vunpack.c.h.b16 %v3832
    %v4438 = vunpack.c.l.b16 %v3833
    %v4439 = vunpack.c.h.b16 %v3833
    %v4440 = vunpack.c.l.b16 %v3834
    %v4441 = vunpack.c.h.b16 %v3834
    %v4442 = vunpack.c.l.b16 %v3835
    %v4443 = vunpack.c.h.b16 %v3835
    %v4444 = vunpack.c.l.b16 %v3836
    %v4445 = vunpack.c.h.b16 %v3836
    %v4446 = vunpack.c.l.b16 %v3837
    %v4447 = vunpack.c.h.b16 %v3837
    %v4448 = vunpack.c.l.b16 %v3838
    %v4449 = vunpack.c.h.b16 %v3838
    %v4450 = vunpack.c.l.b16 %v3839
    %v4451 = vunpack.c.h.b16 %v3839
    %v4452 = vunpack.c.l.b16 %v3840
    %v4453 = vunpack.c.h.b16 %v3840
    %v4454 = vunpack.c.l.b16 %v3841
    %v4455 = vunpack.c.h.b16 %v3841
    %v4456 = vunpack.c.l.b16 %v3842
    %v4457 = vunpack.c.h.b16 %v3842
    %v4458 = vunpack.c.l.b16 %v3843
    %v4459 = vunpack.c.h.b16 %v3843
    %v4460 = vunpack.c.l.b16 %v3844
    %v4461 = vunpack.c.h.b16 %v3844
    %v4462 = vunpack.c.l.b16 %v3845
    %v4463 = vunpack.c.h.b16 %v3845
    %v4464 = vunpack.c.l.b16 %v3846
    %v4465 = vunpack.c.h.b16 %v3846
    %v4466 = vunpack.c.l.b16 %v3847
    %v4467 = vunpack.c.h.b16 %v3847
    %v4468 = vunpack.c.l.b16 %v3848
    %v4469 = vunpack.c.h.b16 %v3848
    %v4470 = vunpack.c.l.b16 %v3849
    %v4471 = vunpack.c.h.b16 %v3849
    %v4472 = vunpack.c.l.b16 %v3850
    %v4473 = vunpack.c.h.b16 %v3850
    %v4474 = vunpack.c.l.b16 %v3851
    %v4475 = vunpack.c.h.b16 %v3851
    %v4476 = vunpack.c.l.b16 %v3852
    %v4477 = vunpack.c.h.b16 %v3852
    %v4478 = vunpack.c.l.b16 %v3853
    %v4479 = vunpack.c.h.b16 %v3853
    %v4480 = vunpack.c.l.b16 %v3854
    %v4481 = vunpack.c.h.b16 %v3854
    %v4482 = vunpack.c.l.b16 %v3855
    %v4483 = vunpack.c.h.b16 %v3855
    %v4484 = vunpack.c.l.b16 %v3856
    %v4485 = vunpack.c.h.b16 %v3856
    %v4486 = vunpack.c.l.b16 %v3857
    %v4487 = vunpack.c.h.b16 %v3857
    %v4488 = vunpack.c.l.b16 %v3858
    %v4489 = vunpack.c.h.b16 %v3858
    %v4490 = vunpack.c.l.b16 %v3859
    %v4491 = vunpack.c.h.b16 %v3859
    %v4492 = vunpack.c.l.b16 %v3860
    %v4493 = vunpack.c.h.b16 %v3860
    %v4494 = vunpack.c.l.b16 %v3861
    %v4495 = vunpack.c.h.b16 %v3861
    %v4496 = vunpack.c.l.b16 %v3862
    %v4497 = vunpack.c.h.b16 %v3862
    %v4498 = vunpack.c.l.b16 %v3863
    %v4499 = vunpack.c.h.b16 %v3863
    %v4500 = vunpack.c.l.b16 %v3864
    %v4501 = vunpack.c.h.b16 %v3864
    %v4502 = vunpack.c.l.b16 %v3865
    %v4503 = vunpack.c.h.b16 %v3865
    %v4504 = vunpack.c.l.b16 %v3866
    %v4505 = vunpack.c.h.b16 %v3866
    %v4506 = vunpack.c.l.b16 %v3867
    %v4507 = vunpack.c.h.b16 %v3867
    %v4508 = vunpack.c.l.b16 %v3868
    %v4509 = vunpack.c.h.b16 %v3868
    %v4510 = vunpack.c.l.b16 %v3869
    %v4511 = vunpack.c.h.b16 %v3869
    %v4512 = vunpack.c.l.b16 %v3870
    %v4513 = vunpack.c.h.b16 %v3870
    %v4514 = vunpack.c.l.b16 %v3871
    %v4515 = vunpack.c.h.b16 %v3871
    %v4516 = vunpack.c.l.b16 %v3872
    %v4517 = vunpack.c.h.b16 %v3872
    %v4518 = vunpack.c.l.b16 %v3873
    %v4519 = vunpack.c.h.b16 %v3873
    %v4520 = vunpack.c.l.b16 %v3874
    %v4521 = vunpack.c.h.b16 %v3874
    %v4522 = vunpack.c.l.b16 %v3875
    %v4523 = vunpack.c.h.b16 %v3875
    %v4524 = vunpack.c.l.b16 %v3876
    %v4525 = vunpack.c.h.b16 %v3876
    %v4526 = vunpack.c.l.b16 %v3877
    %v4527 = vunpack.c.h.b16 %v3877
    %v4528 = vunpack.c.l.b16 %v3878
    %v4529 = vunpack.c.h.b16 %v3878
    %v4530 = vunpack.c.l.b16 %v3879
    %v4531 = vunpack.c.h.b16 %v3879
    %v4532 = vunpack.c.l.b16 %v3880
    %v4533 = vunpack.c.h.b16 %v3880
    %v4534 = vunpack.c.l.b16 %v3881
    %v4535 = vunpack.c.h.b16 %v3881
    %v4536 = vunpack.c.l.b16 %v3882
    %v4537 = vunpack.c.h.b16 %v3882
    %v4538 = vunpack.c.l.b16 %v3883
    %v4539 = vunpack.c.h.b16 %v3883
    %v4540 = vunpack.c.l.b16 %v3884
    %v4541 = vunpack.c.h.b16 %v3884
    %v4542 = vunpack.c.l.b16 %v3885
    %v4543 = vunpack.c.h.b16 %v3885
    %v4544 = vunpack.c.l.b16 %v3886
    %v4545 = vunpack.c.h.b16 %v3886
    %v4546 = vunpack.c.l.b16 %v3887
    %v4547 = vunpack.c.h.b16 %v3887
    %v4548 = vunpack.c.l.b16 %v3888
    %v4549 = vunpack.c.h.b16 %v3888
    %v4550 = vunpack.c.l.b16 %v3889
    %v4551 = vunpack.c.h.b16 %v3889
    %v4552 = vunpack.c.l.b16 %v3890
    %v4553 = vunpack.c.h.b16 %v3890
    %v4554 = vunpack.c.l.b16 %v3891
    %v4555 = vunpack.c.h.b16 %v3891
    %v4556 = vunpack.c.l.b16 %v3892
    %v4557 = vunpack.c.h.b16 %v3892
    %v4558 = vunpack.c.l.b16 %v3893
    %v4559 = vunpack.c.h.b16 %v3893
    %v4560 = vunpack.c.l.b16 %v3894
    %v4561 = vunpack.c.h.b16 %v3894
    %v4562 = vunpack.c.l.b16 %v3895
    %v4563 = vunpack.c.h.b16 %v3895
    %v4564 = vunpack.c.l.b16 %v3896
    %v4565 = vunpack.c.h.b16 %v3896
    %v4566 = vunpack.c.l.b16 %v3897
    %v4567 = vunpack.c.h.b16 %v3897
    %v4568 = vunpack.c.l.b16 %v3898
    %v4569 = vunpack.c.h.b16 %v3898
    %v4570 = vunpack.c.l.b16 %v3899
    %v4571 = vunpack.c.h.b16 %v3899
    %v4572 = vunpack.c.l.b16 %v3900
    %v4573 = vunpack.c.h.b16 %v3900
    %v4574 = vunpack.c.l.b16 %v3901
    %v4575 = vunpack.c.h.b16 %v3901
    %v4576 = vunpack.c.l.b16 %v3902
    %v4577 = vunpack.c.h.b16 %v3902
    %v4578 = vunpack.c.l.b16 %v3903
    %v4579 = vunpack.c.h.b16 %v3903
    %v4580 = vunpack.c.l.b16 %v3904
    %v4581 = vunpack.c.h.b16 %v3904
    %v4582 = vunpack.c.l.b16 %v3905
    %v4583 = vunpack.c.h.b16 %v3905
    %v4584 = vunpack.c.l.b16 %v3906
    %v4585 = vunpack.c.h.b16 %v3906
    %v4586 = vunpack.c.l.b16 %v3907
    %v4587 = vunpack.c.h.b16 %v3907
    %v4588 = vunpack.c.l.b16 %v3908
    %v4589 = vunpack.c.h.b16 %v3908
    %v4590 = vunpack.c.l.b16 %v3909
    %v4591 = vunpack.c.h.b16 %v3909
    %v4592 = vunpack.c.l.b16 %v3910
    %v4593 = vunpack.c.h.b16 %v3910
    %v4594 = vunpack.c.l.b16 %v3911
    %v4595 = vunpack.c.h.b16 %v3911
    %v4596 = vunpack.c.l.b16 %v3912
    %v4597 = vunpack.c.h.b16 %v3912
    %v4598 = vunpack.c.l.b16 %v3913
    %v4599 = vunpack.c.h.b16 %v3913
    %v4600 = vunpack.c.l.b16 %v3914
    %v4601 = vunpack.c.h.b16 %v3914
    %v4602 = vunpack.c.l.b16 %v3915
    %v4603 = vunpack.c.h.b16 %v3915
    %v4604 = vunpack.c.l.b16 %v3916
    %v4605 = vunpack.c.h.b16 %v3916
    %v4606 = vunpack.c.l.b16 %v3917
    %v4607 = vunpack.c.h.b16 %v3917
    %v4608 = vunpack.c.l.b16 %v3918
    %v4609 = vunpack.c.h.b16 %v3918
    %v4610 = vunpack.c.l.b16 %v3919
    %v4611 = vunpack.c.h.b16 %v3919
    %v4612 = vunpack.c.l.b16 %v3920
    %v4613 = vunpack.c.h.b16 %v3920
    %v4614 = vunpack.c.l.b16 %v3921
    %v4615 = vunpack.c.h.b16 %v3921
    %v4616 = vunpack.c.l.b16 %v3922
    %v4617 = vunpack.c.h.b16 %v3922
    %v4618 = vunpack.c.l.b16 %v3923
    %v4619 = vunpack.c.h.b16 %v3923
    %v4620 = vunpack.c.l.b16 %v3924
    %v4621 = vunpack.c.h.b16 %v3924
    %v4622 = vunpack.c.l.b16 %v3925
    %v4623 = vunpack.c.h.b16 %v3925
    %v4624 = vunpack.c.l.b16 %v3926
    %v4625 = vunpack.c.h.b16 %v3926
    %v4626 = vunpack.c.l.b16 %v3927
    %v4627 = vunpack.c.h.b16 %v3927
    %v4628 = vunpack.c.l.b16 %v3928
    %v4629 = vunpack.c.h.b16 %v3928
    %v4630 = vunpack.c.l.b16 %v3929
    %v4631 = vunpack.c.h.b16 %v3929
    %v4632 = vunpack.c.l.b16 %v3930
    %v4633 = vunpack.c.h.b16 %v3930
    %v4634 = vunpack.c.l.b16 %v3931
    %v4635 = vunpack.c.h.b16 %v3931
    %v4636 = vunpack.c.l.b16 %v3932
    %v4637 = vunpack.c.h.b16 %v3932
    %v4638 = vunpack.c.l.b16 %v3933
    %v4639 = vunpack.c.h.b16 %v3933
    %v4640 = vunpack.c.l.b16 %v3934
    %v4641 = vunpack.c.h.b16 %v3934
    %v4642 = vunpack.c.l.b16 %v3935
    %v4643 = vunpack.c.h.b16 %v3935
    %v4644 = vunpack.c.l.b16 %v3936
    %v4645 = vunpack.c.h.b16 %v3936
    %v4646 = vunpack.c.l.b16 %v3937
    %v4647 = vunpack.c.h.b16 %v3937
    %v4648 = vunpack.c.l.b16 %v3938
    %v4649 = vunpack.c.h.b16 %v3938
    %v4650 = vunpack.c.l.b16 %v3939
    %v4651 = vunpack.c.h.b16 %v3939
    %v4652 = vunpack.c.l.b16 %v3940
    %v4653 = vunpack.c.h.b16 %v3940
    %v4654 = vunpack.c.l.b16 %v3941
    %v4655 = vunpack.c.h.b16 %v3941
    %v4656 = vunpack.c.l.b16 %v3942
    %v4657 = vunpack.c.h.b16 %v3942
    %v4658 = vunpack.c.l.b16 %v3943
    %v4659 = vunpack.c.h.b16 %v3943
    %v4660 = vunpack.c.l.b16 %v3944
    %v4661 = vunpack.c.h.b16 %v3944
    %v4662 = vunpack.c.l.b16 %v3945
    %v4663 = vunpack.c.h.b16 %v3945
    %v4664 = vunpack.c.l.b16 %v3946
    %v4665 = vunpack.c.h.b16 %v3946
    %v4666 = vunpack.c.l.b16 %v3947
    %v4667 = vunpack.c.h.b16 %v3947
    %v4668 = vunpack.c.l.b16 %v3948
    %v4669 = vunpack.c.h.b16 %v3948
    %v4670 = vunpack.c.l.b16 %v3949
    %v4671 = vunpack.c.h.b16 %v3949
    %v4672 = vunpack.c.l.b16 %v3950
    %v4673 = vunpack.c.h.b16 %v3950
    %v4674 = vunpack.c.l.b16 %v3951
    %v4675 = vunpack.c.h.b16 %v3951
    %v4676 = vunpack.c.l.b16 %v3952
    %v4677 = vunpack.c.h.b16 %v3952
    %v4678 = vunpack.c.l.b16 %v3953
    %v4679 = vunpack.c.h.b16 %v3953
    %v4680 = vunpack.c.l.b16 %v3954
    %v4681 = vunpack.c.h.b16 %v3954
    %v4682 = vunpack.c.l.b16 %v3955
    %v4683 = vunpack.c.h.b16 %v3955
    %v4684 = vunpack.c.l.b16 %v3956
    %v4685 = vunpack.c.h.b16 %v3956
    %v4686 = vunpack.c.l.b16 %v3957
    %v4687 = vunpack.c.h.b16 %v3957
    %v4688 = vunpack.c.l.b16 %v3958
    %v4689 = vunpack.c.h.b16 %v3958
    %v4690 = vunpack.c.l.b16 %v3959
    %v4691 = vunpack.c.h.b16 %v3959
    %v4692 = vunpack.c.l.b16 %v3960
    %v4693 = vunpack.c.h.b16 %v3960
    %v4694 = vunpack.c.l.b16 %v3961
    %v4695 = vunpack.c.h.b16 %v3961
    %v4696 = vunpack.c.l.b16 %v3962
    %v4697 = vunpack.c.h.b16 %v3962
    %v4698 = vunpack.c.l.b16 %v3963
    %v4699 = vunpack.c.h.b16 %v3963
    %v4700 = vunpack.c.l.b16 %v3964
    %v4701 = vunpack.c.h.b16 %v3964
    %v4702 = vunpack.c.l.b16 %v3965
    %v4703 = vunpack.c.h.b16 %v3965
    %v4704 = vunpack.c.l.b16 %v3966
    %v4705 = vunpack.c.h.b16 %v3966
    %v4706 = vunpack.c.l.b16 %v3967
    %v4707 = vunpack.c.h.b16 %v3967
    %v4708 = vunpack.c.l.b16 %v3968
    %v4709 = vunpack.c.h.b16 %v3968
    %v4710 = vunpack.c.l.b16 %v3969
    %v4711 = vunpack.c.h.b16 %v3969
    %v4712 = vunpack.c.l.b16 %v3970
    %v4713 = vunpack.c.h.b16 %v3970
    %v4714 = vunpack.c.l.b16 %v3971
    %v4715 = vunpack.c.h.b16 %v3971
    %v4716 = vunpack.c.l.b16 %v3972
    %v4717 = vunpack.c.h.b16 %v3972
    %v4718 = vunpack.c.l.b16 %v3973
    %v4719 = vunpack.c.h.b16 %v3973
    %v4720 = vunpack.c.l.b16 %v3974
    %v4721 = vunpack.c.h.b16 %v3974
    %v4722 = vunpack.c.l.b16 %v3975
    %v4723 = vunpack.c.h.b16 %v3975
    %v4724 = vunpack.c.l.b16 %v3976
    %v4725 = vunpack.c.h.b16 %v3976
    %v4726 = vunpack.c.l.b16 %v3977
    %v4727 = vunpack.c.h.b16 %v3977
    %v4728 = vunpack.c.l.b16 %v3978
    %v4729 = vunpack.c.h.b16 %v3978
    %v4730 = vunpack.c.l.b16 %v3979
    %v4731 = vunpack.c.h.b16 %v3979
    %v4732 = vunpack.c.l.b16 %v3980
    %v4733 = vunpack.c.h.b16 %v3980
    %v4734 = vunpack.c.l.b16 %v3981
    %v4735 = vunpack.c.h.b16 %v3981
    %v4736 = vunpack.c.l.b16 %v3982
    %v4737 = vunpack.c.h.b16 %v3982
    %v4738 = vunpack.c.l.b16 %v3983
    %v4739 = vunpack.c.h.b16 %v3983
    %v4740 = vunpack.c.l.b16 %v3984
    %v4741 = vunpack.c.h.b16 %v3984
    %v4742 = vunpack.c.l.b16 %v3985
    %v4743 = vunpack.c.h.b16 %v3985
    %v4744 = vunpack.c.l.b16 %v3986
    %v4745 = vunpack.c.h.b16 %v3986
    %v4746 = vunpack.c.l.b16 %v3987
    %v4747 = vunpack.c.h.b16 %v3987
    %v4748 = vunpack.c.l.b16 %v3988
    %v4749 = vunpack.c.h.b16 %v3988
    %v4750 = vunpack.c.l.b16 %v3989
    %v4751 = vunpack.c.h.b16 %v3989
    %v4752 = vunpack.c.l.b16 %v3990
    %v4753 = vunpack.c.h.b16 %v3990
    %v4754 = vunpack.c.l.b16 %v3991
    %v4755 = vunpack.c.h.b16 %v3991
    %v4756 = vunpack.c.l.b16 %v3992
    %v4757 = vunpack.c.h.b16 %v3992
    %v4758 = vunpack.c.l.b16 %v3993
    %v4759 = vunpack.c.h.b16 %v3993
    %v4760 = vunpack.c.l.b16 %v3994
    %v4761 = vunpack.c.h.b16 %v3994
    %v4762 = vunpack.c.l.b16 %v3995
    %v4763 = vunpack.c.h.b16 %v3995
    %v4764 = vunpack.c.l.b16 %v3996
    %v4765 = vunpack.c.h.b16 %v3996
    %v4766 = vunpack.c.l.b16 %v3997
    %v4767 = vunpack.c.h.b16 %v3997
    %v4768 = vunpack.c.l.b16 %v3998
    %v4769 = vunpack.c.h.b16 %v3998
    %v4770 = vunpack.c.l.b16 %v3999
    %v4771 = vunpack.c.h.b16 %v3999
    %v4772 = vunpack.c.l.b16 %v4000
    %v4773 = vunpack.c.h.b16 %v4000
    %v4774 = vunpack.c.l.b16 %v4001
    %v4775 = vunpack.c.h.b16 %v4001
    %v4776 = vunpack.c.l.b16 %v4002
    %v4777 = vunpack.c.h.b16 %v4002
    %v4778 = vunpack.c.l.b16 %v4003
    %v4779 = vunpack.c.h.b16 %v4003
    %v4780 = vunpack.c.l.b16 %v4004
    %v4781 = vunpack.c.h.b16 %v4004
    %v4782 = vunpack.c.l.b16 %v4005
    %v4783 = vunpack.c.h.b16 %v4005
    %v4784 = vunpack.c.l.b16 %v4006
    %v4785 = vunpack.c.h.b16 %v4006
    %v4786 = vunpack.c.l.b16 %v4007
    %v4787 = vunpack.c.h.b16 %v4007
    %v4788 = vunpack.c.l.b16 %v4008
    %v4789 = vunpack.c.h.b16 %v4008
    %v4790 = vunpack.c.l.b16 %v4009
    %v4791 = vunpack.c.h.b16 %v4009
    %v4792 = vunpack.c.l.b16 %v4010
    %v4793 = vunpack.c.h.b16 %v4010
    %v4794 = vunpack.c.l.b16 %v4011
    %v4795 = vunpack.c.h.b16 %v4011
    %v4796 = vunpack.c.l.b16 %v4012
    %v4797 = vunpack.c.h.b16 %v4012
    %v4798 = vunpack.c.l.b16 %v4013
    %v4799 = vunpack.c.h.b16 %v4013
    %v4800 = vunpack.c.l.b16 %v4014
    %v4801 = vunpack.c.h.b16 %v4014
    %v4802 = vunpack.c.l.b16 %v4015
    %v4803 = vunpack.c.h.b16 %v4015
    %v4804 = vunpack.c.l.b16 %v4016
    %v4805 = vunpack.c.h.b16 %v4016
    %v4806 = vunpack.c.l.b16 %v4017
    %v4807 = vunpack.c.h.b16 %v4017
    %v4808 = vunpack.c.l.b16 %v4018
    %v4809 = vunpack.c.h.b16 %v4018
    %v4810 = vunpack.c.l.b16 %v4019
    %v4811 = vunpack.c.h.b16 %v4019
    %v4812 = vunpack.c.l.b16 %v4020
    %v4813 = vunpack.c.h.b16 %v4020
    %v4814 = vunpack.c.l.b16 %v4021
    %v4815 = vunpack.c.h.b16 %v4021
    %v4816 = vunpack.c.l.b16 %v4022
    %v4817 = vunpack.c.h.b16 %v4022
    %v4818 = vunpack.c.l.b16 %v4023
    %v4819 = vunpack.c.h.b16 %v4023
    %v4820 = vunpack.c.l.b16 %v4024
    %v4821 = vunpack.c.h.b16 %v4024
    %v4822 = vunpack.c.l.b16 %v4025
    %v4823 = vunpack.c.h.b16 %v4025
    %v4824 = vunpack.c.l.b16 %v4026
    %v4825 = vunpack.c.h.b16 %v4026
    %v4826 = vunpack.c.l.b16 %v4027
    %v4827 = vunpack.c.h.b16 %v4027
    %v4828 = vpack.c.b16 %v4324, %v4316
    %v4829 = vpack.c.b16 %v4325, %v4317
    %v4830 = vpack.c.b16 %v4326, %v4318
    %v4831 = vpack.c.b16 %v4327, %v4319
    %v4832 = vpack.c.b16 %v4328, %v4320
    %v4833 = vpack.c.b16 %v4329, %v4321
    %v4834 = vpack.c.b16 %v4330, %v4322
    %v4835 = vpack.c.b16 %v4331, %v4323
    %v4836 = vpack.c.b16 %v4340, %v4332
    %v4837 = vpack.c.b16 %v4341, %v4333
    %v4838 = vpack.c.b16 %v4342, %v4334
    %v4839 = vpack.c.b16 %v4343, %v4335
    %v4840 = vpack.c.b16 %v4344, %v4336
    %v4841 = vpack.c.b16 %v4345, %v4337
    %v4842 = vpack.c.b16 %v4346, %v4338
    %v4843 = vpack.c.b16 %v4347, %v4339
    %v4844 = vpack.c.b16 %v4356, %v4348
    %v4845 = vpack.c.b16 %v4357, %v4349
    %v4846 = vpack.c.b16 %v4358, %v4350
    %v4847 = vpack.c.b16 %v4359, %v4351
    %v4848 = vpack.c.b16 %v4360, %v4352
    %v4849 = vpack.c.b16 %v4361, %v4353
    %v4850 = vpack.c.b16 %v4362, %v4354
    %v4851 = vpack.c.b16 %v4363, %v4355
    %v4852 = vpack.c.b16 %v4372, %v4364
    %v4853 = vpack.c.b16 %v4373, %v4365
    %v4854 = vpack.c.b16 %v4374, %v4366
    %v4855 = vpack.c.b16 %v4375, %v4367
    %v4856 = vpack.c.b16 %v4376, %v4368
    %v4857 = vpack.c.b16 %v4377, %v4369
    %v4858 = vpack.c.b16 %v4378, %v4370
    %v4859 = vpack.c.b16 %v4379, %v4371
    %v4860 = vpack.c.b16 %v4388, %v4380
    %v4861 = vpack.c.b16 %v4389, %v4381
    %v4862 = vpack.c.b16 %v4390, %v4382
    %v4863 = vpack.c.b16 %v4391, %v4383
    %v4864 = vpack.c.b16 %v4392, %v4384
    %v4865 = vpack.c.b16 %v4393, %v4385
    %v4866 = vpack.c.b16 %v4394, %v4386
    %v4867 = vpack.c.b16 %v4395, %v4387
    %v4868 = vpack.c.b16 %v4404, %v4396
    %v4869 = vpack.c.b16 %v4405, %v4397
    %v4870 = vpack.c.b16 %v4406, %v4398
    %v4871 = vpack.c.b16 %v4407, %v4399
    %v4872 = vpack.c.b16 %v4408, %v4400
    %v4873 = vpack.c.b16 %v4409, %v4401
    %v4874 = vpack.c.b16 %v4410, %v4402
    %v4875 = vpack.c.b16 %v4411, %v4403
    %v4876 = vpack.c.b16 %v4420, %v4412
    %v4877 = vpack.c.b16 %v4421, %v4413
    %v4878 = vpack.c.b16 %v4422, %v4414
    %v4879 = vpack.c.b16 %v4423, %v4415
    %v4880 = vpack.c.b16 %v4424, %v4416
    %v4881 = vpack.c.b16 %v4425, %v4417
    %v4882 = vpack.c.b16 %v4426, %v4418
    %v4883 = vpack.c.b16 %v4427, %v4419
    %v4884 = vpack.c.b16 %v4436, %v4428
    %v4885 = vpack.c.b16 %v4437, %v4429
    %v4886 = vpack.c.b16 %v4438, %v4430
    %v4887 = vpack.c.b16 %v4439, %v4431
    %v4888 = vpack.c.b16 %v4440, %v4432
    %v4889 = vpack.c.b16 %v4441, %v4433
    %v4890 = vpack.c.b16 %v4442, %v4434
    %v4891 = vpack.c.b16 %v4443, %v4435
    %v4892 = vpack.c.b16 %v4452, %v4444
    %v4893 = vpack.c.b16 %v4453, %v4445
    %v4894 = vpack.c.b16 %v4454, %v4446
    %v4895 = vpack.c.b16 %v4455, %v4447
    %v4896 = vpack.c.b16 %v4456, %v4448
    %v4897 = vpack.c.b16 %v4457, %v4449
    %v4898 = vpack.c.b16 %v4458, %v4450
    %v4899 = vpack.c.b16 %v4459, %v4451
    %v4900 = vpack.c.b16 %v4468, %v4460
    %v4901 = vpack.c.b16 %v4469, %v4461
    %v4902 = vpack.c.b16 %v4470, %v4462
    %v4903 = vpack.c.b16 %v4471, %v4463
    %v4904 = vpack.c.b16 %v4472, %v4464
    %v4905 = vpack.c.b16 %v4473, %v4465
    %v4906 = vpack.c.b16 %v4474, %v4466
    %v4907 = vpack.c.b16 %v4475, %v4467
    %v4908 = vpack.c.b16 %v4484, %v4476
    %v4909 = vpack.c.b16 %v4485, %v4477
    %v4910 = vpack.c.b16 %v4486, %v4478
    %v4911 = vpack.c.b16 %v4487, %v4479
    %v4912 = vpack.c.b16 %v4488, %v4480
    %v4913 = vpack.c.b16 %v4489, %v4481
    %v4914 = vpack.c.b16 %v4490, %v4482
    %v4915 = vpack.c.b16 %v4491, %v4483
    %v4916 = vpack.c.b16 %v4500, %v4492
    %v4917 = vpack.c.b16 %v4501, %v4493
    %v4918 = vpack.c.b16 %v4502, %v4494
    %v4919 = vpack.c.b16 %v4503, %v4495
    %v4920 = vpack.c.b16 %v4504, %v4496
    %v4921 = vpack.c.b16 %v4505, %v4497
    %v4922 = vpack.c.b16 %v4506, %v4498
    %v4923 = vpack.c.b16 %v4507, %v4499
    %v4924 = vpack.c.b16 %v4516, %v4508
    %v4925 = vpack.c.b16 %v4517, %v4509
    %v4926 = vpack.c.b16 %v4518, %v4510
    %v4927 = vpack.c.b16 %v4519, %v4511
    %v4928 = vpack.c.b16 %v4520, %v4512
    %v4929 = vpack.c.b16 %v4521, %v4513
    %v4930 = vpack.c.b16 %v4522, %v4514
    %v4931 = vpack.c.b16 %v4523, %v4515
    %v4932 = vpack.c.b16 %v4532, %v4524
    %v4933 = vpack.c.b16 %v4533, %v4525
    %v4934 = vpack.c.b16 %v4534, %v4526
    %v4935 = vpack.c.b16 %v4535, %v4527
    %v4936 = vpack.c.b16 %v4536, %v4528
    %v4937 = vpack.c.b16 %v4537, %v4529
    %v4938 = vpack.c.b16 %v4538, %v4530
    %v4939 = vpack.c.b16 %v4539, %v4531
    %v4940 = vpack.c.b16 %v4548, %v4540
    %v4941 = vpack.c.b16 %v4549, %v4541
    %v4942 = vpack.c.b16 %v4550, %v4542
    %v4943 = vpack.c.b16 %v4551, %v4543
    %v4944 = vpack.c.b16 %v4552, %v4544
    %v4945 = vpack.c.b16 %v4553, %v4545
    %v4946 = vpack.c.b16 %v4554, %v4546
    %v4947 = vpack.c.b16 %v4555, %v4547
    %v4948 = vpack.c.b16 %v4564, %v4556
    %v4949 = vpack.c.b16 %v4565, %v4557
    %v4950 = vpack.c.b16 %v4566, %v4558
    %v4951 = vpack.c.b16 %v4567, %v4559
    %v4952 = vpack.c.b16 %v4568, %v4560
    %v4953 = vpack.c.b16 %v4569, %v4561
    %v4954 = vpack.c.b16 %v4570, %v4562
    %v4955 = vpack.c.b16 %v4571, %v4563
    %v4956 = vpack.c.b16 %v4580, %v4572
    %v4957 = vpack.c.b16 %v4581, %v4573
    %v4958 = vpack.c.b16 %v4582, %v4574
    %v4959 = vpack.c.b16 %v4583, %v4575
    %v4960 = vpack.c.b16 %v4584, %v4576
    %v4961 = vpack.c.b16 %v4585, %v4577
    %v4962 = vpack.c.b16 %v4586, %v4578
    %v4963 = vpack.c.b16 %v4587, %v4579
    %v4964 = vpack.c.b16 %v4596, %v4588
    %v4965 = vpack.c.b16 %v4597, %v4589
    %v4966 = vpack.c.b16 %v4598, %v4590
    %v4967 = vpack.c.b16 %v4599, %v4591
    %v4968 = vpack.c.b16 %v4600, %v4592
    %v4969 = vpack.c.b16 %v4601, %v4593
    %v4970 = vpack.c.b16 %v4602, %v4594
    %v4971 = vpack.c.b16 %v4603, %v4595
    %v4972 = vpack.c.b16 %v4612, %v4604
    %v4973 = vpack.c.b16 %v4613, %v4605
    %v4974 = vpack.c.b16 %v4614, %v4606
    %v4975 = vpack.c.b16 %v4615, %v4607
    %v4976 = vpack.c.b16 %v4616, %v4608
    %v4977 = vpack.c.b16 %v4617, %v4609
    %v4978 = vpack.c.b16 %v4618, %v4610
    %v4979 = vpack.c.b16 %v4619, %v4611
    %v4980 = vpack.c.b16 %v4628, %v4620
    %v4981 = vpack.c.b16 %v4629, %v4621
    %v4982 = vpack.c.b16 %v4630, %v4622
    %v4983 = vpack.c.b16 %v4631, %v4623
    %v4984 = vpack.c.b16 %v4632, %v4624
    %v4985 = vpack.c.b16 %v4633, %v4625
    %v4986 = vpack.c.b16 %v4634, %v4626
    %v4987 = vpack.c.b16 %v4635, %v4627
    %v4988 = vpack.c.b16 %v4644, %v4636
    %v4989 = vpack.c.b16 %v4645, %v4637
    %v4990 = vpack.c.b16 %v4646, %v4638
    %v4991 = vpack.c.b16 %v4647, %v4639
    %v4992 = vpack.c.b16 %v4648, %v4640
    %v4993 = vpack.c.b16 %v4649, %v4641
    %v4994 = vpack.c.b16 %v4650, %v4642
    %v4995 = vpack.c.b16 %v4651, %v4643
    %v4996 = vpack.c.b16 %v4660, %v4652
    %v4997 = vpack.c.b16 %v4661, %v4653
    %v4998 = vpack.c.b16 %v4662, %v4654
    %v4999 = vpack.c.b16 %v4663, %v4655
    %v5000 = vpack.c.b16 %v4664, %v4656
    %v5001 = vpack.c.b16 %v4665, %v4657
    %v5002 = vpack.c.b16 %v4666, %v4658
    %v5003 = vpack.c.b16 %v4667, %v4659
    %v5004 = vpack.c.b16 %v4676, %v4668
    %v5005 = vpack.c.b16 %v4677, %v4669
    %v5006 = vpack.c.b16 %v4678, %v4670
    %v5007 = vpack.c.b16 %v4679, %v4671
    %v5008 = vpack.c.b16 %v4680, %v4672
    %v5009 = vpack.c.b16 %v4681, %v4673
    %v5010 = vpack.c.b16 %v4682, %v4674
    %v5011 = vpack.c.b16 %v4683, %v4675
    %v5012 = vpack.c.b16 %v4692, %v4684
    %v5013 = vpack.c.b16 %v4693, %v4685
    %v5014 = vpack.c.b16 %v4694, %v4686
    %v5015 = vpack.c.b16 %v4695, %v4687
    %v5016 = vpack.c.b16 %v4696, %v4688
    %v5017 = vpack.c.b16 %v4697, %v4689
    %v5018 = vpack.c.b16 %v4698, %v4690
    %v5019 = vpack.c.b16 %v4699, %v4691
    %v5020 = vpack.c.b16 %v4708, %v4700
    %v5021 = vpack.c.b16 %v4709, %v4701
    %v5022 = vpack.c.b16 %v4710, %v4702
    %v5023 = vpack.c.b16 %v4711, %v4703
    %v5024 = vpack.c.b16 %v4712, %v4704
    %v5025 = vpack.c.b16 %v4713, %v4705
    %v5026 = vpack.c.b16 %v4714, %v4706
    %v5027 = vpack.c.b16 %v4715, %v4707
    %v5028 = vpack.c.b16 %v4724, %v4716
    %v5029 = vpack.c.b16 %v4725, %v4717
    %v5030 = vpack.c.b16 %v4726, %v4718
    %v5031 = vpack.c.b16 %v4727, %v4719
    %v5032 = vpack.c.b16 %v4728, %v4720
    %v5033 = vpack.c.b16 %v4729, %v4721
    %v5034 = vpack.c.b16 %v4730, %v4722
    %v5035 = vpack.c.b16 %v4731, %v4723
    %v5036 = vpack.c.b16 %v4740, %v4732
    %v5037 = vpack.c.b16 %v4741, %v4733
    %v5038 = vpack.c.b16 %v4742, %v4734
    %v5039 = vpack.c.b16 %v4743, %v4735
    %v5040 = vpack.c.b16 %v4744, %v4736
    %v5041 = vpack.c.b16 %v4745, %v4737
    %v5042 = vpack.c.b16 %v4746, %v4738
    %v5043 = vpack.c.b16 %v4747, %v4739
    %v5044 = vpack.c.b16 %v4756, %v4748
    %v5045 = vpack.c.b16 %v4757, %v4749
    %v5046 = vpack.c.b16 %v4758, %v4750
    %v5047 = vpack.c.b16 %v4759, %v4751
    %v5048 = vpack.c.b16 %v4760, %v4752
    %v5049 = vpack.c.b16 %v4761, %v4753
    %v5050 = vpack.c.b16 %v4762, %v4754
    %v5051 = vpack.c.b16 %v4763, %v4755
    %v5052 = vpack.c.b16 %v4772, %v4764
    %v5053 = vpack.c.b16 %v4773, %v4765
    %v5054 = vpack.c.b16 %v4774, %v4766
    %v5055 = vpack.c.b16 %v4775, %v4767
    %v5056 = vpack.c.b16 %v4776, %v4768
    %v5057 = vpack.c.b16 %v4777, %v4769
    %v5058 = vpack.c.b16 %v4778, %v4770
    %v5059 = vpack.c.b16 %v4779, %v4771
    %v5060 = vpack.c.b16 %v4788, %v4780
    %v5061 = vpack.c.b16 %v4789, %v4781
    %v5062 = vpack.c.b16 %v4790, %v4782
    %v5063 = vpack.c.b16 %v4791, %v4783
    %v5064 = vpack.c.b16 %v4792, %v4784
    %v5065 = vpack.c.b16 %v4793, %v4785
    %v5066 = vpack.c.b16 %v4794, %v4786
    %v5067 = vpack.c.b16 %v4795, %v4787
    %v5068 = vpack.c.b16 %v4804, %v4796
    %v5069 = vpack.c.b16 %v4805, %v4797
    %v5070 = vpack.c.b16 %v4806, %v4798
    %v5071 = vpack.c.b16 %v4807, %v4799
    %v5072 = vpack.c.b16 %v4808, %v4800
    %v5073 = vpack.c.b16 %v4809, %v4801
    %v5074 = vpack.c.b16 %v4810, %v4802
    %v5075 = vpack.c.b16 %v4811, %v4803
    %v5076 = vpack.c.b16 %v4820, %v4812
    %v5077 = vpack.c.b16 %v4821, %v4813
    %v5078 = vpack.c.b16 %v4822, %v4814
    %v5079 = vpack.c.b16 %v4823, %v4815
    %v5080 = vpack.c.b16 %v4824, %v4816
    %v5081 = vpack.c.b16 %v4825, %v4817
    %v5082 = vpack.c.b16 %v4826, %v4818
    %v5083 = vpack.c.b16 %v4827, %v4819
    %5340 = vmatprep.subr.bf16.mxu0 %v4885
    %5341 = vmatpush1.bf16.msra.mxu0 %v4884
    %5342 = vmatprep.subr.bf16.mxu0 %v4877
    %5343 = vmatpush1.bf16.msra.mxu0 %v4876
    %5344 = vmatprep.subr.bf16.mxu0 %v4869
    %5345 = vmatpush1.bf16.msra.mxu0 %v4868
    %5346 = vmatprep.subr.bf16.mxu0 %v4861
    %5347 = vmatpush1.bf16.msra.mxu0 %v4860
    %5348 = vmatprep.subr.bf16.mxu0 %v4853
    %5349 = vmatpush1.bf16.msra.mxu0 %v4852
    %5350 = vmatprep.subr.bf16.mxu0 %v4845
    %5351 = vmatpush1.bf16.msra.mxu0 %v4844
    %5352 = vmatprep.subr.bf16.mxu0 %v4837
    %5353 = vmatpush1.bf16.msra.mxu0 %v4836
    %5354 = vmatprep.subr.bf16.mxu0 %v4829
    %5355 = vmatpush1.bf16.msra.mxu0 %v4828
    %5356 = vmatprep.subr.bf16.mxu0 %v4949
    %5357 = vmatpush2.bf16.msra.mxu0 %v4948
    %5358 = vmatprep.subr.bf16.mxu0 %v4941
    %5359 = vmatpush2.bf16.msra.mxu0 %v4940
    %5360 = vmatprep.subr.bf16.mxu0 %v4933
    %5361 = vmatpush2.bf16.msra.mxu0 %v4932
    %5362 = vmatprep.subr.bf16.mxu0 %v4925
    %5363 = vmatpush2.bf16.msra.mxu0 %v4924
    %5364 = vmatprep.subr.bf16.mxu0 %v4917
    %5365 = vmatpush2.bf16.msra.mxu0 %v4916
    %5366 = vmatprep.subr.bf16.mxu0 %v4909
    %5367 = vmatpush2.bf16.msra.mxu0 %v4908
    %5368 = vmatprep.subr.bf16.mxu0 %v4901
    %5369 = vmatpush2.bf16.msra.mxu0 %v4900
    %5370 = vmatprep.subr.bf16.mxu0 %v4893
    %5371 = vmatpush2.bf16.msra.mxu0 %v4892
    %5372 = vmatprep.mubr.bf16.mxu0 %v4045
    %5373 = vmatmul.mubr.bf16.gmra.mxu0 %v4044
    %v5374 = vpop.f32.mrf.mxu0
    %v5375 = vadd.f32 0.0, %v5374
    %v5376 = vpop.f32.mrf.mxu0
    %v5377 = vadd.f32 0.0, %v5376
    %v5378 = vpop.f32.mrf.mxu0
    %v5379 = vadd.f32 0.0, %v5378
    %v5380 = vpop.f32.mrf.mxu0
    %v5381 = vadd.f32 0.0, %v5380
    %5382 = vmatprep.mubr.bf16.mxu0 %v4049
    %5383 = vmatmul.mubr.bf16.gmra.mxu0 %v4048
    %v5384 = vpop.f32.mrf.mxu0
    %v5385 = vadd.f32 0.0, %v5384
    %v5386 = vpop.f32.mrf.mxu0
    %v5387 = vadd.f32 0.0, %v5386
    %v5388 = vpop.f32.mrf.mxu0
    %v5389 = vadd.f32 0.0, %v5388
    %v5390 = vpop.f32.mrf.mxu0
    %v5391 = vadd.f32 0.0, %v5390
    %5392 = vdwg.mxu0
    %5393 = vmatprep.subr.bf16.mxu0 %v5013
    %5394 = vmatpush1.bf16.msra.mxu0 %v5012
    %5395 = vmatprep.subr.bf16.mxu0 %v5005
    %5396 = vmatpush1.bf16.msra.mxu0 %v5004
    %5397 = vmatprep.subr.bf16.mxu0 %v4997
    %5398 = vmatpush1.bf16.msra.mxu0 %v4996
    %5399 = vmatprep.subr.bf16.mxu0 %v4989
    %5400 = vmatpush1.bf16.msra.mxu0 %v4988
    %5401 = vmatprep.subr.bf16.mxu0 %v4981
    %5402 = vmatpush1.bf16.msra.mxu0 %v4980
    %5403 = vmatprep.subr.bf16.mxu0 %v4973
    %5404 = vmatpush1.bf16.msra.mxu0 %v4972
    %5405 = vmatprep.subr.bf16.mxu0 %v4965
    %5406 = vmatpush1.bf16.msra.mxu0 %v4964
    %5407 = vmatprep.subr.bf16.mxu0 %v4957
    %5408 = vmatpush1.bf16.msra.mxu0 %v4956
    %5409 = vmatprep.subr.bf16.mxu0 %v5077
    %5410 = vmatpush2.bf16.msra.mxu0 %v5076
    %5411 = vmatprep.subr.bf16.mxu0 %v5069
    %5412 = vmatpush2.bf16.msra.mxu0 %v5068
    %5413 = vmatprep.subr.bf16.mxu0 %v5061
    %5414 = vmatpush2.bf16.msra.mxu0 %v5060
    %5415 = vmatprep.subr.bf16.mxu0 %v5053
    %5416 = vmatpush2.bf16.msra.mxu0 %v5052
    %5417 = vmatprep.subr.bf16.mxu0 %v5045
    %5418 = vmatpush2.bf16.msra.mxu0 %v5044
    %5419 = vmatprep.subr.bf16.mxu0 %v5037
    %5420 = vmatpush2.bf16.msra.mxu0 %v5036
    %5421 = vmatprep.subr.bf16.mxu0 %v5029
    %5422 = vmatpush2.bf16.msra.mxu0 %v5028
    %5423 = vmatprep.subr.bf16.mxu0 %v5021
    %5424 = vmatpush2.bf16.msra.mxu0 %v5020
    %5425 = vmatprep.mubr.bf16.mxu0 %v4047
    %5426 = vmatmul.mubr.bf16.gmra.mxu0 %v4046
    %v5427 = vpop.f32.mrf.mxu0
    %v5428 = vadd.f32 %v5375, %v5427
    %v5429 = vpop.f32.mrf.mxu0
    %v5430 = vadd.f32 %v5377, %v5429
    %v5431 = vpop.f32.mrf.mxu0
    %v5432 = vadd.f32 %v5379, %v5431
    %v5433 = vpop.f32.mrf.mxu0
    %v5434 = vadd.f32 %v5381, %v5433
    %5435 = vmatprep.mubr.bf16.mxu0 %v4051
    %5436 = vmatmul.mubr.bf16.gmra.mxu0 %v4050
    %v5437 = vpop.f32.mrf.mxu0
    %v5438 = vadd.f32 %v5385, %v5437
    %v5439 = vpop.f32.mrf.mxu0
    %v5440 = vadd.f32 %v5387, %v5439
    %v5441 = vpop.f32.mrf.mxu0
    %v5442 = vadd.f32 %v5389, %v5441
    %v5443 = vpop.f32.mrf.mxu0
    %v5444 = vadd.f32 %v5391, %v5443
    %5445 = vdwg.mxu0
    %5446 = vmatprep.subr.bf16.mxu0 %v4887
    %5447 = vmatpush1.bf16.msra.mxu0 %v4886
    %5448 = vmatprep.subr.bf16.mxu0 %v4879
    %5449 = vmatpush1.bf16.msra.mxu0 %v4878
    %5450 = vmatprep.subr.bf16.mxu0 %v4871
    %5451 = vmatpush1.bf16.msra.mxu0 %v4870
    %5452 = vmatprep.subr.bf16.mxu0 %v4863
    %5453 = vmatpush1.bf16.msra.mxu0 %v4862
    %5454 = vmatprep.subr.bf16.mxu0 %v4855
    %5455 = vmatpush1.bf16.msra.mxu0 %v4854
    %5456 = vmatprep.subr.bf16.mxu0 %v4847
    %5457 = vmatpush1.bf16.msra.mxu0 %v4846
    %5458 = vmatprep.subr.bf16.mxu0 %v4839
    %5459 = vmatpush1.bf16.msra.mxu0 %v4838
    %5460 = vmatprep.subr.bf16.mxu0 %v4831
    %5461 = vmatpush1.bf16.msra.mxu0 %v4830
    %5462 = vmatprep.subr.bf16.mxu0 %v4951
    %5463 = vmatpush2.bf16.msra.mxu0 %v4950
    %5464 = vmatprep.subr.bf16.mxu0 %v4943
    %5465 = vmatpush2.bf16.msra.mxu0 %v4942
    %5466 = vmatprep.subr.bf16.mxu0 %v4935
    %5467 = vmatpush2.bf16.msra.mxu0 %v4934
    %5468 = vmatprep.subr.bf16.mxu0 %v4927
    %5469 = vmatpush2.bf16.msra.mxu0 %v4926
    %5470 = vmatprep.subr.bf16.mxu0 %v4919
    %5471 = vmatpush2.bf16.msra.mxu0 %v4918
    %5472 = vmatprep.subr.bf16.mxu0 %v4911
    %5473 = vmatpush2.bf16.msra.mxu0 %v4910
    %5474 = vmatprep.subr.bf16.mxu0 %v4903
    %5475 = vmatpush2.bf16.msra.mxu0 %v4902
    %5476 = vmatprep.subr.bf16.mxu0 %v4895
    %5477 = vmatpush2.bf16.msra.mxu0 %v4894
    %5478 = vmatprep.mubr.bf16.mxu0 %v4045
    %5479 = vmatmul.mubr.bf16.gmra.mxu0 %v4044
    %v5480 = vpop.f32.mrf.mxu0
    %v5481 = vadd.f32 0.0, %v5480
    %v5482 = vpop.f32.mrf.mxu0
    %v5483 = vadd.f32 0.0, %v5482
    %v5484 = vpop.f32.mrf.mxu0
    %v5485 = vadd.f32 0.0, %v5484
    %v5486 = vpop.f32.mrf.mxu0
    %v5487 = vadd.f32 0.0, %v5486
    %5488 = vmatprep.mubr.bf16.mxu0 %v4049
    %5489 = vmatmul.mubr.bf16.gmra.mxu0 %v4048
    %v5490 = vpop.f32.mrf.mxu0
    %v5491 = vadd.f32 0.0, %v5490
    %v5492 = vpop.f32.mrf.mxu0
    %v5493 = vadd.f32 0.0, %v5492
    %v5494 = vpop.f32.mrf.mxu0
    %v5495 = vadd.f32 0.0, %v5494
    %v5496 = vpop.f32.mrf.mxu0
    %v5497 = vadd.f32 0.0, %v5496
    %5498 = vdwg.mxu0
    %5499 = vmatprep.subr.bf16.mxu0 %v5015
    %5500 = vmatpush1.bf16.msra.mxu0 %v5014
    %5501 = vmatprep.subr.bf16.mxu0 %v5007
    %5502 = vmatpush1.bf16.msra.mxu0 %v5006
    %5503 = vmatprep.subr.bf16.mxu0 %v4999
    %5504 = vmatpush1.bf16.msra.mxu0 %v4998
    %5505 = vmatprep.subr.bf16.mxu0 %v4991
    %5506 = vmatpush1.bf16.msra.mxu0 %v4990
    %5507 = vmatprep.subr.bf16.mxu0 %v4983
    %5508 = vmatpush1.bf16.msra.mxu0 %v4982
    %5509 = vmatprep.subr.bf16.mxu0 %v4975
    %5510 = vmatpush1.bf16.msra.mxu0 %v4974
    %5511 = vmatprep.subr.bf16.mxu0 %v4967
    %5512 = vmatpush1.bf16.msra.mxu0 %v4966
    %5513 = vmatprep.subr.bf16.mxu0 %v4959
    %5514 = vmatpush1.bf16.msra.mxu0 %v4958
    %5515 = vmatprep.subr.bf16.mxu0 %v5079
    %5516 = vmatpush2.bf16.msra.mxu0 %v5078
    %5517 = vmatprep.subr.bf16.mxu0 %v5071
    %5518 = vmatpush2.bf16.msra.mxu0 %v5070
    %5519 = vmatprep.subr.bf16.mxu0 %v5063
    %5520 = vmatpush2.bf16.msra.mxu0 %v5062
    %5521 = vmatprep.subr.bf16.mxu0 %v5055
    %5522 = vmatpush2.bf16.msra.mxu0 %v5054
    %5523 = vmatprep.subr.bf16.mxu0 %v5047
    %5524 = vmatpush2.bf16.msra.mxu0 %v5046
    %5525 = vmatprep.subr.bf16.mxu0 %v5039
    %5526 = vmatpush2.bf16.msra.mxu0 %v5038
    %5527 = vmatprep.subr.bf16.mxu0 %v5031
    %5528 = vmatpush2.bf16.msra.mxu0 %v5030
    %5529 = vmatprep.subr.bf16.mxu0 %v5023
    %5530 = vmatpush2.bf16.msra.mxu0 %v5022
    %5531 = vmatprep.mubr.bf16.mxu0 %v4047
    %5532 = vmatmul.mubr.bf16.gmra.mxu0 %v4046
    %v5533 = vpop.f32.mrf.mxu0
    %v5534 = vadd.f32 %v5481, %v5533
    %v5535 = vpop.f32.mrf.mxu0
    %v5536 = vadd.f32 %v5483, %v5535
    %v5537 = vpop.f32.mrf.mxu0
    %v5538 = vadd.f32 %v5485, %v5537
    %v5539 = vpop.f32.mrf.mxu0
    %v5540 = vadd.f32 %v5487, %v5539
    %5541 = vmatprep.mubr.bf16.mxu0 %v4051
    %5542 = vmatmul.mubr.bf16.gmra.mxu0 %v4050
    %v5543 = vpop.f32.mrf.mxu0
    %v5544 = vadd.f32 %v5491, %v5543
    %v5545 = vpop.f32.mrf.mxu0
    %v5546 = vadd.f32 %v5493, %v5545
    %v5547 = vpop.f32.mrf.mxu0
    %v5548 = vadd.f32 %v5495, %v5547
    %v5549 = vpop.f32.mrf.mxu0
    %v5550 = vadd.f32 %v5497, %v5549
    %5551 = vdwg.mxu0
    %5552 = vmatprep.subr.bf16.mxu0 %v4889
    %5553 = vmatpush1.bf16.msra.mxu0 %v4888
    %5554 = vmatprep.subr.bf16.mxu0 %v4881
    %5555 = vmatpush1.bf16.msra.mxu0 %v4880
    %5556 = vmatprep.subr.bf16.mxu0 %v4873
    %5557 = vmatpush1.bf16.msra.mxu0 %v4872
    %5558 = vmatprep.subr.bf16.mxu0 %v4865
    %5559 = vmatpush1.bf16.msra.mxu0 %v4864
    %5560 = vmatprep.subr.bf16.mxu0 %v4857
    %5561 = vmatpush1.bf16.msra.mxu0 %v4856
    %5562 = vmatprep.subr.bf16.mxu0 %v4849
    %5563 = vmatpush1.bf16.msra.mxu0 %v4848
    %5564 = vmatprep.subr.bf16.mxu0 %v4841
    %5565 = vmatpush1.bf16.msra.mxu0 %v4840
    %5566 = vmatprep.subr.bf16.mxu0 %v4833
    %5567 = vmatpush1.bf16.msra.mxu0 %v4832
    %5568 = vmatprep.subr.bf16.mxu0 %v4953
    %5569 = vmatpush2.bf16.msra.mxu0 %v4952
    %5570 = vmatprep.subr.bf16.mxu0 %v4945
    %5571 = vmatpush2.bf16.msra.mxu0 %v4944
    %5572 = vmatprep.subr.bf16.mxu0 %v4937
    %5573 = vmatpush2.bf16.msra.mxu0 %v4936
    %5574 = vmatprep.subr.bf16.mxu0 %v4929
    %5575 = vmatpush2.bf16.msra.mxu0 %v4928
    %5576 = vmatprep.subr.bf16.mxu0 %v4921
    %5577 = vmatpush2.bf16.msra.mxu0 %v4920
    %5578 = vmatprep.subr.bf16.mxu0 %v4913
    %5579 = vmatpush2.bf16.msra.mxu0 %v4912
    %5580 = vmatprep.subr.bf16.mxu0 %v4905
    %5581 = vmatpush2.bf16.msra.mxu0 %v4904
    %5582 = vmatprep.subr.bf16.mxu0 %v4897
    %5583 = vmatpush2.bf16.msra.mxu0 %v4896
    %5584 = vmatprep.mubr.bf16.mxu0 %v4045
    %5585 = vmatmul.mubr.bf16.gmra.mxu0 %v4044
    %v5586 = vpop.f32.mrf.mxu0
    %v5587 = vadd.f32 0.0, %v5586
    %v5588 = vpop.f32.mrf.mxu0
    %v5589 = vadd.f32 0.0, %v5588
    %v5590 = vpop.f32.mrf.mxu0
    %v5591 = vadd.f32 0.0, %v5590
    %v5592 = vpop.f32.mrf.mxu0
    %v5593 = vadd.f32 0.0, %v5592
    %5594 = vmatprep.mubr.bf16.mxu0 %v4049
    %5595 = vmatmul.mubr.bf16.gmra.mxu0 %v4048
    %v5596 = vpop.f32.mrf.mxu0
    %v5597 = vadd.f32 0.0, %v5596
    %v5598 = vpop.f32.mrf.mxu0
    %v5599 = vadd.f32 0.0, %v5598
    %v5600 = vpop.f32.mrf.mxu0
    %v5601 = vadd.f32 0.0, %v5600
    %v5602 = vpop.f32.mrf.mxu0
    %v5603 = vadd.f32 0.0, %v5602
    %5604 = vdwg.mxu0
    %5605 = vmatprep.subr.bf16.mxu0 %v5017
    %5606 = vmatpush1.bf16.msra.mxu0 %v5016
    %5607 = vmatprep.subr.bf16.mxu0 %v5009
    %5608 = vmatpush1.bf16.msra.mxu0 %v5008
    %5609 = vmatprep.subr.bf16.mxu0 %v5001
    %5610 = vmatpush1.bf16.msra.mxu0 %v5000
    %5611 = vmatprep.subr.bf16.mxu0 %v4993
    %5612 = vmatpush1.bf16.msra.mxu0 %v4992
    %5613 = vmatprep.subr.bf16.mxu0 %v4985
    %5614 = vmatpush1.bf16.msra.mxu0 %v4984
    %5615 = vmatprep.subr.bf16.mxu0 %v4977
    %5616 = vmatpush1.bf16.msra.mxu0 %v4976
    %5617 = vmatprep.subr.bf16.mxu0 %v4969
    %5618 = vmatpush1.bf16.msra.mxu0 %v4968
    %5619 = vmatprep.subr.bf16.mxu0 %v4961
    %5620 = vmatpush1.bf16.msra.mxu0 %v4960
    %5621 = vmatprep.subr.bf16.mxu0 %v5081
    %5622 = vmatpush2.bf16.msra.mxu0 %v5080
    %5623 = vmatprep.subr.bf16.mxu0 %v5073
    %5624 = vmatpush2.bf16.msra.mxu0 %v5072
    %5625 = vmatprep.subr.bf16.mxu0 %v5065
    %5626 = vmatpush2.bf16.msra.mxu0 %v5064
    %5627 = vmatprep.subr.bf16.mxu0 %v5057
    %5628 = vmatpush2.bf16.msra.mxu0 %v5056
    %5629 = vmatprep.subr.bf16.mxu0 %v5049
    %5630 = vmatpush2.bf16.msra.mxu0 %v5048
    %5631 = vmatprep.subr.bf16.mxu0 %v5041
    %5632 = vmatpush2.bf16.msra.mxu0 %v5040
    %5633 = vmatprep.subr.bf16.mxu0 %v5033
    %5634 = vmatpush2.bf16.msra.mxu0 %v5032
    %5635 = vmatprep.subr.bf16.mxu0 %v5025
    %5636 = vmatpush2.bf16.msra.mxu0 %v5024
    %5637 = vmatprep.mubr.bf16.mxu0 %v4047
    %5638 = vmatmul.mubr.bf16.gmra.mxu0 %v4046
    %v5639 = vpop.f32.mrf.mxu0
    %v5640 = vadd.f32 %v5587, %v5639
    %v5641 = vpop.f32.mrf.mxu0
    %v5642 = vadd.f32 %v5589, %v5641
    %v5643 = vpop.f32.mrf.mxu0
    %v5644 = vadd.f32 %v5591, %v5643
    %v5645 = vpop.f32.mrf.mxu0
    %v5646 = vadd.f32 %v5593, %v5645
    %5647 = vmatprep.mubr.bf16.mxu0 %v4051
    %5648 = vmatmul.mubr.bf16.gmra.mxu0 %v4050
    %v5649 = vpop.f32.mrf.mxu0
    %v5650 = vadd.f32 %v5597, %v5649
    %v5651 = vpop.f32.mrf.mxu0
    %v5652 = vadd.f32 %v5599, %v5651
    %v5653 = vpop.f32.mrf.mxu0
    %v5654 = vadd.f32 %v5601, %v5653
    %v5655 = vpop.f32.mrf.mxu0
    %v5656 = vadd.f32 %v5603, %v5655
    %5657 = vdwg.mxu0
    %5658 = vmatprep.subr.bf16.mxu0 %v4891
    %5659 = vmatpush1.bf16.msra.mxu0 %v4890
    %5660 = vmatprep.subr.bf16.mxu0 %v4883
    %5661 = vmatpush1.bf16.msra.mxu0 %v4882
    %5662 = vmatprep.subr.bf16.mxu0 %v4875
    %5663 = vmatpush1.bf16.msra.mxu0 %v4874
    %5664 = vmatprep.subr.bf16.mxu0 %v4867
    %5665 = vmatpush1.bf16.msra.mxu0 %v4866
    %5666 = vmatprep.subr.bf16.mxu0 %v4859
    %5667 = vmatpush1.bf16.msra.mxu0 %v4858
    %5668 = vmatprep.subr.bf16.mxu0 %v4851
    %5669 = vmatpush1.bf16.msra.mxu0 %v4850
    %5670 = vmatprep.subr.bf16.mxu0 %v4843
    %5671 = vmatpush1.bf16.msra.mxu0 %v4842
    %5672 = vmatprep.subr.bf16.mxu0 %v4835
    %5673 = vmatpush1.bf16.msra.mxu0 %v4834
    %5674 = vmatprep.subr.bf16.mxu0 %v4955
    %5675 = vmatpush2.bf16.msra.mxu0 %v4954
    %5676 = vmatprep.subr.bf16.mxu0 %v4947
    %5677 = vmatpush2.bf16.msra.mxu0 %v4946
    %5678 = vmatprep.subr.bf16.mxu0 %v4939
    %5679 = vmatpush2.bf16.msra.mxu0 %v4938
    %5680 = vmatprep.subr.bf16.mxu0 %v4931
    %5681 = vmatpush2.bf16.msra.mxu0 %v4930
    %5682 = vmatprep.subr.bf16.mxu0 %v4923
    %5683 = vmatpush2.bf16.msra.mxu0 %v4922
    %5684 = vmatprep.subr.bf16.mxu0 %v4915
    %5685 = vmatpush2.bf16.msra.mxu0 %v4914
    %5686 = vmatprep.subr.bf16.mxu0 %v4907
    %5687 = vmatpush2.bf16.msra.mxu0 %v4906
    %5688 = vmatprep.subr.bf16.mxu0 %v4899
    %5689 = vmatpush2.bf16.msra.mxu0 %v4898
    %5690 = vmatprep.mubr.bf16.mxu0 %v4045
    %5691 = vmatmul.mubr.bf16.gmra.mxu0 %v4044
    %v5692 = vpop.f32.mrf.mxu0
    %v5693 = vadd.f32 0.0, %v5692
    %v5694 = vpop.f32.mrf.mxu0
    %v5695 = vadd.f32 0.0, %v5694
    %v5696 = vpop.f32.mrf.mxu0
    %v5697 = vadd.f32 0.0, %v5696
    %v5698 = vpop.f32.mrf.mxu0
    %v5699 = vadd.f32 0.0, %v5698
    %5700 = vmatprep.mubr.bf16.mxu0 %v4049
    %5701 = vmatmul.mubr.bf16.gmra.mxu0 %v4048
    %v5702 = vpop.f32.mrf.mxu0
    %v5703 = vadd.f32 0.0, %v5702
    %v5704 = vpop.f32.mrf.mxu0
    %v5705 = vadd.f32 0.0, %v5704
    %v5706 = vpop.f32.mrf.mxu0
    %v5707 = vadd.f32 0.0, %v5706
    %v5708 = vpop.f32.mrf.mxu0
    %v5709 = vadd.f32 0.0, %v5708
    %5710 = vdwg.mxu0
    %5711 = vmatprep.subr.bf16.mxu0 %v5019
    %5712 = vmatpush1.bf16.msra.mxu0 %v5018
    %5713 = vmatprep.subr.bf16.mxu0 %v5011
    %5714 = vmatpush1.bf16.msra.mxu0 %v5010
    %5715 = vmatprep.subr.bf16.mxu0 %v5003
    %5716 = vmatpush1.bf16.msra.mxu0 %v5002
    %5717 = vmatprep.subr.bf16.mxu0 %v4995
    %5718 = vmatpush1.bf16.msra.mxu0 %v4994
    %5719 = vmatprep.subr.bf16.mxu0 %v4987
    %5720 = vmatpush1.bf16.msra.mxu0 %v4986
    %5721 = vmatprep.subr.bf16.mxu0 %v4979
    %5722 = vmatpush1.bf16.msra.mxu0 %v4978
    %5723 = vmatprep.subr.bf16.mxu0 %v4971
    %5724 = vmatpush1.bf16.msra.mxu0 %v4970
    %5725 = vmatprep.subr.bf16.mxu0 %v4963
    %5726 = vmatpush1.bf16.msra.mxu0 %v4962
    %5727 = vmatprep.subr.bf16.mxu0 %v5083
    %5728 = vmatpush2.bf16.msra.mxu0 %v5082
    %5729 = vmatprep.subr.bf16.mxu0 %v5075
    %5730 = vmatpush2.bf16.msra.mxu0 %v5074
    %5731 = vmatprep.subr.bf16.mxu0 %v5067
    %5732 = vmatpush2.bf16.msra.mxu0 %v5066
    %5733 = vmatprep.subr.bf16.mxu0 %v5059
    %5734 = vmatpush2.bf16.msra.mxu0 %v5058
    %5735 = vmatprep.subr.bf16.mxu0 %v5051
    %5736 = vmatpush2.bf16.msra.mxu0 %v5050
    %5737 = vmatprep.subr.bf16.mxu0 %v5043
    %5738 = vmatpush2.bf16.msra.mxu0 %v5042
    %5739 = vmatprep.subr.bf16.mxu0 %v5035
    %5740 = vmatpush2.bf16.msra.mxu0 %v5034
    %5741 = vmatprep.subr.bf16.mxu0 %v5027
    %5742 = vmatpush2.bf16.msra.mxu0 %v5026
    %5743 = vmatprep.mubr.bf16.mxu0 %v4047
    %5744 = vmatmul.mubr.bf16.gmra.mxu0 %v4046
    %v5745 = vpop.f32.mrf.mxu0
    %v5746 = vadd.f32 %v5693, %v5745
    %v5747 = vpop.f32.mrf.mxu0
    %v5748 = vadd.f32 %v5695, %v5747
    %v5749 = vpop.f32.mrf.mxu0
    %v5750 = vadd.f32 %v5697, %v5749
    %v5751 = vpop.f32.mrf.mxu0
    %v5752 = vadd.f32 %v5699, %v5751
    %5753 = vmatprep.mubr.bf16.mxu0 %v4051
    %5754 = vmatmul.mubr.bf16.gmra.mxu0 %v4050
    %v5755 = vpop.f32.mrf.mxu0
    %v5756 = vadd.f32 %v5703, %v5755
    %v5757 = vpop.f32.mrf.mxu0
    %v5758 = vadd.f32 %v5705, %v5757
    %v5759 = vpop.f32.mrf.mxu0
    %v5760 = vadd.f32 %v5707, %v5759
    %v5761 = vpop.f32.mrf.mxu0
    %v5762 = vadd.f32 %v5709, %v5761
    %5763 = vdwg.mxu0
    %v5772 = vunpack.c.l.b16 %v3404
    %v5773 = vunpack.c.h.b16 %v3404
    %v5774 = vunpack.c.l.b16 %v3405
    %v5775 = vunpack.c.h.b16 %v3405
    %v5776 = vunpack.c.l.b16 %v3406
    %v5777 = vunpack.c.h.b16 %v3406
    %v5778 = vunpack.c.l.b16 %v3407
    %v5779 = vunpack.c.h.b16 %v3407
    %v5780 = vunpack.c.l.b16 %v3408
    %v5781 = vunpack.c.h.b16 %v3408
    %v5782 = vunpack.c.l.b16 %v3409
    %v5783 = vunpack.c.h.b16 %v3409
    %v5784 = vunpack.c.l.b16 %v3410
    %v5785 = vunpack.c.h.b16 %v3410
    %v5786 = vunpack.c.l.b16 %v3411
    %v5787 = vunpack.c.h.b16 %v3411
    %v5788 = vpack.c.b16 %v5776, %v5772
    %v5789 = vpack.c.b16 %v5777, %v5773
    %v5790 = vpack.c.b16 %v5778, %v5774
    %v5791 = vpack.c.b16 %v5779, %v5775
    %v5792 = vpack.c.b16 %v5784, %v5780
    %v5793 = vpack.c.b16 %v5785, %v5781
    %v5794 = vpack.c.b16 %v5786, %v5782
    %v5795 = vpack.c.b16 %v5787, %v5783
    %v6060 = vunpack.c.l.b16 %v3412
    %v6061 = vunpack.c.h.b16 %v3412
    %v6062 = vunpack.c.l.b16 %v3413
    %v6063 = vunpack.c.h.b16 %v3413
    %v6064 = vunpack.c.l.b16 %v3414
    %v6065 = vunpack.c.h.b16 %v3414
    %v6066 = vunpack.c.l.b16 %v3415
    %v6067 = vunpack.c.h.b16 %v3415
    %v6068 = vunpack.c.l.b16 %v3416
    %v6069 = vunpack.c.h.b16 %v3416
    %v6070 = vunpack.c.l.b16 %v3417
    %v6071 = vunpack.c.h.b16 %v3417
    %v6072 = vunpack.c.l.b16 %v3418
    %v6073 = vunpack.c.h.b16 %v3418
    %v6074 = vunpack.c.l.b16 %v3419
    %v6075 = vunpack.c.h.b16 %v3419
    %v6076 = vunpack.c.l.b16 %v3420
    %v6077 = vunpack.c.h.b16 %v3420
    %v6078 = vunpack.c.l.b16 %v3421
    %v6079 = vunpack.c.h.b16 %v3421
    %v6080 = vunpack.c.l.b16 %v3422
    %v6081 = vunpack.c.h.b16 %v3422
    %v6082 = vunpack.c.l.b16 %v3423
    %v6083 = vunpack.c.h.b16 %v3423
    %v6084 = vunpack.c.l.b16 %v3424
    %v6085 = vunpack.c.h.b16 %v3424
    %v6086 = vunpack.c.l.b16 %v3425
    %v6087 = vunpack.c.h.b16 %v3425
    %v6088 = vunpack.c.l.b16 %v3426
    %v6089 = vunpack.c.h.b16 %v3426
    %v6090 = vunpack.c.l.b16 %v3427
    %v6091 = vunpack.c.h.b16 %v3427
    %v6092 = vunpack.c.l.b16 %v3428
    %v6093 = vunpack.c.h.b16 %v3428
    %v6094 = vunpack.c.l.b16 %v3429
    %v6095 = vunpack.c.h.b16 %v3429
    %v6096 = vunpack.c.l.b16 %v3430
    %v6097 = vunpack.c.h.b16 %v3430
    %v6098 = vunpack.c.l.b16 %v3431
    %v6099 = vunpack.c.h.b16 %v3431
    %v6100 = vunpack.c.l.b16 %v3432
    %v6101 = vunpack.c.h.b16 %v3432
    %v6102 = vunpack.c.l.b16 %v3433
    %v6103 = vunpack.c.h.b16 %v3433
    %v6104 = vunpack.c.l.b16 %v3434
    %v6105 = vunpack.c.h.b16 %v3434
    %v6106 = vunpack.c.l.b16 %v3435
    %v6107 = vunpack.c.h.b16 %v3435
    %v6108 = vunpack.c.l.b16 %v3436
    %v6109 = vunpack.c.h.b16 %v3436
    %v6110 = vunpack.c.l.b16 %v3437
    %v6111 = vunpack.c.h.b16 %v3437
    %v6112 = vunpack.c.l.b16 %v3438
    %v6113 = vunpack.c.h.b16 %v3438
    %v6114 = vunpack.c.l.b16 %v3439
    %v6115 = vunpack.c.h.b16 %v3439
    %v6116 = vunpack.c.l.b16 %v3440
    %v6117 = vunpack.c.h.b16 %v3440
    %v6118 = vunpack.c.l.b16 %v3441
    %v6119 = vunpack.c.h.b16 %v3441
    %v6120 = vunpack.c.l.b16 %v3442
    %v6121 = vunpack.c.h.b16 %v3442
    %v6122 = vunpack.c.l.b16 %v3443
    %v6123 = vunpack.c.h.b16 %v3443
    %v6124 = vunpack.c.l.b16 %v3444
    %v6125 = vunpack.c.h.b16 %v3444
    %v6126 = vunpack.c.l.b16 %v3445
    %v6127 = vunpack.c.h.b16 %v3445
    %v6128 = vunpack.c.l.b16 %v3446
    %v6129 = vunpack.c.h.b16 %v3446
    %v6130 = vunpack.c.l.b16 %v3447
    %v6131 = vunpack.c.h.b16 %v3447
    %v6132 = vunpack.c.l.b16 %v3448
    %v6133 = vunpack.c.h.b16 %v3448
    %v6134 = vunpack.c.l.b16 %v3449
    %v6135 = vunpack.c.h.b16 %v3449
    %v6136 = vunpack.c.l.b16 %v3450
    %v6137 = vunpack.c.h.b16 %v3450
    %v6138 = vunpack.c.l.b16 %v3451
    %v6139 = vunpack.c.h.b16 %v3451
    %v6140 = vunpack.c.l.b16 %v3452
    %v6141 = vunpack.c.h.b16 %v3452
    %v6142 = vunpack.c.l.b16 %v3453
    %v6143 = vunpack.c.h.b16 %v3453
    %v6144 = vunpack.c.l.b16 %v3454
    %v6145 = vunpack.c.h.b16 %v3454
    %v6146 = vunpack.c.l.b16 %v3455
    %v6147 = vunpack.c.h.b16 %v3455
    %v6148 = vunpack.c.l.b16 %v3456
    %v6149 = vunpack.c.h.b16 %v3456
    %v6150 = vunpack.c.l.b16 %v3457
    %v6151 = vunpack.c.h.b16 %v3457
    %v6152 = vunpack.c.l.b16 %v3458
    %v6153 = vunpack.c.h.b16 %v3458
    %v6154 = vunpack.c.l.b16 %v3459
    %v6155 = vunpack.c.h.b16 %v3459
    %v6156 = vunpack.c.l.b16 %v3460
    %v6157 = vunpack.c.h.b16 %v3460
    %v6158 = vunpack.c.l.b16 %v3461
    %v6159 = vunpack.c.h.b16 %v3461
    %v6160 = vunpack.c.l.b16 %v3462
    %v6161 = vunpack.c.h.b16 %v3462
    %v6162 = vunpack.c.l.b16 %v3463
    %v6163 = vunpack.c.h.b16 %v3463
    %v6164 = vunpack.c.l.b16 %v3464
    %v6165 = vunpack.c.h.b16 %v3464
    %v6166 = vunpack.c.l.b16 %v3465
    %v6167 = vunpack.c.h.b16 %v3465
    %v6168 = vunpack.c.l.b16 %v3466
    %v6169 = vunpack.c.h.b16 %v3466
    %v6170 = vunpack.c.l.b16 %v3467
    %v6171 = vunpack.c.h.b16 %v3467
    %v6172 = vunpack.c.l.b16 %v3468
    %v6173 = vunpack.c.h.b16 %v3468
    %v6174 = vunpack.c.l.b16 %v3469
    %v6175 = vunpack.c.h.b16 %v3469
    %v6176 = vunpack.c.l.b16 %v3470
    %v6177 = vunpack.c.h.b16 %v3470
    %v6178 = vunpack.c.l.b16 %v3471
    %v6179 = vunpack.c.h.b16 %v3471
    %v6180 = vunpack.c.l.b16 %v3472
    %v6181 = vunpack.c.h.b16 %v3472
    %v6182 = vunpack.c.l.b16 %v3473
    %v6183 = vunpack.c.h.b16 %v3473
    %v6184 = vunpack.c.l.b16 %v3474
    %v6185 = vunpack.c.h.b16 %v3474
    %v6186 = vunpack.c.l.b16 %v3475
    %v6187 = vunpack.c.h.b16 %v3475
    %v6188 = vunpack.c.l.b16 %v3476
    %v6189 = vunpack.c.h.b16 %v3476
    %v6190 = vunpack.c.l.b16 %v3477
    %v6191 = vunpack.c.h.b16 %v3477
    %v6192 = vunpack.c.l.b16 %v3478
    %v6193 = vunpack.c.h.b16 %v3478
    %v6194 = vunpack.c.l.b16 %v3479
    %v6195 = vunpack.c.h.b16 %v3479
    %v6196 = vunpack.c.l.b16 %v3480
    %v6197 = vunpack.c.h.b16 %v3480
    %v6198 = vunpack.c.l.b16 %v3481
    %v6199 = vunpack.c.h.b16 %v3481
    %v6200 = vunpack.c.l.b16 %v3482
    %v6201 = vunpack.c.h.b16 %v3482
    %v6202 = vunpack.c.l.b16 %v3483
    %v6203 = vunpack.c.h.b16 %v3483
    %v6204 = vunpack.c.l.b16 %v3484
    %v6205 = vunpack.c.h.b16 %v3484
    %v6206 = vunpack.c.l.b16 %v3485
    %v6207 = vunpack.c.h.b16 %v3485
    %v6208 = vunpack.c.l.b16 %v3486
    %v6209 = vunpack.c.h.b16 %v3486
    %v6210 = vunpack.c.l.b16 %v3487
    %v6211 = vunpack.c.h.b16 %v3487
    %v6212 = vunpack.c.l.b16 %v3488
    %v6213 = vunpack.c.h.b16 %v3488
    %v6214 = vunpack.c.l.b16 %v3489
    %v6215 = vunpack.c.h.b16 %v3489
    %v6216 = vunpack.c.l.b16 %v3490
    %v6217 = vunpack.c.h.b16 %v3490
    %v6218 = vunpack.c.l.b16 %v3491
    %v6219 = vunpack.c.h.b16 %v3491
    %v6220 = vunpack.c.l.b16 %v3492
    %v6221 = vunpack.c.h.b16 %v3492
    %v6222 = vunpack.c.l.b16 %v3493
    %v6223 = vunpack.c.h.b16 %v3493
    %v6224 = vunpack.c.l.b16 %v3494
    %v6225 = vunpack.c.h.b16 %v3494
    %v6226 = vunpack.c.l.b16 %v3495
    %v6227 = vunpack.c.h.b16 %v3495
    %v6228 = vunpack.c.l.b16 %v3496
    %v6229 = vunpack.c.h.b16 %v3496
    %v6230 = vunpack.c.l.b16 %v3497
    %v6231 = vunpack.c.h.b16 %v3497
    %v6232 = vunpack.c.l.b16 %v3498
    %v6233 = vunpack.c.h.b16 %v3498
    %v6234 = vunpack.c.l.b16 %v3499
    %v6235 = vunpack.c.h.b16 %v3499
    %v6236 = vunpack.c.l.b16 %v3500
    %v6237 = vunpack.c.h.b16 %v3500
    %v6238 = vunpack.c.l.b16 %v3501
    %v6239 = vunpack.c.h.b16 %v3501
    %v6240 = vunpack.c.l.b16 %v3502
    %v6241 = vunpack.c.h.b16 %v3502
    %v6242 = vunpack.c.l.b16 %v3503
    %v6243 = vunpack.c.h.b16 %v3503
    %v6244 = vunpack.c.l.b16 %v3504
    %v6245 = vunpack.c.h.b16 %v3504
    %v6246 = vunpack.c.l.b16 %v3505
    %v6247 = vunpack.c.h.b16 %v3505
    %v6248 = vunpack.c.l.b16 %v3506
    %v6249 = vunpack.c.h.b16 %v3506
    %v6250 = vunpack.c.l.b16 %v3507
    %v6251 = vunpack.c.h.b16 %v3507
    %v6252 = vunpack.c.l.b16 %v3508
    %v6253 = vunpack.c.h.b16 %v3508
    %v6254 = vunpack.c.l.b16 %v3509
    %v6255 = vunpack.c.h.b16 %v3509
    %v6256 = vunpack.c.l.b16 %v3510
    %v6257 = vunpack.c.h.b16 %v3510
    %v6258 = vunpack.c.l.b16 %v3511
    %v6259 = vunpack.c.h.b16 %v3511
    %v6260 = vunpack.c.l.b16 %v3512
    %v6261 = vunpack.c.h.b16 %v3512
    %v6262 = vunpack.c.l.b16 %v3513
    %v6263 = vunpack.c.h.b16 %v3513
    %v6264 = vunpack.c.l.b16 %v3514
    %v6265 = vunpack.c.h.b16 %v3514
    %v6266 = vunpack.c.l.b16 %v3515
    %v6267 = vunpack.c.h.b16 %v3515
    %v6268 = vunpack.c.l.b16 %v3516
    %v6269 = vunpack.c.h.b16 %v3516
    %v6270 = vunpack.c.l.b16 %v3517
    %v6271 = vunpack.c.h.b16 %v3517
    %v6272 = vunpack.c.l.b16 %v3518
    %v6273 = vunpack.c.h.b16 %v3518
    %v6274 = vunpack.c.l.b16 %v3519
    %v6275 = vunpack.c.h.b16 %v3519
    %v6276 = vunpack.c.l.b16 %v3520
    %v6277 = vunpack.c.h.b16 %v3520
    %v6278 = vunpack.c.l.b16 %v3521
    %v6279 = vunpack.c.h.b16 %v3521
    %v6280 = vunpack.c.l.b16 %v3522
    %v6281 = vunpack.c.h.b16 %v3522
    %v6282 = vunpack.c.l.b16 %v3523
    %v6283 = vunpack.c.h.b16 %v3523
    %v6284 = vunpack.c.l.b16 %v3524
    %v6285 = vunpack.c.h.b16 %v3524
    %v6286 = vunpack.c.l.b16 %v3525
    %v6287 = vunpack.c.h.b16 %v3525
    %v6288 = vunpack.c.l.b16 %v3526
    %v6289 = vunpack.c.h.b16 %v3526
    %v6290 = vunpack.c.l.b16 %v3527
    %v6291 = vunpack.c.h.b16 %v3527
    %v6292 = vunpack.c.l.b16 %v3528
    %v6293 = vunpack.c.h.b16 %v3528
    %v6294 = vunpack.c.l.b16 %v3529
    %v6295 = vunpack.c.h.b16 %v3529
    %v6296 = vunpack.c.l.b16 %v3530
    %v6297 = vunpack.c.h.b16 %v3530
    %v6298 = vunpack.c.l.b16 %v3531
    %v6299 = vunpack.c.h.b16 %v3531
    %v6300 = vunpack.c.l.b16 %v3532
    %v6301 = vunpack.c.h.b16 %v3532
    %v6302 = vunpack.c.l.b16 %v3533
    %v6303 = vunpack.c.h.b16 %v3533
    %v6304 = vunpack.c.l.b16 %v3534
    %v6305 = vunpack.c.h.b16 %v3534
    %v6306 = vunpack.c.l.b16 %v3535
    %v6307 = vunpack.c.h.b16 %v3535
    %v6308 = vunpack.c.l.b16 %v3536
    %v6309 = vunpack.c.h.b16 %v3536
    %v6310 = vunpack.c.l.b16 %v3537
    %v6311 = vunpack.c.h.b16 %v3537
    %v6312 = vunpack.c.l.b16 %v3538
    %v6313 = vunpack.c.h.b16 %v3538
    %v6314 = vunpack.c.l.b16 %v3539
    %v6315 = vunpack.c.h.b16 %v3539
    %v6316 = vunpack.c.l.b16 %v3540
    %v6317 = vunpack.c.h.b16 %v3540
    %v6318 = vunpack.c.l.b16 %v3541
    %v6319 = vunpack.c.h.b16 %v3541
    %v6320 = vunpack.c.l.b16 %v3542
    %v6321 = vunpack.c.h.b16 %v3542
    %v6322 = vunpack.c.l.b16 %v3543
    %v6323 = vunpack.c.h.b16 %v3543
    %v6324 = vunpack.c.l.b16 %v3544
    %v6325 = vunpack.c.h.b16 %v3544
    %v6326 = vunpack.c.l.b16 %v3545
    %v6327 = vunpack.c.h.b16 %v3545
    %v6328 = vunpack.c.l.b16 %v3546
    %v6329 = vunpack.c.h.b16 %v3546
    %v6330 = vunpack.c.l.b16 %v3547
    %v6331 = vunpack.c.h.b16 %v3547
    %v6332 = vunpack.c.l.b16 %v3548
    %v6333 = vunpack.c.h.b16 %v3548
    %v6334 = vunpack.c.l.b16 %v3549
    %v6335 = vunpack.c.h.b16 %v3549
    %v6336 = vunpack.c.l.b16 %v3550
    %v6337 = vunpack.c.h.b16 %v3550
    %v6338 = vunpack.c.l.b16 %v3551
    %v6339 = vunpack.c.h.b16 %v3551
    %v6340 = vunpack.c.l.b16 %v3552
    %v6341 = vunpack.c.h.b16 %v3552
    %v6342 = vunpack.c.l.b16 %v3553
    %v6343 = vunpack.c.h.b16 %v3553
    %v6344 = vunpack.c.l.b16 %v3554
    %v6345 = vunpack.c.h.b16 %v3554
    %v6346 = vunpack.c.l.b16 %v3555
    %v6347 = vunpack.c.h.b16 %v3555
    %v6348 = vunpack.c.l.b16 %v3556
    %v6349 = vunpack.c.h.b16 %v3556
    %v6350 = vunpack.c.l.b16 %v3557
    %v6351 = vunpack.c.h.b16 %v3557
    %v6352 = vunpack.c.l.b16 %v3558
    %v6353 = vunpack.c.h.b16 %v3558
    %v6354 = vunpack.c.l.b16 %v3559
    %v6355 = vunpack.c.h.b16 %v3559
    %v6356 = vunpack.c.l.b16 %v3560
    %v6357 = vunpack.c.h.b16 %v3560
    %v6358 = vunpack.c.l.b16 %v3561
    %v6359 = vunpack.c.h.b16 %v3561
    %v6360 = vunpack.c.l.b16 %v3562
    %v6361 = vunpack.c.h.b16 %v3562
    %v6362 = vunpack.c.l.b16 %v3563
    %v6363 = vunpack.c.h.b16 %v3563
    %v6364 = vunpack.c.l.b16 %v3564
    %v6365 = vunpack.c.h.b16 %v3564
    %v6366 = vunpack.c.l.b16 %v3565
    %v6367 = vunpack.c.h.b16 %v3565
    %v6368 = vunpack.c.l.b16 %v3566
    %v6369 = vunpack.c.h.b16 %v3566
    %v6370 = vunpack.c.l.b16 %v3567
    %v6371 = vunpack.c.h.b16 %v3567
    %v6372 = vunpack.c.l.b16 %v3568
    %v6373 = vunpack.c.h.b16 %v3568
    %v6374 = vunpack.c.l.b16 %v3569
    %v6375 = vunpack.c.h.b16 %v3569
    %v6376 = vunpack.c.l.b16 %v3570
    %v6377 = vunpack.c.h.b16 %v3570
    %v6378 = vunpack.c.l.b16 %v3571
    %v6379 = vunpack.c.h.b16 %v3571
    %v6380 = vunpack.c.l.b16 %v3572
    %v6381 = vunpack.c.h.b16 %v3572
    %v6382 = vunpack.c.l.b16 %v3573
    %v6383 = vunpack.c.h.b16 %v3573
    %v6384 = vunpack.c.l.b16 %v3574
    %v6385 = vunpack.c.h.b16 %v3574
    %v6386 = vunpack.c.l.b16 %v3575
    %v6387 = vunpack.c.h.b16 %v3575
    %v6388 = vunpack.c.l.b16 %v3576
    %v6389 = vunpack.c.h.b16 %v3576
    %v6390 = vunpack.c.l.b16 %v3577
    %v6391 = vunpack.c.h.b16 %v3577
    %v6392 = vunpack.c.l.b16 %v3578
    %v6393 = vunpack.c.h.b16 %v3578
    %v6394 = vunpack.c.l.b16 %v3579
    %v6395 = vunpack.c.h.b16 %v3579
    %v6396 = vunpack.c.l.b16 %v3580
    %v6397 = vunpack.c.h.b16 %v3580
    %v6398 = vunpack.c.l.b16 %v3581
    %v6399 = vunpack.c.h.b16 %v3581
    %v6400 = vunpack.c.l.b16 %v3582
    %v6401 = vunpack.c.h.b16 %v3582
    %v6402 = vunpack.c.l.b16 %v3583
    %v6403 = vunpack.c.h.b16 %v3583
    %v6404 = vunpack.c.l.b16 %v3584
    %v6405 = vunpack.c.h.b16 %v3584
    %v6406 = vunpack.c.l.b16 %v3585
    %v6407 = vunpack.c.h.b16 %v3585
    %v6408 = vunpack.c.l.b16 %v3586
    %v6409 = vunpack.c.h.b16 %v3586
    %v6410 = vunpack.c.l.b16 %v3587
    %v6411 = vunpack.c.h.b16 %v3587
    %v6412 = vunpack.c.l.b16 %v3588
    %v6413 = vunpack.c.h.b16 %v3588
    %v6414 = vunpack.c.l.b16 %v3589
    %v6415 = vunpack.c.h.b16 %v3589
    %v6416 = vunpack.c.l.b16 %v3590
    %v6417 = vunpack.c.h.b16 %v3590
    %v6418 = vunpack.c.l.b16 %v3591
    %v6419 = vunpack.c.h.b16 %v3591
    %v6420 = vunpack.c.l.b16 %v3592
    %v6421 = vunpack.c.h.b16 %v3592
    %v6422 = vunpack.c.l.b16 %v3593
    %v6423 = vunpack.c.h.b16 %v3593
    %v6424 = vunpack.c.l.b16 %v3594
    %v6425 = vunpack.c.h.b16 %v3594
    %v6426 = vunpack.c.l.b16 %v3595
    %v6427 = vunpack.c.h.b16 %v3595
    %v6428 = vunpack.c.l.b16 %v3596
    %v6429 = vunpack.c.h.b16 %v3596
    %v6430 = vunpack.c.l.b16 %v3597
    %v6431 = vunpack.c.h.b16 %v3597
    %v6432 = vunpack.c.l.b16 %v3598
    %v6433 = vunpack.c.h.b16 %v3598
    %v6434 = vunpack.c.l.b16 %v3599
    %v6435 = vunpack.c.h.b16 %v3599
    %v6436 = vunpack.c.l.b16 %v3600
    %v6437 = vunpack.c.h.b16 %v3600
    %v6438 = vunpack.c.l.b16 %v3601
    %v6439 = vunpack.c.h.b16 %v3601
    %v6440 = vunpack.c.l.b16 %v3602
    %v6441 = vunpack.c.h.b16 %v3602
    %v6442 = vunpack.c.l.b16 %v3603
    %v6443 = vunpack.c.h.b16 %v3603
    %v6444 = vunpack.c.l.b16 %v3604
    %v6445 = vunpack.c.h.b16 %v3604
    %v6446 = vunpack.c.l.b16 %v3605
    %v6447 = vunpack.c.h.b16 %v3605
    %v6448 = vunpack.c.l.b16 %v3606
    %v6449 = vunpack.c.h.b16 %v3606
    %v6450 = vunpack.c.l.b16 %v3607
    %v6451 = vunpack.c.h.b16 %v3607
    %v6452 = vunpack.c.l.b16 %v3608
    %v6453 = vunpack.c.h.b16 %v3608
    %v6454 = vunpack.c.l.b16 %v3609
    %v6455 = vunpack.c.h.b16 %v3609
    %v6456 = vunpack.c.l.b16 %v3610
    %v6457 = vunpack.c.h.b16 %v3610
    %v6458 = vunpack.c.l.b16 %v3611
    %v6459 = vunpack.c.h.b16 %v3611
    %v6460 = vunpack.c.l.b16 %v3612
    %v6461 = vunpack.c.h.b16 %v3612
    %v6462 = vunpack.c.l.b16 %v3613
    %v6463 = vunpack.c.h.b16 %v3613
    %v6464 = vunpack.c.l.b16 %v3614
    %v6465 = vunpack.c.h.b16 %v3614
    %v6466 = vunpack.c.l.b16 %v3615
    %v6467 = vunpack.c.h.b16 %v3615
    %v6468 = vunpack.c.l.b16 %v3616
    %v6469 = vunpack.c.h.b16 %v3616
    %v6470 = vunpack.c.l.b16 %v3617
    %v6471 = vunpack.c.h.b16 %v3617
    %v6472 = vunpack.c.l.b16 %v3618
    %v6473 = vunpack.c.h.b16 %v3618
    %v6474 = vunpack.c.l.b16 %v3619
    %v6475 = vunpack.c.h.b16 %v3619
    %v6476 = vunpack.c.l.b16 %v3620
    %v6477 = vunpack.c.h.b16 %v3620
    %v6478 = vunpack.c.l.b16 %v3621
    %v6479 = vunpack.c.h.b16 %v3621
    %v6480 = vunpack.c.l.b16 %v3622
    %v6481 = vunpack.c.h.b16 %v3622
    %v6482 = vunpack.c.l.b16 %v3623
    %v6483 = vunpack.c.h.b16 %v3623
    %v6484 = vunpack.c.l.b16 %v3624
    %v6485 = vunpack.c.h.b16 %v3624
    %v6486 = vunpack.c.l.b16 %v3625
    %v6487 = vunpack.c.h.b16 %v3625
    %v6488 = vunpack.c.l.b16 %v3626
    %v6489 = vunpack.c.h.b16 %v3626
    %v6490 = vunpack.c.l.b16 %v3627
    %v6491 = vunpack.c.h.b16 %v3627
    %v6492 = vunpack.c.l.b16 %v3628
    %v6493 = vunpack.c.h.b16 %v3628
    %v6494 = vunpack.c.l.b16 %v3629
    %v6495 = vunpack.c.h.b16 %v3629
    %v6496 = vunpack.c.l.b16 %v3630
    %v6497 = vunpack.c.h.b16 %v3630
    %v6498 = vunpack.c.l.b16 %v3631
    %v6499 = vunpack.c.h.b16 %v3631
    %v6500 = vunpack.c.l.b16 %v3632
    %v6501 = vunpack.c.h.b16 %v3632
    %v6502 = vunpack.c.l.b16 %v3633
    %v6503 = vunpack.c.h.b16 %v3633
    %v6504 = vunpack.c.l.b16 %v3634
    %v6505 = vunpack.c.h.b16 %v3634
    %v6506 = vunpack.c.l.b16 %v3635
    %v6507 = vunpack.c.h.b16 %v3635
    %v6508 = vunpack.c.l.b16 %v3636
    %v6509 = vunpack.c.h.b16 %v3636
    %v6510 = vunpack.c.l.b16 %v3637
    %v6511 = vunpack.c.h.b16 %v3637
    %v6512 = vunpack.c.l.b16 %v3638
    %v6513 = vunpack.c.h.b16 %v3638
    %v6514 = vunpack.c.l.b16 %v3639
    %v6515 = vunpack.c.h.b16 %v3639
    %v6516 = vunpack.c.l.b16 %v3640
    %v6517 = vunpack.c.h.b16 %v3640
    %v6518 = vunpack.c.l.b16 %v3641
    %v6519 = vunpack.c.h.b16 %v3641
    %v6520 = vunpack.c.l.b16 %v3642
    %v6521 = vunpack.c.h.b16 %v3642
    %v6522 = vunpack.c.l.b16 %v3643
    %v6523 = vunpack.c.h.b16 %v3643
    %v6524 = vunpack.c.l.b16 %v3644
    %v6525 = vunpack.c.h.b16 %v3644
    %v6526 = vunpack.c.l.b16 %v3645
    %v6527 = vunpack.c.h.b16 %v3645
    %v6528 = vunpack.c.l.b16 %v3646
    %v6529 = vunpack.c.h.b16 %v3646
    %v6530 = vunpack.c.l.b16 %v3647
    %v6531 = vunpack.c.h.b16 %v3647
    %v6532 = vunpack.c.l.b16 %v3648
    %v6533 = vunpack.c.h.b16 %v3648
    %v6534 = vunpack.c.l.b16 %v3649
    %v6535 = vunpack.c.h.b16 %v3649
    %v6536 = vunpack.c.l.b16 %v3650
    %v6537 = vunpack.c.h.b16 %v3650
    %v6538 = vunpack.c.l.b16 %v3651
    %v6539 = vunpack.c.h.b16 %v3651
    %v6540 = vunpack.c.l.b16 %v3652
    %v6541 = vunpack.c.h.b16 %v3652
    %v6542 = vunpack.c.l.b16 %v3653
    %v6543 = vunpack.c.h.b16 %v3653
    %v6544 = vunpack.c.l.b16 %v3654
    %v6545 = vunpack.c.h.b16 %v3654
    %v6546 = vunpack.c.l.b16 %v3655
    %v6547 = vunpack.c.h.b16 %v3655
    %v6548 = vunpack.c.l.b16 %v3656
    %v6549 = vunpack.c.h.b16 %v3656
    %v6550 = vunpack.c.l.b16 %v3657
    %v6551 = vunpack.c.h.b16 %v3657
    %v6552 = vunpack.c.l.b16 %v3658
    %v6553 = vunpack.c.h.b16 %v3658
    %v6554 = vunpack.c.l.b16 %v3659
    %v6555 = vunpack.c.h.b16 %v3659
    %v6556 = vunpack.c.l.b16 %v3660
    %v6557 = vunpack.c.h.b16 %v3660
    %v6558 = vunpack.c.l.b16 %v3661
    %v6559 = vunpack.c.h.b16 %v3661
    %v6560 = vunpack.c.l.b16 %v3662
    %v6561 = vunpack.c.h.b16 %v3662
    %v6562 = vunpack.c.l.b16 %v3663
    %v6563 = vunpack.c.h.b16 %v3663
    %v6564 = vunpack.c.l.b16 %v3664
    %v6565 = vunpack.c.h.b16 %v3664
    %v6566 = vunpack.c.l.b16 %v3665
    %v6567 = vunpack.c.h.b16 %v3665
    %v6568 = vunpack.c.l.b16 %v3666
    %v6569 = vunpack.c.h.b16 %v3666
    %v6570 = vunpack.c.l.b16 %v3667
    %v6571 = vunpack.c.h.b16 %v3667
    %v6572 = vpack.c.b16 %v6068, %v6060
    %v6573 = vpack.c.b16 %v6069, %v6061
    %v6574 = vpack.c.b16 %v6070, %v6062
    %v6575 = vpack.c.b16 %v6071, %v6063
    %v6576 = vpack.c.b16 %v6072, %v6064
    %v6577 = vpack.c.b16 %v6073, %v6065
    %v6578 = vpack.c.b16 %v6074, %v6066
    %v6579 = vpack.c.b16 %v6075, %v6067
    %v6580 = vpack.c.b16 %v6084, %v6076
    %v6581 = vpack.c.b16 %v6085, %v6077
    %v6582 = vpack.c.b16 %v6086, %v6078
    %v6583 = vpack.c.b16 %v6087, %v6079
    %v6584 = vpack.c.b16 %v6088, %v6080
    %v6585 = vpack.c.b16 %v6089, %v6081
    %v6586 = vpack.c.b16 %v6090, %v6082
    %v6587 = vpack.c.b16 %v6091, %v6083
    %v6588 = vpack.c.b16 %v6100, %v6092
    %v6589 = vpack.c.b16 %v6101, %v6093
    %v6590 = vpack.c.b16 %v6102, %v6094
    %v6591 = vpack.c.b16 %v6103, %v6095
    %v6592 = vpack.c.b16 %v6104, %v6096
    %v6593 = vpack.c.b16 %v6105, %v6097
    %v6594 = vpack.c.b16 %v6106, %v6098
    %v6595 = vpack.c.b16 %v6107, %v6099
    %v6596 = vpack.c.b16 %v6116, %v6108
    %v6597 = vpack.c.b16 %v6117, %v6109
    %v6598 = vpack.c.b16 %v6118, %v6110
    %v6599 = vpack.c.b16 %v6119, %v6111
    %v6600 = vpack.c.b16 %v6120, %v6112
    %v6601 = vpack.c.b16 %v6121, %v6113
    %v6602 = vpack.c.b16 %v6122, %v6114
    %v6603 = vpack.c.b16 %v6123, %v6115
    %v6604 = vpack.c.b16 %v6132, %v6124
    %v6605 = vpack.c.b16 %v6133, %v6125
    %v6606 = vpack.c.b16 %v6134, %v6126
    %v6607 = vpack.c.b16 %v6135, %v6127
    %v6608 = vpack.c.b16 %v6136, %v6128
    %v6609 = vpack.c.b16 %v6137, %v6129
    %v6610 = vpack.c.b16 %v6138, %v6130
    %v6611 = vpack.c.b16 %v6139, %v6131
    %v6612 = vpack.c.b16 %v6148, %v6140
    %v6613 = vpack.c.b16 %v6149, %v6141
    %v6614 = vpack.c.b16 %v6150, %v6142
    %v6615 = vpack.c.b16 %v6151, %v6143
    %v6616 = vpack.c.b16 %v6152, %v6144
    %v6617 = vpack.c.b16 %v6153, %v6145
    %v6618 = vpack.c.b16 %v6154, %v6146
    %v6619 = vpack.c.b16 %v6155, %v6147
    %v6620 = vpack.c.b16 %v6164, %v6156
    %v6621 = vpack.c.b16 %v6165, %v6157
    %v6622 = vpack.c.b16 %v6166, %v6158
    %v6623 = vpack.c.b16 %v6167, %v6159
    %v6624 = vpack.c.b16 %v6168, %v6160
    %v6625 = vpack.c.b16 %v6169, %v6161
    %v6626 = vpack.c.b16 %v6170, %v6162
    %v6627 = vpack.c.b16 %v6171, %v6163
    %v6628 = vpack.c.b16 %v6180, %v6172
    %v6629 = vpack.c.b16 %v6181, %v6173
    %v6630 = vpack.c.b16 %v6182, %v6174
    %v6631 = vpack.c.b16 %v6183, %v6175
    %v6632 = vpack.c.b16 %v6184, %v6176
    %v6633 = vpack.c.b16 %v6185, %v6177
    %v6634 = vpack.c.b16 %v6186, %v6178
    %v6635 = vpack.c.b16 %v6187, %v6179
    %v6636 = vpack.c.b16 %v6196, %v6188
    %v6637 = vpack.c.b16 %v6197, %v6189
    %v6638 = vpack.c.b16 %v6198, %v6190
    %v6639 = vpack.c.b16 %v6199, %v6191
    %v6640 = vpack.c.b16 %v6200, %v6192
    %v6641 = vpack.c.b16 %v6201, %v6193
    %v6642 = vpack.c.b16 %v6202, %v6194
    %v6643 = vpack.c.b16 %v6203, %v6195
    %v6644 = vpack.c.b16 %v6212, %v6204
    %v6645 = vpack.c.b16 %v6213, %v6205
    %v6646 = vpack.c.b16 %v6214, %v6206
    %v6647 = vpack.c.b16 %v6215, %v6207
    %v6648 = vpack.c.b16 %v6216, %v6208
    %v6649 = vpack.c.b16 %v6217, %v6209
    %v6650 = vpack.c.b16 %v6218, %v6210
    %v6651 = vpack.c.b16 %v6219, %v6211
    %v6652 = vpack.c.b16 %v6228, %v6220
    %v6653 = vpack.c.b16 %v6229, %v6221
    %v6654 = vpack.c.b16 %v6230, %v6222
    %v6655 = vpack.c.b16 %v6231, %v6223
    %v6656 = vpack.c.b16 %v6232, %v6224
    %v6657 = vpack.c.b16 %v6233, %v6225
    %v6658 = vpack.c.b16 %v6234, %v6226
    %v6659 = vpack.c.b16 %v6235, %v6227
    %v6660 = vpack.c.b16 %v6244, %v6236
    %v6661 = vpack.c.b16 %v6245, %v6237
    %v6662 = vpack.c.b16 %v6246, %v6238
    %v6663 = vpack.c.b16 %v6247, %v6239
    %v6664 = vpack.c.b16 %v6248, %v6240
    %v6665 = vpack.c.b16 %v6249, %v6241
    %v6666 = vpack.c.b16 %v6250, %v6242
    %v6667 = vpack.c.b16 %v6251, %v6243
    %v6668 = vpack.c.b16 %v6260, %v6252
    %v6669 = vpack.c.b16 %v6261, %v6253
    %v6670 = vpack.c.b16 %v6262, %v6254
    %v6671 = vpack.c.b16 %v6263, %v6255
    %v6672 = vpack.c.b16 %v6264, %v6256
    %v6673 = vpack.c.b16 %v6265, %v6257
    %v6674 = vpack.c.b16 %v6266, %v6258
    %v6675 = vpack.c.b16 %v6267, %v6259
    %v6676 = vpack.c.b16 %v6276, %v6268
    %v6677 = vpack.c.b16 %v6277, %v6269
    %v6678 = vpack.c.b16 %v6278, %v6270
    %v6679 = vpack.c.b16 %v6279, %v6271
    %v6680 = vpack.c.b16 %v6280, %v6272
    %v6681 = vpack.c.b16 %v6281, %v6273
    %v6682 = vpack.c.b16 %v6282, %v6274
    %v6683 = vpack.c.b16 %v6283, %v6275
    %v6684 = vpack.c.b16 %v6292, %v6284
    %v6685 = vpack.c.b16 %v6293, %v6285
    %v6686 = vpack.c.b16 %v6294, %v6286
    %v6687 = vpack.c.b16 %v6295, %v6287
    %v6688 = vpack.c.b16 %v6296, %v6288
    %v6689 = vpack.c.b16 %v6297, %v6289
    %v6690 = vpack.c.b16 %v6298, %v6290
    %v6691 = vpack.c.b16 %v6299, %v6291
    %v6692 = vpack.c.b16 %v6308, %v6300
    %v6693 = vpack.c.b16 %v6309, %v6301
    %v6694 = vpack.c.b16 %v6310, %v6302
    %v6695 = vpack.c.b16 %v6311, %v6303
    %v6696 = vpack.c.b16 %v6312, %v6304
    %v6697 = vpack.c.b16 %v6313, %v6305
    %v6698 = vpack.c.b16 %v6314, %v6306
    %v6699 = vpack.c.b16 %v6315, %v6307
    %v6700 = vpack.c.b16 %v6324, %v6316
    %v6701 = vpack.c.b16 %v6325, %v6317
    %v6702 = vpack.c.b16 %v6326, %v6318
    %v6703 = vpack.c.b16 %v6327, %v6319
    %v6704 = vpack.c.b16 %v6328, %v6320
    %v6705 = vpack.c.b16 %v6329, %v6321
    %v6706 = vpack.c.b16 %v6330, %v6322
    %v6707 = vpack.c.b16 %v6331, %v6323
    %v6708 = vpack.c.b16 %v6340, %v6332
    %v6709 = vpack.c.b16 %v6341, %v6333
    %v6710 = vpack.c.b16 %v6342, %v6334
    %v6711 = vpack.c.b16 %v6343, %v6335
    %v6712 = vpack.c.b16 %v6344, %v6336
    %v6713 = vpack.c.b16 %v6345, %v6337
    %v6714 = vpack.c.b16 %v6346, %v6338
    %v6715 = vpack.c.b16 %v6347, %v6339
    %v6716 = vpack.c.b16 %v6356, %v6348
    %v6717 = vpack.c.b16 %v6357, %v6349
    %v6718 = vpack.c.b16 %v6358, %v6350
    %v6719 = vpack.c.b16 %v6359, %v6351
    %v6720 = vpack.c.b16 %v6360, %v6352
    %v6721 = vpack.c.b16 %v6361, %v6353
    %v6722 = vpack.c.b16 %v6362, %v6354
    %v6723 = vpack.c.b16 %v6363, %v6355
    %v6724 = vpack.c.b16 %v6372, %v6364
    %v6725 = vpack.c.b16 %v6373, %v6365
    %v6726 = vpack.c.b16 %v6374, %v6366
    %v6727 = vpack.c.b16 %v6375, %v6367
    %v6728 = vpack.c.b16 %v6376, %v6368
    %v6729 = vpack.c.b16 %v6377, %v6369
    %v6730 = vpack.c.b16 %v6378, %v6370
    %v6731 = vpack.c.b16 %v6379, %v6371
    %v6732 = vpack.c.b16 %v6388, %v6380
    %v6733 = vpack.c.b16 %v6389, %v6381
    %v6734 = vpack.c.b16 %v6390, %v6382
    %v6735 = vpack.c.b16 %v6391, %v6383
    %v6736 = vpack.c.b16 %v6392, %v6384
    %v6737 = vpack.c.b16 %v6393, %v6385
    %v6738 = vpack.c.b16 %v6394, %v6386
    %v6739 = vpack.c.b16 %v6395, %v6387
    %v6740 = vpack.c.b16 %v6404, %v6396
    %v6741 = vpack.c.b16 %v6405, %v6397
    %v6742 = vpack.c.b16 %v6406, %v6398
    %v6743 = vpack.c.b16 %v6407, %v6399
    %v6744 = vpack.c.b16 %v6408, %v6400
    %v6745 = vpack.c.b16 %v6409, %v6401
    %v6746 = vpack.c.b16 %v6410, %v6402
    %v6747 = vpack.c.b16 %v6411, %v6403
    %v6748 = vpack.c.b16 %v6420, %v6412
    %v6749 = vpack.c.b16 %v6421, %v6413
    %v6750 = vpack.c.b16 %v6422, %v6414
    %v6751 = vpack.c.b16 %v6423, %v6415
    %v6752 = vpack.c.b16 %v6424, %v6416
    %v6753 = vpack.c.b16 %v6425, %v6417
    %v6754 = vpack.c.b16 %v6426, %v6418
    %v6755 = vpack.c.b16 %v6427, %v6419
    %v6756 = vpack.c.b16 %v6436, %v6428
    %v6757 = vpack.c.b16 %v6437, %v6429
    %v6758 = vpack.c.b16 %v6438, %v6430
    %v6759 = vpack.c.b16 %v6439, %v6431
    %v6760 = vpack.c.b16 %v6440, %v6432
    %v6761 = vpack.c.b16 %v6441, %v6433
    %v6762 = vpack.c.b16 %v6442, %v6434
    %v6763 = vpack.c.b16 %v6443, %v6435
    %v6764 = vpack.c.b16 %v6452, %v6444
    %v6765 = vpack.c.b16 %v6453, %v6445
    %v6766 = vpack.c.b16 %v6454, %v6446
    %v6767 = vpack.c.b16 %v6455, %v6447
    %v6768 = vpack.c.b16 %v6456, %v6448
    %v6769 = vpack.c.b16 %v6457, %v6449
    %v6770 = vpack.c.b16 %v6458, %v6450
    %v6771 = vpack.c.b16 %v6459, %v6451
    %v6772 = vpack.c.b16 %v6468, %v6460
    %v6773 = vpack.c.b16 %v6469, %v6461
    %v6774 = vpack.c.b16 %v6470, %v6462
    %v6775 = vpack.c.b16 %v6471, %v6463
    %v6776 = vpack.c.b16 %v6472, %v6464
    %v6777 = vpack.c.b16 %v6473, %v6465
    %v6778 = vpack.c.b16 %v6474, %v6466
    %v6779 = vpack.c.b16 %v6475, %v6467
    %v6780 = vpack.c.b16 %v6484, %v6476
    %v6781 = vpack.c.b16 %v6485, %v6477
    %v6782 = vpack.c.b16 %v6486, %v6478
    %v6783 = vpack.c.b16 %v6487, %v6479
    %v6784 = vpack.c.b16 %v6488, %v6480
    %v6785 = vpack.c.b16 %v6489, %v6481
    %v6786 = vpack.c.b16 %v6490, %v6482
    %v6787 = vpack.c.b16 %v6491, %v6483
    %v6788 = vpack.c.b16 %v6500, %v6492
    %v6789 = vpack.c.b16 %v6501, %v6493
    %v6790 = vpack.c.b16 %v6502, %v6494
    %v6791 = vpack.c.b16 %v6503, %v6495
    %v6792 = vpack.c.b16 %v6504, %v6496
    %v6793 = vpack.c.b16 %v6505, %v6497
    %v6794 = vpack.c.b16 %v6506, %v6498
    %v6795 = vpack.c.b16 %v6507, %v6499
    %v6796 = vpack.c.b16 %v6516, %v6508
    %v6797 = vpack.c.b16 %v6517, %v6509
    %v6798 = vpack.c.b16 %v6518, %v6510
    %v6799 = vpack.c.b16 %v6519, %v6511
    %v6800 = vpack.c.b16 %v6520, %v6512
    %v6801 = vpack.c.b16 %v6521, %v6513
    %v6802 = vpack.c.b16 %v6522, %v6514
    %v6803 = vpack.c.b16 %v6523, %v6515
    %v6804 = vpack.c.b16 %v6532, %v6524
    %v6805 = vpack.c.b16 %v6533, %v6525
    %v6806 = vpack.c.b16 %v6534, %v6526
    %v6807 = vpack.c.b16 %v6535, %v6527
    %v6808 = vpack.c.b16 %v6536, %v6528
    %v6809 = vpack.c.b16 %v6537, %v6529
    %v6810 = vpack.c.b16 %v6538, %v6530
    %v6811 = vpack.c.b16 %v6539, %v6531
    %v6812 = vpack.c.b16 %v6548, %v6540
    %v6813 = vpack.c.b16 %v6549, %v6541
    %v6814 = vpack.c.b16 %v6550, %v6542
    %v6815 = vpack.c.b16 %v6551, %v6543
    %v6816 = vpack.c.b16 %v6552, %v6544
    %v6817 = vpack.c.b16 %v6553, %v6545
    %v6818 = vpack.c.b16 %v6554, %v6546
    %v6819 = vpack.c.b16 %v6555, %v6547
    %v6820 = vpack.c.b16 %v6564, %v6556
    %v6821 = vpack.c.b16 %v6565, %v6557
    %v6822 = vpack.c.b16 %v6566, %v6558
    %v6823 = vpack.c.b16 %v6567, %v6559
    %v6824 = vpack.c.b16 %v6568, %v6560
    %v6825 = vpack.c.b16 %v6569, %v6561
    %v6826 = vpack.c.b16 %v6570, %v6562
    %v6827 = vpack.c.b16 %v6571, %v6563
    %7084 = vmatprep.subr.bf16.mxu0 %v6629
    %7085 = vmatpush1.bf16.msra.mxu0 %v6628
    %7086 = vmatprep.subr.bf16.mxu0 %v6621
    %7087 = vmatpush1.bf16.msra.mxu0 %v6620
    %7088 = vmatprep.subr.bf16.mxu0 %v6613
    %7089 = vmatpush1.bf16.msra.mxu0 %v6612
    %7090 = vmatprep.subr.bf16.mxu0 %v6605
    %7091 = vmatpush1.bf16.msra.mxu0 %v6604
    %7092 = vmatprep.subr.bf16.mxu0 %v6597
    %7093 = vmatpush1.bf16.msra.mxu0 %v6596
    %7094 = vmatprep.subr.bf16.mxu0 %v6589
    %7095 = vmatpush1.bf16.msra.mxu0 %v6588
    %7096 = vmatprep.subr.bf16.mxu0 %v6581
    %7097 = vmatpush1.bf16.msra.mxu0 %v6580
    %7098 = vmatprep.subr.bf16.mxu0 %v6573
    %7099 = vmatpush1.bf16.msra.mxu0 %v6572
    %7100 = vmatprep.subr.bf16.mxu0 %v6693
    %7101 = vmatpush2.bf16.msra.mxu0 %v6692
    %7102 = vmatprep.subr.bf16.mxu0 %v6685
    %7103 = vmatpush2.bf16.msra.mxu0 %v6684
    %7104 = vmatprep.subr.bf16.mxu0 %v6677
    %7105 = vmatpush2.bf16.msra.mxu0 %v6676
    %7106 = vmatprep.subr.bf16.mxu0 %v6669
    %7107 = vmatpush2.bf16.msra.mxu0 %v6668
    %7108 = vmatprep.subr.bf16.mxu0 %v6661
    %7109 = vmatpush2.bf16.msra.mxu0 %v6660
    %7110 = vmatprep.subr.bf16.mxu0 %v6653
    %7111 = vmatpush2.bf16.msra.mxu0 %v6652
    %7112 = vmatprep.subr.bf16.mxu0 %v6645
    %7113 = vmatpush2.bf16.msra.mxu0 %v6644
    %7114 = vmatprep.subr.bf16.mxu0 %v6637
    %7115 = vmatpush2.bf16.msra.mxu0 %v6636
    %7116 = vmatprep.mubr.bf16.mxu0 %v5789
    %7117 = vmatmul.mubr.bf16.gmra.mxu0 %v5788
    %v7118 = vpop.f32.mrf.mxu0
    %v7119 = vadd.f32 %v5428, %v7118
    %v7120 = vpop.f32.mrf.mxu0
    %v7121 = vadd.f32 %v5430, %v7120
    %v7122 = vpop.f32.mrf.mxu0
    %v7123 = vadd.f32 %v5432, %v7122
    %v7124 = vpop.f32.mrf.mxu0
    %v7125 = vadd.f32 %v5434, %v7124
    %7126 = vmatprep.mubr.bf16.mxu0 %v5793
    %7127 = vmatmul.mubr.bf16.gmra.mxu0 %v5792
    %v7128 = vpop.f32.mrf.mxu0
    %v7129 = vadd.f32 %v5438, %v7128
    %v7130 = vpop.f32.mrf.mxu0
    %v7131 = vadd.f32 %v5440, %v7130
    %v7132 = vpop.f32.mrf.mxu0
    %v7133 = vadd.f32 %v5442, %v7132
    %v7134 = vpop.f32.mrf.mxu0
    %v7135 = vadd.f32 %v5444, %v7134
    %7136 = vdwg.mxu0
    %7137 = vmatprep.subr.bf16.mxu0 %v6757
    %7138 = vmatpush1.bf16.msra.mxu0 %v6756
    %7139 = vmatprep.subr.bf16.mxu0 %v6749
    %7140 = vmatpush1.bf16.msra.mxu0 %v6748
    %7141 = vmatprep.subr.bf16.mxu0 %v6741
    %7142 = vmatpush1.bf16.msra.mxu0 %v6740
    %7143 = vmatprep.subr.bf16.mxu0 %v6733
    %7144 = vmatpush1.bf16.msra.mxu0 %v6732
    %7145 = vmatprep.subr.bf16.mxu0 %v6725
    %7146 = vmatpush1.bf16.msra.mxu0 %v6724
    %7147 = vmatprep.subr.bf16.mxu0 %v6717
    %7148 = vmatpush1.bf16.msra.mxu0 %v6716
    %7149 = vmatprep.subr.bf16.mxu0 %v6709
    %7150 = vmatpush1.bf16.msra.mxu0 %v6708
    %7151 = vmatprep.subr.bf16.mxu0 %v6701
    %7152 = vmatpush1.bf16.msra.mxu0 %v6700
    %7153 = vmatprep.subr.bf16.mxu0 %v6821
    %7154 = vmatpush2.bf16.msra.mxu0 %v6820
    %7155 = vmatprep.subr.bf16.mxu0 %v6813
    %7156 = vmatpush2.bf16.msra.mxu0 %v6812
    %7157 = vmatprep.subr.bf16.mxu0 %v6805
    %7158 = vmatpush2.bf16.msra.mxu0 %v6804
    %7159 = vmatprep.subr.bf16.mxu0 %v6797
    %7160 = vmatpush2.bf16.msra.mxu0 %v6796
    %7161 = vmatprep.subr.bf16.mxu0 %v6789
    %7162 = vmatpush2.bf16.msra.mxu0 %v6788
    %7163 = vmatprep.subr.bf16.mxu0 %v6781
    %7164 = vmatpush2.bf16.msra.mxu0 %v6780
    %7165 = vmatprep.subr.bf16.mxu0 %v6773
    %7166 = vmatpush2.bf16.msra.mxu0 %v6772
    %7167 = vmatprep.subr.bf16.mxu0 %v6765
    %7168 = vmatpush2.bf16.msra.mxu0 %v6764
    %7169 = vmatprep.mubr.bf16.mxu0 %v5791
    %7170 = vmatmul.mubr.bf16.gmra.mxu0 %v5790
    %v7171 = vpop.f32.mrf.mxu0
    %v7172 = vadd.f32 %v7119, %v7171
    %v7173 = vpop.f32.mrf.mxu0
    %v7174 = vadd.f32 %v7121, %v7173
    %v7175 = vpop.f32.mrf.mxu0
    %v7176 = vadd.f32 %v7123, %v7175
    %v7177 = vpop.f32.mrf.mxu0
    %v7178 = vadd.f32 %v7125, %v7177
    %7179 = vmatprep.mubr.bf16.mxu0 %v5795
    %7180 = vmatmul.mubr.bf16.gmra.mxu0 %v5794
    %v7181 = vpop.f32.mrf.mxu0
    %v7182 = vadd.f32 %v7129, %v7181
    %v7183 = vpop.f32.mrf.mxu0
    %v7184 = vadd.f32 %v7131, %v7183
    %v7185 = vpop.f32.mrf.mxu0
    %v7186 = vadd.f32 %v7133, %v7185
    %v7187 = vpop.f32.mrf.mxu0
    %v7188 = vadd.f32 %v7135, %v7187
    %7189 = vdwg.mxu0
    %7190 = vmatprep.subr.bf16.mxu0 %v6631
    %7191 = vmatpush1.bf16.msra.mxu0 %v6630
    %7192 = vmatprep.subr.bf16.mxu0 %v6623
    %7193 = vmatpush1.bf16.msra.mxu0 %v6622
    %7194 = vmatprep.subr.bf16.mxu0 %v6615
    %7195 = vmatpush1.bf16.msra.mxu0 %v6614
    %7196 = vmatprep.subr.bf16.mxu0 %v6607
    %7197 = vmatpush1.bf16.msra.mxu0 %v6606
    %7198 = vmatprep.subr.bf16.mxu0 %v6599
    %7199 = vmatpush1.bf16.msra.mxu0 %v6598
    %7200 = vmatprep.subr.bf16.mxu0 %v6591
    %7201 = vmatpush1.bf16.msra.mxu0 %v6590
    %7202 = vmatprep.subr.bf16.mxu0 %v6583
    %7203 = vmatpush1.bf16.msra.mxu0 %v6582
    %7204 = vmatprep.subr.bf16.mxu0 %v6575
    %7205 = vmatpush1.bf16.msra.mxu0 %v6574
    %7206 = vmatprep.subr.bf16.mxu0 %v6695
    %7207 = vmatpush2.bf16.msra.mxu0 %v6694
    %7208 = vmatprep.subr.bf16.mxu0 %v6687
    %7209 = vmatpush2.bf16.msra.mxu0 %v6686
    %7210 = vmatprep.subr.bf16.mxu0 %v6679
    %7211 = vmatpush2.bf16.msra.mxu0 %v6678
    %7212 = vmatprep.subr.bf16.mxu0 %v6671
    %7213 = vmatpush2.bf16.msra.mxu0 %v6670
    %7214 = vmatprep.subr.bf16.mxu0 %v6663
    %7215 = vmatpush2.bf16.msra.mxu0 %v6662
    %7216 = vmatprep.subr.bf16.mxu0 %v6655
    %7217 = vmatpush2.bf16.msra.mxu0 %v6654
    %7218 = vmatprep.subr.bf16.mxu0 %v6647
    %7219 = vmatpush2.bf16.msra.mxu0 %v6646
    %7220 = vmatprep.subr.bf16.mxu0 %v6639
    %7221 = vmatpush2.bf16.msra.mxu0 %v6638
    %7222 = vmatprep.mubr.bf16.mxu0 %v5789
    %7223 = vmatmul.mubr.bf16.gmra.mxu0 %v5788
    %v7224 = vpop.f32.mrf.mxu0
    %v7225 = vadd.f32 %v5534, %v7224
    %v7226 = vpop.f32.mrf.mxu0
    %v7227 = vadd.f32 %v5536, %v7226
    %v7228 = vpop.f32.mrf.mxu0
    %v7229 = vadd.f32 %v5538, %v7228
    %v7230 = vpop.f32.mrf.mxu0
    %v7231 = vadd.f32 %v5540, %v7230
    %7232 = vmatprep.mubr.bf16.mxu0 %v5793
    %7233 = vmatmul.mubr.bf16.gmra.mxu0 %v5792
    %v7234 = vpop.f32.mrf.mxu0
    %v7235 = vadd.f32 %v5544, %v7234
    %v7236 = vpop.f32.mrf.mxu0
    %v7237 = vadd.f32 %v5546, %v7236
    %v7238 = vpop.f32.mrf.mxu0
    %v7239 = vadd.f32 %v5548, %v7238
    %v7240 = vpop.f32.mrf.mxu0
    %v7241 = vadd.f32 %v5550, %v7240
    %7242 = vdwg.mxu0
    %7243 = vmatprep.subr.bf16.mxu0 %v6759
    %7244 = vmatpush1.bf16.msra.mxu0 %v6758
    %7245 = vmatprep.subr.bf16.mxu0 %v6751
    %7246 = vmatpush1.bf16.msra.mxu0 %v6750
    %7247 = vmatprep.subr.bf16.mxu0 %v6743
    %7248 = vmatpush1.bf16.msra.mxu0 %v6742
    %7249 = vmatprep.subr.bf16.mxu0 %v6735
    %7250 = vmatpush1.bf16.msra.mxu0 %v6734
    %7251 = vmatprep.subr.bf16.mxu0 %v6727
    %7252 = vmatpush1.bf16.msra.mxu0 %v6726
    %7253 = vmatprep.subr.bf16.mxu0 %v6719
    %7254 = vmatpush1.bf16.msra.mxu0 %v6718
    %7255 = vmatprep.subr.bf16.mxu0 %v6711
    %7256 = vmatpush1.bf16.msra.mxu0 %v6710
    %7257 = vmatprep.subr.bf16.mxu0 %v6703
    %7258 = vmatpush1.bf16.msra.mxu0 %v6702
    %7259 = vmatprep.subr.bf16.mxu0 %v6823
    %7260 = vmatpush2.bf16.msra.mxu0 %v6822
    %7261 = vmatprep.subr.bf16.mxu0 %v6815
    %7262 = vmatpush2.bf16.msra.mxu0 %v6814
    %7263 = vmatprep.subr.bf16.mxu0 %v6807
    %7264 = vmatpush2.bf16.msra.mxu0 %v6806
    %7265 = vmatprep.subr.bf16.mxu0 %v6799
    %7266 = vmatpush2.bf16.msra.mxu0 %v6798
    %7267 = vmatprep.subr.bf16.mxu0 %v6791
    %7268 = vmatpush2.bf16.msra.mxu0 %v6790
    %7269 = vmatprep.subr.bf16.mxu0 %v6783
    %7270 = vmatpush2.bf16.msra.mxu0 %v6782
    %7271 = vmatprep.subr.bf16.mxu0 %v6775
    %7272 = vmatpush2.bf16.msra.mxu0 %v6774
    %7273 = vmatprep.subr.bf16.mxu0 %v6767
    %7274 = vmatpush2.bf16.msra.mxu0 %v6766
    %7275 = vmatprep.mubr.bf16.mxu0 %v5791
    %7276 = vmatmul.mubr.bf16.gmra.mxu0 %v5790
    %v7277 = vpop.f32.mrf.mxu0
    %v7278 = vadd.f32 %v7225, %v7277
    %v7279 = vpop.f32.mrf.mxu0
    %v7280 = vadd.f32 %v7227, %v7279
    %v7281 = vpop.f32.mrf.mxu0
    %v7282 = vadd.f32 %v7229, %v7281
    %v7283 = vpop.f32.mrf.mxu0
    %v7284 = vadd.f32 %v7231, %v7283
    %7285 = vmatprep.mubr.bf16.mxu0 %v5795
    %7286 = vmatmul.mubr.bf16.gmra.mxu0 %v5794
    %v7287 = vpop.f32.mrf.mxu0
    %v7288 = vadd.f32 %v7235, %v7287
    %v7289 = vpop.f32.mrf.mxu0
    %v7290 = vadd.f32 %v7237, %v7289
    %v7291 = vpop.f32.mrf.mxu0
    %v7292 = vadd.f32 %v7239, %v7291
    %v7293 = vpop.f32.mrf.mxu0
    %v7294 = vadd.f32 %v7241, %v7293
    %7295 = vdwg.mxu0
    %7296 = vmatprep.subr.bf16.mxu0 %v6633
    %7297 = vmatpush1.bf16.msra.mxu0 %v6632
    %7298 = vmatprep.subr.bf16.mxu0 %v6625
    %7299 = vmatpush1.bf16.msra.mxu0 %v6624
    %7300 = vmatprep.subr.bf16.mxu0 %v6617
    %7301 = vmatpush1.bf16.msra.mxu0 %v6616
    %7302 = vmatprep.subr.bf16.mxu0 %v6609
    %7303 = vmatpush1.bf16.msra.mxu0 %v6608
    %7304 = vmatprep.subr.bf16.mxu0 %v6601
    %7305 = vmatpush1.bf16.msra.mxu0 %v6600
    %7306 = vmatprep.subr.bf16.mxu0 %v6593
    %7307 = vmatpush1.bf16.msra.mxu0 %v6592
    %7308 = vmatprep.subr.bf16.mxu0 %v6585
    %7309 = vmatpush1.bf16.msra.mxu0 %v6584
    %7310 = vmatprep.subr.bf16.mxu0 %v6577
    %7311 = vmatpush1.bf16.msra.mxu0 %v6576
    %7312 = vmatprep.subr.bf16.mxu0 %v6697
    %7313 = vmatpush2.bf16.msra.mxu0 %v6696
    %7314 = vmatprep.subr.bf16.mxu0 %v6689
    %7315 = vmatpush2.bf16.msra.mxu0 %v6688
    %7316 = vmatprep.subr.bf16.mxu0 %v6681
    %7317 = vmatpush2.bf16.msra.mxu0 %v6680
    %7318 = vmatprep.subr.bf16.mxu0 %v6673
    %7319 = vmatpush2.bf16.msra.mxu0 %v6672
    %7320 = vmatprep.subr.bf16.mxu0 %v6665
    %7321 = vmatpush2.bf16.msra.mxu0 %v6664
    %7322 = vmatprep.subr.bf16.mxu0 %v6657
    %7323 = vmatpush2.bf16.msra.mxu0 %v6656
    %7324 = vmatprep.subr.bf16.mxu0 %v6649
    %7325 = vmatpush2.bf16.msra.mxu0 %v6648
    %7326 = vmatprep.subr.bf16.mxu0 %v6641
    %7327 = vmatpush2.bf16.msra.mxu0 %v6640
    %7328 = vmatprep.mubr.bf16.mxu0 %v5789
    %7329 = vmatmul.mubr.bf16.gmra.mxu0 %v5788
    %v7330 = vpop.f32.mrf.mxu0
    %v7331 = vadd.f32 %v5640, %v7330
    %v7332 = vpop.f32.mrf.mxu0
    %v7333 = vadd.f32 %v5642, %v7332
    %v7334 = vpop.f32.mrf.mxu0
    %v7335 = vadd.f32 %v5644, %v7334
    %v7336 = vpop.f32.mrf.mxu0
    %v7337 = vadd.f32 %v5646, %v7336
    %7338 = vmatprep.mubr.bf16.mxu0 %v5793
    %7339 = vmatmul.mubr.bf16.gmra.mxu0 %v5792
    %v7340 = vpop.f32.mrf.mxu0
    %v7341 = vadd.f32 %v5650, %v7340
    %v7342 = vpop.f32.mrf.mxu0
    %v7343 = vadd.f32 %v5652, %v7342
    %v7344 = vpop.f32.mrf.mxu0
    %v7345 = vadd.f32 %v5654, %v7344
    %v7346 = vpop.f32.mrf.mxu0
    %v7347 = vadd.f32 %v5656, %v7346
    %7348 = vdwg.mxu0
    %7349 = vmatprep.subr.bf16.mxu0 %v6761
    %7350 = vmatpush1.bf16.msra.mxu0 %v6760
    %7351 = vmatprep.subr.bf16.mxu0 %v6753
    %7352 = vmatpush1.bf16.msra.mxu0 %v6752
    %7353 = vmatprep.subr.bf16.mxu0 %v6745
    %7354 = vmatpush1.bf16.msra.mxu0 %v6744
    %7355 = vmatprep.subr.bf16.mxu0 %v6737
    %7356 = vmatpush1.bf16.msra.mxu0 %v6736
    %7357 = vmatprep.subr.bf16.mxu0 %v6729
    %7358 = vmatpush1.bf16.msra.mxu0 %v6728
    %7359 = vmatprep.subr.bf16.mxu0 %v6721
    %7360 = vmatpush1.bf16.msra.mxu0 %v6720
    %7361 = vmatprep.subr.bf16.mxu0 %v6713
    %7362 = vmatpush1.bf16.msra.mxu0 %v6712
    %7363 = vmatprep.subr.bf16.mxu0 %v6705
    %7364 = vmatpush1.bf16.msra.mxu0 %v6704
    %7365 = vmatprep.subr.bf16.mxu0 %v6825
    %7366 = vmatpush2.bf16.msra.mxu0 %v6824
    %7367 = vmatprep.subr.bf16.mxu0 %v6817
    %7368 = vmatpush2.bf16.msra.mxu0 %v6816
    %7369 = vmatprep.subr.bf16.mxu0 %v6809
    %7370 = vmatpush2.bf16.msra.mxu0 %v6808
    %7371 = vmatprep.subr.bf16.mxu0 %v6801
    %7372 = vmatpush2.bf16.msra.mxu0 %v6800
    %7373 = vmatprep.subr.bf16.mxu0 %v6793
    %7374 = vmatpush2.bf16.msra.mxu0 %v6792
    %7375 = vmatprep.subr.bf16.mxu0 %v6785
    %7376 = vmatpush2.bf16.msra.mxu0 %v6784
    %7377 = vmatprep.subr.bf16.mxu0 %v6777
    %7378 = vmatpush2.bf16.msra.mxu0 %v6776
    %7379 = vmatprep.subr.bf16.mxu0 %v6769
    %7380 = vmatpush2.bf16.msra.mxu0 %v6768
    %7381 = vmatprep.mubr.bf16.mxu0 %v5791
    %7382 = vmatmul.mubr.bf16.gmra.mxu0 %v5790
    %v7383 = vpop.f32.mrf.mxu0
    %v7384 = vadd.f32 %v7331, %v7383
    %v7385 = vpop.f32.mrf.mxu0
    %v7386 = vadd.f32 %v7333, %v7385
    %v7387 = vpop.f32.mrf.mxu0
    %v7388 = vadd.f32 %v7335, %v7387
    %v7389 = vpop.f32.mrf.mxu0
    %v7390 = vadd.f32 %v7337, %v7389
    %7391 = vmatprep.mubr.bf16.mxu0 %v5795
    %7392 = vmatmul.mubr.bf16.gmra.mxu0 %v5794
    %v7393 = vpop.f32.mrf.mxu0
    %v7394 = vadd.f32 %v7341, %v7393
    %v7395 = vpop.f32.mrf.mxu0
    %v7396 = vadd.f32 %v7343, %v7395
    %v7397 = vpop.f32.mrf.mxu0
    %v7398 = vadd.f32 %v7345, %v7397
    %v7399 = vpop.f32.mrf.mxu0
    %v7400 = vadd.f32 %v7347, %v7399
    %7401 = vdwg.mxu0
    %7402 = vmatprep.subr.bf16.mxu0 %v6635
    %7403 = vmatpush1.bf16.msra.mxu0 %v6634
    %7404 = vmatprep.subr.bf16.mxu0 %v6627
    %7405 = vmatpush1.bf16.msra.mxu0 %v6626
    %7406 = vmatprep.subr.bf16.mxu0 %v6619
    %7407 = vmatpush1.bf16.msra.mxu0 %v6618
    %7408 = vmatprep.subr.bf16.mxu0 %v6611
    %7409 = vmatpush1.bf16.msra.mxu0 %v6610
    %7410 = vmatprep.subr.bf16.mxu0 %v6603
    %7411 = vmatpush1.bf16.msra.mxu0 %v6602
    %7412 = vmatprep.subr.bf16.mxu0 %v6595
    %7413 = vmatpush1.bf16.msra.mxu0 %v6594
    %7414 = vmatprep.subr.bf16.mxu0 %v6587
    %7415 = vmatpush1.bf16.msra.mxu0 %v6586
    %7416 = vmatprep.subr.bf16.mxu0 %v6579
    %7417 = vmatpush1.bf16.msra.mxu0 %v6578
    %7418 = vmatprep.subr.bf16.mxu0 %v6699
    %7419 = vmatpush2.bf16.msra.mxu0 %v6698
    %7420 = vmatprep.subr.bf16.mxu0 %v6691
    %7421 = vmatpush2.bf16.msra.mxu0 %v6690
    %7422 = vmatprep.subr.bf16.mxu0 %v6683
    %7423 = vmatpush2.bf16.msra.mxu0 %v6682
    %7424 = vmatprep.subr.bf16.mxu0 %v6675
    %7425 = vmatpush2.bf16.msra.mxu0 %v6674
    %7426 = vmatprep.subr.bf16.mxu0 %v6667
    %7427 = vmatpush2.bf16.msra.mxu0 %v6666
    %7428 = vmatprep.subr.bf16.mxu0 %v6659
    %7429 = vmatpush2.bf16.msra.mxu0 %v6658
    %7430 = vmatprep.subr.bf16.mxu0 %v6651
    %7431 = vmatpush2.bf16.msra.mxu0 %v6650
    %7432 = vmatprep.subr.bf16.mxu0 %v6643
    %7433 = vmatpush2.bf16.msra.mxu0 %v6642
    %7434 = vmatprep.mubr.bf16.mxu0 %v5789
    %7435 = vmatmul.mubr.bf16.gmra.mxu0 %v5788
    %v7436 = vpop.f32.mrf.mxu0
    %v7437 = vadd.f32 %v5746, %v7436
    %v7438 = vpop.f32.mrf.mxu0
    %v7439 = vadd.f32 %v5748, %v7438
    %v7440 = vpop.f32.mrf.mxu0
    %v7441 = vadd.f32 %v5750, %v7440
    %v7442 = vpop.f32.mrf.mxu0
    %v7443 = vadd.f32 %v5752, %v7442
    %7444 = vmatprep.mubr.bf16.mxu0 %v5793
    %7445 = vmatmul.mubr.bf16.gmra.mxu0 %v5792
    %v7446 = vpop.f32.mrf.mxu0
    %v7447 = vadd.f32 %v5756, %v7446
    %v7448 = vpop.f32.mrf.mxu0
    %v7449 = vadd.f32 %v5758, %v7448
    %v7450 = vpop.f32.mrf.mxu0
    %v7451 = vadd.f32 %v5760, %v7450
    %v7452 = vpop.f32.mrf.mxu0
    %v7453 = vadd.f32 %v5762, %v7452
    %7454 = vdwg.mxu0
    %7455 = vmatprep.subr.bf16.mxu0 %v6763
    %7456 = vmatpush1.bf16.msra.mxu0 %v6762
    %7457 = vmatprep.subr.bf16.mxu0 %v6755
    %7458 = vmatpush1.bf16.msra.mxu0 %v6754
    %7459 = vmatprep.subr.bf16.mxu0 %v6747
    %7460 = vmatpush1.bf16.msra.mxu0 %v6746
    %7461 = vmatprep.subr.bf16.mxu0 %v6739
    %7462 = vmatpush1.bf16.msra.mxu0 %v6738
    %7463 = vmatprep.subr.bf16.mxu0 %v6731
    %7464 = vmatpush1.bf16.msra.mxu0 %v6730
    %7465 = vmatprep.subr.bf16.mxu0 %v6723
    %7466 = vmatpush1.bf16.msra.mxu0 %v6722
    %7467 = vmatprep.subr.bf16.mxu0 %v6715
    %7468 = vmatpush1.bf16.msra.mxu0 %v6714
    %7469 = vmatprep.subr.bf16.mxu0 %v6707
    %7470 = vmatpush1.bf16.msra.mxu0 %v6706
    %7471 = vmatprep.subr.bf16.mxu0 %v6827
    %7472 = vmatpush2.bf16.msra.mxu0 %v6826
    %7473 = vmatprep.subr.bf16.mxu0 %v6819
    %7474 = vmatpush2.bf16.msra.mxu0 %v6818
    %7475 = vmatprep.subr.bf16.mxu0 %v6811
    %7476 = vmatpush2.bf16.msra.mxu0 %v6810
    %7477 = vmatprep.subr.bf16.mxu0 %v6803
    %7478 = vmatpush2.bf16.msra.mxu0 %v6802
    %7479 = vmatprep.subr.bf16.mxu0 %v6795
    %7480 = vmatpush2.bf16.msra.mxu0 %v6794
    %7481 = vmatprep.subr.bf16.mxu0 %v6787
    %7482 = vmatpush2.bf16.msra.mxu0 %v6786
    %7483 = vmatprep.subr.bf16.mxu0 %v6779
    %7484 = vmatpush2.bf16.msra.mxu0 %v6778
    %7485 = vmatprep.subr.bf16.mxu0 %v6771
    %7486 = vmatpush2.bf16.msra.mxu0 %v6770
    %7487 = vmatprep.mubr.bf16.mxu0 %v5791
    %7488 = vmatmul.mubr.bf16.gmra.mxu0 %v5790
    %v7489 = vpop.f32.mrf.mxu0
    %v7490 = vadd.f32 %v7437, %v7489
    %v7491 = vpop.f32.mrf.mxu0
    %v7492 = vadd.f32 %v7439, %v7491
    %v7493 = vpop.f32.mrf.mxu0
    %v7494 = vadd.f32 %v7441, %v7493
    %v7495 = vpop.f32.mrf.mxu0
    %v7496 = vadd.f32 %v7443, %v7495
    %7497 = vmatprep.mubr.bf16.mxu0 %v5795
    %7498 = vmatmul.mubr.bf16.gmra.mxu0 %v5794
    %v7499 = vpop.f32.mrf.mxu0
    %v7500 = vadd.f32 %v7447, %v7499
    %v7501 = vpop.f32.mrf.mxu0
    %v7502 = vadd.f32 %v7449, %v7501
    %v7503 = vpop.f32.mrf.mxu0
    %v7504 = vadd.f32 %v7451, %v7503
    %v7505 = vpop.f32.mrf.mxu0
    %v7506 = vadd.f32 %v7453, %v7505
    %7507 = vdwg.mxu0
    %v7508 = vld [vmem:[#allocation2] sm:$0xee]
    %v7509 = vld [vmem:[#allocation2 + $0x8] sm:$0xee]
    %v7510 = vld [vmem:[#allocation2 + $0x30] sm:$0xee]
    %v7511 = vld [vmem:[#allocation2 + $0x38] sm:$0xee]
    %vm7520 = vcmask 1042432
    %vm7521 = vcmask 1046532
    %vm7522 = vmor %vm7520, %vm7521
    %v7523 = vrot.slane %v7508, 5
    %v7524 = vrot.slane %v7523, 4
    %v7525 = vrot.slane %v3406, 5
    %v7526 = vsel %vm7522, %v7524, %v7525
    %v7527 = vrot.slane %v7509, 5
    %v7528 = vrot.slane %v7527, 4
    %v7529 = vrot.slane %v3407, 5
    %v7530 = vsel %vm7522, %v7528, %v7529
    %v7531 = vrot.slane %v7525, 4
    %v7532 = vrot.slane %v3668, 5
    %v7533 = vsel %vm7522, %v7531, %v7532
    %v7534 = vrot.slane %v7529, 4
    %v7535 = vrot.slane %v3669, 5
    %v7536 = vsel %vm7522, %v7534, %v7535
    %v7537 = vrot.slane %v7510, 5
    %v7538 = vrot.slane %v7537, 4
    %v7539 = vrot.slane %v3410, 5
    %v7540 = vsel %vm7522, %v7538, %v7539
    %v7541 = vrot.slane %v7511, 5
    %v7542 = vrot.slane %v7541, 4
    %v7543 = vrot.slane %v3411, 5
    %v7544 = vsel %vm7522, %v7542, %v7543
    %v7545 = vrot.slane %v7539, 4
    %v7546 = vrot.slane %v3670, 5
    %v7547 = vsel %vm7522, %v7545, %v7546
    %v7548 = vrot.slane %v7543, 4
    %v7549 = vrot.slane %v3671, 5
    %v7550 = vsel %vm7522, %v7548, %v7549
    %s7551 = scalar_lea.vmem [#allocation8], 4096
    %v7552 = vld [vmem:[%s7551] sm:$0xff]
    %v7553 = vld [vmem:[%s7551 + $0x8] sm:$0xff]
    %v7554 = vld [vmem:[%s7551 + $0x10] sm:$0xff]
    %v7555 = vld [vmem:[%s7551 + $0x18] sm:$0xff]
    %v7556 = vld [vmem:[%s7551 + $0x20] sm:$0xff]
    %v7557 = vld [vmem:[%s7551 + $0x28] sm:$0xff]
    %v7558 = vld [vmem:[%s7551 + $0x30] sm:$0xff]
    %v7559 = vld [vmem:[%s7551 + $0x38] sm:$0xff]
    %v7560 = vld [vmem:[%s7551 + $0x40] sm:$0xff]
    %v7561 = vld [vmem:[%s7551 + $0x48] sm:$0xff]
    %v7562 = vld [vmem:[%s7551 + $0x50] sm:$0xff]
    %v7563 = vld [vmem:[%s7551 + $0x58] sm:$0xff]
    %v7564 = vld [vmem:[%s7551 + $0x60] sm:$0xff]
    %v7565 = vld [vmem:[%s7551 + $0x68] sm:$0xff]
    %v7566 = vld [vmem:[%s7551 + $0x70] sm:$0xff]
    %v7567 = vld [vmem:[%s7551 + $0x78] sm:$0xff]
    %v7568 = vld [vmem:[%s7551 + $0x80] sm:$0xff]
    %v7569 = vld [vmem:[%s7551 + $0x88] sm:$0xff]
    %v7570 = vld [vmem:[%s7551 + $0x90] sm:$0xff]
    %v7571 = vld [vmem:[%s7551 + $0x98] sm:$0xff]
    %v7572 = vld [vmem:[%s7551 + $0xa0] sm:$0xff]
    %v7573 = vld [vmem:[%s7551 + $0xa8] sm:$0xff]
    %v7574 = vld [vmem:[%s7551 + $0xb0] sm:$0xff]
    %v7575 = vld [vmem:[%s7551 + $0xb8] sm:$0xff]
    %v7576 = vld [vmem:[%s7551 + $0xc0] sm:$0xff]
    %v7577 = vld [vmem:[%s7551 + $0xc8] sm:$0xff]
    %v7578 = vld [vmem:[%s7551 + $0xd0] sm:$0xff]
    %v7579 = vld [vmem:[%s7551 + $0xd8] sm:$0xff]
    %v7580 = vld [vmem:[%s7551 + $0xe0] sm:$0xff]
    %v7581 = vld [vmem:[%s7551 + $0xe8] sm:$0xff]
    %v7582 = vld [vmem:[%s7551 + $0xf0] sm:$0xff]
    %v7583 = vld [vmem:[%s7551 + $0xf8] sm:$0xff]
    %v7584 = vld [vmem:[%s7551 + $0x100] sm:$0xff]
    %v7585 = vld [vmem:[%s7551 + $0x108] sm:$0xff]
    %v7586 = vld [vmem:[%s7551 + $0x110] sm:$0xff]
    %v7587 = vld [vmem:[%s7551 + $0x118] sm:$0xff]
    %v7588 = vld [vmem:[%s7551 + $0x120] sm:$0xff]
    %v7589 = vld [vmem:[%s7551 + $0x128] sm:$0xff]
    %v7590 = vld [vmem:[%s7551 + $0x130] sm:$0xff]
    %v7591 = vld [vmem:[%s7551 + $0x138] sm:$0xff]
    %v7592 = vld [vmem:[%s7551 + $0x140] sm:$0xff]
    %v7593 = vld [vmem:[%s7551 + $0x148] sm:$0xff]
    %v7594 = vld [vmem:[%s7551 + $0x150] sm:$0xff]
    %v7595 = vld [vmem:[%s7551 + $0x158] sm:$0xff]
    %v7596 = vld [vmem:[%s7551 + $0x160] sm:$0xff]
    %v7597 = vld [vmem:[%s7551 + $0x168] sm:$0xff]
    %v7598 = vld [vmem:[%s7551 + $0x170] sm:$0xff]
    %v7599 = vld [vmem:[%s7551 + $0x178] sm:$0xff]
    %v7600 = vld [vmem:[%s7551 + $0x180] sm:$0xff]
    %v7601 = vld [vmem:[%s7551 + $0x188] sm:$0xff]
    %v7602 = vld [vmem:[%s7551 + $0x190] sm:$0xff]
    %v7603 = vld [vmem:[%s7551 + $0x198] sm:$0xff]
    %v7604 = vld [vmem:[%s7551 + $0x1a0] sm:$0xff]
    %v7605 = vld [vmem:[%s7551 + $0x1a8] sm:$0xff]
    %v7606 = vld [vmem:[%s7551 + $0x1b0] sm:$0xff]
    %v7607 = vld [vmem:[%s7551 + $0x1b8] sm:$0xff]
    %v7608 = vld [vmem:[%s7551 + $0x1c0] sm:$0xff]
    %v7609 = vld [vmem:[%s7551 + $0x1c8] sm:$0xff]
    %v7610 = vld [vmem:[%s7551 + $0x1d0] sm:$0xff]
    %v7611 = vld [vmem:[%s7551 + $0x1d8] sm:$0xff]
    %v7612 = vld [vmem:[%s7551 + $0x1e0] sm:$0xff]
    %v7613 = vld [vmem:[%s7551 + $0x1e8] sm:$0xff]
    %v7614 = vld [vmem:[%s7551 + $0x1f0] sm:$0xff]
    %v7615 = vld [vmem:[%s7551 + $0x1f8] sm:$0xff]
    %v7616 = vld [vmem:[%s7551 + $0x200] sm:$0xff]
    %v7617 = vld [vmem:[%s7551 + $0x208] sm:$0xff]
    %v7618 = vld [vmem:[%s7551 + $0x210] sm:$0xff]
    %v7619 = vld [vmem:[%s7551 + $0x218] sm:$0xff]
    %v7620 = vld [vmem:[%s7551 + $0x220] sm:$0xff]
    %v7621 = vld [vmem:[%s7551 + $0x228] sm:$0xff]
    %v7622 = vld [vmem:[%s7551 + $0x230] sm:$0xff]
    %v7623 = vld [vmem:[%s7551 + $0x238] sm:$0xff]
    %v7624 = vld [vmem:[%s7551 + $0x240] sm:$0xff]
    %v7625 = vld [vmem:[%s7551 + $0x248] sm:$0xff]
    %v7626 = vld [vmem:[%s7551 + $0x250] sm:$0xff]
    %v7627 = vld [vmem:[%s7551 + $0x258] sm:$0xff]
    %v7628 = vld [vmem:[%s7551 + $0x260] sm:$0xff]
    %v7629 = vld [vmem:[%s7551 + $0x268] sm:$0xff]
    %v7630 = vld [vmem:[%s7551 + $0x270] sm:$0xff]
    %v7631 = vld [vmem:[%s7551 + $0x278] sm:$0xff]
    %v7632 = vld [vmem:[%s7551 + $0x280] sm:$0xff]
    %v7633 = vld [vmem:[%s7551 + $0x288] sm:$0xff]
    %v7634 = vld [vmem:[%s7551 + $0x290] sm:$0xff]
    %v7635 = vld [vmem:[%s7551 + $0x298] sm:$0xff]
    %v7636 = vld [vmem:[%s7551 + $0x2a0] sm:$0xff]
    %v7637 = vld [vmem:[%s7551 + $0x2a8] sm:$0xff]
    %v7638 = vld [vmem:[%s7551 + $0x2b0] sm:$0xff]
    %v7639 = vld [vmem:[%s7551 + $0x2b8] sm:$0xff]
    %v7640 = vld [vmem:[%s7551 + $0x2c0] sm:$0xff]
    %v7641 = vld [vmem:[%s7551 + $0x2c8] sm:$0xff]
    %v7642 = vld [vmem:[%s7551 + $0x2d0] sm:$0xff]
    %v7643 = vld [vmem:[%s7551 + $0x2d8] sm:$0xff]
    %v7644 = vld [vmem:[%s7551 + $0x2e0] sm:$0xff]
    %v7645 = vld [vmem:[%s7551 + $0x2e8] sm:$0xff]
    %v7646 = vld [vmem:[%s7551 + $0x2f0] sm:$0xff]
    %v7647 = vld [vmem:[%s7551 + $0x2f8] sm:$0xff]
    %v7648 = vld [vmem:[%s7551 + $0x300] sm:$0xff]
    %v7649 = vld [vmem:[%s7551 + $0x308] sm:$0xff]
    %v7650 = vld [vmem:[%s7551 + $0x310] sm:$0xff]
    %v7651 = vld [vmem:[%s7551 + $0x318] sm:$0xff]
    %v7652 = vld [vmem:[%s7551 + $0x320] sm:$0xff]
    %v7653 = vld [vmem:[%s7551 + $0x328] sm:$0xff]
    %v7654 = vld [vmem:[%s7551 + $0x330] sm:$0xff]
    %v7655 = vld [vmem:[%s7551 + $0x338] sm:$0xff]
    %v7656 = vld [vmem:[%s7551 + $0x340] sm:$0xff]
    %v7657 = vld [vmem:[%s7551 + $0x348] sm:$0xff]
    %v7658 = vld [vmem:[%s7551 + $0x350] sm:$0xff]
    %v7659 = vld [vmem:[%s7551 + $0x358] sm:$0xff]
    %v7660 = vld [vmem:[%s7551 + $0x360] sm:$0xff]
    %v7661 = vld [vmem:[%s7551 + $0x368] sm:$0xff]
    %v7662 = vld [vmem:[%s7551 + $0x370] sm:$0xff]
    %v7663 = vld [vmem:[%s7551 + $0x378] sm:$0xff]
    %v7664 = vld [vmem:[%s7551 + $0x380] sm:$0xff]
    %v7665 = vld [vmem:[%s7551 + $0x388] sm:$0xff]
    %v7666 = vld [vmem:[%s7551 + $0x390] sm:$0xff]
    %v7667 = vld [vmem:[%s7551 + $0x398] sm:$0xff]
    %v7668 = vld [vmem:[%s7551 + $0x3a0] sm:$0xff]
    %v7669 = vld [vmem:[%s7551 + $0x3a8] sm:$0xff]
    %v7670 = vld [vmem:[%s7551 + $0x3b0] sm:$0xff]
    %v7671 = vld [vmem:[%s7551 + $0x3b8] sm:$0xff]
    %v7672 = vld [vmem:[%s7551 + $0x3c0] sm:$0xff]
    %v7673 = vld [vmem:[%s7551 + $0x3c8] sm:$0xff]
    %v7674 = vld [vmem:[%s7551 + $0x3d0] sm:$0xff]
    %v7675 = vld [vmem:[%s7551 + $0x3d8] sm:$0xff]
    %v7676 = vld [vmem:[%s7551 + $0x3e0] sm:$0xff]
    %v7677 = vld [vmem:[%s7551 + $0x3e8] sm:$0xff]
    %v7678 = vld [vmem:[%s7551 + $0x3f0] sm:$0xff]
    %v7679 = vld [vmem:[%s7551 + $0x3f8] sm:$0xff]
    %v7680 = vld [vmem:[%s7551 + $0x400] sm:$0xff]
    %v7681 = vld [vmem:[%s7551 + $0x408] sm:$0xff]
    %v7682 = vld [vmem:[%s7551 + $0x410] sm:$0xff]
    %v7683 = vld [vmem:[%s7551 + $0x418] sm:$0xff]
    %v7684 = vld [vmem:[%s7551 + $0x420] sm:$0xff]
    %v7685 = vld [vmem:[%s7551 + $0x428] sm:$0xff]
    %v7686 = vld [vmem:[%s7551 + $0x430] sm:$0xff]
    %v7687 = vld [vmem:[%s7551 + $0x438] sm:$0xff]
    %v7688 = vld [vmem:[%s7551 + $0x440] sm:$0xff]
    %v7689 = vld [vmem:[%s7551 + $0x448] sm:$0xff]
    %v7690 = vld [vmem:[%s7551 + $0x450] sm:$0xff]
    %v7691 = vld [vmem:[%s7551 + $0x458] sm:$0xff]
    %v7692 = vld [vmem:[%s7551 + $0x460] sm:$0xff]
    %v7693 = vld [vmem:[%s7551 + $0x468] sm:$0xff]
    %v7694 = vld [vmem:[%s7551 + $0x470] sm:$0xff]
    %v7695 = vld [vmem:[%s7551 + $0x478] sm:$0xff]
    %v7696 = vld [vmem:[%s7551 + $0x480] sm:$0xff]
    %v7697 = vld [vmem:[%s7551 + $0x488] sm:$0xff]
    %v7698 = vld [vmem:[%s7551 + $0x490] sm:$0xff]
    %v7699 = vld [vmem:[%s7551 + $0x498] sm:$0xff]
    %v7700 = vld [vmem:[%s7551 + $0x4a0] sm:$0xff]
    %v7701 = vld [vmem:[%s7551 + $0x4a8] sm:$0xff]
    %v7702 = vld [vmem:[%s7551 + $0x4b0] sm:$0xff]
    %v7703 = vld [vmem:[%s7551 + $0x4b8] sm:$0xff]
    %v7704 = vld [vmem:[%s7551 + $0x4c0] sm:$0xff]
    %v7705 = vld [vmem:[%s7551 + $0x4c8] sm:$0xff]
    %v7706 = vld [vmem:[%s7551 + $0x4d0] sm:$0xff]
    %v7707 = vld [vmem:[%s7551 + $0x4d8] sm:$0xff]
    %v7708 = vld [vmem:[%s7551 + $0x4e0] sm:$0xff]
    %v7709 = vld [vmem:[%s7551 + $0x4e8] sm:$0xff]
    %v7710 = vld [vmem:[%s7551 + $0x4f0] sm:$0xff]
    %v7711 = vld [vmem:[%s7551 + $0x4f8] sm:$0xff]
    %v7712 = vld [vmem:[%s7551 + $0x500] sm:$0xff]
    %v7713 = vld [vmem:[%s7551 + $0x508] sm:$0xff]
    %v7714 = vld [vmem:[%s7551 + $0x510] sm:$0xff]
    %v7715 = vld [vmem:[%s7551 + $0x518] sm:$0xff]
    %v7716 = vld [vmem:[%s7551 + $0x520] sm:$0xff]
    %v7717 = vld [vmem:[%s7551 + $0x528] sm:$0xff]
    %v7718 = vld [vmem:[%s7551 + $0x530] sm:$0xff]
    %v7719 = vld [vmem:[%s7551 + $0x538] sm:$0xff]
    %v7720 = vld [vmem:[%s7551 + $0x540] sm:$0xff]
    %v7721 = vld [vmem:[%s7551 + $0x548] sm:$0xff]
    %v7722 = vld [vmem:[%s7551 + $0x550] sm:$0xff]
    %v7723 = vld [vmem:[%s7551 + $0x558] sm:$0xff]
    %v7724 = vld [vmem:[%s7551 + $0x560] sm:$0xff]
    %v7725 = vld [vmem:[%s7551 + $0x568] sm:$0xff]
    %v7726 = vld [vmem:[%s7551 + $0x570] sm:$0xff]
    %v7727 = vld [vmem:[%s7551 + $0x578] sm:$0xff]
    %v7728 = vld [vmem:[%s7551 + $0x580] sm:$0xff]
    %v7729 = vld [vmem:[%s7551 + $0x588] sm:$0xff]
    %v7730 = vld [vmem:[%s7551 + $0x590] sm:$0xff]
    %v7731 = vld [vmem:[%s7551 + $0x598] sm:$0xff]
    %v7732 = vld [vmem:[%s7551 + $0x5a0] sm:$0xff]
    %v7733 = vld [vmem:[%s7551 + $0x5a8] sm:$0xff]
    %v7734 = vld [vmem:[%s7551 + $0x5b0] sm:$0xff]
    %v7735 = vld [vmem:[%s7551 + $0x5b8] sm:$0xff]
    %v7736 = vld [vmem:[%s7551 + $0x5c0] sm:$0xff]
    %v7737 = vld [vmem:[%s7551 + $0x5c8] sm:$0xff]
    %v7738 = vld [vmem:[%s7551 + $0x5d0] sm:$0xff]
    %v7739 = vld [vmem:[%s7551 + $0x5d8] sm:$0xff]
    %v7740 = vld [vmem:[%s7551 + $0x5e0] sm:$0xff]
    %v7741 = vld [vmem:[%s7551 + $0x5e8] sm:$0xff]
    %v7742 = vld [vmem:[%s7551 + $0x5f0] sm:$0xff]
    %v7743 = vld [vmem:[%s7551 + $0x5f8] sm:$0xff]
    %v7744 = vld [vmem:[%s7551 + $0x600] sm:$0xff]
    %v7745 = vld [vmem:[%s7551 + $0x608] sm:$0xff]
    %v7746 = vld [vmem:[%s7551 + $0x610] sm:$0xff]
    %v7747 = vld [vmem:[%s7551 + $0x618] sm:$0xff]
    %v7748 = vld [vmem:[%s7551 + $0x620] sm:$0xff]
    %v7749 = vld [vmem:[%s7551 + $0x628] sm:$0xff]
    %v7750 = vld [vmem:[%s7551 + $0x630] sm:$0xff]
    %v7751 = vld [vmem:[%s7551 + $0x638] sm:$0xff]
    %v7752 = vld [vmem:[%s7551 + $0x640] sm:$0xff]
    %v7753 = vld [vmem:[%s7551 + $0x648] sm:$0xff]
    %v7754 = vld [vmem:[%s7551 + $0x650] sm:$0xff]
    %v7755 = vld [vmem:[%s7551 + $0x658] sm:$0xff]
    %v7756 = vld [vmem:[%s7551 + $0x660] sm:$0xff]
    %v7757 = vld [vmem:[%s7551 + $0x668] sm:$0xff]
    %v7758 = vld [vmem:[%s7551 + $0x670] sm:$0xff]
    %v7759 = vld [vmem:[%s7551 + $0x678] sm:$0xff]
    %v7760 = vld [vmem:[%s7551 + $0x680] sm:$0xff]
    %v7761 = vld [vmem:[%s7551 + $0x688] sm:$0xff]
    %v7762 = vld [vmem:[%s7551 + $0x690] sm:$0xff]
    %v7763 = vld [vmem:[%s7551 + $0x698] sm:$0xff]
    %v7764 = vld [vmem:[%s7551 + $0x6a0] sm:$0xff]
    %v7765 = vld [vmem:[%s7551 + $0x6a8] sm:$0xff]
    %v7766 = vld [vmem:[%s7551 + $0x6b0] sm:$0xff]
    %v7767 = vld [vmem:[%s7551 + $0x6b8] sm:$0xff]
    %v7768 = vld [vmem:[%s7551 + $0x6c0] sm:$0xff]
    %v7769 = vld [vmem:[%s7551 + $0x6c8] sm:$0xff]
    %v7770 = vld [vmem:[%s7551 + $0x6d0] sm:$0xff]
    %v7771 = vld [vmem:[%s7551 + $0x6d8] sm:$0xff]
    %v7772 = vld [vmem:[%s7551 + $0x6e0] sm:$0xff]
    %v7773 = vld [vmem:[%s7551 + $0x6e8] sm:$0xff]
    %v7774 = vld [vmem:[%s7551 + $0x6f0] sm:$0xff]
    %v7775 = vld [vmem:[%s7551 + $0x6f8] sm:$0xff]
    %v7776 = vld [vmem:[%s7551 + $0x700] sm:$0xff]
    %v7777 = vld [vmem:[%s7551 + $0x708] sm:$0xff]
    %v7778 = vld [vmem:[%s7551 + $0x710] sm:$0xff]
    %v7779 = vld [vmem:[%s7551 + $0x718] sm:$0xff]
    %v7780 = vld [vmem:[%s7551 + $0x720] sm:$0xff]
    %v7781 = vld [vmem:[%s7551 + $0x728] sm:$0xff]
    %v7782 = vld [vmem:[%s7551 + $0x730] sm:$0xff]
    %v7783 = vld [vmem:[%s7551 + $0x738] sm:$0xff]
    %v7784 = vld [vmem:[%s7551 + $0x740] sm:$0xff]
    %v7785 = vld [vmem:[%s7551 + $0x748] sm:$0xff]
    %v7786 = vld [vmem:[%s7551 + $0x750] sm:$0xff]
    %v7787 = vld [vmem:[%s7551 + $0x758] sm:$0xff]
    %v7788 = vld [vmem:[%s7551 + $0x760] sm:$0xff]
    %v7789 = vld [vmem:[%s7551 + $0x768] sm:$0xff]
    %v7790 = vld [vmem:[%s7551 + $0x770] sm:$0xff]
    %v7791 = vld [vmem:[%s7551 + $0x778] sm:$0xff]
    %v7792 = vld [vmem:[%s7551 + $0x780] sm:$0xff]
    %v7793 = vld [vmem:[%s7551 + $0x788] sm:$0xff]
    %v7794 = vld [vmem:[%s7551 + $0x790] sm:$0xff]
    %v7795 = vld [vmem:[%s7551 + $0x798] sm:$0xff]
    %v7796 = vld [vmem:[%s7551 + $0x7a0] sm:$0xff]
    %v7797 = vld [vmem:[%s7551 + $0x7a8] sm:$0xff]
    %v7798 = vld [vmem:[%s7551 + $0x7b0] sm:$0xff]
    %v7799 = vld [vmem:[%s7551 + $0x7b8] sm:$0xff]
    %v7800 = vld [vmem:[%s7551 + $0x7c0] sm:$0xff]
    %v7801 = vld [vmem:[%s7551 + $0x7c8] sm:$0xff]
    %v7802 = vld [vmem:[%s7551 + $0x7d0] sm:$0xff]
    %v7803 = vld [vmem:[%s7551 + $0x7d8] sm:$0xff]
    %v7804 = vld [vmem:[%s7551 + $0x7e0] sm:$0xff]
    %v7805 = vld [vmem:[%s7551 + $0x7e8] sm:$0xff]
    %v7806 = vld [vmem:[%s7551 + $0x7f0] sm:$0xff]
    %v7807 = vld [vmem:[%s7551 + $0x7f8] sm:$0xff]
    %v7808 = vunpack.c.l.b16 %v7526
    %v7809 = vunpack.c.h.b16 %v7526
    %v7810 = vunpack.c.l.b16 %v7530
    %v7811 = vunpack.c.h.b16 %v7530
    %v7812 = vunpack.c.l.b16 %v7533
    %v7813 = vunpack.c.h.b16 %v7533
    %v7814 = vunpack.c.l.b16 %v7536
    %v7815 = vunpack.c.h.b16 %v7536
    %v7816 = vunpack.c.l.b16 %v7540
    %v7817 = vunpack.c.h.b16 %v7540
    %v7818 = vunpack.c.l.b16 %v7544
    %v7819 = vunpack.c.h.b16 %v7544
    %v7820 = vunpack.c.l.b16 %v7547
    %v7821 = vunpack.c.h.b16 %v7547
    %v7822 = vunpack.c.l.b16 %v7550
    %v7823 = vunpack.c.h.b16 %v7550
    %v7824 = vpack.c.b16 %v7812, %v7808
    %v7825 = vpack.c.b16 %v7813, %v7809
    %v7826 = vpack.c.b16 %v7814, %v7810
    %v7827 = vpack.c.b16 %v7815, %v7811
    %v7828 = vpack.c.b16 %v7820, %v7816
    %v7829 = vpack.c.b16 %v7821, %v7817
    %v7830 = vpack.c.b16 %v7822, %v7818
    %v7831 = vpack.c.b16 %v7823, %v7819
    %v8096 = vunpack.c.l.b16 %v7552
    %v8097 = vunpack.c.h.b16 %v7552
    %v8098 = vunpack.c.l.b16 %v7553
    %v8099 = vunpack.c.h.b16 %v7553
    %v8100 = vunpack.c.l.b16 %v7554
    %v8101 = vunpack.c.h.b16 %v7554
    %v8102 = vunpack.c.l.b16 %v7555
    %v8103 = vunpack.c.h.b16 %v7555
    %v8104 = vunpack.c.l.b16 %v7556
    %v8105 = vunpack.c.h.b16 %v7556
    %v8106 = vunpack.c.l.b16 %v7557
    %v8107 = vunpack.c.h.b16 %v7557
    %v8108 = vunpack.c.l.b16 %v7558
    %v8109 = vunpack.c.h.b16 %v7558
    %v8110 = vunpack.c.l.b16 %v7559
    %v8111 = vunpack.c.h.b16 %v7559
    %v8112 = vunpack.c.l.b16 %v7560
    %v8113 = vunpack.c.h.b16 %v7560
    %v8114 = vunpack.c.l.b16 %v7561
    %v8115 = vunpack.c.h.b16 %v7561
    %v8116 = vunpack.c.l.b16 %v7562
    %v8117 = vunpack.c.h.b16 %v7562
    %v8118 = vunpack.c.l.b16 %v7563
    %v8119 = vunpack.c.h.b16 %v7563
    %v8120 = vunpack.c.l.b16 %v7564
    %v8121 = vunpack.c.h.b16 %v7564
    %v8122 = vunpack.c.l.b16 %v7565
    %v8123 = vunpack.c.h.b16 %v7565
    %v8124 = vunpack.c.l.b16 %v7566
    %v8125 = vunpack.c.h.b16 %v7566
    %v8126 = vunpack.c.l.b16 %v7567
    %v8127 = vunpack.c.h.b16 %v7567
    %v8128 = vunpack.c.l.b16 %v7568
    %v8129 = vunpack.c.h.b16 %v7568
    %v8130 = vunpack.c.l.b16 %v7569
    %v8131 = vunpack.c.h.b16 %v7569
    %v8132 = vunpack.c.l.b16 %v7570
    %v8133 = vunpack.c.h.b16 %v7570
    %v8134 = vunpack.c.l.b16 %v7571
    %v8135 = vunpack.c.h.b16 %v7571
    %v8136 = vunpack.c.l.b16 %v7572
    %v8137 = vunpack.c.h.b16 %v7572
    %v8138 = vunpack.c.l.b16 %v7573
    %v8139 = vunpack.c.h.b16 %v7573
    %v8140 = vunpack.c.l.b16 %v7574
    %v8141 = vunpack.c.h.b16 %v7574
    %v8142 = vunpack.c.l.b16 %v7575
    %v8143 = vunpack.c.h.b16 %v7575
    %v8144 = vunpack.c.l.b16 %v7576
    %v8145 = vunpack.c.h.b16 %v7576
    %v8146 = vunpack.c.l.b16 %v7577
    %v8147 = vunpack.c.h.b16 %v7577
    %v8148 = vunpack.c.l.b16 %v7578
    %v8149 = vunpack.c.h.b16 %v7578
    %v8150 = vunpack.c.l.b16 %v7579
    %v8151 = vunpack.c.h.b16 %v7579
    %v8152 = vunpack.c.l.b16 %v7580
    %v8153 = vunpack.c.h.b16 %v7580
    %v8154 = vunpack.c.l.b16 %v7581
    %v8155 = vunpack.c.h.b16 %v7581
    %v8156 = vunpack.c.l.b16 %v7582
    %v8157 = vunpack.c.h.b16 %v7582
    %v8158 = vunpack.c.l.b16 %v7583
    %v8159 = vunpack.c.h.b16 %v7583
    %v8160 = vunpack.c.l.b16 %v7584
    %v8161 = vunpack.c.h.b16 %v7584
    %v8162 = vunpack.c.l.b16 %v7585
    %v8163 = vunpack.c.h.b16 %v7585
    %v8164 = vunpack.c.l.b16 %v7586
    %v8165 = vunpack.c.h.b16 %v7586
    %v8166 = vunpack.c.l.b16 %v7587
    %v8167 = vunpack.c.h.b16 %v7587
    %v8168 = vunpack.c.l.b16 %v7588
    %v8169 = vunpack.c.h.b16 %v7588
    %v8170 = vunpack.c.l.b16 %v7589
    %v8171 = vunpack.c.h.b16 %v7589
    %v8172 = vunpack.c.l.b16 %v7590
    %v8173 = vunpack.c.h.b16 %v7590
    %v8174 = vunpack.c.l.b16 %v7591
    %v8175 = vunpack.c.h.b16 %v7591
    %v8176 = vunpack.c.l.b16 %v7592
    %v8177 = vunpack.c.h.b16 %v7592
    %v8178 = vunpack.c.l.b16 %v7593
    %v8179 = vunpack.c.h.b16 %v7593
    %v8180 = vunpack.c.l.b16 %v7594
    %v8181 = vunpack.c.h.b16 %v7594
    %v8182 = vunpack.c.l.b16 %v7595
    %v8183 = vunpack.c.h.b16 %v7595
    %v8184 = vunpack.c.l.b16 %v7596
    %v8185 = vunpack.c.h.b16 %v7596
    %v8186 = vunpack.c.l.b16 %v7597
    %v8187 = vunpack.c.h.b16 %v7597
    %v8188 = vunpack.c.l.b16 %v7598
    %v8189 = vunpack.c.h.b16 %v7598
    %v8190 = vunpack.c.l.b16 %v7599
    %v8191 = vunpack.c.h.b16 %v7599
    %v8192 = vunpack.c.l.b16 %v7600
    %v8193 = vunpack.c.h.b16 %v7600
    %v8194 = vunpack.c.l.b16 %v7601
    %v8195 = vunpack.c.h.b16 %v7601
    %v8196 = vunpack.c.l.b16 %v7602
    %v8197 = vunpack.c.h.b16 %v7602
    %v8198 = vunpack.c.l.b16 %v7603
    %v8199 = vunpack.c.h.b16 %v7603
    %v8200 = vunpack.c.l.b16 %v7604
    %v8201 = vunpack.c.h.b16 %v7604
    %v8202 = vunpack.c.l.b16 %v7605
    %v8203 = vunpack.c.h.b16 %v7605
    %v8204 = vunpack.c.l.b16 %v7606
    %v8205 = vunpack.c.h.b16 %v7606
    %v8206 = vunpack.c.l.b16 %v7607
    %v8207 = vunpack.c.h.b16 %v7607
    %v8208 = vunpack.c.l.b16 %v7608
    %v8209 = vunpack.c.h.b16 %v7608
    %v8210 = vunpack.c.l.b16 %v7609
    %v8211 = vunpack.c.h.b16 %v7609
    %v8212 = vunpack.c.l.b16 %v7610
    %v8213 = vunpack.c.h.b16 %v7610
    %v8214 = vunpack.c.l.b16 %v7611
    %v8215 = vunpack.c.h.b16 %v7611
    %v8216 = vunpack.c.l.b16 %v7612
    %v8217 = vunpack.c.h.b16 %v7612
    %v8218 = vunpack.c.l.b16 %v7613
    %v8219 = vunpack.c.h.b16 %v7613
    %v8220 = vunpack.c.l.b16 %v7614
    %v8221 = vunpack.c.h.b16 %v7614
    %v8222 = vunpack.c.l.b16 %v7615
    %v8223 = vunpack.c.h.b16 %v7615
    %v8224 = vunpack.c.l.b16 %v7616
    %v8225 = vunpack.c.h.b16 %v7616
    %v8226 = vunpack.c.l.b16 %v7617
    %v8227 = vunpack.c.h.b16 %v7617
    %v8228 = vunpack.c.l.b16 %v7618
    %v8229 = vunpack.c.h.b16 %v7618
    %v8230 = vunpack.c.l.b16 %v7619
    %v8231 = vunpack.c.h.b16 %v7619
    %v8232 = vunpack.c.l.b16 %v7620
    %v8233 = vunpack.c.h.b16 %v7620
    %v8234 = vunpack.c.l.b16 %v7621
    %v8235 = vunpack.c.h.b16 %v7621
    %v8236 = vunpack.c.l.b16 %v7622
    %v8237 = vunpack.c.h.b16 %v7622
    %v8238 = vunpack.c.l.b16 %v7623
    %v8239 = vunpack.c.h.b16 %v7623
    %v8240 = vunpack.c.l.b16 %v7624
    %v8241 = vunpack.c.h.b16 %v7624
    %v8242 = vunpack.c.l.b16 %v7625
    %v8243 = vunpack.c.h.b16 %v7625
    %v8244 = vunpack.c.l.b16 %v7626
    %v8245 = vunpack.c.h.b16 %v7626
    %v8246 = vunpack.c.l.b16 %v7627
    %v8247 = vunpack.c.h.b16 %v7627
    %v8248 = vunpack.c.l.b16 %v7628
    %v8249 = vunpack.c.h.b16 %v7628
    %v8250 = vunpack.c.l.b16 %v7629
    %v8251 = vunpack.c.h.b16 %v7629
    %v8252 = vunpack.c.l.b16 %v7630
    %v8253 = vunpack.c.h.b16 %v7630
    %v8254 = vunpack.c.l.b16 %v7631
    %v8255 = vunpack.c.h.b16 %v7631
    %v8256 = vunpack.c.l.b16 %v7632
    %v8257 = vunpack.c.h.b16 %v7632
    %v8258 = vunpack.c.l.b16 %v7633
    %v8259 = vunpack.c.h.b16 %v7633
    %v8260 = vunpack.c.l.b16 %v7634
    %v8261 = vunpack.c.h.b16 %v7634
    %v8262 = vunpack.c.l.b16 %v7635
    %v8263 = vunpack.c.h.b16 %v7635
    %v8264 = vunpack.c.l.b16 %v7636
    %v8265 = vunpack.c.h.b16 %v7636
    %v8266 = vunpack.c.l.b16 %v7637
    %v8267 = vunpack.c.h.b16 %v7637
    %v8268 = vunpack.c.l.b16 %v7638
    %v8269 = vunpack.c.h.b16 %v7638
    %v8270 = vunpack.c.l.b16 %v7639
    %v8271 = vunpack.c.h.b16 %v7639
    %v8272 = vunpack.c.l.b16 %v7640
    %v8273 = vunpack.c.h.b16 %v7640
    %v8274 = vunpack.c.l.b16 %v7641
    %v8275 = vunpack.c.h.b16 %v7641
    %v8276 = vunpack.c.l.b16 %v7642
    %v8277 = vunpack.c.h.b16 %v7642
    %v8278 = vunpack.c.l.b16 %v7643
    %v8279 = vunpack.c.h.b16 %v7643
    %v8280 = vunpack.c.l.b16 %v7644
    %v8281 = vunpack.c.h.b16 %v7644
    %v8282 = vunpack.c.l.b16 %v7645
    %v8283 = vunpack.c.h.b16 %v7645
    %v8284 = vunpack.c.l.b16 %v7646
    %v8285 = vunpack.c.h.b16 %v7646
    %v8286 = vunpack.c.l.b16 %v7647
    %v8287 = vunpack.c.h.b16 %v7647
    %v8288 = vunpack.c.l.b16 %v7648
    %v8289 = vunpack.c.h.b16 %v7648
    %v8290 = vunpack.c.l.b16 %v7649
    %v8291 = vunpack.c.h.b16 %v7649
    %v8292 = vunpack.c.l.b16 %v7650
    %v8293 = vunpack.c.h.b16 %v7650
    %v8294 = vunpack.c.l.b16 %v7651
    %v8295 = vunpack.c.h.b16 %v7651
    %v8296 = vunpack.c.l.b16 %v7652
    %v8297 = vunpack.c.h.b16 %v7652
    %v8298 = vunpack.c.l.b16 %v7653
    %v8299 = vunpack.c.h.b16 %v7653
    %v8300 = vunpack.c.l.b16 %v7654
    %v8301 = vunpack.c.h.b16 %v7654
    %v8302 = vunpack.c.l.b16 %v7655
    %v8303 = vunpack.c.h.b16 %v7655
    %v8304 = vunpack.c.l.b16 %v7656
    %v8305 = vunpack.c.h.b16 %v7656
    %v8306 = vunpack.c.l.b16 %v7657
    %v8307 = vunpack.c.h.b16 %v7657
    %v8308 = vunpack.c.l.b16 %v7658
    %v8309 = vunpack.c.h.b16 %v7658
    %v8310 = vunpack.c.l.b16 %v7659
    %v8311 = vunpack.c.h.b16 %v7659
    %v8312 = vunpack.c.l.b16 %v7660
    %v8313 = vunpack.c.h.b16 %v7660
    %v8314 = vunpack.c.l.b16 %v7661
    %v8315 = vunpack.c.h.b16 %v7661
    %v8316 = vunpack.c.l.b16 %v7662
    %v8317 = vunpack.c.h.b16 %v7662
    %v8318 = vunpack.c.l.b16 %v7663
    %v8319 = vunpack.c.h.b16 %v7663
    %v8320 = vunpack.c.l.b16 %v7664
    %v8321 = vunpack.c.h.b16 %v7664
    %v8322 = vunpack.c.l.b16 %v7665
    %v8323 = vunpack.c.h.b16 %v7665
    %v8324 = vunpack.c.l.b16 %v7666
    %v8325 = vunpack.c.h.b16 %v7666
    %v8326 = vunpack.c.l.b16 %v7667
    %v8327 = vunpack.c.h.b16 %v7667
    %v8328 = vunpack.c.l.b16 %v7668
    %v8329 = vunpack.c.h.b16 %v7668
    %v8330 = vunpack.c.l.b16 %v7669
    %v8331 = vunpack.c.h.b16 %v7669
    %v8332 = vunpack.c.l.b16 %v7670
    %v8333 = vunpack.c.h.b16 %v7670
    %v8334 = vunpack.c.l.b16 %v7671
    %v8335 = vunpack.c.h.b16 %v7671
    %v8336 = vunpack.c.l.b16 %v7672
    %v8337 = vunpack.c.h.b16 %v7672
    %v8338 = vunpack.c.l.b16 %v7673
    %v8339 = vunpack.c.h.b16 %v7673
    %v8340 = vunpack.c.l.b16 %v7674
    %v8341 = vunpack.c.h.b16 %v7674
    %v8342 = vunpack.c.l.b16 %v7675
    %v8343 = vunpack.c.h.b16 %v7675
    %v8344 = vunpack.c.l.b16 %v7676
    %v8345 = vunpack.c.h.b16 %v7676
    %v8346 = vunpack.c.l.b16 %v7677
    %v8347 = vunpack.c.h.b16 %v7677
    %v8348 = vunpack.c.l.b16 %v7678
    %v8349 = vunpack.c.h.b16 %v7678
    %v8350 = vunpack.c.l.b16 %v7679
    %v8351 = vunpack.c.h.b16 %v7679
    %v8352 = vunpack.c.l.b16 %v7680
    %v8353 = vunpack.c.h.b16 %v7680
    %v8354 = vunpack.c.l.b16 %v7681
    %v8355 = vunpack.c.h.b16 %v7681
    %v8356 = vunpack.c.l.b16 %v7682
    %v8357 = vunpack.c.h.b16 %v7682
    %v8358 = vunpack.c.l.b16 %v7683
    %v8359 = vunpack.c.h.b16 %v7683
    %v8360 = vunpack.c.l.b16 %v7684
    %v8361 = vunpack.c.h.b16 %v7684
    %v8362 = vunpack.c.l.b16 %v7685
    %v8363 = vunpack.c.h.b16 %v7685
    %v8364 = vunpack.c.l.b16 %v7686
    %v8365 = vunpack.c.h.b16 %v7686
    %v8366 = vunpack.c.l.b16 %v7687
    %v8367 = vunpack.c.h.b16 %v7687
    %v8368 = vunpack.c.l.b16 %v7688
    %v8369 = vunpack.c.h.b16 %v7688
    %v8370 = vunpack.c.l.b16 %v7689
    %v8371 = vunpack.c.h.b16 %v7689
    %v8372 = vunpack.c.l.b16 %v7690
    %v8373 = vunpack.c.h.b16 %v7690
    %v8374 = vunpack.c.l.b16 %v7691
    %v8375 = vunpack.c.h.b16 %v7691
    %v8376 = vunpack.c.l.b16 %v7692
    %v8377 = vunpack.c.h.b16 %v7692
    %v8378 = vunpack.c.l.b16 %v7693
    %v8379 = vunpack.c.h.b16 %v7693
    %v8380 = vunpack.c.l.b16 %v7694
    %v8381 = vunpack.c.h.b16 %v7694
    %v8382 = vunpack.c.l.b16 %v7695
    %v8383 = vunpack.c.h.b16 %v7695
    %v8384 = vunpack.c.l.b16 %v7696
    %v8385 = vunpack.c.h.b16 %v7696
    %v8386 = vunpack.c.l.b16 %v7697
    %v8387 = vunpack.c.h.b16 %v7697
    %v8388 = vunpack.c.l.b16 %v7698
    %v8389 = vunpack.c.h.b16 %v7698
    %v8390 = vunpack.c.l.b16 %v7699
    %v8391 = vunpack.c.h.b16 %v7699
    %v8392 = vunpack.c.l.b16 %v7700
    %v8393 = vunpack.c.h.b16 %v7700
    %v8394 = vunpack.c.l.b16 %v7701
    %v8395 = vunpack.c.h.b16 %v7701
    %v8396 = vunpack.c.l.b16 %v7702
    %v8397 = vunpack.c.h.b16 %v7702
    %v8398 = vunpack.c.l.b16 %v7703
    %v8399 = vunpack.c.h.b16 %v7703
    %v8400 = vunpack.c.l.b16 %v7704
    %v8401 = vunpack.c.h.b16 %v7704
    %v8402 = vunpack.c.l.b16 %v7705
    %v8403 = vunpack.c.h.b16 %v7705
    %v8404 = vunpack.c.l.b16 %v7706
    %v8405 = vunpack.c.h.b16 %v7706
    %v8406 = vunpack.c.l.b16 %v7707
    %v8407 = vunpack.c.h.b16 %v7707
    %v8408 = vunpack.c.l.b16 %v7708
    %v8409 = vunpack.c.h.b16 %v7708
    %v8410 = vunpack.c.l.b16 %v7709
    %v8411 = vunpack.c.h.b16 %v7709
    %v8412 = vunpack.c.l.b16 %v7710
    %v8413 = vunpack.c.h.b16 %v7710
    %v8414 = vunpack.c.l.b16 %v7711
    %v8415 = vunpack.c.h.b16 %v7711
    %v8416 = vunpack.c.l.b16 %v7712
    %v8417 = vunpack.c.h.b16 %v7712
    %v8418 = vunpack.c.l.b16 %v7713
    %v8419 = vunpack.c.h.b16 %v7713
    %v8420 = vunpack.c.l.b16 %v7714
    %v8421 = vunpack.c.h.b16 %v7714
    %v8422 = vunpack.c.l.b16 %v7715
    %v8423 = vunpack.c.h.b16 %v7715
    %v8424 = vunpack.c.l.b16 %v7716
    %v8425 = vunpack.c.h.b16 %v7716
    %v8426 = vunpack.c.l.b16 %v7717
    %v8427 = vunpack.c.h.b16 %v7717
    %v8428 = vunpack.c.l.b16 %v7718
    %v8429 = vunpack.c.h.b16 %v7718
    %v8430 = vunpack.c.l.b16 %v7719
    %v8431 = vunpack.c.h.b16 %v7719
    %v8432 = vunpack.c.l.b16 %v7720
    %v8433 = vunpack.c.h.b16 %v7720
    %v8434 = vunpack.c.l.b16 %v7721
    %v8435 = vunpack.c.h.b16 %v7721
    %v8436 = vunpack.c.l.b16 %v7722
    %v8437 = vunpack.c.h.b16 %v7722
    %v8438 = vunpack.c.l.b16 %v7723
    %v8439 = vunpack.c.h.b16 %v7723
    %v8440 = vunpack.c.l.b16 %v7724
    %v8441 = vunpack.c.h.b16 %v7724
    %v8442 = vunpack.c.l.b16 %v7725
    %v8443 = vunpack.c.h.b16 %v7725
    %v8444 = vunpack.c.l.b16 %v7726
    %v8445 = vunpack.c.h.b16 %v7726
    %v8446 = vunpack.c.l.b16 %v7727
    %v8447 = vunpack.c.h.b16 %v7727
    %v8448 = vunpack.c.l.b16 %v7728
    %v8449 = vunpack.c.h.b16 %v7728
    %v8450 = vunpack.c.l.b16 %v7729
    %v8451 = vunpack.c.h.b16 %v7729
    %v8452 = vunpack.c.l.b16 %v7730
    %v8453 = vunpack.c.h.b16 %v7730
    %v8454 = vunpack.c.l.b16 %v7731
    %v8455 = vunpack.c.h.b16 %v7731
    %v8456 = vunpack.c.l.b16 %v7732
    %v8457 = vunpack.c.h.b16 %v7732
    %v8458 = vunpack.c.l.b16 %v7733
    %v8459 = vunpack.c.h.b16 %v7733
    %v8460 = vunpack.c.l.b16 %v7734
    %v8461 = vunpack.c.h.b16 %v7734
    %v8462 = vunpack.c.l.b16 %v7735
    %v8463 = vunpack.c.h.b16 %v7735
    %v8464 = vunpack.c.l.b16 %v7736
    %v8465 = vunpack.c.h.b16 %v7736
    %v8466 = vunpack.c.l.b16 %v7737
    %v8467 = vunpack.c.h.b16 %v7737
    %v8468 = vunpack.c.l.b16 %v7738
    %v8469 = vunpack.c.h.b16 %v7738
    %v8470 = vunpack.c.l.b16 %v7739
    %v8471 = vunpack.c.h.b16 %v7739
    %v8472 = vunpack.c.l.b16 %v7740
    %v8473 = vunpack.c.h.b16 %v7740
    %v8474 = vunpack.c.l.b16 %v7741
    %v8475 = vunpack.c.h.b16 %v7741
    %v8476 = vunpack.c.l.b16 %v7742
    %v8477 = vunpack.c.h.b16 %v7742
    %v8478 = vunpack.c.l.b16 %v7743
    %v8479 = vunpack.c.h.b16 %v7743
    %v8480 = vunpack.c.l.b16 %v7744
    %v8481 = vunpack.c.h.b16 %v7744
    %v8482 = vunpack.c.l.b16 %v7745
    %v8483 = vunpack.c.h.b16 %v7745
    %v8484 = vunpack.c.l.b16 %v7746
    %v8485 = vunpack.c.h.b16 %v7746
    %v8486 = vunpack.c.l.b16 %v7747
    %v8487 = vunpack.c.h.b16 %v7747
    %v8488 = vunpack.c.l.b16 %v7748
    %v8489 = vunpack.c.h.b16 %v7748
    %v8490 = vunpack.c.l.b16 %v7749
    %v8491 = vunpack.c.h.b16 %v7749
    %v8492 = vunpack.c.l.b16 %v7750
    %v8493 = vunpack.c.h.b16 %v7750
    %v8494 = vunpack.c.l.b16 %v7751
    %v8495 = vunpack.c.h.b16 %v7751
    %v8496 = vunpack.c.l.b16 %v7752
    %v8497 = vunpack.c.h.b16 %v7752
    %v8498 = vunpack.c.l.b16 %v7753
    %v8499 = vunpack.c.h.b16 %v7753
    %v8500 = vunpack.c.l.b16 %v7754
    %v8501 = vunpack.c.h.b16 %v7754
    %v8502 = vunpack.c.l.b16 %v7755
    %v8503 = vunpack.c.h.b16 %v7755
    %v8504 = vunpack.c.l.b16 %v7756
    %v8505 = vunpack.c.h.b16 %v7756
    %v8506 = vunpack.c.l.b16 %v7757
    %v8507 = vunpack.c.h.b16 %v7757
    %v8508 = vunpack.c.l.b16 %v7758
    %v8509 = vunpack.c.h.b16 %v7758
    %v8510 = vunpack.c.l.b16 %v7759
    %v8511 = vunpack.c.h.b16 %v7759
    %v8512 = vunpack.c.l.b16 %v7760
    %v8513 = vunpack.c.h.b16 %v7760
    %v8514 = vunpack.c.l.b16 %v7761
    %v8515 = vunpack.c.h.b16 %v7761
    %v8516 = vunpack.c.l.b16 %v7762
    %v8517 = vunpack.c.h.b16 %v7762
    %v8518 = vunpack.c.l.b16 %v7763
    %v8519 = vunpack.c.h.b16 %v7763
    %v8520 = vunpack.c.l.b16 %v7764
    %v8521 = vunpack.c.h.b16 %v7764
    %v8522 = vunpack.c.l.b16 %v7765
    %v8523 = vunpack.c.h.b16 %v7765
    %v8524 = vunpack.c.l.b16 %v7766
    %v8525 = vunpack.c.h.b16 %v7766
    %v8526 = vunpack.c.l.b16 %v7767
    %v8527 = vunpack.c.h.b16 %v7767
    %v8528 = vunpack.c.l.b16 %v7768
    %v8529 = vunpack.c.h.b16 %v7768
    %v8530 = vunpack.c.l.b16 %v7769
    %v8531 = vunpack.c.h.b16 %v7769
    %v8532 = vunpack.c.l.b16 %v7770
    %v8533 = vunpack.c.h.b16 %v7770
    %v8534 = vunpack.c.l.b16 %v7771
    %v8535 = vunpack.c.h.b16 %v7771
    %v8536 = vunpack.c.l.b16 %v7772
    %v8537 = vunpack.c.h.b16 %v7772
    %v8538 = vunpack.c.l.b16 %v7773
    %v8539 = vunpack.c.h.b16 %v7773
    %v8540 = vunpack.c.l.b16 %v7774
    %v8541 = vunpack.c.h.b16 %v7774
    %v8542 = vunpack.c.l.b16 %v7775
    %v8543 = vunpack.c.h.b16 %v7775
    %v8544 = vunpack.c.l.b16 %v7776
    %v8545 = vunpack.c.h.b16 %v7776
    %v8546 = vunpack.c.l.b16 %v7777
    %v8547 = vunpack.c.h.b16 %v7777
    %v8548 = vunpack.c.l.b16 %v7778
    %v8549 = vunpack.c.h.b16 %v7778
    %v8550 = vunpack.c.l.b16 %v7779
    %v8551 = vunpack.c.h.b16 %v7779
    %v8552 = vunpack.c.l.b16 %v7780
    %v8553 = vunpack.c.h.b16 %v7780
    %v8554 = vunpack.c.l.b16 %v7781
    %v8555 = vunpack.c.h.b16 %v7781
    %v8556 = vunpack.c.l.b16 %v7782
    %v8557 = vunpack.c.h.b16 %v7782
    %v8558 = vunpack.c.l.b16 %v7783
    %v8559 = vunpack.c.h.b16 %v7783
    %v8560 = vunpack.c.l.b16 %v7784
    %v8561 = vunpack.c.h.b16 %v7784
    %v8562 = vunpack.c.l.b16 %v7785
    %v8563 = vunpack.c.h.b16 %v7785
    %v8564 = vunpack.c.l.b16 %v7786
    %v8565 = vunpack.c.h.b16 %v7786
    %v8566 = vunpack.c.l.b16 %v7787
    %v8567 = vunpack.c.h.b16 %v7787
    %v8568 = vunpack.c.l.b16 %v7788
    %v8569 = vunpack.c.h.b16 %v7788
    %v8570 = vunpack.c.l.b16 %v7789
    %v8571 = vunpack.c.h.b16 %v7789
    %v8572 = vunpack.c.l.b16 %v7790
    %v8573 = vunpack.c.h.b16 %v7790
    %v8574 = vunpack.c.l.b16 %v7791
    %v8575 = vunpack.c.h.b16 %v7791
    %v8576 = vunpack.c.l.b16 %v7792
    %v8577 = vunpack.c.h.b16 %v7792
    %v8578 = vunpack.c.l.b16 %v7793
    %v8579 = vunpack.c.h.b16 %v7793
    %v8580 = vunpack.c.l.b16 %v7794
    %v8581 = vunpack.c.h.b16 %v7794
    %v8582 = vunpack.c.l.b16 %v7795
    %v8583 = vunpack.c.h.b16 %v7795
    %v8584 = vunpack.c.l.b16 %v7796
    %v8585 = vunpack.c.h.b16 %v7796
    %v8586 = vunpack.c.l.b16 %v7797
    %v8587 = vunpack.c.h.b16 %v7797
    %v8588 = vunpack.c.l.b16 %v7798
    %v8589 = vunpack.c.h.b16 %v7798
    %v8590 = vunpack.c.l.b16 %v7799
    %v8591 = vunpack.c.h.b16 %v7799
    %v8592 = vunpack.c.l.b16 %v7800
    %v8593 = vunpack.c.h.b16 %v7800
    %v8594 = vunpack.c.l.b16 %v7801
    %v8595 = vunpack.c.h.b16 %v7801
    %v8596 = vunpack.c.l.b16 %v7802
    %v8597 = vunpack.c.h.b16 %v7802
    %v8598 = vunpack.c.l.b16 %v7803
    %v8599 = vunpack.c.h.b16 %v7803
    %v8600 = vunpack.c.l.b16 %v7804
    %v8601 = vunpack.c.h.b16 %v7804
    %v8602 = vunpack.c.l.b16 %v7805
    %v8603 = vunpack.c.h.b16 %v7805
    %v8604 = vunpack.c.l.b16 %v7806
    %v8605 = vunpack.c.h.b16 %v7806
    %v8606 = vunpack.c.l.b16 %v7807
    %v8607 = vunpack.c.h.b16 %v7807
    %v8608 = vpack.c.b16 %v8104, %v8096
    %v8609 = vpack.c.b16 %v8105, %v8097
    %v8610 = vpack.c.b16 %v8106, %v8098
    %v8611 = vpack.c.b16 %v8107, %v8099
    %v8612 = vpack.c.b16 %v8108, %v8100
    %v8613 = vpack.c.b16 %v8109, %v8101
    %v8614 = vpack.c.b16 %v8110, %v8102
    %v8615 = vpack.c.b16 %v8111, %v8103
    %v8616 = vpack.c.b16 %v8120, %v8112
    %v8617 = vpack.c.b16 %v8121, %v8113
    %v8618 = vpack.c.b16 %v8122, %v8114
    %v8619 = vpack.c.b16 %v8123, %v8115
    %v8620 = vpack.c.b16 %v8124, %v8116
    %v8621 = vpack.c.b16 %v8125, %v8117
    %v8622 = vpack.c.b16 %v8126, %v8118
    %v8623 = vpack.c.b16 %v8127, %v8119
    %v8624 = vpack.c.b16 %v8136, %v8128
    %v8625 = vpack.c.b16 %v8137, %v8129
    %v8626 = vpack.c.b16 %v8138, %v8130
    %v8627 = vpack.c.b16 %v8139, %v8131
    %v8628 = vpack.c.b16 %v8140, %v8132
    %v8629 = vpack.c.b16 %v8141, %v8133
    %v8630 = vpack.c.b16 %v8142, %v8134
    %v8631 = vpack.c.b16 %v8143, %v8135
    %v8632 = vpack.c.b16 %v8152, %v8144
    %v8633 = vpack.c.b16 %v8153, %v8145
    %v8634 = vpack.c.b16 %v8154, %v8146
    %v8635 = vpack.c.b16 %v8155, %v8147
    %v8636 = vpack.c.b16 %v8156, %v8148
    %v8637 = vpack.c.b16 %v8157, %v8149
    %v8638 = vpack.c.b16 %v8158, %v8150
    %v8639 = vpack.c.b16 %v8159, %v8151
    %v8640 = vpack.c.b16 %v8168, %v8160
    %v8641 = vpack.c.b16 %v8169, %v8161
    %v8642 = vpack.c.b16 %v8170, %v8162
    %v8643 = vpack.c.b16 %v8171, %v8163
    %v8644 = vpack.c.b16 %v8172, %v8164
    %v8645 = vpack.c.b16 %v8173, %v8165
    %v8646 = vpack.c.b16 %v8174, %v8166
    %v8647 = vpack.c.b16 %v8175, %v8167
    %v8648 = vpack.c.b16 %v8184, %v8176
    %v8649 = vpack.c.b16 %v8185, %v8177
    %v8650 = vpack.c.b16 %v8186, %v8178
    %v8651 = vpack.c.b16 %v8187, %v8179
    %v8652 = vpack.c.b16 %v8188, %v8180
    %v8653 = vpack.c.b16 %v8189, %v8181
    %v8654 = vpack.c.b16 %v8190, %v8182
    %v8655 = vpack.c.b16 %v8191, %v8183
    %v8656 = vpack.c.b16 %v8200, %v8192
    %v8657 = vpack.c.b16 %v8201, %v8193
    %v8658 = vpack.c.b16 %v8202, %v8194
    %v8659 = vpack.c.b16 %v8203, %v8195
    %v8660 = vpack.c.b16 %v8204, %v8196
    %v8661 = vpack.c.b16 %v8205, %v8197
    %v8662 = vpack.c.b16 %v8206, %v8198
    %v8663 = vpack.c.b16 %v8207, %v8199
    %v8664 = vpack.c.b16 %v8216, %v8208
    %v8665 = vpack.c.b16 %v8217, %v8209
    %v8666 = vpack.c.b16 %v8218, %v8210
    %v8667 = vpack.c.b16 %v8219, %v8211
    %v8668 = vpack.c.b16 %v8220, %v8212
    %v8669 = vpack.c.b16 %v8221, %v8213
    %v8670 = vpack.c.b16 %v8222, %v8214
    %v8671 = vpack.c.b16 %v8223, %v8215
    %v8672 = vpack.c.b16 %v8232, %v8224
    %v8673 = vpack.c.b16 %v8233, %v8225
    %v8674 = vpack.c.b16 %v8234, %v8226
    %v8675 = vpack.c.b16 %v8235, %v8227
    %v8676 = vpack.c.b16 %v8236, %v8228
    %v8677 = vpack.c.b16 %v8237, %v8229
    %v8678 = vpack.c.b16 %v8238, %v8230
    %v8679 = vpack.c.b16 %v8239, %v8231
    %v8680 = vpack.c.b16 %v8248, %v8240
    %v8681 = vpack.c.b16 %v8249, %v8241
    %v8682 = vpack.c.b16 %v8250, %v8242
    %v8683 = vpack.c.b16 %v8251, %v8243
    %v8684 = vpack.c.b16 %v8252, %v8244
    %v8685 = vpack.c.b16 %v8253, %v8245
    %v8686 = vpack.c.b16 %v8254, %v8246
    %v8687 = vpack.c.b16 %v8255, %v8247
    %v8688 = vpack.c.b16 %v8264, %v8256
    %v8689 = vpack.c.b16 %v8265, %v8257
    %v8690 = vpack.c.b16 %v8266, %v8258
    %v8691 = vpack.c.b16 %v8267, %v8259
    %v8692 = vpack.c.b16 %v8268, %v8260
    %v8693 = vpack.c.b16 %v8269, %v8261
    %v8694 = vpack.c.b16 %v8270, %v8262
    %v8695 = vpack.c.b16 %v8271, %v8263
    %v8696 = vpack.c.b16 %v8280, %v8272
    %v8697 = vpack.c.b16 %v8281, %v8273
    %v8698 = vpack.c.b16 %v8282, %v8274
    %v8699 = vpack.c.b16 %v8283, %v8275
    %v8700 = vpack.c.b16 %v8284, %v8276
    %v8701 = vpack.c.b16 %v8285, %v8277
    %v8702 = vpack.c.b16 %v8286, %v8278
    %v8703 = vpack.c.b16 %v8287, %v8279
    %v8704 = vpack.c.b16 %v8296, %v8288
    %v8705 = vpack.c.b16 %v8297, %v8289
    %v8706 = vpack.c.b16 %v8298, %v8290
    %v8707 = vpack.c.b16 %v8299, %v8291
    %v8708 = vpack.c.b16 %v8300, %v8292
    %v8709 = vpack.c.b16 %v8301, %v8293
    %v8710 = vpack.c.b16 %v8302, %v8294
    %v8711 = vpack.c.b16 %v8303, %v8295
    %v8712 = vpack.c.b16 %v8312, %v8304
    %v8713 = vpack.c.b16 %v8313, %v8305
    %v8714 = vpack.c.b16 %v8314, %v8306
    %v8715 = vpack.c.b16 %v8315, %v8307
    %v8716 = vpack.c.b16 %v8316, %v8308
    %v8717 = vpack.c.b16 %v8317, %v8309
    %v8718 = vpack.c.b16 %v8318, %v8310
    %v8719 = vpack.c.b16 %v8319, %v8311
    %v8720 = vpack.c.b16 %v8328, %v8320
    %v8721 = vpack.c.b16 %v8329, %v8321
    %v8722 = vpack.c.b16 %v8330, %v8322
    %v8723 = vpack.c.b16 %v8331, %v8323
    %v8724 = vpack.c.b16 %v8332, %v8324
    %v8725 = vpack.c.b16 %v8333, %v8325
    %v8726 = vpack.c.b16 %v8334, %v8326
    %v8727 = vpack.c.b16 %v8335, %v8327
    %v8728 = vpack.c.b16 %v8344, %v8336
    %v8729 = vpack.c.b16 %v8345, %v8337
    %v8730 = vpack.c.b16 %v8346, %v8338
    %v8731 = vpack.c.b16 %v8347, %v8339
    %v8732 = vpack.c.b16 %v8348, %v8340
    %v8733 = vpack.c.b16 %v8349, %v8341
    %v8734 = vpack.c.b16 %v8350, %v8342
    %v8735 = vpack.c.b16 %v8351, %v8343
    %v8736 = vpack.c.b16 %v8360, %v8352
    %v8737 = vpack.c.b16 %v8361, %v8353
    %v8738 = vpack.c.b16 %v8362, %v8354
    %v8739 = vpack.c.b16 %v8363, %v8355
    %v8740 = vpack.c.b16 %v8364, %v8356
    %v8741 = vpack.c.b16 %v8365, %v8357
    %v8742 = vpack.c.b16 %v8366, %v8358
    %v8743 = vpack.c.b16 %v8367, %v8359
    %v8744 = vpack.c.b16 %v8376, %v8368
    %v8745 = vpack.c.b16 %v8377, %v8369
    %v8746 = vpack.c.b16 %v8378, %v8370
    %v8747 = vpack.c.b16 %v8379, %v8371
    %v8748 = vpack.c.b16 %v8380, %v8372
    %v8749 = vpack.c.b16 %v8381, %v8373
    %v8750 = vpack.c.b16 %v8382, %v8374
    %v8751 = vpack.c.b16 %v8383, %v8375
    %v8752 = vpack.c.b16 %v8392, %v8384
    %v8753 = vpack.c.b16 %v8393, %v8385
    %v8754 = vpack.c.b16 %v8394, %v8386
    %v8755 = vpack.c.b16 %v8395, %v8387
    %v8756 = vpack.c.b16 %v8396, %v8388
    %v8757 = vpack.c.b16 %v8397, %v8389
    %v8758 = vpack.c.b16 %v8398, %v8390
    %v8759 = vpack.c.b16 %v8399, %v8391
    %v8760 = vpack.c.b16 %v8408, %v8400
    %v8761 = vpack.c.b16 %v8409, %v8401
    %v8762 = vpack.c.b16 %v8410, %v8402
    %v8763 = vpack.c.b16 %v8411, %v8403
    %v8764 = vpack.c.b16 %v8412, %v8404
    %v8765 = vpack.c.b16 %v8413, %v8405
    %v8766 = vpack.c.b16 %v8414, %v8406
    %v8767 = vpack.c.b16 %v8415, %v8407
    %v8768 = vpack.c.b16 %v8424, %v8416
    %v8769 = vpack.c.b16 %v8425, %v8417
    %v8770 = vpack.c.b16 %v8426, %v8418
    %v8771 = vpack.c.b16 %v8427, %v8419
    %v8772 = vpack.c.b16 %v8428, %v8420
    %v8773 = vpack.c.b16 %v8429, %v8421
    %v8774 = vpack.c.b16 %v8430, %v8422
    %v8775 = vpack.c.b16 %v8431, %v8423
    %v8776 = vpack.c.b16 %v8440, %v8432
    %v8777 = vpack.c.b16 %v8441, %v8433
    %v8778 = vpack.c.b16 %v8442, %v8434
    %v8779 = vpack.c.b16 %v8443, %v8435
    %v8780 = vpack.c.b16 %v8444, %v8436
    %v8781 = vpack.c.b16 %v8445, %v8437
    %v8782 = vpack.c.b16 %v8446, %v8438
    %v8783 = vpack.c.b16 %v8447, %v8439
    %v8784 = vpack.c.b16 %v8456, %v8448
    %v8785 = vpack.c.b16 %v8457, %v8449
    %v8786 = vpack.c.b16 %v8458, %v8450
    %v8787 = vpack.c.b16 %v8459, %v8451
    %v8788 = vpack.c.b16 %v8460, %v8452
    %v8789 = vpack.c.b16 %v8461, %v8453
    %v8790 = vpack.c.b16 %v8462, %v8454
    %v8791 = vpack.c.b16 %v8463, %v8455
    %v8792 = vpack.c.b16 %v8472, %v8464
    %v8793 = vpack.c.b16 %v8473, %v8465
    %v8794 = vpack.c.b16 %v8474, %v8466
    %v8795 = vpack.c.b16 %v8475, %v8467
    %v8796 = vpack.c.b16 %v8476, %v8468
    %v8797 = vpack.c.b16 %v8477, %v8469
    %v8798 = vpack.c.b16 %v8478, %v8470
    %v8799 = vpack.c.b16 %v8479, %v8471
    %v8800 = vpack.c.b16 %v8488, %v8480
    %v8801 = vpack.c.b16 %v8489, %v8481
    %v8802 = vpack.c.b16 %v8490, %v8482
    %v8803 = vpack.c.b16 %v8491, %v8483
    %v8804 = vpack.c.b16 %v8492, %v8484
    %v8805 = vpack.c.b16 %v8493, %v8485
    %v8806 = vpack.c.b16 %v8494, %v8486
    %v8807 = vpack.c.b16 %v8495, %v8487
    %v8808 = vpack.c.b16 %v8504, %v8496
    %v8809 = vpack.c.b16 %v8505, %v8497
    %v8810 = vpack.c.b16 %v8506, %v8498
    %v8811 = vpack.c.b16 %v8507, %v8499
    %v8812 = vpack.c.b16 %v8508, %v8500
    %v8813 = vpack.c.b16 %v8509, %v8501
    %v8814 = vpack.c.b16 %v8510, %v8502
    %v8815 = vpack.c.b16 %v8511, %v8503
    %v8816 = vpack.c.b16 %v8520, %v8512
    %v8817 = vpack.c.b16 %v8521, %v8513
    %v8818 = vpack.c.b16 %v8522, %v8514
    %v8819 = vpack.c.b16 %v8523, %v8515
    %v8820 = vpack.c.b16 %v8524, %v8516
    %v8821 = vpack.c.b16 %v8525, %v8517
    %v8822 = vpack.c.b16 %v8526, %v8518
    %v8823 = vpack.c.b16 %v8527, %v8519
    %v8824 = vpack.c.b16 %v8536, %v8528
    %v8825 = vpack.c.b16 %v8537, %v8529
    %v8826 = vpack.c.b16 %v8538, %v8530
    %v8827 = vpack.c.b16 %v8539, %v8531
    %v8828 = vpack.c.b16 %v8540, %v8532
    %v8829 = vpack.c.b16 %v8541, %v8533
    %v8830 = vpack.c.b16 %v8542, %v8534
    %v8831 = vpack.c.b16 %v8543, %v8535
    %v8832 = vpack.c.b16 %v8552, %v8544
    %v8833 = vpack.c.b16 %v8553, %v8545
    %v8834 = vpack.c.b16 %v8554, %v8546
    %v8835 = vpack.c.b16 %v8555, %v8547
    %v8836 = vpack.c.b16 %v8556, %v8548
    %v8837 = vpack.c.b16 %v8557, %v8549
    %v8838 = vpack.c.b16 %v8558, %v8550
    %v8839 = vpack.c.b16 %v8559, %v8551
    %v8840 = vpack.c.b16 %v8568, %v8560
    %v8841 = vpack.c.b16 %v8569, %v8561
    %v8842 = vpack.c.b16 %v8570, %v8562
    %v8843 = vpack.c.b16 %v8571, %v8563
    %v8844 = vpack.c.b16 %v8572, %v8564
    %v8845 = vpack.c.b16 %v8573, %v8565
    %v8846 = vpack.c.b16 %v8574, %v8566
    %v8847 = vpack.c.b16 %v8575, %v8567
    %v8848 = vpack.c.b16 %v8584, %v8576
    %v8849 = vpack.c.b16 %v8585, %v8577
    %v8850 = vpack.c.b16 %v8586, %v8578
    %v8851 = vpack.c.b16 %v8587, %v8579
    %v8852 = vpack.c.b16 %v8588, %v8580
    %v8853 = vpack.c.b16 %v8589, %v8581
    %v8854 = vpack.c.b16 %v8590, %v8582
    %v8855 = vpack.c.b16 %v8591, %v8583
    %v8856 = vpack.c.b16 %v8600, %v8592
    %v8857 = vpack.c.b16 %v8601, %v8593
    %v8858 = vpack.c.b16 %v8602, %v8594
    %v8859 = vpack.c.b16 %v8603, %v8595
    %v8860 = vpack.c.b16 %v8604, %v8596
    %v8861 = vpack.c.b16 %v8605, %v8597
    %v8862 = vpack.c.b16 %v8606, %v8598
    %v8863 = vpack.c.b16 %v8607, %v8599
    %9120 = vmatprep.subr.bf16.mxu0 %v8665
    %9121 = vmatpush1.bf16.msra.mxu0 %v8664
    %9122 = vmatprep.subr.bf16.mxu0 %v8657
    %9123 = vmatpush1.bf16.msra.mxu0 %v8656
    %9124 = vmatprep.subr.bf16.mxu0 %v8649
    %9125 = vmatpush1.bf16.msra.mxu0 %v8648
    %9126 = vmatprep.subr.bf16.mxu0 %v8641
    %9127 = vmatpush1.bf16.msra.mxu0 %v8640
    %9128 = vmatprep.subr.bf16.mxu0 %v8633
    %9129 = vmatpush1.bf16.msra.mxu0 %v8632
    %9130 = vmatprep.subr.bf16.mxu0 %v8625
    %9131 = vmatpush1.bf16.msra.mxu0 %v8624
    %9132 = vmatprep.subr.bf16.mxu0 %v8617
    %9133 = vmatpush1.bf16.msra.mxu0 %v8616
    %9134 = vmatprep.subr.bf16.mxu0 %v8609
    %9135 = vmatpush1.bf16.msra.mxu0 %v8608
    %9136 = vmatprep.subr.bf16.mxu0 %v8729
    %9137 = vmatpush2.bf16.msra.mxu0 %v8728
    %9138 = vmatprep.subr.bf16.mxu0 %v8721
    %9139 = vmatpush2.bf16.msra.mxu0 %v8720
    %9140 = vmatprep.subr.bf16.mxu0 %v8713
    %9141 = vmatpush2.bf16.msra.mxu0 %v8712
    %9142 = vmatprep.subr.bf16.mxu0 %v8705
    %9143 = vmatpush2.bf16.msra.mxu0 %v8704
    %9144 = vmatprep.subr.bf16.mxu0 %v8697
    %9145 = vmatpush2.bf16.msra.mxu0 %v8696
    %9146 = vmatprep.subr.bf16.mxu0 %v8689
    %9147 = vmatpush2.bf16.msra.mxu0 %v8688
    %9148 = vmatprep.subr.bf16.mxu0 %v8681
    %9149 = vmatpush2.bf16.msra.mxu0 %v8680
    %9150 = vmatprep.subr.bf16.mxu0 %v8673
    %9151 = vmatpush2.bf16.msra.mxu0 %v8672
    %9152 = vmatprep.mubr.bf16.mxu0 %v7825
    %9153 = vmatmul.mubr.bf16.gmra.mxu0 %v7824
    %v9154 = vpop.f32.mrf.mxu0
    %v9155 = vadd.f32 0.0, %v9154
    %v9156 = vpop.f32.mrf.mxu0
    %v9157 = vadd.f32 0.0, %v9156
    %v9158 = vpop.f32.mrf.mxu0
    %v9159 = vadd.f32 0.0, %v9158
    %v9160 = vpop.f32.mrf.mxu0
    %v9161 = vadd.f32 0.0, %v9160
    %9162 = vmatprep.mubr.bf16.mxu0 %v7829
    %9163 = vmatmul.mubr.bf16.gmra.mxu0 %v7828
    %v9164 = vpop.f32.mrf.mxu0
    %v9165 = vadd.f32 0.0, %v9164
    %v9166 = vpop.f32.mrf.mxu0
    %v9167 = vadd.f32 0.0, %v9166
    %v9168 = vpop.f32.mrf.mxu0
    %v9169 = vadd.f32 0.0, %v9168
    %v9170 = vpop.f32.mrf.mxu0
    %v9171 = vadd.f32 0.0, %v9170
    %9172 = vdwg.mxu0
    %9173 = vmatprep.subr.bf16.mxu0 %v8793
    %9174 = vmatpush1.bf16.msra.mxu0 %v8792
    %9175 = vmatprep.subr.bf16.mxu0 %v8785
    %9176 = vmatpush1.bf16.msra.mxu0 %v8784
    %9177 = vmatprep.subr.bf16.mxu0 %v8777
    %9178 = vmatpush1.bf16.msra.mxu0 %v8776
    %9179 = vmatprep.subr.bf16.mxu0 %v8769
    %9180 = vmatpush1.bf16.msra.mxu0 %v8768
    %9181 = vmatprep.subr.bf16.mxu0 %v8761
    %9182 = vmatpush1.bf16.msra.mxu0 %v8760
    %9183 = vmatprep.subr.bf16.mxu0 %v8753
    %9184 = vmatpush1.bf16.msra.mxu0 %v8752
    %9185 = vmatprep.subr.bf16.mxu0 %v8745
    %9186 = vmatpush1.bf16.msra.mxu0 %v8744
    %9187 = vmatprep.subr.bf16.mxu0 %v8737
    %9188 = vmatpush1.bf16.msra.mxu0 %v8736
    %9189 = vmatprep.subr.bf16.mxu0 %v8857
    %9190 = vmatpush2.bf16.msra.mxu0 %v8856
    %9191 = vmatprep.subr.bf16.mxu0 %v8849
    %9192 = vmatpush2.bf16.msra.mxu0 %v8848
    %9193 = vmatprep.subr.bf16.mxu0 %v8841
    %9194 = vmatpush2.bf16.msra.mxu0 %v8840
    %9195 = vmatprep.subr.bf16.mxu0 %v8833
    %9196 = vmatpush2.bf16.msra.mxu0 %v8832
    %9197 = vmatprep.subr.bf16.mxu0 %v8825
    %9198 = vmatpush2.bf16.msra.mxu0 %v8824
    %9199 = vmatprep.subr.bf16.mxu0 %v8817
    %9200 = vmatpush2.bf16.msra.mxu0 %v8816
    %9201 = vmatprep.subr.bf16.mxu0 %v8809
    %9202 = vmatpush2.bf16.msra.mxu0 %v8808
    %9203 = vmatprep.subr.bf16.mxu0 %v8801
    %9204 = vmatpush2.bf16.msra.mxu0 %v8800
    %9205 = vmatprep.mubr.bf16.mxu0 %v7827
    %9206 = vmatmul.mubr.bf16.gmra.mxu0 %v7826
    %v9207 = vpop.f32.mrf.mxu0
    %v9208 = vadd.f32 %v9155, %v9207
    %v9209 = vpop.f32.mrf.mxu0
    %v9210 = vadd.f32 %v9157, %v9209
    %v9211 = vpop.f32.mrf.mxu0
    %v9212 = vadd.f32 %v9159, %v9211
    %v9213 = vpop.f32.mrf.mxu0
    %v9214 = vadd.f32 %v9161, %v9213
    %9215 = vmatprep.mubr.bf16.mxu0 %v7831
    %9216 = vmatmul.mubr.bf16.gmra.mxu0 %v7830
    %v9217 = vpop.f32.mrf.mxu0
    %v9218 = vadd.f32 %v9165, %v9217
    %v9219 = vpop.f32.mrf.mxu0
    %v9220 = vadd.f32 %v9167, %v9219
    %v9221 = vpop.f32.mrf.mxu0
    %v9222 = vadd.f32 %v9169, %v9221
    %v9223 = vpop.f32.mrf.mxu0
    %v9224 = vadd.f32 %v9171, %v9223
    %9225 = vdwg.mxu0
    %9226 = vmatprep.subr.bf16.mxu0 %v8667
    %9227 = vmatpush1.bf16.msra.mxu0 %v8666
    %9228 = vmatprep.subr.bf16.mxu0 %v8659
    %9229 = vmatpush1.bf16.msra.mxu0 %v8658
    %9230 = vmatprep.subr.bf16.mxu0 %v8651
    %9231 = vmatpush1.bf16.msra.mxu0 %v8650
    %9232 = vmatprep.subr.bf16.mxu0 %v8643
    %9233 = vmatpush1.bf16.msra.mxu0 %v8642
    %9234 = vmatprep.subr.bf16.mxu0 %v8635
    %9235 = vmatpush1.bf16.msra.mxu0 %v8634
    %9236 = vmatprep.subr.bf16.mxu0 %v8627
    %9237 = vmatpush1.bf16.msra.mxu0 %v8626
    %9238 = vmatprep.subr.bf16.mxu0 %v8619
    %9239 = vmatpush1.bf16.msra.mxu0 %v8618
    %9240 = vmatprep.subr.bf16.mxu0 %v8611
    %9241 = vmatpush1.bf16.msra.mxu0 %v8610
    %9242 = vmatprep.subr.bf16.mxu0 %v8731
    %9243 = vmatpush2.bf16.msra.mxu0 %v8730
    %9244 = vmatprep.subr.bf16.mxu0 %v8723
    %9245 = vmatpush2.bf16.msra.mxu0 %v8722
    %9246 = vmatprep.subr.bf16.mxu0 %v8715
    %9247 = vmatpush2.bf16.msra.mxu0 %v8714
    %9248 = vmatprep.subr.bf16.mxu0 %v8707
    %9249 = vmatpush2.bf16.msra.mxu0 %v8706
    %9250 = vmatprep.subr.bf16.mxu0 %v8699
    %9251 = vmatpush2.bf16.msra.mxu0 %v8698
    %9252 = vmatprep.subr.bf16.mxu0 %v8691
    %9253 = vmatpush2.bf16.msra.mxu0 %v8690
    %9254 = vmatprep.subr.bf16.mxu0 %v8683
    %9255 = vmatpush2.bf16.msra.mxu0 %v8682
    %9256 = vmatprep.subr.bf16.mxu0 %v8675
    %9257 = vmatpush2.bf16.msra.mxu0 %v8674
    %9258 = vmatprep.mubr.bf16.mxu0 %v7825
    %9259 = vmatmul.mubr.bf16.gmra.mxu0 %v7824
    %v9260 = vpop.f32.mrf.mxu0
    %v9261 = vadd.f32 0.0, %v9260
    %v9262 = vpop.f32.mrf.mxu0
    %v9263 = vadd.f32 0.0, %v9262
    %v9264 = vpop.f32.mrf.mxu0
    %v9265 = vadd.f32 0.0, %v9264
    %v9266 = vpop.f32.mrf.mxu0
    %v9267 = vadd.f32 0.0, %v9266
    %9268 = vmatprep.mubr.bf16.mxu0 %v7829
    %9269 = vmatmul.mubr.bf16.gmra.mxu0 %v7828
    %v9270 = vpop.f32.mrf.mxu0
    %v9271 = vadd.f32 0.0, %v9270
    %v9272 = vpop.f32.mrf.mxu0
    %v9273 = vadd.f32 0.0, %v9272
    %v9274 = vpop.f32.mrf.mxu0
    %v9275 = vadd.f32 0.0, %v9274
    %v9276 = vpop.f32.mrf.mxu0
    %v9277 = vadd.f32 0.0, %v9276
    %9278 = vdwg.mxu0
    %9279 = vmatprep.subr.bf16.mxu0 %v8795
    %9280 = vmatpush1.bf16.msra.mxu0 %v8794
    %9281 = vmatprep.subr.bf16.mxu0 %v8787
    %9282 = vmatpush1.bf16.msra.mxu0 %v8786
    %9283 = vmatprep.subr.bf16.mxu0 %v8779
    %9284 = vmatpush1.bf16.msra.mxu0 %v8778
    %9285 = vmatprep.subr.bf16.mxu0 %v8771
    %9286 = vmatpush1.bf16.msra.mxu0 %v8770
    %9287 = vmatprep.subr.bf16.mxu0 %v8763
    %9288 = vmatpush1.bf16.msra.mxu0 %v8762
    %9289 = vmatprep.subr.bf16.mxu0 %v8755
    %9290 = vmatpush1.bf16.msra.mxu0 %v8754
    %9291 = vmatprep.subr.bf16.mxu0 %v8747
    %9292 = vmatpush1.bf16.msra.mxu0 %v8746
    %9293 = vmatprep.subr.bf16.mxu0 %v8739
    %9294 = vmatpush1.bf16.msra.mxu0 %v8738
    %9295 = vmatprep.subr.bf16.mxu0 %v8859
    %9296 = vmatpush2.bf16.msra.mxu0 %v8858
    %9297 = vmatprep.subr.bf16.mxu0 %v8851
    %9298 = vmatpush2.bf16.msra.mxu0 %v8850
    %9299 = vmatprep.subr.bf16.mxu0 %v8843
    %9300 = vmatpush2.bf16.msra.mxu0 %v8842
    %9301 = vmatprep.subr.bf16.mxu0 %v8835
    %9302 = vmatpush2.bf16.msra.mxu0 %v8834
    %9303 = vmatprep.subr.bf16.mxu0 %v8827
    %9304 = vmatpush2.bf16.msra.mxu0 %v8826
    %9305 = vmatprep.subr.bf16.mxu0 %v8819
    %9306 = vmatpush2.bf16.msra.mxu0 %v8818
    %9307 = vmatprep.subr.bf16.mxu0 %v8811
    %9308 = vmatpush2.bf16.msra.mxu0 %v8810
    %9309 = vmatprep.subr.bf16.mxu0 %v8803
    %9310 = vmatpush2.bf16.msra.mxu0 %v8802
    %9311 = vmatprep.mubr.bf16.mxu0 %v7827
    %9312 = vmatmul.mubr.bf16.gmra.mxu0 %v7826
    %v9313 = vpop.f32.mrf.mxu0
    %v9314 = vadd.f32 %v9261, %v9313
    %v9315 = vpop.f32.mrf.mxu0
    %v9316 = vadd.f32 %v9263, %v9315
    %v9317 = vpop.f32.mrf.mxu0
    %v9318 = vadd.f32 %v9265, %v9317
    %v9319 = vpop.f32.mrf.mxu0
    %v9320 = vadd.f32 %v9267, %v9319
    %9321 = vmatprep.mubr.bf16.mxu0 %v7831
    %9322 = vmatmul.mubr.bf16.gmra.mxu0 %v7830
    %v9323 = vpop.f32.mrf.mxu0
    %v9324 = vadd.f32 %v9271, %v9323
    %v9325 = vpop.f32.mrf.mxu0
    %v9326 = vadd.f32 %v9273, %v9325
    %v9327 = vpop.f32.mrf.mxu0
    %v9328 = vadd.f32 %v9275, %v9327
    %v9329 = vpop.f32.mrf.mxu0
    %v9330 = vadd.f32 %v9277, %v9329
    %9331 = vdwg.mxu0
    %9332 = vmatprep.subr.bf16.mxu0 %v8669
    %9333 = vmatpush1.bf16.msra.mxu0 %v8668
    %9334 = vmatprep.subr.bf16.mxu0 %v8661
    %9335 = vmatpush1.bf16.msra.mxu0 %v8660
    %9336 = vmatprep.subr.bf16.mxu0 %v8653
    %9337 = vmatpush1.bf16.msra.mxu0 %v8652
    %9338 = vmatprep.subr.bf16.mxu0 %v8645
    %9339 = vmatpush1.bf16.msra.mxu0 %v8644
    %9340 = vmatprep.subr.bf16.mxu0 %v8637
    %9341 = vmatpush1.bf16.msra.mxu0 %v8636
    %9342 = vmatprep.subr.bf16.mxu0 %v8629
    %9343 = vmatpush1.bf16.msra.mxu0 %v8628
    %9344 = vmatprep.subr.bf16.mxu0 %v8621
    %9345 = vmatpush1.bf16.msra.mxu0 %v8620
    %9346 = vmatprep.subr.bf16.mxu0 %v8613
    %9347 = vmatpush1.bf16.msra.mxu0 %v8612
    %9348 = vmatprep.subr.bf16.mxu0 %v8733
    %9349 = vmatpush2.bf16.msra.mxu0 %v8732
    %9350 = vmatprep.subr.bf16.mxu0 %v8725
    %9351 = vmatpush2.bf16.msra.mxu0 %v8724
    %9352 = vmatprep.subr.bf16.mxu0 %v8717
    %9353 = vmatpush2.bf16.msra.mxu0 %v8716
    %9354 = vmatprep.subr.bf16.mxu0 %v8709
    %9355 = vmatpush2.bf16.msra.mxu0 %v8708
    %9356 = vmatprep.subr.bf16.mxu0 %v8701
    %9357 = vmatpush2.bf16.msra.mxu0 %v8700
    %9358 = vmatprep.subr.bf16.mxu0 %v8693
    %9359 = vmatpush2.bf16.msra.mxu0 %v8692
    %9360 = vmatprep.subr.bf16.mxu0 %v8685
    %9361 = vmatpush2.bf16.msra.mxu0 %v8684
    %9362 = vmatprep.subr.bf16.mxu0 %v8677
    %9363 = vmatpush2.bf16.msra.mxu0 %v8676
    %9364 = vmatprep.mubr.bf16.mxu0 %v7825
    %9365 = vmatmul.mubr.bf16.gmra.mxu0 %v7824
    %v9366 = vpop.f32.mrf.mxu0
    %v9367 = vadd.f32 0.0, %v9366
    %v9368 = vpop.f32.mrf.mxu0
    %v9369 = vadd.f32 0.0, %v9368
    %v9370 = vpop.f32.mrf.mxu0
    %v9371 = vadd.f32 0.0, %v9370
    %v9372 = vpop.f32.mrf.mxu0
    %v9373 = vadd.f32 0.0, %v9372
    %9374 = vmatprep.mubr.bf16.mxu0 %v7829
    %9375 = vmatmul.mubr.bf16.gmra.mxu0 %v7828
    %v9376 = vpop.f32.mrf.mxu0
    %v9377 = vadd.f32 0.0, %v9376
    %v9378 = vpop.f32.mrf.mxu0
    %v9379 = vadd.f32 0.0, %v9378
    %v9380 = vpop.f32.mrf.mxu0
    %v9381 = vadd.f32 0.0, %v9380
    %v9382 = vpop.f32.mrf.mxu0
    %v9383 = vadd.f32 0.0, %v9382
    %9384 = vdwg.mxu0
    %9385 = vmatprep.subr.bf16.mxu0 %v8797
    %9386 = vmatpush1.bf16.msra.mxu0 %v8796
    %9387 = vmatprep.subr.bf16.mxu0 %v8789
    %9388 = vmatpush1.bf16.msra.mxu0 %v8788
    %9389 = vmatprep.subr.bf16.mxu0 %v8781
    %9390 = vmatpush1.bf16.msra.mxu0 %v8780
    %9391 = vmatprep.subr.bf16.mxu0 %v8773
    %9392 = vmatpush1.bf16.msra.mxu0 %v8772
    %9393 = vmatprep.subr.bf16.mxu0 %v8765
    %9394 = vmatpush1.bf16.msra.mxu0 %v8764
    %9395 = vmatprep.subr.bf16.mxu0 %v8757
    %9396 = vmatpush1.bf16.msra.mxu0 %v8756
    %9397 = vmatprep.subr.bf16.mxu0 %v8749
    %9398 = vmatpush1.bf16.msra.mxu0 %v8748
    %9399 = vmatprep.subr.bf16.mxu0 %v8741
    %9400 = vmatpush1.bf16.msra.mxu0 %v8740
    %9401 = vmatprep.subr.bf16.mxu0 %v8861
    %9402 = vmatpush2.bf16.msra.mxu0 %v8860
    %9403 = vmatprep.subr.bf16.mxu0 %v8853
    %9404 = vmatpush2.bf16.msra.mxu0 %v8852
    %9405 = vmatprep.subr.bf16.mxu0 %v8845
    %9406 = vmatpush2.bf16.msra.mxu0 %v8844
    %9407 = vmatprep.subr.bf16.mxu0 %v8837
    %9408 = vmatpush2.bf16.msra.mxu0 %v8836
    %9409 = vmatprep.subr.bf16.mxu0 %v8829
    %9410 = vmatpush2.bf16.msra.mxu0 %v8828
    %9411 = vmatprep.subr.bf16.mxu0 %v8821
    %9412 = vmatpush2.bf16.msra.mxu0 %v8820
    %9413 = vmatprep.subr.bf16.mxu0 %v8813
    %9414 = vmatpush2.bf16.msra.mxu0 %v8812
    %9415 = vmatprep.subr.bf16.mxu0 %v8805
    %9416 = vmatpush2.bf16.msra.mxu0 %v8804
    %9417 = vmatprep.mubr.bf16.mxu0 %v7827
    %9418 = vmatmul.mubr.bf16.gmra.mxu0 %v7826
    %v9419 = vpop.f32.mrf.mxu0
    %v9420 = vadd.f32 %v9367, %v9419
    %v9421 = vpop.f32.mrf.mxu0
    %v9422 = vadd.f32 %v9369, %v9421
    %v9423 = vpop.f32.mrf.mxu0
    %v9424 = vadd.f32 %v9371, %v9423
    %v9425 = vpop.f32.mrf.mxu0
    %v9426 = vadd.f32 %v9373, %v9425
    %9427 = vmatprep.mubr.bf16.mxu0 %v7831
    %9428 = vmatmul.mubr.bf16.gmra.mxu0 %v7830
    %v9429 = vpop.f32.mrf.mxu0
    %v9430 = vadd.f32 %v9377, %v9429
    %v9431 = vpop.f32.mrf.mxu0
    %v9432 = vadd.f32 %v9379, %v9431
    %v9433 = vpop.f32.mrf.mxu0
    %v9434 = vadd.f32 %v9381, %v9433
    %v9435 = vpop.f32.mrf.mxu0
    %v9436 = vadd.f32 %v9383, %v9435
    %9437 = vdwg.mxu0
    %9438 = vmatprep.subr.bf16.mxu0 %v8671
    %9439 = vmatpush1.bf16.msra.mxu0 %v8670
    %9440 = vmatprep.subr.bf16.mxu0 %v8663
    %9441 = vmatpush1.bf16.msra.mxu0 %v8662
    %9442 = vmatprep.subr.bf16.mxu0 %v8655
    %9443 = vmatpush1.bf16.msra.mxu0 %v8654
    %9444 = vmatprep.subr.bf16.mxu0 %v8647
    %9445 = vmatpush1.bf16.msra.mxu0 %v8646
    %9446 = vmatprep.subr.bf16.mxu0 %v8639
    %9447 = vmatpush1.bf16.msra.mxu0 %v8638
    %9448 = vmatprep.subr.bf16.mxu0 %v8631
    %9449 = vmatpush1.bf16.msra.mxu0 %v8630
    %9450 = vmatprep.subr.bf16.mxu0 %v8623
    %9451 = vmatpush1.bf16.msra.mxu0 %v8622
    %9452 = vmatprep.subr.bf16.mxu0 %v8615
    %9453 = vmatpush1.bf16.msra.mxu0 %v8614
    %9454 = vmatprep.subr.bf16.mxu0 %v8735
    %9455 = vmatpush2.bf16.msra.mxu0 %v8734
    %9456 = vmatprep.subr.bf16.mxu0 %v8727
    %9457 = vmatpush2.bf16.msra.mxu0 %v8726
    %9458 = vmatprep.subr.bf16.mxu0 %v8719
    %9459 = vmatpush2.bf16.msra.mxu0 %v8718
    %9460 = vmatprep.subr.bf16.mxu0 %v8711
    %9461 = vmatpush2.bf16.msra.mxu0 %v8710
    %9462 = vmatprep.subr.bf16.mxu0 %v8703
    %9463 = vmatpush2.bf16.msra.mxu0 %v8702
    %9464 = vmatprep.subr.bf16.mxu0 %v8695
    %9465 = vmatpush2.bf16.msra.mxu0 %v8694
    %9466 = vmatprep.subr.bf16.mxu0 %v8687
    %9467 = vmatpush2.bf16.msra.mxu0 %v8686
    %9468 = vmatprep.subr.bf16.mxu0 %v8679
    %9469 = vmatpush2.bf16.msra.mxu0 %v8678
    %9470 = vmatprep.mubr.bf16.mxu0 %v7825
    %9471 = vmatmul.mubr.bf16.gmra.mxu0 %v7824
    %v9472 = vpop.f32.mrf.mxu0
    %v9473 = vadd.f32 0.0, %v9472
    %v9474 = vpop.f32.mrf.mxu0
    %v9475 = vadd.f32 0.0, %v9474
    %v9476 = vpop.f32.mrf.mxu0
    %v9477 = vadd.f32 0.0, %v9476
    %v9478 = vpop.f32.mrf.mxu0
    %v9479 = vadd.f32 0.0, %v9478
    %9480 = vmatprep.mubr.bf16.mxu0 %v7829
    %9481 = vmatmul.mubr.bf16.gmra.mxu0 %v7828
    %v9482 = vpop.f32.mrf.mxu0
    %v9483 = vadd.f32 0.0, %v9482
    %v9484 = vpop.f32.mrf.mxu0
    %v9485 = vadd.f32 0.0, %v9484
    %v9486 = vpop.f32.mrf.mxu0
    %v9487 = vadd.f32 0.0, %v9486
    %v9488 = vpop.f32.mrf.mxu0
    %v9489 = vadd.f32 0.0, %v9488
    %9490 = vdwg.mxu0
    %9491 = vmatprep.subr.bf16.mxu0 %v8799
    %9492 = vmatpush1.bf16.msra.mxu0 %v8798
    %9493 = vmatprep.subr.bf16.mxu0 %v8791
    %9494 = vmatpush1.bf16.msra.mxu0 %v8790
    %9495 = vmatprep.subr.bf16.mxu0 %v8783
    %9496 = vmatpush1.bf16.msra.mxu0 %v8782
    %9497 = vmatprep.subr.bf16.mxu0 %v8775
    %9498 = vmatpush1.bf16.msra.mxu0 %v8774
    %9499 = vmatprep.subr.bf16.mxu0 %v8767
    %9500 = vmatpush1.bf16.msra.mxu0 %v8766
    %9501 = vmatprep.subr.bf16.mxu0 %v8759
    %9502 = vmatpush1.bf16.msra.mxu0 %v8758
    %9503 = vmatprep.subr.bf16.mxu0 %v8751
    %9504 = vmatpush1.bf16.msra.mxu0 %v8750
    %9505 = vmatprep.subr.bf16.mxu0 %v8743
    %9506 = vmatpush1.bf16.msra.mxu0 %v8742
    %9507 = vmatprep.subr.bf16.mxu0 %v8863
    %9508 = vmatpush2.bf16.msra.mxu0 %v8862
    %9509 = vmatprep.subr.bf16.mxu0 %v8855
    %9510 = vmatpush2.bf16.msra.mxu0 %v8854
    %9511 = vmatprep.subr.bf16.mxu0 %v8847
    %9512 = vmatpush2.bf16.msra.mxu0 %v8846
    %9513 = vmatprep.subr.bf16.mxu0 %v8839
    %9514 = vmatpush2.bf16.msra.mxu0 %v8838
    %9515 = vmatprep.subr.bf16.mxu0 %v8831
    %9516 = vmatpush2.bf16.msra.mxu0 %v8830
    %9517 = vmatprep.subr.bf16.mxu0 %v8823
    %9518 = vmatpush2.bf16.msra.mxu0 %v8822
    %9519 = vmatprep.subr.bf16.mxu0 %v8815
    %9520 = vmatpush2.bf16.msra.mxu0 %v8814
    %9521 = vmatprep.subr.bf16.mxu0 %v8807
    %9522 = vmatpush2.bf16.msra.mxu0 %v8806
    %9523 = vmatprep.mubr.bf16.mxu0 %v7827
    %9524 = vmatmul.mubr.bf16.gmra.mxu0 %v7826
    %v9525 = vpop.f32.mrf.mxu0
    %v9526 = vadd.f32 %v9473, %v9525
    %v9527 = vpop.f32.mrf.mxu0
    %v9528 = vadd.f32 %v9475, %v9527
    %v9529 = vpop.f32.mrf.mxu0
    %v9530 = vadd.f32 %v9477, %v9529
    %v9531 = vpop.f32.mrf.mxu0
    %v9532 = vadd.f32 %v9479, %v9531
    %9533 = vmatprep.mubr.bf16.mxu0 %v7831
    %9534 = vmatmul.mubr.bf16.gmra.mxu0 %v7830
    %v9535 = vpop.f32.mrf.mxu0
    %v9536 = vadd.f32 %v9483, %v9535
    %v9537 = vpop.f32.mrf.mxu0
    %v9538 = vadd.f32 %v9485, %v9537
    %v9539 = vpop.f32.mrf.mxu0
    %v9540 = vadd.f32 %v9487, %v9539
    %v9541 = vpop.f32.mrf.mxu0
    %v9542 = vadd.f32 %v9489, %v9541
    %9543 = vdwg.mxu0
    %v9544 = vadd.f32 %v7172, %v9208
    %v9545 = vadd.f32 %v7174, %v9210
    %v9546 = vadd.f32 %v7278, %v9314
    %v9547 = vadd.f32 %v7280, %v9316
    %v9548 = vadd.f32 %v7384, %v9420
    %v9549 = vadd.f32 %v7386, %v9422
    %v9550 = vadd.f32 %v7490, %v9526
    %v9551 = vadd.f32 %v7492, %v9528
    %v9552 = vadd.f32 %v7176, %v9212
    %v9553 = vadd.f32 %v7178, %v9214
    %v9554 = vadd.f32 %v7282, %v9318
    %v9555 = vadd.f32 %v7284, %v9320
    %v9556 = vadd.f32 %v7388, %v9424
    %v9557 = vadd.f32 %v7390, %v9426
    %v9558 = vadd.f32 %v7494, %v9530
    %v9559 = vadd.f32 %v7496, %v9532
    %v9560 = vadd.f32 %v7182, %v9218
    %v9561 = vadd.f32 %v7184, %v9220
    %v9562 = vadd.f32 %v7288, %v9324
    %v9563 = vadd.f32 %v7290, %v9326
    %v9564 = vadd.f32 %v7394, %v9430
    %v9565 = vadd.f32 %v7396, %v9432
    %v9566 = vadd.f32 %v7500, %v9536
    %v9567 = vadd.f32 %v7502, %v9538
    %v9568 = vadd.f32 %v7186, %v9222
    %v9569 = vadd.f32 %v7188, %v9224
    %v9570 = vadd.f32 %v7292, %v9328
    %v9571 = vadd.f32 %v7294, %v9330
    %v9572 = vadd.f32 %v7398, %v9434
    %v9573 = vadd.f32 %v7400, %v9436
    %v9574 = vadd.f32 %v7504, %v9540
    %v9575 = vadd.f32 %v7506, %v9542
    %v9576 = vld [vmem:[#allocation9] sm:$0xff]
    %v9578 = vlaneseq
    %v9579 = vshrl.u32 %v9578, 7
    %v9580 = vsub.s32 0, %v9579
    %v9581 = vrot.slane %v9576, %v9580
    %v9582 = vlaneseq
    %v9583 = vshrl.u32 %v9582, 7
    %v9584 = vsub.s32 1, %v9583
    %v9585 = vrot.slane %v9576, %v9584
    %v9586 = vlaneseq
    %v9587 = vshrl.u32 %v9586, 7
    %v9588 = vsub.s32 2, %v9587
    %v9589 = vrot.slane %v9576, %v9588
    %v9590 = vlaneseq
    %v9591 = vshrl.u32 %v9590, 7
    %v9592 = vsub.s32 3, %v9591
    %v9593 = vrot.slane %v9576, %v9592
    %v9594 = vlaneseq
    %v9595 = vshrl.u32 %v9594, 7
    %v9596 = vsub.s32 4, %v9595
    %v9597 = vrot.slane %v9576, %v9596
    %v9598 = vlaneseq
    %v9599 = vshrl.u32 %v9598, 7
    %v9600 = vsub.s32 5, %v9599
    %v9601 = vrot.slane %v9576, %v9600
    %v9602 = vlaneseq
    %v9603 = vshrl.u32 %v9602, 7
    %v9604 = vsub.s32 6, %v9603
    %v9605 = vrot.slane %v9576, %v9604
    %v9606 = vlaneseq
    %v9607 = vshrl.u32 %v9606, 7
    %v9608 = vsub.s32 7, %v9607
    %v9609 = vrot.slane %v9576, %v9608
    %v9618 = vadd.f32 %v9544, %v9581
    %v9619 = vadd.f32 %v9545, %v9585
    %v9620 = vadd.f32 %v9546, %v9589
    %v9621 = vadd.f32 %v9547, %v9593
    %v9622 = vadd.f32 %v9548, %v9597
    %v9623 = vadd.f32 %v9549, %v9601
    %v9624 = vadd.f32 %v9550, %v9605
    %v9625 = vadd.f32 %v9551, %v9609
    %v9626 = vadd.f32 %v9552, %v9581
    %v9627 = vadd.f32 %v9553, %v9585
    %v9628 = vadd.f32 %v9554, %v9589
    %v9629 = vadd.f32 %v9555, %v9593
    %v9630 = vadd.f32 %v9556, %v9597
    %v9631 = vadd.f32 %v9557, %v9601
    %v9632 = vadd.f32 %v9558, %v9605
    %v9633 = vadd.f32 %v9559, %v9609
    %v9634 = vadd.f32 %v9560, %v9581
    %v9635 = vadd.f32 %v9561, %v9585
    %v9636 = vadd.f32 %v9562, %v9589
    %v9637 = vadd.f32 %v9563, %v9593
    %v9638 = vadd.f32 %v9564, %v9597
    %v9639 = vadd.f32 %v9565, %v9601
    %v9640 = vadd.f32 %v9566, %v9605
    %v9641 = vadd.f32 %v9567, %v9609
    %v9642 = vadd.f32 %v9568, %v9581
    %v9643 = vadd.f32 %v9569, %v9585
    %v9644 = vadd.f32 %v9570, %v9589
    %v9645 = vadd.f32 %v9571, %v9593
    %v9646 = vadd.f32 %v9572, %v9597
    %v9647 = vadd.f32 %v9573, %v9601
    %v9648 = vadd.f32 %v9574, %v9605
    %v9649 = vadd.f32 %v9575, %v9609
    %v9650 = vmax.f32 %v9618, 0.0
    %v9651 = vmax.f32 %v9619, 0.0
    %v9652 = vmax.f32 %v9620, 0.0
    %v9653 = vmax.f32 %v9621, 0.0
    %v9654 = vmax.f32 %v9622, 0.0
    %v9655 = vmax.f32 %v9623, 0.0
    %v9656 = vmax.f32 %v9624, 0.0
    %v9657 = vmax.f32 %v9625, 0.0
    %v9658 = vmax.f32 %v9626, 0.0
    %v9659 = vmax.f32 %v9627, 0.0
    %v9660 = vmax.f32 %v9628, 0.0
    %v9661 = vmax.f32 %v9629, 0.0
    %v9662 = vmax.f32 %v9630, 0.0
    %v9663 = vmax.f32 %v9631, 0.0
    %v9664 = vmax.f32 %v9632, 0.0
    %v9665 = vmax.f32 %v9633, 0.0
    %v9666 = vmax.f32 %v9634, 0.0
    %v9667 = vmax.f32 %v9635, 0.0
    %v9668 = vmax.f32 %v9636, 0.0
    %v9669 = vmax.f32 %v9637, 0.0
    %v9670 = vmax.f32 %v9638, 0.0
    %v9671 = vmax.f32 %v9639, 0.0
    %v9672 = vmax.f32 %v9640, 0.0
    %v9673 = vmax.f32 %v9641, 0.0
    %v9674 = vmax.f32 %v9642, 0.0
    %v9675 = vmax.f32 %v9643, 0.0
    %v9676 = vmax.f32 %v9644, 0.0
    %v9677 = vmax.f32 %v9645, 0.0
    %v9678 = vmax.f32 %v9646, 0.0
    %v9679 = vmax.f32 %v9647, 0.0
    %v9680 = vmax.f32 %v9648, 0.0
    %v9681 = vmax.f32 %v9649, 0.0
    %v9714 = vcombine.low %v9650, %v9651
    %v9715 = vcombine.high %v9650, %v9651
    %v9716 = vcombine.low %v9652, %v9653
    %v9717 = vcombine.high %v9652, %v9653
    %v9719 = vunpack.c.l.s4 1983009808
    %v9720 = vunpack.c.0.s8 %v9719
    %v9721 = vlaneseq
    %v9722 = vshrl.u32 %v9721, 7
    %v9723 = vsub.s32 %v9720, %v9722
    %v9724 = vrot.slane %v9714, %v9723
    %v9726 = vunpack.c.l.s4 1983009808
    %v9727 = vunpack.c.0.s8 %v9726
    %v9728 = vlaneseq
    %v9729 = vshrl.u32 %v9728, 7
    %v9730 = vsub.s32 %v9727, %v9729
    %v9731 = vrot.slane %v9715, %v9730
    %v9733 = vunpack.c.l.s4 1983009808
    %v9734 = vunpack.c.0.s8 %v9733
    %v9735 = vlaneseq
    %v9736 = vshrl.u32 %v9735, 7
    %v9737 = vsub.s32 %v9734, %v9736
    %v9738 = vrot.slane %v9716, %v9737
    %v9740 = vunpack.c.l.s4 1983009808
    %v9741 = vunpack.c.0.s8 %v9740
    %v9742 = vlaneseq
    %v9743 = vshrl.u32 %v9742, 7
    %v9744 = vsub.s32 %v9741, %v9743
    %v9745 = vrot.slane %v9717, %v9744
    %v9746 = vcombine.low %v9724, %v9738
    %v9747 = vcombine.high %v9724, %v9738
    %v9748 = vcombine.low %v9731, %v9745
    %v9749 = vcombine.high %v9731, %v9745
    %v9750 = vcombine.low %v9654, %v9655
    %v9751 = vcombine.high %v9654, %v9655
    %v9752 = vcombine.low %v9656, %v9657
    %v9753 = vcombine.high %v9656, %v9657
    %v9755 = vunpack.c.l.s4 1983009808
    %v9756 = vunpack.c.0.s8 %v9755
    %v9757 = vlaneseq
    %v9758 = vshrl.u32 %v9757, 7
    %v9759 = vsub.s32 %v9756, %v9758
    %v9760 = vrot.slane %v9750, %v9759
    %v9762 = vunpack.c.l.s4 1983009808
    %v9763 = vunpack.c.0.s8 %v9762
    %v9764 = vlaneseq
    %v9765 = vshrl.u32 %v9764, 7
    %v9766 = vsub.s32 %v9763, %v9765
    %v9767 = vrot.slane %v9751, %v9766
    %v9769 = vunpack.c.l.s4 1983009808
    %v9770 = vunpack.c.0.s8 %v9769
    %v9771 = vlaneseq
    %v9772 = vshrl.u32 %v9771, 7
    %v9773 = vsub.s32 %v9770, %v9772
    %v9774 = vrot.slane %v9752, %v9773
    %v9776 = vunpack.c.l.s4 1983009808
    %v9777 = vunpack.c.0.s8 %v9776
    %v9778 = vlaneseq
    %v9779 = vshrl.u32 %v9778, 7
    %v9780 = vsub.s32 %v9777, %v9779
    %v9781 = vrot.slane %v9753, %v9780
    %v9782 = vcombine.low %v9760, %v9774
    %v9783 = vcombine.high %v9760, %v9774
    %v9784 = vcombine.low %v9767, %v9781
    %v9785 = vcombine.high %v9767, %v9781
    %v9786 = vcombine.low %v9658, %v9659
    %v9787 = vcombine.high %v9658, %v9659
    %v9788 = vcombine.low %v9660, %v9661
    %v9789 = vcombine.high %v9660, %v9661
    %v9791 = vunpack.c.l.s4 1983009808
    %v9792 = vunpack.c.0.s8 %v9791
    %v9793 = vlaneseq
    %v9794 = vshrl.u32 %v9793, 7
    %v9795 = vsub.s32 %v9792, %v9794
    %v9796 = vrot.slane %v9786, %v9795
    %v9798 = vunpack.c.l.s4 1983009808
    %v9799 = vunpack.c.0.s8 %v9798
    %v9800 = vlaneseq
    %v9801 = vshrl.u32 %v9800, 7
    %v9802 = vsub.s32 %v9799, %v9801
    %v9803 = vrot.slane %v9787, %v9802
    %v9805 = vunpack.c.l.s4 1983009808
    %v9806 = vunpack.c.0.s8 %v9805
    %v9807 = vlaneseq
    %v9808 = vshrl.u32 %v9807, 7
    %v9809 = vsub.s32 %v9806, %v9808
    %v9810 = vrot.slane %v9788, %v9809
    %v9812 = vunpack.c.l.s4 1983009808
    %v9813 = vunpack.c.0.s8 %v9812
    %v9814 = vlaneseq
    %v9815 = vshrl.u32 %v9814, 7
    %v9816 = vsub.s32 %v9813, %v9815
    %v9817 = vrot.slane %v9789, %v9816
    %v9818 = vcombine.low %v9796, %v9810
    %v9819 = vcombine.high %v9796, %v9810
    %v9820 = vcombine.low %v9803, %v9817
    %v9821 = vcombine.high %v9803, %v9817
    %v9822 = vcombine.low %v9662, %v9663
    %v9823 = vcombine.high %v9662, %v9663
    %v9824 = vcombine.low %v9664, %v9665
    %v9825 = vcombine.high %v9664, %v9665
    %v9827 = vunpack.c.l.s4 1983009808
    %v9828 = vunpack.c.0.s8 %v9827
    %v9829 = vlaneseq
    %v9830 = vshrl.u32 %v9829, 7
    %v9831 = vsub.s32 %v9828, %v9830
    %v9832 = vrot.slane %v9822, %v9831
    %v9834 = vunpack.c.l.s4 1983009808
    %v9835 = vunpack.c.0.s8 %v9834
    %v9836 = vlaneseq
    %v9837 = vshrl.u32 %v9836, 7
    %v9838 = vsub.s32 %v9835, %v9837
    %v9839 = vrot.slane %v9823, %v9838
    %v9841 = vunpack.c.l.s4 1983009808
    %v9842 = vunpack.c.0.s8 %v9841
    %v9843 = vlaneseq
    %v9844 = vshrl.u32 %v9843, 7
    %v9845 = vsub.s32 %v9842, %v9844
    %v9846 = vrot.slane %v9824, %v9845
    %v9848 = vunpack.c.l.s4 1983009808
    %v9849 = vunpack.c.0.s8 %v9848
    %v9850 = vlaneseq
    %v9851 = vshrl.u32 %v9850, 7
    %v9852 = vsub.s32 %v9849, %v9851
    %v9853 = vrot.slane %v9825, %v9852
    %v9854 = vcombine.low %v9832, %v9846
    %v9855 = vcombine.high %v9832, %v9846
    %v9856 = vcombine.low %v9839, %v9853
    %v9857 = vcombine.high %v9839, %v9853
    %v9858 = vcombine.low %v9666, %v9667
    %v9859 = vcombine.high %v9666, %v9667
    %v9860 = vcombine.low %v9668, %v9669
    %v9861 = vcombine.high %v9668, %v9669
    %v9863 = vunpack.c.l.s4 1983009808
    %v9864 = vunpack.c.0.s8 %v9863
    %v9865 = vlaneseq
    %v9866 = vshrl.u32 %v9865, 7
    %v9867 = vsub.s32 %v9864, %v9866
    %v9868 = vrot.slane %v9858, %v9867
    %v9870 = vunpack.c.l.s4 1983009808
    %v9871 = vunpack.c.0.s8 %v9870
    %v9872 = vlaneseq
    %v9873 = vshrl.u32 %v9872, 7
    %v9874 = vsub.s32 %v9871, %v9873
    %v9875 = vrot.slane %v9859, %v9874
    %v9877 = vunpack.c.l.s4 1983009808
    %v9878 = vunpack.c.0.s8 %v9877
    %v9879 = vlaneseq
    %v9880 = vshrl.u32 %v9879, 7
    %v9881 = vsub.s32 %v9878, %v9880
    %v9882 = vrot.slane %v9860, %v9881
    %v9884 = vunpack.c.l.s4 1983009808
    %v9885 = vunpack.c.0.s8 %v9884
    %v9886 = vlaneseq
    %v9887 = vshrl.u32 %v9886, 7
    %v9888 = vsub.s32 %v9885, %v9887
    %v9889 = vrot.slane %v9861, %v9888
    %v9890 = vcombine.low %v9868, %v9882
    %v9891 = vcombine.high %v9868, %v9882
    %v9892 = vcombine.low %v9875, %v9889
    %v9893 = vcombine.high %v9875, %v9889
    %v9894 = vcombine.low %v9670, %v9671
    %v9895 = vcombine.high %v9670, %v9671
    %v9896 = vcombine.low %v9672, %v9673
    %v9897 = vcombine.high %v9672, %v9673
    %v9899 = vunpack.c.l.s4 1983009808
    %v9900 = vunpack.c.0.s8 %v9899
    %v9901 = vlaneseq
    %v9902 = vshrl.u32 %v9901, 7
    %v9903 = vsub.s32 %v9900, %v9902
    %v9904 = vrot.slane %v9894, %v9903
    %v9906 = vunpack.c.l.s4 1983009808
    %v9907 = vunpack.c.0.s8 %v9906
    %v9908 = vlaneseq
    %v9909 = vshrl.u32 %v9908, 7
    %v9910 = vsub.s32 %v9907, %v9909
    %v9911 = vrot.slane %v9895, %v9910
    %v9913 = vunpack.c.l.s4 1983009808
    %v9914 = vunpack.c.0.s8 %v9913
    %v9915 = vlaneseq
    %v9916 = vshrl.u32 %v9915, 7
    %v9917 = vsub.s32 %v9914, %v9916
    %v9918 = vrot.slane %v9896, %v9917
    %v9920 = vunpack.c.l.s4 1983009808
    %v9921 = vunpack.c.0.s8 %v9920
    %v9922 = vlaneseq
    %v9923 = vshrl.u32 %v9922, 7
    %v9924 = vsub.s32 %v9921, %v9923
    %v9925 = vrot.slane %v9897, %v9924
    %v9926 = vcombine.low %v9904, %v9918
    %v9927 = vcombine.high %v9904, %v9918
    %v9928 = vcombine.low %v9911, %v9925
    %v9929 = vcombine.high %v9911, %v9925
    %v9930 = vcombine.low %v9674, %v9675
    %v9931 = vcombine.high %v9674, %v9675
    %v9932 = vcombine.low %v9676, %v9677
    %v9933 = vcombine.high %v9676, %v9677
    %v9935 = vunpack.c.l.s4 1983009808
    %v9936 = vunpack.c.0.s8 %v9935
    %v9937 = vlaneseq
    %v9938 = vshrl.u32 %v9937, 7
    %v9939 = vsub.s32 %v9936, %v9938
    %v9940 = vrot.slane %v9930, %v9939
    %v9942 = vunpack.c.l.s4 1983009808
    %v9943 = vunpack.c.0.s8 %v9942
    %v9944 = vlaneseq
    %v9945 = vshrl.u32 %v9944, 7
    %v9946 = vsub.s32 %v9943, %v9945
    %v9947 = vrot.slane %v9931, %v9946
    %v9949 = vunpack.c.l.s4 1983009808
    %v9950 = vunpack.c.0.s8 %v9949
    %v9951 = vlaneseq
    %v9952 = vshrl.u32 %v9951, 7
    %v9953 = vsub.s32 %v9950, %v9952
    %v9954 = vrot.slane %v9932, %v9953
    %v9956 = vunpack.c.l.s4 1983009808
    %v9957 = vunpack.c.0.s8 %v9956
    %v9958 = vlaneseq
    %v9959 = vshrl.u32 %v9958, 7
    %v9960 = vsub.s32 %v9957, %v9959
    %v9961 = vrot.slane %v9933, %v9960
    %v9962 = vcombine.low %v9940, %v9954
    %v9963 = vcombine.high %v9940, %v9954
    %v9964 = vcombine.low %v9947, %v9961
    %v9965 = vcombine.high %v9947, %v9961
    %v9966 = vcombine.low %v9678, %v9679
    %v9967 = vcombine.high %v9678, %v9679
    %v9968 = vcombine.low %v9680, %v9681
    %v9969 = vcombine.high %v9680, %v9681
    %v9971 = vunpack.c.l.s4 1983009808
    %v9972 = vunpack.c.0.s8 %v9971
    %v9973 = vlaneseq
    %v9974 = vshrl.u32 %v9973, 7
    %v9975 = vsub.s32 %v9972, %v9974
    %v9976 = vrot.slane %v9966, %v9975
    %v9978 = vunpack.c.l.s4 1983009808
    %v9979 = vunpack.c.0.s8 %v9978
    %v9980 = vlaneseq
    %v9981 = vshrl.u32 %v9980, 7
    %v9982 = vsub.s32 %v9979, %v9981
    %v9983 = vrot.slane %v9967, %v9982
    %v9985 = vunpack.c.l.s4 1983009808
    %v9986 = vunpack.c.0.s8 %v9985
    %v9987 = vlaneseq
    %v9988 = vshrl.u32 %v9987, 7
    %v9989 = vsub.s32 %v9986, %v9988
    %v9990 = vrot.slane %v9968, %v9989
    %v9992 = vunpack.c.l.s4 1983009808
    %v9993 = vunpack.c.0.s8 %v9992
    %v9994 = vlaneseq
    %v9995 = vshrl.u32 %v9994, 7
    %v9996 = vsub.s32 %v9993, %v9995
    %v9997 = vrot.slane %v9969, %v9996
    %v9998 = vcombine.low %v9976, %v9990
    %v9999 = vcombine.high %v9976, %v9990
    %v10000 = vcombine.low %v9983, %v9997
    %v10001 = vcombine.high %v9983, %v9997
    %v10034 = vrot.slane %v9746, 7
    %v10035 = vrot.slane %v10034, 2
    %v10036 = vrot.slane %v9782, 7
    %v10037 = vrot.slane %v10036, 2
    %v10038 = vrot.slane %v9747, 7
    %v10039 = vrot.slane %v10038, 2
    %v10040 = vrot.slane %v9783, 7
    %v10041 = vrot.slane %v10040, 2
    %v10042 = vrot.slane %v9748, 7
    %v10043 = vrot.slane %v10042, 2
    %v10044 = vrot.slane %v9784, 7
    %v10045 = vrot.slane %v10044, 2
    %v10046 = vrot.slane %v9749, 7
    %v10047 = vrot.slane %v10046, 2
    %v10048 = vrot.slane %v9785, 7
    %v10049 = vrot.slane %v10048, 2
    %v10050 = vrot.slane %v9818, 7
    %v10051 = vrot.slane %v10050, 2
    %v10052 = vrot.slane %v9854, 7
    %v10053 = vrot.slane %v10052, 2
    %v10054 = vrot.slane %v9819, 7
    %v10055 = vrot.slane %v10054, 2
    %v10056 = vrot.slane %v9855, 7
    %v10057 = vrot.slane %v10056, 2
    %v10058 = vrot.slane %v9820, 7
    %v10059 = vrot.slane %v10058, 2
    %v10060 = vrot.slane %v9856, 7
    %v10061 = vrot.slane %v10060, 2
    %v10062 = vrot.slane %v9821, 7
    %v10063 = vrot.slane %v10062, 2
    %v10064 = vrot.slane %v9857, 7
    %v10065 = vrot.slane %v10064, 2
    %v10066 = vrot.slane %v9890, 7
    %v10067 = vrot.slane %v10066, 2
    %v10068 = vrot.slane %v9926, 7
    %v10069 = vrot.slane %v10068, 2
    %v10070 = vrot.slane %v9891, 7
    %v10071 = vrot.slane %v10070, 2
    %v10072 = vrot.slane %v9927, 7
    %v10073 = vrot.slane %v10072, 2
    %v10074 = vrot.slane %v9892, 7
    %v10075 = vrot.slane %v10074, 2
    %v10076 = vrot.slane %v9928, 7
    %v10077 = vrot.slane %v10076, 2
    %v10078 = vrot.slane %v9893, 7
    %v10079 = vrot.slane %v10078, 2
    %v10080 = vrot.slane %v9929, 7
    %v10081 = vrot.slane %v10080, 2
    %v10082 = vrot.slane %v9962, 7
    %v10083 = vrot.slane %v10082, 2
    %v10084 = vrot.slane %v9998, 7
    %v10085 = vrot.slane %v10084, 2
    %v10086 = vrot.slane %v9963, 7
    %v10087 = vrot.slane %v10086, 2
    %v10088 = vrot.slane %v9999, 7
    %v10089 = vrot.slane %v10088, 2
    %v10090 = vrot.slane %v9964, 7
    %v10091 = vrot.slane %v10090, 2
    %v10092 = vrot.slane %v10000, 7
    %v10093 = vrot.slane %v10092, 2
    %v10094 = vrot.slane %v9965, 7
    %v10095 = vrot.slane %v10094, 2
    %v10096 = vrot.slane %v10001, 7
    %v10097 = vrot.slane %v10096, 2
    %v10130 = vmax.f32 %v9746, %v10035
    %v10131 = vmax.f32 %v9782, %v10037
    %v10132 = vmax.f32 %v9747, %v10039
    %v10133 = vmax.f32 %v9783, %v10041
    %v10134 = vmax.f32 %v9748, %v10043
    %v10135 = vmax.f32 %v9784, %v10045
    %v10136 = vmax.f32 %v9749, %v10047
    %v10137 = vmax.f32 %v9785, %v10049
    %v10138 = vmax.f32 %v9818, %v10051
    %v10139 = vmax.f32 %v9854, %v10053
    %v10140 = vmax.f32 %v9819, %v10055
    %v10141 = vmax.f32 %v9855, %v10057
    %v10142 = vmax.f32 %v9820, %v10059
    %v10143 = vmax.f32 %v9856, %v10061
    %v10144 = vmax.f32 %v9821, %v10063
    %v10145 = vmax.f32 %v9857, %v10065
    %v10146 = vmax.f32 %v9890, %v10067
    %v10147 = vmax.f32 %v9926, %v10069
    %v10148 = vmax.f32 %v9891, %v10071
    %v10149 = vmax.f32 %v9927, %v10073
    %v10150 = vmax.f32 %v9892, %v10075
    %v10151 = vmax.f32 %v9928, %v10077
    %v10152 = vmax.f32 %v9893, %v10079
    %v10153 = vmax.f32 %v9929, %v10081
    %v10154 = vmax.f32 %v9962, %v10083
    %v10155 = vmax.f32 %v9998, %v10085
    %v10156 = vmax.f32 %v9963, %v10087
    %v10157 = vmax.f32 %v9999, %v10089
    %v10158 = vmax.f32 %v9964, %v10091
    %v10159 = vmax.f32 %v10000, %v10093
    %v10160 = vmax.f32 %v9965, %v10095
    %v10161 = vmax.f32 %v10001, %v10097
    %v10162 = vmax.f32 %v10130, %v10131
    %v10163 = vmax.f32 %v10132, %v10133
    %v10164 = vmax.f32 %v10134, %v10135
    %v10165 = vmax.f32 %v10136, %v10137
    %v10166 = vmax.f32 %v10138, %v10139
    %v10167 = vmax.f32 %v10140, %v10141
    %v10168 = vmax.f32 %v10142, %v10143
    %v10169 = vmax.f32 %v10144, %v10145
    %v10170 = vmax.f32 %v10146, %v10147
    %v10171 = vmax.f32 %v10148, %v10149
    %v10172 = vmax.f32 %v10150, %v10151
    %v10173 = vmax.f32 %v10152, %v10153
    %v10174 = vmax.f32 %v10154, %v10155
    %v10175 = vmax.f32 %v10156, %v10157
    %v10176 = vmax.f32 %v10158, %v10159
    %v10177 = vmax.f32 %v10160, %v10161
    %v10194 = vlaneseq
    %v10195 = vshrl.u32 %v10194, 7
    %v10196 = vsub.s32 0, %v10195
    %v10197 = vrot.slane %v10162, %v10196
    %v10198 = vlaneseq
    %v10199 = vshrl.u32 %v10198, 7
    %v10200 = vsub.s32 2, %v10199
    %v10201 = vrot.slane %v10162, %v10200
    %v10202 = vlaneseq
    %v10203 = vshrl.u32 %v10202, 7
    %v10204 = vsub.s32 4, %v10203
    %v10205 = vrot.slane %v10162, %v10204
    %v10206 = vlaneseq
    %v10207 = vshrl.u32 %v10206, 7
    %v10208 = vsub.s32 6, %v10207
    %v10209 = vrot.slane %v10162, %v10208
    %v10210 = vlaneseq
    %v10211 = vshrl.u32 %v10210, 7
    %v10212 = vsub.s32 0, %v10211
    %v10213 = vrot.slane %v10163, %v10212
    %v10214 = vlaneseq
    %v10215 = vshrl.u32 %v10214, 7
    %v10216 = vsub.s32 2, %v10215
    %v10217 = vrot.slane %v10163, %v10216
    %v10218 = vlaneseq
    %v10219 = vshrl.u32 %v10218, 7
    %v10220 = vsub.s32 4, %v10219
    %v10221 = vrot.slane %v10163, %v10220
    %v10222 = vlaneseq
    %v10223 = vshrl.u32 %v10222, 7
    %v10224 = vsub.s32 6, %v10223
    %v10225 = vrot.slane %v10163, %v10224
    %v10226 = vlaneseq
    %v10227 = vshrl.u32 %v10226, 7
    %v10228 = vsub.s32 0, %v10227
    %v10229 = vrot.slane %v10164, %v10228
    %v10230 = vlaneseq
    %v10231 = vshrl.u32 %v10230, 7
    %v10232 = vsub.s32 2, %v10231
    %v10233 = vrot.slane %v10164, %v10232
    %v10234 = vlaneseq
    %v10235 = vshrl.u32 %v10234, 7
    %v10236 = vsub.s32 4, %v10235
    %v10237 = vrot.slane %v10164, %v10236
    %v10238 = vlaneseq
    %v10239 = vshrl.u32 %v10238, 7
    %v10240 = vsub.s32 6, %v10239
    %v10241 = vrot.slane %v10164, %v10240
    %v10242 = vlaneseq
    %v10243 = vshrl.u32 %v10242, 7
    %v10244 = vsub.s32 0, %v10243
    %v10245 = vrot.slane %v10165, %v10244
    %v10246 = vlaneseq
    %v10247 = vshrl.u32 %v10246, 7
    %v10248 = vsub.s32 2, %v10247
    %v10249 = vrot.slane %v10165, %v10248
    %v10250 = vlaneseq
    %v10251 = vshrl.u32 %v10250, 7
    %v10252 = vsub.s32 4, %v10251
    %v10253 = vrot.slane %v10165, %v10252
    %v10254 = vlaneseq
    %v10255 = vshrl.u32 %v10254, 7
    %v10256 = vsub.s32 6, %v10255
    %v10257 = vrot.slane %v10165, %v10256
    %v10258 = vlaneseq
    %v10259 = vshrl.u32 %v10258, 7
    %v10260 = vsub.s32 0, %v10259
    %v10261 = vrot.slane %v10166, %v10260
    %v10262 = vlaneseq
    %v10263 = vshrl.u32 %v10262, 7
    %v10264 = vsub.s32 2, %v10263
    %v10265 = vrot.slane %v10166, %v10264
    %v10266 = vlaneseq
    %v10267 = vshrl.u32 %v10266, 7
    %v10268 = vsub.s32 4, %v10267
    %v10269 = vrot.slane %v10166, %v10268
    %v10270 = vlaneseq
    %v10271 = vshrl.u32 %v10270, 7
    %v10272 = vsub.s32 6, %v10271
    %v10273 = vrot.slane %v10166, %v10272
    %v10274 = vlaneseq
    %v10275 = vshrl.u32 %v10274, 7
    %v10276 = vsub.s32 0, %v10275
    %v10277 = vrot.slane %v10167, %v10276
    %v10278 = vlaneseq
    %v10279 = vshrl.u32 %v10278, 7
    %v10280 = vsub.s32 2, %v10279
    %v10281 = vrot.slane %v10167, %v10280
    %v10282 = vlaneseq
    %v10283 = vshrl.u32 %v10282, 7
    %v10284 = vsub.s32 4, %v10283
    %v10285 = vrot.slane %v10167, %v10284
    %v10286 = vlaneseq
    %v10287 = vshrl.u32 %v10286, 7
    %v10288 = vsub.s32 6, %v10287
    %v10289 = vrot.slane %v10167, %v10288
    %v10290 = vlaneseq
    %v10291 = vshrl.u32 %v10290, 7
    %v10292 = vsub.s32 0, %v10291
    %v10293 = vrot.slane %v10168, %v10292
    %v10294 = vlaneseq
    %v10295 = vshrl.u32 %v10294, 7
    %v10296 = vsub.s32 2, %v10295
    %v10297 = vrot.slane %v10168, %v10296
    %v10298 = vlaneseq
    %v10299 = vshrl.u32 %v10298, 7
    %v10300 = vsub.s32 4, %v10299
    %v10301 = vrot.slane %v10168, %v10300
    %v10302 = vlaneseq
    %v10303 = vshrl.u32 %v10302, 7
    %v10304 = vsub.s32 6, %v10303
    %v10305 = vrot.slane %v10168, %v10304
    %v10306 = vlaneseq
    %v10307 = vshrl.u32 %v10306, 7
    %v10308 = vsub.s32 0, %v10307
    %v10309 = vrot.slane %v10169, %v10308
    %v10310 = vlaneseq
    %v10311 = vshrl.u32 %v10310, 7
    %v10312 = vsub.s32 2, %v10311
    %v10313 = vrot.slane %v10169, %v10312
    %v10314 = vlaneseq
    %v10315 = vshrl.u32 %v10314, 7
    %v10316 = vsub.s32 4, %v10315
    %v10317 = vrot.slane %v10169, %v10316
    %v10318 = vlaneseq
    %v10319 = vshrl.u32 %v10318, 7
    %v10320 = vsub.s32 6, %v10319
    %v10321 = vrot.slane %v10169, %v10320
    %v10322 = vlaneseq
    %v10323 = vshrl.u32 %v10322, 7
    %v10324 = vsub.s32 0, %v10323
    %v10325 = vrot.slane %v10170, %v10324
    %v10326 = vlaneseq
    %v10327 = vshrl.u32 %v10326, 7
    %v10328 = vsub.s32 2, %v10327
    %v10329 = vrot.slane %v10170, %v10328
    %v10330 = vlaneseq
    %v10331 = vshrl.u32 %v10330, 7
    %v10332 = vsub.s32 4, %v10331
    %v10333 = vrot.slane %v10170, %v10332
    %v10334 = vlaneseq
    %v10335 = vshrl.u32 %v10334, 7
    %v10336 = vsub.s32 6, %v10335
    %v10337 = vrot.slane %v10170, %v10336
    %v10338 = vlaneseq
    %v10339 = vshrl.u32 %v10338, 7
    %v10340 = vsub.s32 0, %v10339
    %v10341 = vrot.slane %v10171, %v10340
    %v10342 = vlaneseq
    %v10343 = vshrl.u32 %v10342, 7
    %v10344 = vsub.s32 2, %v10343
    %v10345 = vrot.slane %v10171, %v10344
    %v10346 = vlaneseq
    %v10347 = vshrl.u32 %v10346, 7
    %v10348 = vsub.s32 4, %v10347
    %v10349 = vrot.slane %v10171, %v10348
    %v10350 = vlaneseq
    %v10351 = vshrl.u32 %v10350, 7
    %v10352 = vsub.s32 6, %v10351
    %v10353 = vrot.slane %v10171, %v10352
    %v10354 = vlaneseq
    %v10355 = vshrl.u32 %v10354, 7
    %v10356 = vsub.s32 0, %v10355
    %v10357 = vrot.slane %v10172, %v10356
    %v10358 = vlaneseq
    %v10359 = vshrl.u32 %v10358, 7
    %v10360 = vsub.s32 2, %v10359
    %v10361 = vrot.slane %v10172, %v10360
    %v10362 = vlaneseq
    %v10363 = vshrl.u32 %v10362, 7
    %v10364 = vsub.s32 4, %v10363
    %v10365 = vrot.slane %v10172, %v10364
    %v10366 = vlaneseq
    %v10367 = vshrl.u32 %v10366, 7
    %v10368 = vsub.s32 6, %v10367
    %v10369 = vrot.slane %v10172, %v10368
    %v10370 = vlaneseq
    %v10371 = vshrl.u32 %v10370, 7
    %v10372 = vsub.s32 0, %v10371
    %v10373 = vrot.slane %v10173, %v10372
    %v10374 = vlaneseq
    %v10375 = vshrl.u32 %v10374, 7
    %v10376 = vsub.s32 2, %v10375
    %v10377 = vrot.slane %v10173, %v10376
    %v10378 = vlaneseq
    %v10379 = vshrl.u32 %v10378, 7
    %v10380 = vsub.s32 4, %v10379
    %v10381 = vrot.slane %v10173, %v10380
    %v10382 = vlaneseq
    %v10383 = vshrl.u32 %v10382, 7
    %v10384 = vsub.s32 6, %v10383
    %v10385 = vrot.slane %v10173, %v10384
    %v10386 = vlaneseq
    %v10387 = vshrl.u32 %v10386, 7
    %v10388 = vsub.s32 0, %v10387
    %v10389 = vrot.slane %v10174, %v10388
    %v10390 = vlaneseq
    %v10391 = vshrl.u32 %v10390, 7
    %v10392 = vsub.s32 2, %v10391
    %v10393 = vrot.slane %v10174, %v10392
    %v10394 = vlaneseq
    %v10395 = vshrl.u32 %v10394, 7
    %v10396 = vsub.s32 4, %v10395
    %v10397 = vrot.slane %v10174, %v10396
    %v10398 = vlaneseq
    %v10399 = vshrl.u32 %v10398, 7
    %v10400 = vsub.s32 6, %v10399
    %v10401 = vrot.slane %v10174, %v10400
    %v10402 = vlaneseq
    %v10403 = vshrl.u32 %v10402, 7
    %v10404 = vsub.s32 0, %v10403
    %v10405 = vrot.slane %v10175, %v10404
    %v10406 = vlaneseq
    %v10407 = vshrl.u32 %v10406, 7
    %v10408 = vsub.s32 2, %v10407
    %v10409 = vrot.slane %v10175, %v10408
    %v10410 = vlaneseq
    %v10411 = vshrl.u32 %v10410, 7
    %v10412 = vsub.s32 4, %v10411
    %v10413 = vrot.slane %v10175, %v10412
    %v10414 = vlaneseq
    %v10415 = vshrl.u32 %v10414, 7
    %v10416 = vsub.s32 6, %v10415
    %v10417 = vrot.slane %v10175, %v10416
    %v10418 = vlaneseq
    %v10419 = vshrl.u32 %v10418, 7
    %v10420 = vsub.s32 0, %v10419
    %v10421 = vrot.slane %v10176, %v10420
    %v10422 = vlaneseq
    %v10423 = vshrl.u32 %v10422, 7
    %v10424 = vsub.s32 2, %v10423
    %v10425 = vrot.slane %v10176, %v10424
    %v10426 = vlaneseq
    %v10427 = vshrl.u32 %v10426, 7
    %v10428 = vsub.s32 4, %v10427
    %v10429 = vrot.slane %v10176, %v10428
    %v10430 = vlaneseq
    %v10431 = vshrl.u32 %v10430, 7
    %v10432 = vsub.s32 6, %v10431
    %v10433 = vrot.slane %v10176, %v10432
    %v10434 = vlaneseq
    %v10435 = vshrl.u32 %v10434, 7
    %v10436 = vsub.s32 0, %v10435
    %v10437 = vrot.slane %v10177, %v10436
    %v10438 = vlaneseq
    %v10439 = vshrl.u32 %v10438, 7
    %v10440 = vsub.s32 2, %v10439
    %v10441 = vrot.slane %v10177, %v10440
    %v10442 = vlaneseq
    %v10443 = vshrl.u32 %v10442, 7
    %v10444 = vsub.s32 4, %v10443
    %v10445 = vrot.slane %v10177, %v10444
    %v10446 = vlaneseq
    %v10447 = vshrl.u32 %v10446, 7
    %v10448 = vsub.s32 6, %v10447
    %v10449 = vrot.slane %v10177, %v10448
    %v10514 = vpack.c.bf16 %v10197, %v10197
    %v10515 = vpack.c.bf16 %v10201, %v10201
    %v10516 = vpack.c.bf16 %v10205, %v10205
    %v10517 = vpack.c.bf16 %v10209, %v10209
    %v10518 = vpack.c.bf16 %v10213, %v10213
    %v10519 = vpack.c.bf16 %v10217, %v10217
    %v10520 = vpack.c.bf16 %v10221, %v10221
    %v10521 = vpack.c.bf16 %v10225, %v10225
    %v10522 = vpack.c.bf16 %v10229, %v10229
    %v10523 = vpack.c.bf16 %v10233, %v10233
    %v10524 = vpack.c.bf16 %v10237, %v10237
    %v10525 = vpack.c.bf16 %v10241, %v10241
    %v10526 = vpack.c.bf16 %v10245, %v10245
    %v10527 = vpack.c.bf16 %v10249, %v10249
    %v10528 = vpack.c.bf16 %v10253, %v10253
    %v10529 = vpack.c.bf16 %v10257, %v10257
    %v10530 = vpack.c.bf16 %v10261, %v10261
    %v10531 = vpack.c.bf16 %v10265, %v10265
    %v10532 = vpack.c.bf16 %v10269, %v10269
    %v10533 = vpack.c.bf16 %v10273, %v10273
    %v10534 = vpack.c.bf16 %v10277, %v10277
    %v10535 = vpack.c.bf16 %v10281, %v10281
    %v10536 = vpack.c.bf16 %v10285, %v10285
    %v10537 = vpack.c.bf16 %v10289, %v10289
    %v10538 = vpack.c.bf16 %v10293, %v10293
    %v10539 = vpack.c.bf16 %v10297, %v10297
    %v10540 = vpack.c.bf16 %v10301, %v10301
    %v10541 = vpack.c.bf16 %v10305, %v10305
    %v10542 = vpack.c.bf16 %v10309, %v10309
    %v10543 = vpack.c.bf16 %v10313, %v10313
    %v10544 = vpack.c.bf16 %v10317, %v10317
    %v10545 = vpack.c.bf16 %v10321, %v10321
    %v10546 = vpack.c.bf16 %v10325, %v10325
    %v10547 = vpack.c.bf16 %v10329, %v10329
    %v10548 = vpack.c.bf16 %v10333, %v10333
    %v10549 = vpack.c.bf16 %v10337, %v10337
    %v10550 = vpack.c.bf16 %v10341, %v10341
    %v10551 = vpack.c.bf16 %v10345, %v10345
    %v10552 = vpack.c.bf16 %v10349, %v10349
    %v10553 = vpack.c.bf16 %v10353, %v10353
    %v10554 = vpack.c.bf16 %v10357, %v10357
    %v10555 = vpack.c.bf16 %v10361, %v10361
    %v10556 = vpack.c.bf16 %v10365, %v10365
    %v10557 = vpack.c.bf16 %v10369, %v10369
    %v10558 = vpack.c.bf16 %v10373, %v10373
    %v10559 = vpack.c.bf16 %v10377, %v10377
    %v10560 = vpack.c.bf16 %v10381, %v10381
    %v10561 = vpack.c.bf16 %v10385, %v10385
    %v10562 = vpack.c.bf16 %v10389, %v10389
    %v10563 = vpack.c.bf16 %v10393, %v10393
    %v10564 = vpack.c.bf16 %v10397, %v10397
    %v10565 = vpack.c.bf16 %v10401, %v10401
    %v10566 = vpack.c.bf16 %v10405, %v10405
    %v10567 = vpack.c.bf16 %v10409, %v10409
    %v10568 = vpack.c.bf16 %v10413, %v10413
    %v10569 = vpack.c.bf16 %v10417, %v10417
    %v10570 = vpack.c.bf16 %v10421, %v10421
    %v10571 = vpack.c.bf16 %v10425, %v10425
    %v10572 = vpack.c.bf16 %v10429, %v10429
    %v10573 = vpack.c.bf16 %v10433, %v10433
    %v10574 = vpack.c.bf16 %v10437, %v10437
    %v10575 = vpack.c.bf16 %v10441, %v10441
    %v10576 = vpack.c.bf16 %v10445, %v10445
    %v10577 = vpack.c.bf16 %v10449, %v10449
    %v10578 = vld [vmem:[#allocation11] sm:$0xf]
    %v10579 = vld [vmem:[#allocation11 + $0x4] sm:$0xf]
    %v10580 = vld [vmem:[#allocation11 + $0x8] sm:$0xf]
    %v10581 = vld [vmem:[#allocation11 + $0xc] sm:$0xf]
    %v10582 = vld [vmem:[#allocation11 + $0x10] sm:$0xf]
    %v10583 = vld [vmem:[#allocation11 + $0x14] sm:$0xf]
    %v10584 = vld [vmem:[#allocation11 + $0x18] sm:$0xf]
    %v10585 = vld [vmem:[#allocation11 + $0x1c] sm:$0xf]
    %v10586 = vld [vmem:[#allocation11 + $0x20] sm:$0xf]
    %v10587 = vld [vmem:[#allocation11 + $0x24] sm:$0xf]
    %v10588 = vld [vmem:[#allocation11 + $0x28] sm:$0xf]
    %v10589 = vld [vmem:[#allocation11 + $0x2c] sm:$0xf]
    %v10590 = vld [vmem:[#allocation11 + $0x30] sm:$0xf]
    %v10591 = vld [vmem:[#allocation11 + $0x34] sm:$0xf]
    %v10592 = vld [vmem:[#allocation11 + $0x38] sm:$0xf]
    %v10593 = vld [vmem:[#allocation11 + $0x3c] sm:$0xf]
    %v10594 = vld [vmem:[#allocation11 + $0x40] sm:$0xf]
    %v10595 = vld [vmem:[#allocation11 + $0x44] sm:$0xf]
    %v10596 = vld [vmem:[#allocation11 + $0x48] sm:$0xf]
    %v10597 = vld [vmem:[#allocation11 + $0x4c] sm:$0xf]
    %v10598 = vld [vmem:[#allocation11 + $0x50] sm:$0xf]
    %v10599 = vld [vmem:[#allocation11 + $0x54] sm:$0xf]
    %v10600 = vld [vmem:[#allocation11 + $0x58] sm:$0xf]
    %v10601 = vld [vmem:[#allocation11 + $0x5c] sm:$0xf]
    %v10602 = vld [vmem:[#allocation11 + $0x60] sm:$0xf]
    %v10603 = vld [vmem:[#allocation11 + $0x64] sm:$0xf]
    %v10604 = vld [vmem:[#allocation11 + $0x68] sm:$0xf]
    %v10605 = vld [vmem:[#allocation11 + $0x6c] sm:$0xf]
    %v10606 = vld [vmem:[#allocation11 + $0x70] sm:$0xf]
    %v10607 = vld [vmem:[#allocation11 + $0x74] sm:$0xf]
    %v10608 = vld [vmem:[#allocation11 + $0x78] sm:$0xf]
    %v10609 = vld [vmem:[#allocation11 + $0x7c] sm:$0xf]
    %v10610 = vld [vmem:[#allocation11 + $0x80] sm:$0xf]
    %v10611 = vld [vmem:[#allocation11 + $0x84] sm:$0xf]
    %v10612 = vld [vmem:[#allocation11 + $0x88] sm:$0xf]
    %v10613 = vld [vmem:[#allocation11 + $0x8c] sm:$0xf]
    %v10614 = vld [vmem:[#allocation11 + $0x90] sm:$0xf]
    %v10615 = vld [vmem:[#allocation11 + $0x94] sm:$0xf]
    %v10616 = vld [vmem:[#allocation11 + $0x98] sm:$0xf]
    %v10617 = vld [vmem:[#allocation11 + $0x9c] sm:$0xf]
    %v10618 = vld [vmem:[#allocation11 + $0xa0] sm:$0xf]
    %v10619 = vld [vmem:[#allocation11 + $0xa4] sm:$0xf]
    %v10620 = vld [vmem:[#allocation11 + $0xa8] sm:$0xf]
    %v10621 = vld [vmem:[#allocation11 + $0xac] sm:$0xf]
    %v10622 = vld [vmem:[#allocation11 + $0xb0] sm:$0xf]
    %v10623 = vld [vmem:[#allocation11 + $0xb4] sm:$0xf]
    %v10624 = vld [vmem:[#allocation11 + $0xb8] sm:$0xf]
    %v10625 = vld [vmem:[#allocation11 + $0xbc] sm:$0xf]
    %v10626 = vld [vmem:[#allocation11 + $0xc0] sm:$0xf]
    %v10627 = vld [vmem:[#allocation11 + $0xc4] sm:$0xf]
    %v10628 = vld [vmem:[#allocation11 + $0xc8] sm:$0xf]
    %v10629 = vld [vmem:[#allocation11 + $0xcc] sm:$0xf]
    %v10630 = vld [vmem:[#allocation11 + $0xd0] sm:$0xf]
    %v10631 = vld [vmem:[#allocation11 + $0xd4] sm:$0xf]
    %v10632 = vld [vmem:[#allocation11 + $0xd8] sm:$0xf]
    %v10633 = vld [vmem:[#allocation11 + $0xdc] sm:$0xf]
    %v10634 = vld [vmem:[#allocation11 + $0xe0] sm:$0xf]
    %v10635 = vld [vmem:[#allocation11 + $0xe4] sm:$0xf]
    %v10636 = vld [vmem:[#allocation11 + $0xe8] sm:$0xf]
    %v10637 = vld [vmem:[#allocation11 + $0xec] sm:$0xf]
    %v10638 = vld [vmem:[#allocation11 + $0xf0] sm:$0xf]
    %v10639 = vld [vmem:[#allocation11 + $0xf4] sm:$0xf]
    %v10640 = vld [vmem:[#allocation11 + $0xf8] sm:$0xf]
    %v10641 = vld [vmem:[#allocation11 + $0xfc] sm:$0xf]
    %s10642 = scalar_lea.vmem [#allocation11], 256
    %v10643 = vld [vmem:[%s10642] sm:$0xf]
    %v10644 = vld [vmem:[%s10642 + $0x4] sm:$0xf]
    %v10645 = vld [vmem:[%s10642 + $0x8] sm:$0xf]
    %v10646 = vld [vmem:[%s10642 + $0xc] sm:$0xf]
    %v10647 = vld [vmem:[%s10642 + $0x10] sm:$0xf]
    %v10648 = vld [vmem:[%s10642 + $0x14] sm:$0xf]
    %v10649 = vld [vmem:[%s10642 + $0x18] sm:$0xf]
    %v10650 = vld [vmem:[%s10642 + $0x1c] sm:$0xf]
    %v10651 = vld [vmem:[%s10642 + $0x20] sm:$0xf]
    %v10652 = vld [vmem:[%s10642 + $0x24] sm:$0xf]
    %v10653 = vld [vmem:[%s10642 + $0x28] sm:$0xf]
    %v10654 = vld [vmem:[%s10642 + $0x2c] sm:$0xf]
    %v10655 = vld [vmem:[%s10642 + $0x30] sm:$0xf]
    %v10656 = vld [vmem:[%s10642 + $0x34] sm:$0xf]
    %v10657 = vld [vmem:[%s10642 + $0x38] sm:$0xf]
    %v10658 = vld [vmem:[%s10642 + $0x3c] sm:$0xf]
    %v10659 = vld [vmem:[%s10642 + $0x40] sm:$0xf]
    %v10660 = vld [vmem:[%s10642 + $0x44] sm:$0xf]
    %v10661 = vld [vmem:[%s10642 + $0x48] sm:$0xf]
    %v10662 = vld [vmem:[%s10642 + $0x4c] sm:$0xf]
    %v10663 = vld [vmem:[%s10642 + $0x50] sm:$0xf]
    %v10664 = vld [vmem:[%s10642 + $0x54] sm:$0xf]
    %v10665 = vld [vmem:[%s10642 + $0x58] sm:$0xf]
    %v10666 = vld [vmem:[%s10642 + $0x5c] sm:$0xf]
    %v10667 = vld [vmem:[%s10642 + $0x60] sm:$0xf]
    %v10668 = vld [vmem:[%s10642 + $0x64] sm:$0xf]
    %v10669 = vld [vmem:[%s10642 + $0x68] sm:$0xf]
    %v10670 = vld [vmem:[%s10642 + $0x6c] sm:$0xf]
    %v10671 = vld [vmem:[%s10642 + $0x70] sm:$0xf]
    %v10672 = vld [vmem:[%s10642 + $0x74] sm:$0xf]
    %v10673 = vld [vmem:[%s10642 + $0x78] sm:$0xf]
    %v10674 = vld [vmem:[%s10642 + $0x7c] sm:$0xf]
    %v10675 = vld [vmem:[%s10642 + $0x80] sm:$0xf]
    %v10676 = vld [vmem:[%s10642 + $0x84] sm:$0xf]
    %v10677 = vld [vmem:[%s10642 + $0x88] sm:$0xf]
    %v10678 = vld [vmem:[%s10642 + $0x8c] sm:$0xf]
    %v10679 = vld [vmem:[%s10642 + $0x90] sm:$0xf]
    %v10680 = vld [vmem:[%s10642 + $0x94] sm:$0xf]
    %v10681 = vld [vmem:[%s10642 + $0x98] sm:$0xf]
    %v10682 = vld [vmem:[%s10642 + $0x9c] sm:$0xf]
    %v10683 = vld [vmem:[%s10642 + $0xa0] sm:$0xf]
    %v10684 = vld [vmem:[%s10642 + $0xa4] sm:$0xf]
    %v10685 = vld [vmem:[%s10642 + $0xa8] sm:$0xf]
    %v10686 = vld [vmem:[%s10642 + $0xac] sm:$0xf]
    %v10687 = vld [vmem:[%s10642 + $0xb0] sm:$0xf]
    %v10688 = vld [vmem:[%s10642 + $0xb4] sm:$0xf]
    %v10689 = vld [vmem:[%s10642 + $0xb8] sm:$0xf]
    %v10690 = vld [vmem:[%s10642 + $0xbc] sm:$0xf]
    %v10691 = vld [vmem:[%s10642 + $0xc0] sm:$0xf]
    %v10692 = vld [vmem:[%s10642 + $0xc4] sm:$0xf]
    %v10693 = vld [vmem:[%s10642 + $0xc8] sm:$0xf]
    %v10694 = vld [vmem:[%s10642 + $0xcc] sm:$0xf]
    %v10695 = vld [vmem:[%s10642 + $0xd0] sm:$0xf]
    %v10696 = vld [vmem:[%s10642 + $0xd4] sm:$0xf]
    %v10697 = vld [vmem:[%s10642 + $0xd8] sm:$0xf]
    %v10698 = vld [vmem:[%s10642 + $0xdc] sm:$0xf]
    %v10699 = vld [vmem:[%s10642 + $0xe0] sm:$0xf]
    %v10700 = vld [vmem:[%s10642 + $0xe4] sm:$0xf]
    %v10701 = vld [vmem:[%s10642 + $0xe8] sm:$0xf]
    %v10702 = vld [vmem:[%s10642 + $0xec] sm:$0xf]
    %v10703 = vld [vmem:[%s10642 + $0xf0] sm:$0xf]
    %v10704 = vld [vmem:[%s10642 + $0xf4] sm:$0xf]
    %v10705 = vld [vmem:[%s10642 + $0xf8] sm:$0xf]
    %v10706 = vld [vmem:[%s10642 + $0xfc] sm:$0xf]
    %v10715 = vunpack.c.l.b16 %v10518
    %v10716 = vunpack.c.l.b16 %v10519
    %v10717 = vunpack.c.l.b16 %v10520
    %v10718 = vunpack.c.l.b16 %v10521
    %v10719 = vunpack.c.l.b16 %v10550
    %v10720 = vunpack.c.l.b16 %v10551
    %v10721 = vunpack.c.l.b16 %v10552
    %v10722 = vunpack.c.l.b16 %v10553
    %v10723 = vrot.slane %v10719, 7
    %v10724 = vsel %vm3183, %v10723, %v10715
    %v10725 = vrot.slane %v10720, 7
    %v10726 = vsel %vm3183, %v10725, %v10716
    %v10727 = vrot.slane %v10721, 7
    %v10728 = vsel %vm3183, %v10727, %v10717
    %v10729 = vrot.slane %v10722, 7
    %v10730 = vsel %vm3183, %v10729, %v10718
    %v10731 = vpack.c.b16 %v10724, %v10724
    %v10732 = vpack.c.b16 %v10726, %v10726
    %v10733 = vpack.c.b16 %v10728, %v10728
    %v10734 = vpack.c.b16 %v10730, %v10730
    %v10803 = vunpack.c.l.b16 %v10643
    %v10804 = vunpack.c.l.b16 %v10644
    %v10805 = vunpack.c.l.b16 %v10645
    %v10806 = vunpack.c.l.b16 %v10646
    %v10807 = vunpack.c.l.b16 %v10647
    %v10808 = vunpack.c.l.b16 %v10648
    %v10809 = vunpack.c.l.b16 %v10649
    %v10810 = vunpack.c.l.b16 %v10650
    %v10811 = vunpack.c.l.b16 %v10651
    %v10812 = vunpack.c.l.b16 %v10652
    %v10813 = vunpack.c.l.b16 %v10653
    %v10814 = vunpack.c.l.b16 %v10654
    %v10815 = vunpack.c.l.b16 %v10655
    %v10816 = vunpack.c.l.b16 %v10656
    %v10817 = vunpack.c.l.b16 %v10657
    %v10818 = vunpack.c.l.b16 %v10658
    %v10819 = vunpack.c.l.b16 %v10659
    %v10820 = vunpack.c.l.b16 %v10660
    %v10821 = vunpack.c.l.b16 %v10661
    %v10822 = vunpack.c.l.b16 %v10662
    %v10823 = vunpack.c.l.b16 %v10663
    %v10824 = vunpack.c.l.b16 %v10664
    %v10825 = vunpack.c.l.b16 %v10665
    %v10826 = vunpack.c.l.b16 %v10666
    %v10827 = vunpack.c.l.b16 %v10667
    %v10828 = vunpack.c.l.b16 %v10668
    %v10829 = vunpack.c.l.b16 %v10669
    %v10830 = vunpack.c.l.b16 %v10670
    %v10831 = vunpack.c.l.b16 %v10671
    %v10832 = vunpack.c.l.b16 %v10672
    %v10833 = vunpack.c.l.b16 %v10673
    %v10834 = vunpack.c.l.b16 %v10674
    %v10835 = vunpack.c.l.b16 %v10675
    %v10836 = vunpack.c.l.b16 %v10676
    %v10837 = vunpack.c.l.b16 %v10677
    %v10838 = vunpack.c.l.b16 %v10678
    %v10839 = vunpack.c.l.b16 %v10679
    %v10840 = vunpack.c.l.b16 %v10680
    %v10841 = vunpack.c.l.b16 %v10681
    %v10842 = vunpack.c.l.b16 %v10682
    %v10843 = vunpack.c.l.b16 %v10683
    %v10844 = vunpack.c.l.b16 %v10684
    %v10845 = vunpack.c.l.b16 %v10685
    %v10846 = vunpack.c.l.b16 %v10686
    %v10847 = vunpack.c.l.b16 %v10687
    %v10848 = vunpack.c.l.b16 %v10688
    %v10849 = vunpack.c.l.b16 %v10689
    %v10850 = vunpack.c.l.b16 %v10690
    %v10851 = vunpack.c.l.b16 %v10691
    %v10852 = vunpack.c.l.b16 %v10692
    %v10853 = vunpack.c.l.b16 %v10693
    %v10854 = vunpack.c.l.b16 %v10694
    %v10855 = vunpack.c.l.b16 %v10695
    %v10856 = vunpack.c.l.b16 %v10696
    %v10857 = vunpack.c.l.b16 %v10697
    %v10858 = vunpack.c.l.b16 %v10698
    %v10859 = vunpack.c.l.b16 %v10699
    %v10860 = vunpack.c.l.b16 %v10700
    %v10861 = vunpack.c.l.b16 %v10701
    %v10862 = vunpack.c.l.b16 %v10702
    %v10863 = vunpack.c.l.b16 %v10703
    %v10864 = vunpack.c.l.b16 %v10704
    %v10865 = vunpack.c.l.b16 %v10705
    %v10866 = vunpack.c.l.b16 %v10706
    %v10867 = vpack.c.b16 %v10804, %v10803
    %v10868 = vpack.c.b16 %v10806, %v10805
    %v10869 = vpack.c.b16 %v10808, %v10807
    %v10870 = vpack.c.b16 %v10810, %v10809
    %v10871 = vpack.c.b16 %v10812, %v10811
    %v10872 = vpack.c.b16 %v10814, %v10813
    %v10873 = vpack.c.b16 %v10816, %v10815
    %v10874 = vpack.c.b16 %v10818, %v10817
    %v10875 = vpack.c.b16 %v10820, %v10819
    %v10876 = vpack.c.b16 %v10822, %v10821
    %v10877 = vpack.c.b16 %v10824, %v10823
    %v10878 = vpack.c.b16 %v10826, %v10825
    %v10879 = vpack.c.b16 %v10828, %v10827
    %v10880 = vpack.c.b16 %v10830, %v10829
    %v10881 = vpack.c.b16 %v10832, %v10831
    %v10882 = vpack.c.b16 %v10834, %v10833
    %v10883 = vpack.c.b16 %v10836, %v10835
    %v10884 = vpack.c.b16 %v10838, %v10837
    %v10885 = vpack.c.b16 %v10840, %v10839
    %v10886 = vpack.c.b16 %v10842, %v10841
    %v10887 = vpack.c.b16 %v10844, %v10843
    %v10888 = vpack.c.b16 %v10846, %v10845
    %v10889 = vpack.c.b16 %v10848, %v10847
    %v10890 = vpack.c.b16 %v10850, %v10849
    %v10891 = vpack.c.b16 %v10852, %v10851
    %v10892 = vpack.c.b16 %v10854, %v10853
    %v10893 = vpack.c.b16 %v10856, %v10855
    %v10894 = vpack.c.b16 %v10858, %v10857
    %v10895 = vpack.c.b16 %v10860, %v10859
    %v10896 = vpack.c.b16 %v10862, %v10861
    %v10897 = vpack.c.b16 %v10864, %v10863
    %v10898 = vpack.c.b16 %v10866, %v10865
    %10931 = vmatprep.subr.bf16.mxu0 0
    %10932 = vmatpush1.bf16.msra.mxu0 %v10874
    %10933 = vmatprep.subr.bf16.mxu0 0
    %10934 = vmatpush1.bf16.msra.mxu0 %v10873
    %10935 = vmatprep.subr.bf16.mxu0 0
    %10936 = vmatpush1.bf16.msra.mxu0 %v10872
    %10937 = vmatprep.subr.bf16.mxu0 0
    %10938 = vmatpush1.bf16.msra.mxu0 %v10871
    %10939 = vmatprep.subr.bf16.mxu0 0
    %10940 = vmatpush1.bf16.msra.mxu0 %v10870
    %10941 = vmatprep.subr.bf16.mxu0 0
    %10942 = vmatpush1.bf16.msra.mxu0 %v10869
    %10943 = vmatprep.subr.bf16.mxu0 0
    %10944 = vmatpush1.bf16.msra.mxu0 %v10868
    %10945 = vmatprep.subr.bf16.mxu0 0
    %10946 = vmatpush1.bf16.msra.mxu0 %v10867
    %10947 = vmatprep.subr.bf16.mxu0 0
    %10948 = vmatpush2.bf16.msra.mxu0 %v10882
    %10949 = vmatprep.subr.bf16.mxu0 0
    %10950 = vmatpush2.bf16.msra.mxu0 %v10881
    %10951 = vmatprep.subr.bf16.mxu0 0
    %10952 = vmatpush2.bf16.msra.mxu0 %v10880
    %10953 = vmatprep.subr.bf16.mxu0 0
    %10954 = vmatpush2.bf16.msra.mxu0 %v10879
    %10955 = vmatprep.subr.bf16.mxu0 0
    %10956 = vmatpush2.bf16.msra.mxu0 %v10878
    %10957 = vmatprep.subr.bf16.mxu0 0
    %10958 = vmatpush2.bf16.msra.mxu0 %v10877
    %10959 = vmatprep.subr.bf16.mxu0 0
    %10960 = vmatpush2.bf16.msra.mxu0 %v10876
    %10961 = vmatprep.subr.bf16.mxu0 0
    %10962 = vmatpush2.bf16.msra.mxu0 %v10875
    %10963 = vmatprep.mubr.bf16.mxu0 %v10732
    %10964 = vmatmul.mubr.bf16.gmra.mxu0 %v10731
    %v10965 = vpop.f32.mrf.mxu0
    %v10966 = vadd.f32 0.0, %v10965
    %v10967 = vpop.f32.mrf.mxu0
    %v10968 = vpop.f32.mrf.mxu0
    %v10969 = vpop.f32.mrf.mxu0
    %10970 = vdwg.mxu0
    %10971 = vmatprep.subr.bf16.mxu0 0
    %10972 = vmatpush1.bf16.msra.mxu0 %v10890
    %10973 = vmatprep.subr.bf16.mxu0 0
    %10974 = vmatpush1.bf16.msra.mxu0 %v10889
    %10975 = vmatprep.subr.bf16.mxu0 0
    %10976 = vmatpush1.bf16.msra.mxu0 %v10888
    %10977 = vmatprep.subr.bf16.mxu0 0
    %10978 = vmatpush1.bf16.msra.mxu0 %v10887
    %10979 = vmatprep.subr.bf16.mxu0 0
    %10980 = vmatpush1.bf16.msra.mxu0 %v10886
    %10981 = vmatprep.subr.bf16.mxu0 0
    %10982 = vmatpush1.bf16.msra.mxu0 %v10885
    %10983 = vmatprep.subr.bf16.mxu0 0
    %10984 = vmatpush1.bf16.msra.mxu0 %v10884
    %10985 = vmatprep.subr.bf16.mxu0 0
    %10986 = vmatpush1.bf16.msra.mxu0 %v10883
    %10987 = vmatprep.subr.bf16.mxu0 0
    %10988 = vmatpush2.bf16.msra.mxu0 %v10898
    %10989 = vmatprep.subr.bf16.mxu0 0
    %10990 = vmatpush2.bf16.msra.mxu0 %v10897
    %10991 = vmatprep.subr.bf16.mxu0 0
    %10992 = vmatpush2.bf16.msra.mxu0 %v10896
    %10993 = vmatprep.subr.bf16.mxu0 0
    %10994 = vmatpush2.bf16.msra.mxu0 %v10895
    %10995 = vmatprep.subr.bf16.mxu0 0
    %10996 = vmatpush2.bf16.msra.mxu0 %v10894
    %10997 = vmatprep.subr.bf16.mxu0 0
    %10998 = vmatpush2.bf16.msra.mxu0 %v10893
    %10999 = vmatprep.subr.bf16.mxu0 0
    %11000 = vmatpush2.bf16.msra.mxu0 %v10892
    %11001 = vmatprep.subr.bf16.mxu0 0
    %11002 = vmatpush2.bf16.msra.mxu0 %v10891
    %11003 = vmatprep.mubr.bf16.mxu0 %v10734
    %11004 = vmatmul.mubr.bf16.gmra.mxu0 %v10733
    %v11005 = vpop.f32.mrf.mxu0
    %v11006 = vadd.f32 %v10966, %v11005
    %v11007 = vpop.f32.mrf.mxu0
    %v11008 = vpop.f32.mrf.mxu0
    %v11009 = vpop.f32.mrf.mxu0
    %11010 = vdwg.mxu0
    %v11019 = vunpack.c.l.b16 %v10514
    %v11020 = vunpack.c.l.b16 %v10515
    %v11021 = vunpack.c.l.b16 %v10516
    %v11022 = vunpack.c.l.b16 %v10517
    %v11023 = vunpack.c.l.b16 %v10546
    %v11024 = vunpack.c.l.b16 %v10547
    %v11025 = vunpack.c.l.b16 %v10548
    %v11026 = vunpack.c.l.b16 %v10549
    %v11027 = vrot.slane %v11023, 7
    %v11028 = vsel %vm3183, %v11027, %v11019
    %v11029 = vrot.slane %v11024, 7
    %v11030 = vsel %vm3183, %v11029, %v11020
    %v11031 = vrot.slane %v11025, 7
    %v11032 = vsel %vm3183, %v11031, %v11021
    %v11033 = vrot.slane %v11026, 7
    %v11034 = vsel %vm3183, %v11033, %v11022
    %v11035 = vpack.c.b16 %v11028, %v11028
    %v11036 = vpack.c.b16 %v11030, %v11030
    %v11037 = vpack.c.b16 %v11032, %v11032
    %v11038 = vpack.c.b16 %v11034, %v11034
    %v11107 = vunpack.c.l.b16 %v10578
    %v11108 = vunpack.c.l.b16 %v10579
    %v11109 = vunpack.c.l.b16 %v10580
    %v11110 = vunpack.c.l.b16 %v10581
    %v11111 = vunpack.c.l.b16 %v10582
    %v11112 = vunpack.c.l.b16 %v10583
    %v11113 = vunpack.c.l.b16 %v10584
    %v11114 = vunpack.c.l.b16 %v10585
    %v11115 = vunpack.c.l.b16 %v10586
    %v11116 = vunpack.c.l.b16 %v10587
    %v11117 = vunpack.c.l.b16 %v10588
    %v11118 = vunpack.c.l.b16 %v10589
    %v11119 = vunpack.c.l.b16 %v10590
    %v11120 = vunpack.c.l.b16 %v10591
    %v11121 = vunpack.c.l.b16 %v10592
    %v11122 = vunpack.c.l.b16 %v10593
    %v11123 = vunpack.c.l.b16 %v10594
    %v11124 = vunpack.c.l.b16 %v10595
    %v11125 = vunpack.c.l.b16 %v10596
    %v11126 = vunpack.c.l.b16 %v10597
    %v11127 = vunpack.c.l.b16 %v10598
    %v11128 = vunpack.c.l.b16 %v10599
    %v11129 = vunpack.c.l.b16 %v10600
    %v11130 = vunpack.c.l.b16 %v10601
    %v11131 = vunpack.c.l.b16 %v10602
    %v11132 = vunpack.c.l.b16 %v10603
    %v11133 = vunpack.c.l.b16 %v10604
    %v11134 = vunpack.c.l.b16 %v10605
    %v11135 = vunpack.c.l.b16 %v10606
    %v11136 = vunpack.c.l.b16 %v10607
    %v11137 = vunpack.c.l.b16 %v10608
    %v11138 = vunpack.c.l.b16 %v10609
    %v11139 = vunpack.c.l.b16 %v10610
    %v11140 = vunpack.c.l.b16 %v10611
    %v11141 = vunpack.c.l.b16 %v10612
    %v11142 = vunpack.c.l.b16 %v10613
    %v11143 = vunpack.c.l.b16 %v10614
    %v11144 = vunpack.c.l.b16 %v10615
    %v11145 = vunpack.c.l.b16 %v10616
    %v11146 = vunpack.c.l.b16 %v10617
    %v11147 = vunpack.c.l.b16 %v10618
    %v11148 = vunpack.c.l.b16 %v10619
    %v11149 = vunpack.c.l.b16 %v10620
    %v11150 = vunpack.c.l.b16 %v10621
    %v11151 = vunpack.c.l.b16 %v10622
    %v11152 = vunpack.c.l.b16 %v10623
    %v11153 = vunpack.c.l.b16 %v10624
    %v11154 = vunpack.c.l.b16 %v10625
    %v11155 = vunpack.c.l.b16 %v10626
    %v11156 = vunpack.c.l.b16 %v10627
    %v11157 = vunpack.c.l.b16 %v10628
    %v11158 = vunpack.c.l.b16 %v10629
    %v11159 = vunpack.c.l.b16 %v10630
    %v11160 = vunpack.c.l.b16 %v10631
    %v11161 = vunpack.c.l.b16 %v10632
    %v11162 = vunpack.c.l.b16 %v10633
    %v11163 = vunpack.c.l.b16 %v10634
    %v11164 = vunpack.c.l.b16 %v10635
    %v11165 = vunpack.c.l.b16 %v10636
    %v11166 = vunpack.c.l.b16 %v10637
    %v11167 = vunpack.c.l.b16 %v10638
    %v11168 = vunpack.c.l.b16 %v10639
    %v11169 = vunpack.c.l.b16 %v10640
    %v11170 = vunpack.c.l.b16 %v10641
    %v11171 = vpack.c.b16 %v11108, %v11107
    %v11172 = vpack.c.b16 %v11110, %v11109
    %v11173 = vpack.c.b16 %v11112, %v11111
    %v11174 = vpack.c.b16 %v11114, %v11113
    %v11175 = vpack.c.b16 %v11116, %v11115
    %v11176 = vpack.c.b16 %v11118, %v11117
    %v11177 = vpack.c.b16 %v11120, %v11119
    %v11178 = vpack.c.b16 %v11122, %v11121
    %v11179 = vpack.c.b16 %v11124, %v11123
    %v11180 = vpack.c.b16 %v11126, %v11125
    %v11181 = vpack.c.b16 %v11128, %v11127
    %v11182 = vpack.c.b16 %v11130, %v11129
    %v11183 = vpack.c.b16 %v11132, %v11131
    %v11184 = vpack.c.b16 %v11134, %v11133
    %v11185 = vpack.c.b16 %v11136, %v11135
    %v11186 = vpack.c.b16 %v11138, %v11137
    %v11187 = vpack.c.b16 %v11140, %v11139
    %v11188 = vpack.c.b16 %v11142, %v11141
    %v11189 = vpack.c.b16 %v11144, %v11143
    %v11190 = vpack.c.b16 %v11146, %v11145
    %v11191 = vpack.c.b16 %v11148, %v11147
    %v11192 = vpack.c.b16 %v11150, %v11149
    %v11193 = vpack.c.b16 %v11152, %v11151
    %v11194 = vpack.c.b16 %v11154, %v11153
    %v11195 = vpack.c.b16 %v11156, %v11155
    %v11196 = vpack.c.b16 %v11158, %v11157
    %v11197 = vpack.c.b16 %v11160, %v11159
    %v11198 = vpack.c.b16 %v11162, %v11161
    %v11199 = vpack.c.b16 %v11164, %v11163
    %v11200 = vpack.c.b16 %v11166, %v11165
    %v11201 = vpack.c.b16 %v11168, %v11167
    %v11202 = vpack.c.b16 %v11170, %v11169
    %11235 = vmatprep.subr.bf16.mxu0 0
    %11236 = vmatpush1.bf16.msra.mxu0 %v11178
    %11237 = vmatprep.subr.bf16.mxu0 0
    %11238 = vmatpush1.bf16.msra.mxu0 %v11177
    %11239 = vmatprep.subr.bf16.mxu0 0
    %11240 = vmatpush1.bf16.msra.mxu0 %v11176
    %11241 = vmatprep.subr.bf16.mxu0 0
    %11242 = vmatpush1.bf16.msra.mxu0 %v11175
    %11243 = vmatprep.subr.bf16.mxu0 0
    %11244 = vmatpush1.bf16.msra.mxu0 %v11174
    %11245 = vmatprep.subr.bf16.mxu0 0
    %11246 = vmatpush1.bf16.msra.mxu0 %v11173
    %11247 = vmatprep.subr.bf16.mxu0 0
    %11248 = vmatpush1.bf16.msra.mxu0 %v11172
    %11249 = vmatprep.subr.bf16.mxu0 0
    %11250 = vmatpush1.bf16.msra.mxu0 %v11171
    %11251 = vmatprep.subr.bf16.mxu0 0
    %11252 = vmatpush2.bf16.msra.mxu0 %v11186
    %11253 = vmatprep.subr.bf16.mxu0 0
    %11254 = vmatpush2.bf16.msra.mxu0 %v11185
    %11255 = vmatprep.subr.bf16.mxu0 0
    %11256 = vmatpush2.bf16.msra.mxu0 %v11184
    %11257 = vmatprep.subr.bf16.mxu0 0
    %11258 = vmatpush2.bf16.msra.mxu0 %v11183
    %11259 = vmatprep.subr.bf16.mxu0 0
    %11260 = vmatpush2.bf16.msra.mxu0 %v11182
    %11261 = vmatprep.subr.bf16.mxu0 0
    %11262 = vmatpush2.bf16.msra.mxu0 %v11181
    %11263 = vmatprep.subr.bf16.mxu0 0
    %11264 = vmatpush2.bf16.msra.mxu0 %v11180
    %11265 = vmatprep.subr.bf16.mxu0 0
    %11266 = vmatpush2.bf16.msra.mxu0 %v11179
    %11267 = vmatprep.mubr.bf16.mxu0 %v11036
    %11268 = vmatmul.mubr.bf16.gmra.mxu0 %v11035
    %v11269 = vpop.f32.mrf.mxu0
    %v11270 = vadd.f32 %v11006, %v11269
    %v11271 = vpop.f32.mrf.mxu0
    %v11272 = vpop.f32.mrf.mxu0
    %v11273 = vpop.f32.mrf.mxu0
    %11274 = vdwg.mxu0
    %11275 = vmatprep.subr.bf16.mxu0 0
    %11276 = vmatpush1.bf16.msra.mxu0 %v11194
    %11277 = vmatprep.subr.bf16.mxu0 0
    %11278 = vmatpush1.bf16.msra.mxu0 %v11193
    %11279 = vmatprep.subr.bf16.mxu0 0
    %11280 = vmatpush1.bf16.msra.mxu0 %v11192
    %11281 = vmatprep.subr.bf16.mxu0 0
    %11282 = vmatpush1.bf16.msra.mxu0 %v11191
    %11283 = vmatprep.subr.bf16.mxu0 0
    %11284 = vmatpush1.bf16.msra.mxu0 %v11190
    %11285 = vmatprep.subr.bf16.mxu0 0
    %11286 = vmatpush1.bf16.msra.mxu0 %v11189
    %11287 = vmatprep.subr.bf16.mxu0 0
    %11288 = vmatpush1.bf16.msra.mxu0 %v11188
    %11289 = vmatprep.subr.bf16.mxu0 0
    %11290 = vmatpush1.bf16.msra.mxu0 %v11187
    %11291 = vmatprep.subr.bf16.mxu0 0
    %11292 = vmatpush2.bf16.msra.mxu0 %v11202
    %11293 = vmatprep.subr.bf16.mxu0 0
    %11294 = vmatpush2.bf16.msra.mxu0 %v11201
    %11295 = vmatprep.subr.bf16.mxu0 0
    %11296 = vmatpush2.bf16.msra.mxu0 %v11200
    %11297 = vmatprep.subr.bf16.mxu0 0
    %11298 = vmatpush2.bf16.msra.mxu0 %v11199
    %11299 = vmatprep.subr.bf16.mxu0 0
    %11300 = vmatpush2.bf16.msra.mxu0 %v11198
    %11301 = vmatprep.subr.bf16.mxu0 0
    %11302 = vmatpush2.bf16.msra.mxu0 %v11197
    %11303 = vmatprep.subr.bf16.mxu0 0
    %11304 = vmatpush2.bf16.msra.mxu0 %v11196
    %11305 = vmatprep.subr.bf16.mxu0 0
    %11306 = vmatpush2.bf16.msra.mxu0 %v11195
    %11307 = vmatprep.mubr.bf16.mxu0 %v11038
    %11308 = vmatmul.mubr.bf16.gmra.mxu0 %v11037
    %v11309 = vpop.f32.mrf.mxu0
    %v11310 = vadd.f32 %v11270, %v11309
    %v11311 = vpop.f32.mrf.mxu0
    %v11312 = vpop.f32.mrf.mxu0
    %v11313 = vpop.f32.mrf.mxu0
    %11314 = vdwg.mxu0
    %s11315 = scalar_lea.vmem [#allocation11], 512
    %v11316 = vld [vmem:[%s11315] sm:$0xf]
    %v11317 = vld [vmem:[%s11315 + $0x4] sm:$0xf]
    %v11318 = vld [vmem:[%s11315 + $0x8] sm:$0xf]
    %v11319 = vld [vmem:[%s11315 + $0xc] sm:$0xf]
    %v11320 = vld [vmem:[%s11315 + $0x10] sm:$0xf]
    %v11321 = vld [vmem:[%s11315 + $0x14] sm:$0xf]
    %v11322 = vld [vmem:[%s11315 + $0x18] sm:$0xf]
    %v11323 = vld [vmem:[%s11315 + $0x1c] sm:$0xf]
    %v11324 = vld [vmem:[%s11315 + $0x20] sm:$0xf]
    %v11325 = vld [vmem:[%s11315 + $0x24] sm:$0xf]
    %v11326 = vld [vmem:[%s11315 + $0x28] sm:$0xf]
    %v11327 = vld [vmem:[%s11315 + $0x2c] sm:$0xf]
    %v11328 = vld [vmem:[%s11315 + $0x30] sm:$0xf]
    %v11329 = vld [vmem:[%s11315 + $0x34] sm:$0xf]
    %v11330 = vld [vmem:[%s11315 + $0x38] sm:$0xf]
    %v11331 = vld [vmem:[%s11315 + $0x3c] sm:$0xf]
    %v11332 = vld [vmem:[%s11315 + $0x40] sm:$0xf]
    %v11333 = vld [vmem:[%s11315 + $0x44] sm:$0xf]
    %v11334 = vld [vmem:[%s11315 + $0x48] sm:$0xf]
    %v11335 = vld [vmem:[%s11315 + $0x4c] sm:$0xf]
    %v11336 = vld [vmem:[%s11315 + $0x50] sm:$0xf]
    %v11337 = vld [vmem:[%s11315 + $0x54] sm:$0xf]
    %v11338 = vld [vmem:[%s11315 + $0x58] sm:$0xf]
    %v11339 = vld [vmem:[%s11315 + $0x5c] sm:$0xf]
    %v11340 = vld [vmem:[%s11315 + $0x60] sm:$0xf]
    %v11341 = vld [vmem:[%s11315 + $0x64] sm:$0xf]
    %v11342 = vld [vmem:[%s11315 + $0x68] sm:$0xf]
    %v11343 = vld [vmem:[%s11315 + $0x6c] sm:$0xf]
    %v11344 = vld [vmem:[%s11315 + $0x70] sm:$0xf]
    %v11345 = vld [vmem:[%s11315 + $0x74] sm:$0xf]
    %v11346 = vld [vmem:[%s11315 + $0x78] sm:$0xf]
    %v11347 = vld [vmem:[%s11315 + $0x7c] sm:$0xf]
    %v11348 = vld [vmem:[%s11315 + $0x80] sm:$0xf]
    %v11349 = vld [vmem:[%s11315 + $0x84] sm:$0xf]
    %v11350 = vld [vmem:[%s11315 + $0x88] sm:$0xf]
    %v11351 = vld [vmem:[%s11315 + $0x8c] sm:$0xf]
    %v11352 = vld [vmem:[%s11315 + $0x90] sm:$0xf]
    %v11353 = vld [vmem:[%s11315 + $0x94] sm:$0xf]
    %v11354 = vld [vmem:[%s11315 + $0x98] sm:$0xf]
    %v11355 = vld [vmem:[%s11315 + $0x9c] sm:$0xf]
    %v11356 = vld [vmem:[%s11315 + $0xa0] sm:$0xf]
    %v11357 = vld [vmem:[%s11315 + $0xa4] sm:$0xf]
    %v11358 = vld [vmem:[%s11315 + $0xa8] sm:$0xf]
    %v11359 = vld [vmem:[%s11315 + $0xac] sm:$0xf]
    %v11360 = vld [vmem:[%s11315 + $0xb0] sm:$0xf]
    %v11361 = vld [vmem:[%s11315 + $0xb4] sm:$0xf]
    %v11362 = vld [vmem:[%s11315 + $0xb8] sm:$0xf]
    %v11363 = vld [vmem:[%s11315 + $0xbc] sm:$0xf]
    %v11364 = vld [vmem:[%s11315 + $0xc0] sm:$0xf]
    %v11365 = vld [vmem:[%s11315 + $0xc4] sm:$0xf]
    %v11366 = vld [vmem:[%s11315 + $0xc8] sm:$0xf]
    %v11367 = vld [vmem:[%s11315 + $0xcc] sm:$0xf]
    %v11368 = vld [vmem:[%s11315 + $0xd0] sm:$0xf]
    %v11369 = vld [vmem:[%s11315 + $0xd4] sm:$0xf]
    %v11370 = vld [vmem:[%s11315 + $0xd8] sm:$0xf]
    %v11371 = vld [vmem:[%s11315 + $0xdc] sm:$0xf]
    %v11372 = vld [vmem:[%s11315 + $0xe0] sm:$0xf]
    %v11373 = vld [vmem:[%s11315 + $0xe4] sm:$0xf]
    %v11374 = vld [vmem:[%s11315 + $0xe8] sm:$0xf]
    %v11375 = vld [vmem:[%s11315 + $0xec] sm:$0xf]
    %v11376 = vld [vmem:[%s11315 + $0xf0] sm:$0xf]
    %v11377 = vld [vmem:[%s11315 + $0xf4] sm:$0xf]
    %v11378 = vld [vmem:[%s11315 + $0xf8] sm:$0xf]
    %v11379 = vld [vmem:[%s11315 + $0xfc] sm:$0xf]
    %v11388 = vunpack.c.l.b16 %v10522
    %v11389 = vunpack.c.l.b16 %v10523
    %v11390 = vunpack.c.l.b16 %v10524
    %v11391 = vunpack.c.l.b16 %v10525
    %v11392 = vunpack.c.l.b16 %v10554
    %v11393 = vunpack.c.l.b16 %v10555
    %v11394 = vunpack.c.l.b16 %v10556
    %v11395 = vunpack.c.l.b16 %v10557
    %v11396 = vrot.slane %v11392, 7
    %v11397 = vsel %vm3183, %v11396, %v11388
    %v11398 = vrot.slane %v11393, 7
    %v11399 = vsel %vm3183, %v11398, %v11389
    %v11400 = vrot.slane %v11394, 7
    %v11401 = vsel %vm3183, %v11400, %v11390
    %v11402 = vrot.slane %v11395, 7
    %v11403 = vsel %vm3183, %v11402, %v11391
    %v11404 = vpack.c.b16 %v11397, %v11397
    %v11405 = vpack.c.b16 %v11399, %v11399
    %v11406 = vpack.c.b16 %v11401, %v11401
    %v11407 = vpack.c.b16 %v11403, %v11403
    %v11476 = vunpack.c.l.b16 %v11316
    %v11477 = vunpack.c.l.b16 %v11317
    %v11478 = vunpack.c.l.b16 %v11318
    %v11479 = vunpack.c.l.b16 %v11319
    %v11480 = vunpack.c.l.b16 %v11320
    %v11481 = vunpack.c.l.b16 %v11321
    %v11482 = vunpack.c.l.b16 %v11322
    %v11483 = vunpack.c.l.b16 %v11323
    %v11484 = vunpack.c.l.b16 %v11324
    %v11485 = vunpack.c.l.b16 %v11325
    %v11486 = vunpack.c.l.b16 %v11326
    %v11487 = vunpack.c.l.b16 %v11327
    %v11488 = vunpack.c.l.b16 %v11328
    %v11489 = vunpack.c.l.b16 %v11329
    %v11490 = vunpack.c.l.b16 %v11330
    %v11491 = vunpack.c.l.b16 %v11331
    %v11492 = vunpack.c.l.b16 %v11332
    %v11493 = vunpack.c.l.b16 %v11333
    %v11494 = vunpack.c.l.b16 %v11334
    %v11495 = vunpack.c.l.b16 %v11335
    %v11496 = vunpack.c.l.b16 %v11336
    %v11497 = vunpack.c.l.b16 %v11337
    %v11498 = vunpack.c.l.b16 %v11338
    %v11499 = vunpack.c.l.b16 %v11339
    %v11500 = vunpack.c.l.b16 %v11340
    %v11501 = vunpack.c.l.b16 %v11341
    %v11502 = vunpack.c.l.b16 %v11342
    %v11503 = vunpack.c.l.b16 %v11343
    %v11504 = vunpack.c.l.b16 %v11344
    %v11505 = vunpack.c.l.b16 %v11345
    %v11506 = vunpack.c.l.b16 %v11346
    %v11507 = vunpack.c.l.b16 %v11347
    %v11508 = vunpack.c.l.b16 %v11348
    %v11509 = vunpack.c.l.b16 %v11349
    %v11510 = vunpack.c.l.b16 %v11350
    %v11511 = vunpack.c.l.b16 %v11351
    %v11512 = vunpack.c.l.b16 %v11352
    %v11513 = vunpack.c.l.b16 %v11353
    %v11514 = vunpack.c.l.b16 %v11354
    %v11515 = vunpack.c.l.b16 %v11355
    %v11516 = vunpack.c.l.b16 %v11356
    %v11517 = vunpack.c.l.b16 %v11357
    %v11518 = vunpack.c.l.b16 %v11358
    %v11519 = vunpack.c.l.b16 %v11359
    %v11520 = vunpack.c.l.b16 %v11360
    %v11521 = vunpack.c.l.b16 %v11361
    %v11522 = vunpack.c.l.b16 %v11362
    %v11523 = vunpack.c.l.b16 %v11363
    %v11524 = vunpack.c.l.b16 %v11364
    %v11525 = vunpack.c.l.b16 %v11365
    %v11526 = vunpack.c.l.b16 %v11366
    %v11527 = vunpack.c.l.b16 %v11367
    %v11528 = vunpack.c.l.b16 %v11368
    %v11529 = vunpack.c.l.b16 %v11369
    %v11530 = vunpack.c.l.b16 %v11370
    %v11531 = vunpack.c.l.b16 %v11371
    %v11532 = vunpack.c.l.b16 %v11372
    %v11533 = vunpack.c.l.b16 %v11373
    %v11534 = vunpack.c.l.b16 %v11374
    %v11535 = vunpack.c.l.b16 %v11375
    %v11536 = vunpack.c.l.b16 %v11376
    %v11537 = vunpack.c.l.b16 %v11377
    %v11538 = vunpack.c.l.b16 %v11378
    %v11539 = vunpack.c.l.b16 %v11379
    %v11540 = vpack.c.b16 %v11477, %v11476
    %v11541 = vpack.c.b16 %v11479, %v11478
    %v11542 = vpack.c.b16 %v11481, %v11480
    %v11543 = vpack.c.b16 %v11483, %v11482
    %v11544 = vpack.c.b16 %v11485, %v11484
    %v11545 = vpack.c.b16 %v11487, %v11486
    %v11546 = vpack.c.b16 %v11489, %v11488
    %v11547 = vpack.c.b16 %v11491, %v11490
    %v11548 = vpack.c.b16 %v11493, %v11492
    %v11549 = vpack.c.b16 %v11495, %v11494
    %v11550 = vpack.c.b16 %v11497, %v11496
    %v11551 = vpack.c.b16 %v11499, %v11498
    %v11552 = vpack.c.b16 %v11501, %v11500
    %v11553 = vpack.c.b16 %v11503, %v11502
    %v11554 = vpack.c.b16 %v11505, %v11504
    %v11555 = vpack.c.b16 %v11507, %v11506
    %v11556 = vpack.c.b16 %v11509, %v11508
    %v11557 = vpack.c.b16 %v11511, %v11510
    %v11558 = vpack.c.b16 %v11513, %v11512
    %v11559 = vpack.c.b16 %v11515, %v11514
    %v11560 = vpack.c.b16 %v11517, %v11516
    %v11561 = vpack.c.b16 %v11519, %v11518
    %v11562 = vpack.c.b16 %v11521, %v11520
    %v11563 = vpack.c.b16 %v11523, %v11522
    %v11564 = vpack.c.b16 %v11525, %v11524
    %v11565 = vpack.c.b16 %v11527, %v11526
    %v11566 = vpack.c.b16 %v11529, %v11528
    %v11567 = vpack.c.b16 %v11531, %v11530
    %v11568 = vpack.c.b16 %v11533, %v11532
    %v11569 = vpack.c.b16 %v11535, %v11534
    %v11570 = vpack.c.b16 %v11537, %v11536
    %v11571 = vpack.c.b16 %v11539, %v11538
    %11604 = vmatprep.subr.bf16.mxu0 0
    %11605 = vmatpush1.bf16.msra.mxu0 %v11547
    %11606 = vmatprep.subr.bf16.mxu0 0
    %11607 = vmatpush1.bf16.msra.mxu0 %v11546
    %11608 = vmatprep.subr.bf16.mxu0 0
    %11609 = vmatpush1.bf16.msra.mxu0 %v11545
    %11610 = vmatprep.subr.bf16.mxu0 0
    %11611 = vmatpush1.bf16.msra.mxu0 %v11544
    %11612 = vmatprep.subr.bf16.mxu0 0
    %11613 = vmatpush1.bf16.msra.mxu0 %v11543
    %11614 = vmatprep.subr.bf16.mxu0 0
    %11615 = vmatpush1.bf16.msra.mxu0 %v11542
    %11616 = vmatprep.subr.bf16.mxu0 0
    %11617 = vmatpush1.bf16.msra.mxu0 %v11541
    %11618 = vmatprep.subr.bf16.mxu0 0
    %11619 = vmatpush1.bf16.msra.mxu0 %v11540
    %11620 = vmatprep.subr.bf16.mxu0 0
    %11621 = vmatpush2.bf16.msra.mxu0 %v11555
    %11622 = vmatprep.subr.bf16.mxu0 0
    %11623 = vmatpush2.bf16.msra.mxu0 %v11554
    %11624 = vmatprep.subr.bf16.mxu0 0
    %11625 = vmatpush2.bf16.msra.mxu0 %v11553
    %11626 = vmatprep.subr.bf16.mxu0 0
    %11627 = vmatpush2.bf16.msra.mxu0 %v11552
    %11628 = vmatprep.subr.bf16.mxu0 0
    %11629 = vmatpush2.bf16.msra.mxu0 %v11551
    %11630 = vmatprep.subr.bf16.mxu0 0
    %11631 = vmatpush2.bf16.msra.mxu0 %v11550
    %11632 = vmatprep.subr.bf16.mxu0 0
    %11633 = vmatpush2.bf16.msra.mxu0 %v11549
    %11634 = vmatprep.subr.bf16.mxu0 0
    %11635 = vmatpush2.bf16.msra.mxu0 %v11548
    %11636 = vmatprep.mubr.bf16.mxu0 %v11405
    %11637 = vmatmul.mubr.bf16.gmra.mxu0 %v11404
    %v11638 = vpop.f32.mrf.mxu0
    %v11639 = vadd.f32 0.0, %v11638
    %v11640 = vpop.f32.mrf.mxu0
    %v11641 = vpop.f32.mrf.mxu0
    %v11642 = vpop.f32.mrf.mxu0
    %11643 = vdwg.mxu0
    %11644 = vmatprep.subr.bf16.mxu0 0
    %11645 = vmatpush1.bf16.msra.mxu0 %v11563
    %11646 = vmatprep.subr.bf16.mxu0 0
    %11647 = vmatpush1.bf16.msra.mxu0 %v11562
    %11648 = vmatprep.subr.bf16.mxu0 0
    %11649 = vmatpush1.bf16.msra.mxu0 %v11561
    %11650 = vmatprep.subr.bf16.mxu0 0
    %11651 = vmatpush1.bf16.msra.mxu0 %v11560
    %11652 = vmatprep.subr.bf16.mxu0 0
    %11653 = vmatpush1.bf16.msra.mxu0 %v11559
    %11654 = vmatprep.subr.bf16.mxu0 0
    %11655 = vmatpush1.bf16.msra.mxu0 %v11558
    %11656 = vmatprep.subr.bf16.mxu0 0
    %11657 = vmatpush1.bf16.msra.mxu0 %v11557
    %11658 = vmatprep.subr.bf16.mxu0 0
    %11659 = vmatpush1.bf16.msra.mxu0 %v11556
    %11660 = vmatprep.subr.bf16.mxu0 0
    %11661 = vmatpush2.bf16.msra.mxu0 %v11571
    %11662 = vmatprep.subr.bf16.mxu0 0
    %11663 = vmatpush2.bf16.msra.mxu0 %v11570
    %11664 = vmatprep.subr.bf16.mxu0 0
    %11665 = vmatpush2.bf16.msra.mxu0 %v11569
    %11666 = vmatprep.subr.bf16.mxu0 0
    %11667 = vmatpush2.bf16.msra.mxu0 %v11568
    %11668 = vmatprep.subr.bf16.mxu0 0
    %11669 = vmatpush2.bf16.msra.mxu0 %v11567
    %11670 = vmatprep.subr.bf16.mxu0 0
    %11671 = vmatpush2.bf16.msra.mxu0 %v11566
    %11672 = vmatprep.subr.bf16.mxu0 0
    %11673 = vmatpush2.bf16.msra.mxu0 %v11565
    %11674 = vmatprep.subr.bf16.mxu0 0
    %11675 = vmatpush2.bf16.msra.mxu0 %v11564
    %11676 = vmatprep.mubr.bf16.mxu0 %v11407
    %11677 = vmatmul.mubr.bf16.gmra.mxu0 %v11406
    %v11678 = vpop.f32.mrf.mxu0
    %v11679 = vadd.f32 %v11639, %v11678
    %v11680 = vpop.f32.mrf.mxu0
    %v11681 = vpop.f32.mrf.mxu0
    %v11682 = vpop.f32.mrf.mxu0
    %11683 = vdwg.mxu0
    %v11684 = vadd.f32 %v11310, %v11679
    %s11685 = scalar_lea.vmem [#allocation11], 768
    %v11686 = vld [vmem:[%s11685] sm:$0xf]
    %v11687 = vld [vmem:[%s11685 + $0x4] sm:$0xf]
    %v11688 = vld [vmem:[%s11685 + $0x8] sm:$0xf]
    %v11689 = vld [vmem:[%s11685 + $0xc] sm:$0xf]
    %v11690 = vld [vmem:[%s11685 + $0x10] sm:$0xf]
    %v11691 = vld [vmem:[%s11685 + $0x14] sm:$0xf]
    %v11692 = vld [vmem:[%s11685 + $0x18] sm:$0xf]
    %v11693 = vld [vmem:[%s11685 + $0x1c] sm:$0xf]
    %v11694 = vld [vmem:[%s11685 + $0x20] sm:$0xf]
    %v11695 = vld [vmem:[%s11685 + $0x24] sm:$0xf]
    %v11696 = vld [vmem:[%s11685 + $0x28] sm:$0xf]
    %v11697 = vld [vmem:[%s11685 + $0x2c] sm:$0xf]
    %v11698 = vld [vmem:[%s11685 + $0x30] sm:$0xf]
    %v11699 = vld [vmem:[%s11685 + $0x34] sm:$0xf]
    %v11700 = vld [vmem:[%s11685 + $0x38] sm:$0xf]
    %v11701 = vld [vmem:[%s11685 + $0x3c] sm:$0xf]
    %v11702 = vld [vmem:[%s11685 + $0x40] sm:$0xf]
    %v11703 = vld [vmem:[%s11685 + $0x44] sm:$0xf]
    %v11704 = vld [vmem:[%s11685 + $0x48] sm:$0xf]
    %v11705 = vld [vmem:[%s11685 + $0x4c] sm:$0xf]
    %v11706 = vld [vmem:[%s11685 + $0x50] sm:$0xf]
    %v11707 = vld [vmem:[%s11685 + $0x54] sm:$0xf]
    %v11708 = vld [vmem:[%s11685 + $0x58] sm:$0xf]
    %v11709 = vld [vmem:[%s11685 + $0x5c] sm:$0xf]
    %v11710 = vld [vmem:[%s11685 + $0x60] sm:$0xf]
    %v11711 = vld [vmem:[%s11685 + $0x64] sm:$0xf]
    %v11712 = vld [vmem:[%s11685 + $0x68] sm:$0xf]
    %v11713 = vld [vmem:[%s11685 + $0x6c] sm:$0xf]
    %v11714 = vld [vmem:[%s11685 + $0x70] sm:$0xf]
    %v11715 = vld [vmem:[%s11685 + $0x74] sm:$0xf]
    %v11716 = vld [vmem:[%s11685 + $0x78] sm:$0xf]
    %v11717 = vld [vmem:[%s11685 + $0x7c] sm:$0xf]
    %v11718 = vld [vmem:[%s11685 + $0x80] sm:$0xf]
    %v11719 = vld [vmem:[%s11685 + $0x84] sm:$0xf]
    %v11720 = vld [vmem:[%s11685 + $0x88] sm:$0xf]
    %v11721 = vld [vmem:[%s11685 + $0x8c] sm:$0xf]
    %v11722 = vld [vmem:[%s11685 + $0x90] sm:$0xf]
    %v11723 = vld [vmem:[%s11685 + $0x94] sm:$0xf]
    %v11724 = vld [vmem:[%s11685 + $0x98] sm:$0xf]
    %v11725 = vld [vmem:[%s11685 + $0x9c] sm:$0xf]
    %v11726 = vld [vmem:[%s11685 + $0xa0] sm:$0xf]
    %v11727 = vld [vmem:[%s11685 + $0xa4] sm:$0xf]
    %v11728 = vld [vmem:[%s11685 + $0xa8] sm:$0xf]
    %v11729 = vld [vmem:[%s11685 + $0xac] sm:$0xf]
    %v11730 = vld [vmem:[%s11685 + $0xb0] sm:$0xf]
    %v11731 = vld [vmem:[%s11685 + $0xb4] sm:$0xf]
    %v11732 = vld [vmem:[%s11685 + $0xb8] sm:$0xf]
    %v11733 = vld [vmem:[%s11685 + $0xbc] sm:$0xf]
    %v11734 = vld [vmem:[%s11685 + $0xc0] sm:$0xf]
    %v11735 = vld [vmem:[%s11685 + $0xc4] sm:$0xf]
    %v11736 = vld [vmem:[%s11685 + $0xc8] sm:$0xf]
    %v11737 = vld [vmem:[%s11685 + $0xcc] sm:$0xf]
    %v11738 = vld [vmem:[%s11685 + $0xd0] sm:$0xf]
    %v11739 = vld [vmem:[%s11685 + $0xd4] sm:$0xf]
    %v11740 = vld [vmem:[%s11685 + $0xd8] sm:$0xf]
    %v11741 = vld [vmem:[%s11685 + $0xdc] sm:$0xf]
    %v11742 = vld [vmem:[%s11685 + $0xe0] sm:$0xf]
    %v11743 = vld [vmem:[%s11685 + $0xe4] sm:$0xf]
    %v11744 = vld [vmem:[%s11685 + $0xe8] sm:$0xf]
    %v11745 = vld [vmem:[%s11685 + $0xec] sm:$0xf]
    %v11746 = vld [vmem:[%s11685 + $0xf0] sm:$0xf]
    %v11747 = vld [vmem:[%s11685 + $0xf4] sm:$0xf]
    %v11748 = vld [vmem:[%s11685 + $0xf8] sm:$0xf]
    %v11749 = vld [vmem:[%s11685 + $0xfc] sm:$0xf]
    %v11758 = vunpack.c.l.b16 %v10526
    %v11759 = vunpack.c.l.b16 %v10527
    %v11760 = vunpack.c.l.b16 %v10528
    %v11761 = vunpack.c.l.b16 %v10529
    %v11762 = vunpack.c.l.b16 %v10558
    %v11763 = vunpack.c.l.b16 %v10559
    %v11764 = vunpack.c.l.b16 %v10560
    %v11765 = vunpack.c.l.b16 %v10561
    %v11766 = vrot.slane %v11762, 7
    %v11767 = vsel %vm3183, %v11766, %v11758
    %v11768 = vrot.slane %v11763, 7
    %v11769 = vsel %vm3183, %v11768, %v11759
    %v11770 = vrot.slane %v11764, 7
    %v11771 = vsel %vm3183, %v11770, %v11760
    %v11772 = vrot.slane %v11765, 7
    %v11773 = vsel %vm3183, %v11772, %v11761
    %v11774 = vpack.c.b16 %v11767, %v11767
    %v11775 = vpack.c.b16 %v11769, %v11769
    %v11776 = vpack.c.b16 %v11771, %v11771
    %v11777 = vpack.c.b16 %v11773, %v11773
    %v11846 = vunpack.c.l.b16 %v11686
    %v11847 = vunpack.c.l.b16 %v11687
    %v11848 = vunpack.c.l.b16 %v11688
    %v11849 = vunpack.c.l.b16 %v11689
    %v11850 = vunpack.c.l.b16 %v11690
    %v11851 = vunpack.c.l.b16 %v11691
    %v11852 = vunpack.c.l.b16 %v11692
    %v11853 = vunpack.c.l.b16 %v11693
    %v11854 = vunpack.c.l.b16 %v11694
    %v11855 = vunpack.c.l.b16 %v11695
    %v11856 = vunpack.c.l.b16 %v11696
    %v11857 = vunpack.c.l.b16 %v11697
    %v11858 = vunpack.c.l.b16 %v11698
    %v11859 = vunpack.c.l.b16 %v11699
    %v11860 = vunpack.c.l.b16 %v11700
    %v11861 = vunpack.c.l.b16 %v11701
    %v11862 = vunpack.c.l.b16 %v11702
    %v11863 = vunpack.c.l.b16 %v11703
    %v11864 = vunpack.c.l.b16 %v11704
    %v11865 = vunpack.c.l.b16 %v11705
    %v11866 = vunpack.c.l.b16 %v11706
    %v11867 = vunpack.c.l.b16 %v11707
    %v11868 = vunpack.c.l.b16 %v11708
    %v11869 = vunpack.c.l.b16 %v11709
    %v11870 = vunpack.c.l.b16 %v11710
    %v11871 = vunpack.c.l.b16 %v11711
    %v11872 = vunpack.c.l.b16 %v11712
    %v11873 = vunpack.c.l.b16 %v11713
    %v11874 = vunpack.c.l.b16 %v11714
    %v11875 = vunpack.c.l.b16 %v11715
    %v11876 = vunpack.c.l.b16 %v11716
    %v11877 = vunpack.c.l.b16 %v11717
    %v11878 = vunpack.c.l.b16 %v11718
    %v11879 = vunpack.c.l.b16 %v11719
    %v11880 = vunpack.c.l.b16 %v11720
    %v11881 = vunpack.c.l.b16 %v11721
    %v11882 = vunpack.c.l.b16 %v11722
    %v11883 = vunpack.c.l.b16 %v11723
    %v11884 = vunpack.c.l.b16 %v11724
    %v11885 = vunpack.c.l.b16 %v11725
    %v11886 = vunpack.c.l.b16 %v11726
    %v11887 = vunpack.c.l.b16 %v11727
    %v11888 = vunpack.c.l.b16 %v11728
    %v11889 = vunpack.c.l.b16 %v11729
    %v11890 = vunpack.c.l.b16 %v11730
    %v11891 = vunpack.c.l.b16 %v11731
    %v11892 = vunpack.c.l.b16 %v11732
    %v11893 = vunpack.c.l.b16 %v11733
    %v11894 = vunpack.c.l.b16 %v11734
    %v11895 = vunpack.c.l.b16 %v11735
    %v11896 = vunpack.c.l.b16 %v11736
    %v11897 = vunpack.c.l.b16 %v11737
    %v11898 = vunpack.c.l.b16 %v11738
    %v11899 = vunpack.c.l.b16 %v11739
    %v11900 = vunpack.c.l.b16 %v11740
    %v11901 = vunpack.c.l.b16 %v11741
    %v11902 = vunpack.c.l.b16 %v11742
    %v11903 = vunpack.c.l.b16 %v11743
    %v11904 = vunpack.c.l.b16 %v11744
    %v11905 = vunpack.c.l.b16 %v11745
    %v11906 = vunpack.c.l.b16 %v11746
    %v11907 = vunpack.c.l.b16 %v11747
    %v11908 = vunpack.c.l.b16 %v11748
    %v11909 = vunpack.c.l.b16 %v11749
    %v11910 = vpack.c.b16 %v11847, %v11846
    %v11911 = vpack.c.b16 %v11849, %v11848
    %v11912 = vpack.c.b16 %v11851, %v11850
    %v11913 = vpack.c.b16 %v11853, %v11852
    %v11914 = vpack.c.b16 %v11855, %v11854
    %v11915 = vpack.c.b16 %v11857, %v11856
    %v11916 = vpack.c.b16 %v11859, %v11858
    %v11917 = vpack.c.b16 %v11861, %v11860
    %v11918 = vpack.c.b16 %v11863, %v11862
    %v11919 = vpack.c.b16 %v11865, %v11864
    %v11920 = vpack.c.b16 %v11867, %v11866
    %v11921 = vpack.c.b16 %v11869, %v11868
    %v11922 = vpack.c.b16 %v11871, %v11870
    %v11923 = vpack.c.b16 %v11873, %v11872
    %v11924 = vpack.c.b16 %v11875, %v11874
    %v11925 = vpack.c.b16 %v11877, %v11876
    %v11926 = vpack.c.b16 %v11879, %v11878
    %v11927 = vpack.c.b16 %v11881, %v11880
    %v11928 = vpack.c.b16 %v11883, %v11882
    %v11929 = vpack.c.b16 %v11885, %v11884
    %v11930 = vpack.c.b16 %v11887, %v11886
    %v11931 = vpack.c.b16 %v11889, %v11888
    %v11932 = vpack.c.b16 %v11891, %v11890
    %v11933 = vpack.c.b16 %v11893, %v11892
    %v11934 = vpack.c.b16 %v11895, %v11894
    %v11935 = vpack.c.b16 %v11897, %v11896
    %v11936 = vpack.c.b16 %v11899, %v11898
    %v11937 = vpack.c.b16 %v11901, %v11900
    %v11938 = vpack.c.b16 %v11903, %v11902
    %v11939 = vpack.c.b16 %v11905, %v11904
    %v11940 = vpack.c.b16 %v11907, %v11906
    %v11941 = vpack.c.b16 %v11909, %v11908
    %11974 = vmatprep.subr.bf16.mxu0 0
    %11975 = vmatpush1.bf16.msra.mxu0 %v11917
    %11976 = vmatprep.subr.bf16.mxu0 0
    %11977 = vmatpush1.bf16.msra.mxu0 %v11916
    %11978 = vmatprep.subr.bf16.mxu0 0
    %11979 = vmatpush1.bf16.msra.mxu0 %v11915
    %11980 = vmatprep.subr.bf16.mxu0 0
    %11981 = vmatpush1.bf16.msra.mxu0 %v11914
    %11982 = vmatprep.subr.bf16.mxu0 0
    %11983 = vmatpush1.bf16.msra.mxu0 %v11913
    %11984 = vmatprep.subr.bf16.mxu0 0
    %11985 = vmatpush1.bf16.msra.mxu0 %v11912
    %11986 = vmatprep.subr.bf16.mxu0 0
    %11987 = vmatpush1.bf16.msra.mxu0 %v11911
    %11988 = vmatprep.subr.bf16.mxu0 0
    %11989 = vmatpush1.bf16.msra.mxu0 %v11910
    %11990 = vmatprep.subr.bf16.mxu0 0
    %11991 = vmatpush2.bf16.msra.mxu0 %v11925
    %11992 = vmatprep.subr.bf16.mxu0 0
    %11993 = vmatpush2.bf16.msra.mxu0 %v11924
    %11994 = vmatprep.subr.bf16.mxu0 0
    %11995 = vmatpush2.bf16.msra.mxu0 %v11923
    %11996 = vmatprep.subr.bf16.mxu0 0
    %11997 = vmatpush2.bf16.msra.mxu0 %v11922
    %11998 = vmatprep.subr.bf16.mxu0 0
    %11999 = vmatpush2.bf16.msra.mxu0 %v11921
    %12000 = vmatprep.subr.bf16.mxu0 0
    %12001 = vmatpush2.bf16.msra.mxu0 %v11920
    %12002 = vmatprep.subr.bf16.mxu0 0
    %12003 = vmatpush2.bf16.msra.mxu0 %v11919
    %12004 = vmatprep.subr.bf16.mxu0 0
    %12005 = vmatpush2.bf16.msra.mxu0 %v11918
    %12006 = vmatprep.mubr.bf16.mxu0 %v11775
    %12007 = vmatmul.mubr.bf16.gmra.mxu0 %v11774
    %v12008 = vpop.f32.mrf.mxu0
    %v12009 = vadd.f32 0.0, %v12008
    %v12010 = vpop.f32.mrf.mxu0
    %v12011 = vpop.f32.mrf.mxu0
    %v12012 = vpop.f32.mrf.mxu0
    %12013 = vdwg.mxu0
    %12014 = vmatprep.subr.bf16.mxu0 0
    %12015 = vmatpush1.bf16.msra.mxu0 %v11933
    %12016 = vmatprep.subr.bf16.mxu0 0
    %12017 = vmatpush1.bf16.msra.mxu0 %v11932
    %12018 = vmatprep.subr.bf16.mxu0 0
    %12019 = vmatpush1.bf16.msra.mxu0 %v11931
    %12020 = vmatprep.subr.bf16.mxu0 0
    %12021 = vmatpush1.bf16.msra.mxu0 %v11930
    %12022 = vmatprep.subr.bf16.mxu0 0
    %12023 = vmatpush1.bf16.msra.mxu0 %v11929
    %12024 = vmatprep.subr.bf16.mxu0 0
    %12025 = vmatpush1.bf16.msra.mxu0 %v11928
    %12026 = vmatprep.subr.bf16.mxu0 0
    %12027 = vmatpush1.bf16.msra.mxu0 %v11927
    %12028 = vmatprep.subr.bf16.mxu0 0
    %12029 = vmatpush1.bf16.msra.mxu0 %v11926
    %12030 = vmatprep.subr.bf16.mxu0 0
    %12031 = vmatpush2.bf16.msra.mxu0 %v11941
    %12032 = vmatprep.subr.bf16.mxu0 0
    %12033 = vmatpush2.bf16.msra.mxu0 %v11940
    %12034 = vmatprep.subr.bf16.mxu0 0
    %12035 = vmatpush2.bf16.msra.mxu0 %v11939
    %12036 = vmatprep.subr.bf16.mxu0 0
    %12037 = vmatpush2.bf16.msra.mxu0 %v11938
    %12038 = vmatprep.subr.bf16.mxu0 0
    %12039 = vmatpush2.bf16.msra.mxu0 %v11937
    %12040 = vmatprep.subr.bf16.mxu0 0
    %12041 = vmatpush2.bf16.msra.mxu0 %v11936
    %12042 = vmatprep.subr.bf16.mxu0 0
    %12043 = vmatpush2.bf16.msra.mxu0 %v11935
    %12044 = vmatprep.subr.bf16.mxu0 0
    %12045 = vmatpush2.bf16.msra.mxu0 %v11934
    %12046 = vmatprep.mubr.bf16.mxu0 %v11777
    %12047 = vmatmul.mubr.bf16.gmra.mxu0 %v11776
    %v12048 = vpop.f32.mrf.mxu0
    %v12049 = vadd.f32 %v12009, %v12048
    %v12050 = vpop.f32.mrf.mxu0
    %v12051 = vpop.f32.mrf.mxu0
    %v12052 = vpop.f32.mrf.mxu0
    %12053 = vdwg.mxu0
    %v12054 = vadd.f32 %v11684, %v12049
    %s12055 = scalar_lea.vmem [#allocation11], 1024
    %v12056 = vld [vmem:[%s12055] sm:$0xf]
    %v12057 = vld [vmem:[%s12055 + $0x4] sm:$0xf]
    %v12058 = vld [vmem:[%s12055 + $0x8] sm:$0xf]
    %v12059 = vld [vmem:[%s12055 + $0xc] sm:$0xf]
    %v12060 = vld [vmem:[%s12055 + $0x10] sm:$0xf]
    %v12061 = vld [vmem:[%s12055 + $0x14] sm:$0xf]
    %v12062 = vld [vmem:[%s12055 + $0x18] sm:$0xf]
    %v12063 = vld [vmem:[%s12055 + $0x1c] sm:$0xf]
    %v12064 = vld [vmem:[%s12055 + $0x20] sm:$0xf]
    %v12065 = vld [vmem:[%s12055 + $0x24] sm:$0xf]
    %v12066 = vld [vmem:[%s12055 + $0x28] sm:$0xf]
    %v12067 = vld [vmem:[%s12055 + $0x2c] sm:$0xf]
    %v12068 = vld [vmem:[%s12055 + $0x30] sm:$0xf]
    %v12069 = vld [vmem:[%s12055 + $0x34] sm:$0xf]
    %v12070 = vld [vmem:[%s12055 + $0x38] sm:$0xf]
    %v12071 = vld [vmem:[%s12055 + $0x3c] sm:$0xf]
    %v12072 = vld [vmem:[%s12055 + $0x40] sm:$0xf]
    %v12073 = vld [vmem:[%s12055 + $0x44] sm:$0xf]
    %v12074 = vld [vmem:[%s12055 + $0x48] sm:$0xf]
    %v12075 = vld [vmem:[%s12055 + $0x4c] sm:$0xf]
    %v12076 = vld [vmem:[%s12055 + $0x50] sm:$0xf]
    %v12077 = vld [vmem:[%s12055 + $0x54] sm:$0xf]
    %v12078 = vld [vmem:[%s12055 + $0x58] sm:$0xf]
    %v12079 = vld [vmem:[%s12055 + $0x5c] sm:$0xf]
    %v12080 = vld [vmem:[%s12055 + $0x60] sm:$0xf]
    %v12081 = vld [vmem:[%s12055 + $0x64] sm:$0xf]
    %v12082 = vld [vmem:[%s12055 + $0x68] sm:$0xf]
    %v12083 = vld [vmem:[%s12055 + $0x6c] sm:$0xf]
    %v12084 = vld [vmem:[%s12055 + $0x70] sm:$0xf]
    %v12085 = vld [vmem:[%s12055 + $0x74] sm:$0xf]
    %v12086 = vld [vmem:[%s12055 + $0x78] sm:$0xf]
    %v12087 = vld [vmem:[%s12055 + $0x7c] sm:$0xf]
    %v12088 = vld [vmem:[%s12055 + $0x80] sm:$0xf]
    %v12089 = vld [vmem:[%s12055 + $0x84] sm:$0xf]
    %v12090 = vld [vmem:[%s12055 + $0x88] sm:$0xf]
    %v12091 = vld [vmem:[%s12055 + $0x8c] sm:$0xf]
    %v12092 = vld [vmem:[%s12055 + $0x90] sm:$0xf]
    %v12093 = vld [vmem:[%s12055 + $0x94] sm:$0xf]
    %v12094 = vld [vmem:[%s12055 + $0x98] sm:$0xf]
    %v12095 = vld [vmem:[%s12055 + $0x9c] sm:$0xf]
    %v12096 = vld [vmem:[%s12055 + $0xa0] sm:$0xf]
    %v12097 = vld [vmem:[%s12055 + $0xa4] sm:$0xf]
    %v12098 = vld [vmem:[%s12055 + $0xa8] sm:$0xf]
    %v12099 = vld [vmem:[%s12055 + $0xac] sm:$0xf]
    %v12100 = vld [vmem:[%s12055 + $0xb0] sm:$0xf]
    %v12101 = vld [vmem:[%s12055 + $0xb4] sm:$0xf]
    %v12102 = vld [vmem:[%s12055 + $0xb8] sm:$0xf]
    %v12103 = vld [vmem:[%s12055 + $0xbc] sm:$0xf]
    %v12104 = vld [vmem:[%s12055 + $0xc0] sm:$0xf]
    %v12105 = vld [vmem:[%s12055 + $0xc4] sm:$0xf]
    %v12106 = vld [vmem:[%s12055 + $0xc8] sm:$0xf]
    %v12107 = vld [vmem:[%s12055 + $0xcc] sm:$0xf]
    %v12108 = vld [vmem:[%s12055 + $0xd0] sm:$0xf]
    %v12109 = vld [vmem:[%s12055 + $0xd4] sm:$0xf]
    %v12110 = vld [vmem:[%s12055 + $0xd8] sm:$0xf]
    %v12111 = vld [vmem:[%s12055 + $0xdc] sm:$0xf]
    %v12112 = vld [vmem:[%s12055 + $0xe0] sm:$0xf]
    %v12113 = vld [vmem:[%s12055 + $0xe4] sm:$0xf]
    %v12114 = vld [vmem:[%s12055 + $0xe8] sm:$0xf]
    %v12115 = vld [vmem:[%s12055 + $0xec] sm:$0xf]
    %v12116 = vld [vmem:[%s12055 + $0xf0] sm:$0xf]
    %v12117 = vld [vmem:[%s12055 + $0xf4] sm:$0xf]
    %v12118 = vld [vmem:[%s12055 + $0xf8] sm:$0xf]
    %v12119 = vld [vmem:[%s12055 + $0xfc] sm:$0xf]
    %v12128 = vunpack.c.l.b16 %v10530
    %v12129 = vunpack.c.l.b16 %v10531
    %v12130 = vunpack.c.l.b16 %v10532
    %v12131 = vunpack.c.l.b16 %v10533
    %v12132 = vunpack.c.l.b16 %v10562
    %v12133 = vunpack.c.l.b16 %v10563
    %v12134 = vunpack.c.l.b16 %v10564
    %v12135 = vunpack.c.l.b16 %v10565
    %v12136 = vrot.slane %v12132, 7
    %v12137 = vsel %vm3183, %v12136, %v12128
    %v12138 = vrot.slane %v12133, 7
    %v12139 = vsel %vm3183, %v12138, %v12129
    %v12140 = vrot.slane %v12134, 7
    %v12141 = vsel %vm3183, %v12140, %v12130
    %v12142 = vrot.slane %v12135, 7
    %v12143 = vsel %vm3183, %v12142, %v12131
    %v12144 = vpack.c.b16 %v12137, %v12137
    %v12145 = vpack.c.b16 %v12139, %v12139
    %v12146 = vpack.c.b16 %v12141, %v12141
    %v12147 = vpack.c.b16 %v12143, %v12143
    %v12216 = vunpack.c.l.b16 %v12056
    %v12217 = vunpack.c.l.b16 %v12057
    %v12218 = vunpack.c.l.b16 %v12058
    %v12219 = vunpack.c.l.b16 %v12059
    %v12220 = vunpack.c.l.b16 %v12060
    %v12221 = vunpack.c.l.b16 %v12061
    %v12222 = vunpack.c.l.b16 %v12062
    %v12223 = vunpack.c.l.b16 %v12063
    %v12224 = vunpack.c.l.b16 %v12064
    %v12225 = vunpack.c.l.b16 %v12065
    %v12226 = vunpack.c.l.b16 %v12066
    %v12227 = vunpack.c.l.b16 %v12067
    %v12228 = vunpack.c.l.b16 %v12068
    %v12229 = vunpack.c.l.b16 %v12069
    %v12230 = vunpack.c.l.b16 %v12070
    %v12231 = vunpack.c.l.b16 %v12071
    %v12232 = vunpack.c.l.b16 %v12072
    %v12233 = vunpack.c.l.b16 %v12073
    %v12234 = vunpack.c.l.b16 %v12074
    %v12235 = vunpack.c.l.b16 %v12075
    %v12236 = vunpack.c.l.b16 %v12076
    %v12237 = vunpack.c.l.b16 %v12077
    %v12238 = vunpack.c.l.b16 %v12078
    %v12239 = vunpack.c.l.b16 %v12079
    %v12240 = vunpack.c.l.b16 %v12080
    %v12241 = vunpack.c.l.b16 %v12081
    %v12242 = vunpack.c.l.b16 %v12082
    %v12243 = vunpack.c.l.b16 %v12083
    %v12244 = vunpack.c.l.b16 %v12084
    %v12245 = vunpack.c.l.b16 %v12085
    %v12246 = vunpack.c.l.b16 %v12086
    %v12247 = vunpack.c.l.b16 %v12087
    %v12248 = vunpack.c.l.b16 %v12088
    %v12249 = vunpack.c.l.b16 %v12089
    %v12250 = vunpack.c.l.b16 %v12090
    %v12251 = vunpack.c.l.b16 %v12091
    %v12252 = vunpack.c.l.b16 %v12092
    %v12253 = vunpack.c.l.b16 %v12093
    %v12254 = vunpack.c.l.b16 %v12094
    %v12255 = vunpack.c.l.b16 %v12095
    %v12256 = vunpack.c.l.b16 %v12096
    %v12257 = vunpack.c.l.b16 %v12097
    %v12258 = vunpack.c.l.b16 %v12098
    %v12259 = vunpack.c.l.b16 %v12099
    %v12260 = vunpack.c.l.b16 %v12100
    %v12261 = vunpack.c.l.b16 %v12101
    %v12262 = vunpack.c.l.b16 %v12102
    %v12263 = vunpack.c.l.b16 %v12103
    %v12264 = vunpack.c.l.b16 %v12104
    %v12265 = vunpack.c.l.b16 %v12105
    %v12266 = vunpack.c.l.b16 %v12106
    %v12267 = vunpack.c.l.b16 %v12107
    %v12268 = vunpack.c.l.b16 %v12108
    %v12269 = vunpack.c.l.b16 %v12109
    %v12270 = vunpack.c.l.b16 %v12110
    %v12271 = vunpack.c.l.b16 %v12111
    %v12272 = vunpack.c.l.b16 %v12112
    %v12273 = vunpack.c.l.b16 %v12113
    %v12274 = vunpack.c.l.b16 %v12114
    %v12275 = vunpack.c.l.b16 %v12115
    %v12276 = vunpack.c.l.b16 %v12116
    %v12277 = vunpack.c.l.b16 %v12117
    %v12278 = vunpack.c.l.b16 %v12118
    %v12279 = vunpack.c.l.b16 %v12119
    %v12280 = vpack.c.b16 %v12217, %v12216
    %v12281 = vpack.c.b16 %v12219, %v12218
    %v12282 = vpack.c.b16 %v12221, %v12220
    %v12283 = vpack.c.b16 %v12223, %v12222
    %v12284 = vpack.c.b16 %v12225, %v12224
    %v12285 = vpack.c.b16 %v12227, %v12226
    %v12286 = vpack.c.b16 %v12229, %v12228
    %v12287 = vpack.c.b16 %v12231, %v12230
    %v12288 = vpack.c.b16 %v12233, %v12232
    %v12289 = vpack.c.b16 %v12235, %v12234
    %v12290 = vpack.c.b16 %v12237, %v12236
    %v12291 = vpack.c.b16 %v12239, %v12238
    %v12292 = vpack.c.b16 %v12241, %v12240
    %v12293 = vpack.c.b16 %v12243, %v12242
    %v12294 = vpack.c.b16 %v12245, %v12244
    %v12295 = vpack.c.b16 %v12247, %v12246
    %v12296 = vpack.c.b16 %v12249, %v12248
    %v12297 = vpack.c.b16 %v12251, %v12250
    %v12298 = vpack.c.b16 %v12253, %v12252
    %v12299 = vpack.c.b16 %v12255, %v12254
    %v12300 = vpack.c.b16 %v12257, %v12256
    %v12301 = vpack.c.b16 %v12259, %v12258
    %v12302 = vpack.c.b16 %v12261, %v12260
    %v12303 = vpack.c.b16 %v12263, %v12262
    %v12304 = vpack.c.b16 %v12265, %v12264
    %v12305 = vpack.c.b16 %v12267, %v12266
    %v12306 = vpack.c.b16 %v12269, %v12268
    %v12307 = vpack.c.b16 %v12271, %v12270
    %v12308 = vpack.c.b16 %v12273, %v12272
    %v12309 = vpack.c.b16 %v12275, %v12274
    %v12310 = vpack.c.b16 %v12277, %v12276
    %v12311 = vpack.c.b16 %v12279, %v12278
    %12344 = vmatprep.subr.bf16.mxu0 0
    %12345 = vmatpush1.bf16.msra.mxu0 %v12287
    %12346 = vmatprep.subr.bf16.mxu0 0
    %12347 = vmatpush1.bf16.msra.mxu0 %v12286
    %12348 = vmatprep.subr.bf16.mxu0 0
    %12349 = vmatpush1.bf16.msra.mxu0 %v12285
    %12350 = vmatprep.subr.bf16.mxu0 0
    %12351 = vmatpush1.bf16.msra.mxu0 %v12284
    %12352 = vmatprep.subr.bf16.mxu0 0
    %12353 = vmatpush1.bf16.msra.mxu0 %v12283
    %12354 = vmatprep.subr.bf16.mxu0 0
    %12355 = vmatpush1.bf16.msra.mxu0 %v12282
    %12356 = vmatprep.subr.bf16.mxu0 0
    %12357 = vmatpush1.bf16.msra.mxu0 %v12281
    %12358 = vmatprep.subr.bf16.mxu0 0
    %12359 = vmatpush1.bf16.msra.mxu0 %v12280
    %12360 = vmatprep.subr.bf16.mxu0 0
    %12361 = vmatpush2.bf16.msra.mxu0 %v12295
    %12362 = vmatprep.subr.bf16.mxu0 0
    %12363 = vmatpush2.bf16.msra.mxu0 %v12294
    %12364 = vmatprep.subr.bf16.mxu0 0
    %12365 = vmatpush2.bf16.msra.mxu0 %v12293
    %12366 = vmatprep.subr.bf16.mxu0 0
    %12367 = vmatpush2.bf16.msra.mxu0 %v12292
    %12368 = vmatprep.subr.bf16.mxu0 0
    %12369 = vmatpush2.bf16.msra.mxu0 %v12291
    %12370 = vmatprep.subr.bf16.mxu0 0
    %12371 = vmatpush2.bf16.msra.mxu0 %v12290
    %12372 = vmatprep.subr.bf16.mxu0 0
    %12373 = vmatpush2.bf16.msra.mxu0 %v12289
    %12374 = vmatprep.subr.bf16.mxu0 0
    %12375 = vmatpush2.bf16.msra.mxu0 %v12288
    %12376 = vmatprep.mubr.bf16.mxu0 %v12145
    %12377 = vmatmul.mubr.bf16.gmra.mxu0 %v12144
    %v12378 = vpop.f32.mrf.mxu0
    %v12379 = vadd.f32 0.0, %v12378
    %v12380 = vpop.f32.mrf.mxu0
    %v12381 = vpop.f32.mrf.mxu0
    %v12382 = vpop.f32.mrf.mxu0
    %12383 = vdwg.mxu0
    %12384 = vmatprep.subr.bf16.mxu0 0
    %12385 = vmatpush1.bf16.msra.mxu0 %v12303
    %12386 = vmatprep.subr.bf16.mxu0 0
    %12387 = vmatpush1.bf16.msra.mxu0 %v12302
    %12388 = vmatprep.subr.bf16.mxu0 0
    %12389 = vmatpush1.bf16.msra.mxu0 %v12301
    %12390 = vmatprep.subr.bf16.mxu0 0
    %12391 = vmatpush1.bf16.msra.mxu0 %v12300
    %12392 = vmatprep.subr.bf16.mxu0 0
    %12393 = vmatpush1.bf16.msra.mxu0 %v12299
    %12394 = vmatprep.subr.bf16.mxu0 0
    %12395 = vmatpush1.bf16.msra.mxu0 %v12298
    %12396 = vmatprep.subr.bf16.mxu0 0
    %12397 = vmatpush1.bf16.msra.mxu0 %v12297
    %12398 = vmatprep.subr.bf16.mxu0 0
    %12399 = vmatpush1.bf16.msra.mxu0 %v12296
    %12400 = vmatprep.subr.bf16.mxu0 0
    %12401 = vmatpush2.bf16.msra.mxu0 %v12311
    %12402 = vmatprep.subr.bf16.mxu0 0
    %12403 = vmatpush2.bf16.msra.mxu0 %v12310
    %12404 = vmatprep.subr.bf16.mxu0 0
    %12405 = vmatpush2.bf16.msra.mxu0 %v12309
    %12406 = vmatprep.subr.bf16.mxu0 0
    %12407 = vmatpush2.bf16.msra.mxu0 %v12308
    %12408 = vmatprep.subr.bf16.mxu0 0
    %12409 = vmatpush2.bf16.msra.mxu0 %v12307
    %12410 = vmatprep.subr.bf16.mxu0 0
    %12411 = vmatpush2.bf16.msra.mxu0 %v12306
    %12412 = vmatprep.subr.bf16.mxu0 0
    %12413 = vmatpush2.bf16.msra.mxu0 %v12305
    %12414 = vmatprep.subr.bf16.mxu0 0
    %12415 = vmatpush2.bf16.msra.mxu0 %v12304
    %12416 = vmatprep.mubr.bf16.mxu0 %v12147
    %12417 = vmatmul.mubr.bf16.gmra.mxu0 %v12146
    %v12418 = vpop.f32.mrf.mxu0
    %v12419 = vadd.f32 %v12379, %v12418
    %v12420 = vpop.f32.mrf.mxu0
    %v12421 = vpop.f32.mrf.mxu0
    %v12422 = vpop.f32.mrf.mxu0
    %12423 = vdwg.mxu0
    %v12424 = vadd.f32 %v12054, %v12419
    %s12425 = scalar_lea.vmem [#allocation11], 1280
    %v12426 = vld [vmem:[%s12425] sm:$0xf]
    %v12427 = vld [vmem:[%s12425 + $0x4] sm:$0xf]
    %v12428 = vld [vmem:[%s12425 + $0x8] sm:$0xf]
    %v12429 = vld [vmem:[%s12425 + $0xc] sm:$0xf]
    %v12430 = vld [vmem:[%s12425 + $0x10] sm:$0xf]
    %v12431 = vld [vmem:[%s12425 + $0x14] sm:$0xf]
    %v12432 = vld [vmem:[%s12425 + $0x18] sm:$0xf]
    %v12433 = vld [vmem:[%s12425 + $0x1c] sm:$0xf]
    %v12434 = vld [vmem:[%s12425 + $0x20] sm:$0xf]
    %v12435 = vld [vmem:[%s12425 + $0x24] sm:$0xf]
    %v12436 = vld [vmem:[%s12425 + $0x28] sm:$0xf]
    %v12437 = vld [vmem:[%s12425 + $0x2c] sm:$0xf]
    %v12438 = vld [vmem:[%s12425 + $0x30] sm:$0xf]
    %v12439 = vld [vmem:[%s12425 + $0x34] sm:$0xf]
    %v12440 = vld [vmem:[%s12425 + $0x38] sm:$0xf]
    %v12441 = vld [vmem:[%s12425 + $0x3c] sm:$0xf]
    %v12442 = vld [vmem:[%s12425 + $0x40] sm:$0xf]
    %v12443 = vld [vmem:[%s12425 + $0x44] sm:$0xf]
    %v12444 = vld [vmem:[%s12425 + $0x48] sm:$0xf]
    %v12445 = vld [vmem:[%s12425 + $0x4c] sm:$0xf]
    %v12446 = vld [vmem:[%s12425 + $0x50] sm:$0xf]
    %v12447 = vld [vmem:[%s12425 + $0x54] sm:$0xf]
    %v12448 = vld [vmem:[%s12425 + $0x58] sm:$0xf]
    %v12449 = vld [vmem:[%s12425 + $0x5c] sm:$0xf]
    %v12450 = vld [vmem:[%s12425 + $0x60] sm:$0xf]
    %v12451 = vld [vmem:[%s12425 + $0x64] sm:$0xf]
    %v12452 = vld [vmem:[%s12425 + $0x68] sm:$0xf]
    %v12453 = vld [vmem:[%s12425 + $0x6c] sm:$0xf]
    %v12454 = vld [vmem:[%s12425 + $0x70] sm:$0xf]
    %v12455 = vld [vmem:[%s12425 + $0x74] sm:$0xf]
    %v12456 = vld [vmem:[%s12425 + $0x78] sm:$0xf]
    %v12457 = vld [vmem:[%s12425 + $0x7c] sm:$0xf]
    %v12458 = vld [vmem:[%s12425 + $0x80] sm:$0xf]
    %v12459 = vld [vmem:[%s12425 + $0x84] sm:$0xf]
    %v12460 = vld [vmem:[%s12425 + $0x88] sm:$0xf]
    %v12461 = vld [vmem:[%s12425 + $0x8c] sm:$0xf]
    %v12462 = vld [vmem:[%s12425 + $0x90] sm:$0xf]
    %v12463 = vld [vmem:[%s12425 + $0x94] sm:$0xf]
    %v12464 = vld [vmem:[%s12425 + $0x98] sm:$0xf]
    %v12465 = vld [vmem:[%s12425 + $0x9c] sm:$0xf]
    %v12466 = vld [vmem:[%s12425 + $0xa0] sm:$0xf]
    %v12467 = vld [vmem:[%s12425 + $0xa4] sm:$0xf]
    %v12468 = vld [vmem:[%s12425 + $0xa8] sm:$0xf]
    %v12469 = vld [vmem:[%s12425 + $0xac] sm:$0xf]
    %v12470 = vld [vmem:[%s12425 + $0xb0] sm:$0xf]
    %v12471 = vld [vmem:[%s12425 + $0xb4] sm:$0xf]
    %v12472 = vld [vmem:[%s12425 + $0xb8] sm:$0xf]
    %v12473 = vld [vmem:[%s12425 + $0xbc] sm:$0xf]
    %v12474 = vld [vmem:[%s12425 + $0xc0] sm:$0xf]
    %v12475 = vld [vmem:[%s12425 + $0xc4] sm:$0xf]
    %v12476 = vld [vmem:[%s12425 + $0xc8] sm:$0xf]
    %v12477 = vld [vmem:[%s12425 + $0xcc] sm:$0xf]
    %v12478 = vld [vmem:[%s12425 + $0xd0] sm:$0xf]
    %v12479 = vld [vmem:[%s12425 + $0xd4] sm:$0xf]
    %v12480 = vld [vmem:[%s12425 + $0xd8] sm:$0xf]
    %v12481 = vld [vmem:[%s12425 + $0xdc] sm:$0xf]
    %v12482 = vld [vmem:[%s12425 + $0xe0] sm:$0xf]
    %v12483 = vld [vmem:[%s12425 + $0xe4] sm:$0xf]
    %v12484 = vld [vmem:[%s12425 + $0xe8] sm:$0xf]
    %v12485 = vld [vmem:[%s12425 + $0xec] sm:$0xf]
    %v12486 = vld [vmem:[%s12425 + $0xf0] sm:$0xf]
    %v12487 = vld [vmem:[%s12425 + $0xf4] sm:$0xf]
    %v12488 = vld [vmem:[%s12425 + $0xf8] sm:$0xf]
    %v12489 = vld [vmem:[%s12425 + $0xfc] sm:$0xf]
    %v12498 = vunpack.c.l.b16 %v10534
    %v12499 = vunpack.c.l.b16 %v10535
    %v12500 = vunpack.c.l.b16 %v10536
    %v12501 = vunpack.c.l.b16 %v10537
    %v12502 = vunpack.c.l.b16 %v10566
    %v12503 = vunpack.c.l.b16 %v10567
    %v12504 = vunpack.c.l.b16 %v10568
    %v12505 = vunpack.c.l.b16 %v10569
    %v12506 = vrot.slane %v12502, 7
    %v12507 = vsel %vm3183, %v12506, %v12498
    %v12508 = vrot.slane %v12503, 7
    %v12509 = vsel %vm3183, %v12508, %v12499
    %v12510 = vrot.slane %v12504, 7
    %v12511 = vsel %vm3183, %v12510, %v12500
    %v12512 = vrot.slane %v12505, 7
    %v12513 = vsel %vm3183, %v12512, %v12501
    %v12514 = vpack.c.b16 %v12507, %v12507
    %v12515 = vpack.c.b16 %v12509, %v12509
    %v12516 = vpack.c.b16 %v12511, %v12511
    %v12517 = vpack.c.b16 %v12513, %v12513
    %v12586 = vunpack.c.l.b16 %v12426
    %v12587 = vunpack.c.l.b16 %v12427
    %v12588 = vunpack.c.l.b16 %v12428
    %v12589 = vunpack.c.l.b16 %v12429
    %v12590 = vunpack.c.l.b16 %v12430
    %v12591 = vunpack.c.l.b16 %v12431
    %v12592 = vunpack.c.l.b16 %v12432
    %v12593 = vunpack.c.l.b16 %v12433
    %v12594 = vunpack.c.l.b16 %v12434
    %v12595 = vunpack.c.l.b16 %v12435
    %v12596 = vunpack.c.l.b16 %v12436
    %v12597 = vunpack.c.l.b16 %v12437
    %v12598 = vunpack.c.l.b16 %v12438
    %v12599 = vunpack.c.l.b16 %v12439
    %v12600 = vunpack.c.l.b16 %v12440
    %v12601 = vunpack.c.l.b16 %v12441
    %v12602 = vunpack.c.l.b16 %v12442
    %v12603 = vunpack.c.l.b16 %v12443
    %v12604 = vunpack.c.l.b16 %v12444
    %v12605 = vunpack.c.l.b16 %v12445
    %v12606 = vunpack.c.l.b16 %v12446
    %v12607 = vunpack.c.l.b16 %v12447
    %v12608 = vunpack.c.l.b16 %v12448
    %v12609 = vunpack.c.l.b16 %v12449
    %v12610 = vunpack.c.l.b16 %v12450
    %v12611 = vunpack.c.l.b16 %v12451
    %v12612 = vunpack.c.l.b16 %v12452
    %v12613 = vunpack.c.l.b16 %v12453
    %v12614 = vunpack.c.l.b16 %v12454
    %v12615 = vunpack.c.l.b16 %v12455
    %v12616 = vunpack.c.l.b16 %v12456
    %v12617 = vunpack.c.l.b16 %v12457
    %v12618 = vunpack.c.l.b16 %v12458
    %v12619 = vunpack.c.l.b16 %v12459
    %v12620 = vunpack.c.l.b16 %v12460
    %v12621 = vunpack.c.l.b16 %v12461
    %v12622 = vunpack.c.l.b16 %v12462
    %v12623 = vunpack.c.l.b16 %v12463
    %v12624 = vunpack.c.l.b16 %v12464
    %v12625 = vunpack.c.l.b16 %v12465
    %v12626 = vunpack.c.l.b16 %v12466
    %v12627 = vunpack.c.l.b16 %v12467
    %v12628 = vunpack.c.l.b16 %v12468
    %v12629 = vunpack.c.l.b16 %v12469
    %v12630 = vunpack.c.l.b16 %v12470
    %v12631 = vunpack.c.l.b16 %v12471
    %v12632 = vunpack.c.l.b16 %v12472
    %v12633 = vunpack.c.l.b16 %v12473
    %v12634 = vunpack.c.l.b16 %v12474
    %v12635 = vunpack.c.l.b16 %v12475
    %v12636 = vunpack.c.l.b16 %v12476
    %v12637 = vunpack.c.l.b16 %v12477
    %v12638 = vunpack.c.l.b16 %v12478
    %v12639 = vunpack.c.l.b16 %v12479
    %v12640 = vunpack.c.l.b16 %v12480
    %v12641 = vunpack.c.l.b16 %v12481
    %v12642 = vunpack.c.l.b16 %v12482
    %v12643 = vunpack.c.l.b16 %v12483
    %v12644 = vunpack.c.l.b16 %v12484
    %v12645 = vunpack.c.l.b16 %v12485
    %v12646 = vunpack.c.l.b16 %v12486
    %v12647 = vunpack.c.l.b16 %v12487
    %v12648 = vunpack.c.l.b16 %v12488
    %v12649 = vunpack.c.l.b16 %v12489
    %v12650 = vpack.c.b16 %v12587, %v12586
    %v12651 = vpack.c.b16 %v12589, %v12588
    %v12652 = vpack.c.b16 %v12591, %v12590
    %v12653 = vpack.c.b16 %v12593, %v12592
    %v12654 = vpack.c.b16 %v12595, %v12594
    %v12655 = vpack.c.b16 %v12597, %v12596
    %v12656 = vpack.c.b16 %v12599, %v12598
    %v12657 = vpack.c.b16 %v12601, %v12600
    %v12658 = vpack.c.b16 %v12603, %v12602
    %v12659 = vpack.c.b16 %v12605, %v12604
    %v12660 = vpack.c.b16 %v12607, %v12606
    %v12661 = vpack.c.b16 %v12609, %v12608
    %v12662 = vpack.c.b16 %v12611, %v12610
    %v12663 = vpack.c.b16 %v12613, %v12612
    %v12664 = vpack.c.b16 %v12615, %v12614
    %v12665 = vpack.c.b16 %v12617, %v12616
    %v12666 = vpack.c.b16 %v12619, %v12618
    %v12667 = vpack.c.b16 %v12621, %v12620
    %v12668 = vpack.c.b16 %v12623, %v12622
    %v12669 = vpack.c.b16 %v12625, %v12624
    %v12670 = vpack.c.b16 %v12627, %v12626
    %v12671 = vpack.c.b16 %v12629, %v12628
    %v12672 = vpack.c.b16 %v12631, %v12630
    %v12673 = vpack.c.b16 %v12633, %v12632
    %v12674 = vpack.c.b16 %v12635, %v12634
    %v12675 = vpack.c.b16 %v12637, %v12636
    %v12676 = vpack.c.b16 %v12639, %v12638
    %v12677 = vpack.c.b16 %v12641, %v12640
    %v12678 = vpack.c.b16 %v12643, %v12642
    %v12679 = vpack.c.b16 %v12645, %v12644
    %v12680 = vpack.c.b16 %v12647, %v12646
    %v12681 = vpack.c.b16 %v12649, %v12648
    %12714 = vmatprep.subr.bf16.mxu0 0
    %12715 = vmatpush1.bf16.msra.mxu0 %v12657
    %12716 = vmatprep.subr.bf16.mxu0 0
    %12717 = vmatpush1.bf16.msra.mxu0 %v12656
    %12718 = vmatprep.subr.bf16.mxu0 0
    %12719 = vmatpush1.bf16.msra.mxu0 %v12655
    %12720 = vmatprep.subr.bf16.mxu0 0
    %12721 = vmatpush1.bf16.msra.mxu0 %v12654
    %12722 = vmatprep.subr.bf16.mxu0 0
    %12723 = vmatpush1.bf16.msra.mxu0 %v12653
    %12724 = vmatprep.subr.bf16.mxu0 0
    %12725 = vmatpush1.bf16.msra.mxu0 %v12652
    %12726 = vmatprep.subr.bf16.mxu0 0
    %12727 = vmatpush1.bf16.msra.mxu0 %v12651
    %12728 = vmatprep.subr.bf16.mxu0 0
    %12729 = vmatpush1.bf16.msra.mxu0 %v12650
    %12730 = vmatprep.subr.bf16.mxu0 0
    %12731 = vmatpush2.bf16.msra.mxu0 %v12665
    %12732 = vmatprep.subr.bf16.mxu0 0
    %12733 = vmatpush2.bf16.msra.mxu0 %v12664
    %12734 = vmatprep.subr.bf16.mxu0 0
    %12735 = vmatpush2.bf16.msra.mxu0 %v12663
    %12736 = vmatprep.subr.bf16.mxu0 0
    %12737 = vmatpush2.bf16.msra.mxu0 %v12662
    %12738 = vmatprep.subr.bf16.mxu0 0
    %12739 = vmatpush2.bf16.msra.mxu0 %v12661
    %12740 = vmatprep.subr.bf16.mxu0 0
    %12741 = vmatpush2.bf16.msra.mxu0 %v12660
    %12742 = vmatprep.subr.bf16.mxu0 0
    %12743 = vmatpush2.bf16.msra.mxu0 %v12659
    %12744 = vmatprep.subr.bf16.mxu0 0
    %12745 = vmatpush2.bf16.msra.mxu0 %v12658
    %12746 = vmatprep.mubr.bf16.mxu0 %v12515
    %12747 = vmatmul.mubr.bf16.gmra.mxu0 %v12514
    %v12748 = vpop.f32.mrf.mxu0
    %v12749 = vadd.f32 0.0, %v12748
    %v12750 = vpop.f32.mrf.mxu0
    %v12751 = vpop.f32.mrf.mxu0
    %v12752 = vpop.f32.mrf.mxu0
    %12753 = vdwg.mxu0
    %12754 = vmatprep.subr.bf16.mxu0 0
    %12755 = vmatpush1.bf16.msra.mxu0 %v12673
    %12756 = vmatprep.subr.bf16.mxu0 0
    %12757 = vmatpush1.bf16.msra.mxu0 %v12672
    %12758 = vmatprep.subr.bf16.mxu0 0
    %12759 = vmatpush1.bf16.msra.mxu0 %v12671
    %12760 = vmatprep.subr.bf16.mxu0 0
    %12761 = vmatpush1.bf16.msra.mxu0 %v12670
    %12762 = vmatprep.subr.bf16.mxu0 0
    %12763 = vmatpush1.bf16.msra.mxu0 %v12669
    %12764 = vmatprep.subr.bf16.mxu0 0
    %12765 = vmatpush1.bf16.msra.mxu0 %v12668
    %12766 = vmatprep.subr.bf16.mxu0 0
    %12767 = vmatpush1.bf16.msra.mxu0 %v12667
    %12768 = vmatprep.subr.bf16.mxu0 0
    %12769 = vmatpush1.bf16.msra.mxu0 %v12666
    %12770 = vmatprep.subr.bf16.mxu0 0
    %12771 = vmatpush2.bf16.msra.mxu0 %v12681
    %12772 = vmatprep.subr.bf16.mxu0 0
    %12773 = vmatpush2.bf16.msra.mxu0 %v12680
    %12774 = vmatprep.subr.bf16.mxu0 0
    %12775 = vmatpush2.bf16.msra.mxu0 %v12679
    %12776 = vmatprep.subr.bf16.mxu0 0
    %12777 = vmatpush2.bf16.msra.mxu0 %v12678
    %12778 = vmatprep.subr.bf16.mxu0 0
    %12779 = vmatpush2.bf16.msra.mxu0 %v12677
    %12780 = vmatprep.subr.bf16.mxu0 0
    %12781 = vmatpush2.bf16.msra.mxu0 %v12676
    %12782 = vmatprep.subr.bf16.mxu0 0
    %12783 = vmatpush2.bf16.msra.mxu0 %v12675
    %12784 = vmatprep.subr.bf16.mxu0 0
    %12785 = vmatpush2.bf16.msra.mxu0 %v12674
    %12786 = vmatprep.mubr.bf16.mxu0 %v12517
    %12787 = vmatmul.mubr.bf16.gmra.mxu0 %v12516
    %v12788 = vpop.f32.mrf.mxu0
    %v12789 = vadd.f32 %v12749, %v12788
    %v12790 = vpop.f32.mrf.mxu0
    %v12791 = vpop.f32.mrf.mxu0
    %v12792 = vpop.f32.mrf.mxu0
    %12793 = vdwg.mxu0
    %v12794 = vadd.f32 %v12424, %v12789
    %s12795 = scalar_lea.vmem [#allocation11], 1536
    %v12796 = vld [vmem:[%s12795] sm:$0xf]
    %v12797 = vld [vmem:[%s12795 + $0x4] sm:$0xf]
    %v12798 = vld [vmem:[%s12795 + $0x8] sm:$0xf]
    %v12799 = vld [vmem:[%s12795 + $0xc] sm:$0xf]
    %v12800 = vld [vmem:[%s12795 + $0x10] sm:$0xf]
    %v12801 = vld [vmem:[%s12795 + $0x14] sm:$0xf]
    %v12802 = vld [vmem:[%s12795 + $0x18] sm:$0xf]
    %v12803 = vld [vmem:[%s12795 + $0x1c] sm:$0xf]
    %v12804 = vld [vmem:[%s12795 + $0x20] sm:$0xf]
    %v12805 = vld [vmem:[%s12795 + $0x24] sm:$0xf]
    %v12806 = vld [vmem:[%s12795 + $0x28] sm:$0xf]
    %v12807 = vld [vmem:[%s12795 + $0x2c] sm:$0xf]
    %v12808 = vld [vmem:[%s12795 + $0x30] sm:$0xf]
    %v12809 = vld [vmem:[%s12795 + $0x34] sm:$0xf]
    %v12810 = vld [vmem:[%s12795 + $0x38] sm:$0xf]
    %v12811 = vld [vmem:[%s12795 + $0x3c] sm:$0xf]
    %v12812 = vld [vmem:[%s12795 + $0x40] sm:$0xf]
    %v12813 = vld [vmem:[%s12795 + $0x44] sm:$0xf]
    %v12814 = vld [vmem:[%s12795 + $0x48] sm:$0xf]
    %v12815 = vld [vmem:[%s12795 + $0x4c] sm:$0xf]
    %v12816 = vld [vmem:[%s12795 + $0x50] sm:$0xf]
    %v12817 = vld [vmem:[%s12795 + $0x54] sm:$0xf]
    %v12818 = vld [vmem:[%s12795 + $0x58] sm:$0xf]
    %v12819 = vld [vmem:[%s12795 + $0x5c] sm:$0xf]
    %v12820 = vld [vmem:[%s12795 + $0x60] sm:$0xf]
    %v12821 = vld [vmem:[%s12795 + $0x64] sm:$0xf]
    %v12822 = vld [vmem:[%s12795 + $0x68] sm:$0xf]
    %v12823 = vld [vmem:[%s12795 + $0x6c] sm:$0xf]
    %v12824 = vld [vmem:[%s12795 + $0x70] sm:$0xf]
    %v12825 = vld [vmem:[%s12795 + $0x74] sm:$0xf]
    %v12826 = vld [vmem:[%s12795 + $0x78] sm:$0xf]
    %v12827 = vld [vmem:[%s12795 + $0x7c] sm:$0xf]
    %v12828 = vld [vmem:[%s12795 + $0x80] sm:$0xf]
    %v12829 = vld [vmem:[%s12795 + $0x84] sm:$0xf]
    %v12830 = vld [vmem:[%s12795 + $0x88] sm:$0xf]
    %v12831 = vld [vmem:[%s12795 + $0x8c] sm:$0xf]
    %v12832 = vld [vmem:[%s12795 + $0x90] sm:$0xf]
    %v12833 = vld [vmem:[%s12795 + $0x94] sm:$0xf]
    %v12834 = vld [vmem:[%s12795 + $0x98] sm:$0xf]
    %v12835 = vld [vmem:[%s12795 + $0x9c] sm:$0xf]
    %v12836 = vld [vmem:[%s12795 + $0xa0] sm:$0xf]
    %v12837 = vld [vmem:[%s12795 + $0xa4] sm:$0xf]
    %v12838 = vld [vmem:[%s12795 + $0xa8] sm:$0xf]
    %v12839 = vld [vmem:[%s12795 + $0xac] sm:$0xf]
    %v12840 = vld [vmem:[%s12795 + $0xb0] sm:$0xf]
    %v12841 = vld [vmem:[%s12795 + $0xb4] sm:$0xf]
    %v12842 = vld [vmem:[%s12795 + $0xb8] sm:$0xf]
    %v12843 = vld [vmem:[%s12795 + $0xbc] sm:$0xf]
    %v12844 = vld [vmem:[%s12795 + $0xc0] sm:$0xf]
    %v12845 = vld [vmem:[%s12795 + $0xc4] sm:$0xf]
    %v12846 = vld [vmem:[%s12795 + $0xc8] sm:$0xf]
    %v12847 = vld [vmem:[%s12795 + $0xcc] sm:$0xf]
    %v12848 = vld [vmem:[%s12795 + $0xd0] sm:$0xf]
    %v12849 = vld [vmem:[%s12795 + $0xd4] sm:$0xf]
    %v12850 = vld [vmem:[%s12795 + $0xd8] sm:$0xf]
    %v12851 = vld [vmem:[%s12795 + $0xdc] sm:$0xf]
    %v12852 = vld [vmem:[%s12795 + $0xe0] sm:$0xf]
    %v12853 = vld [vmem:[%s12795 + $0xe4] sm:$0xf]
    %v12854 = vld [vmem:[%s12795 + $0xe8] sm:$0xf]
    %v12855 = vld [vmem:[%s12795 + $0xec] sm:$0xf]
    %v12856 = vld [vmem:[%s12795 + $0xf0] sm:$0xf]
    %v12857 = vld [vmem:[%s12795 + $0xf4] sm:$0xf]
    %v12858 = vld [vmem:[%s12795 + $0xf8] sm:$0xf]
    %v12859 = vld [vmem:[%s12795 + $0xfc] sm:$0xf]
    %v12868 = vunpack.c.l.b16 %v10538
    %v12869 = vunpack.c.l.b16 %v10539
    %v12870 = vunpack.c.l.b16 %v10540
    %v12871 = vunpack.c.l.b16 %v10541
    %v12872 = vunpack.c.l.b16 %v10570
    %v12873 = vunpack.c.l.b16 %v10571
    %v12874 = vunpack.c.l.b16 %v10572
    %v12875 = vunpack.c.l.b16 %v10573
    %v12876 = vrot.slane %v12872, 7
    %v12877 = vsel %vm3183, %v12876, %v12868
    %v12878 = vrot.slane %v12873, 7
    %v12879 = vsel %vm3183, %v12878, %v12869
    %v12880 = vrot.slane %v12874, 7
    %v12881 = vsel %vm3183, %v12880, %v12870
    %v12882 = vrot.slane %v12875, 7
    %v12883 = vsel %vm3183, %v12882, %v12871
    %v12884 = vpack.c.b16 %v12877, %v12877
    %v12885 = vpack.c.b16 %v12879, %v12879
    %v12886 = vpack.c.b16 %v12881, %v12881
    %v12887 = vpack.c.b16 %v12883, %v12883
    %v12956 = vunpack.c.l.b16 %v12796
    %v12957 = vunpack.c.l.b16 %v12797
    %v12958 = vunpack.c.l.b16 %v12798
    %v12959 = vunpack.c.l.b16 %v12799
    %v12960 = vunpack.c.l.b16 %v12800
    %v12961 = vunpack.c.l.b16 %v12801
    %v12962 = vunpack.c.l.b16 %v12802
    %v12963 = vunpack.c.l.b16 %v12803
    %v12964 = vunpack.c.l.b16 %v12804
    %v12965 = vunpack.c.l.b16 %v12805
    %v12966 = vunpack.c.l.b16 %v12806
    %v12967 = vunpack.c.l.b16 %v12807
    %v12968 = vunpack.c.l.b16 %v12808
    %v12969 = vunpack.c.l.b16 %v12809
    %v12970 = vunpack.c.l.b16 %v12810
    %v12971 = vunpack.c.l.b16 %v12811
    %v12972 = vunpack.c.l.b16 %v12812
    %v12973 = vunpack.c.l.b16 %v12813
    %v12974 = vunpack.c.l.b16 %v12814
    %v12975 = vunpack.c.l.b16 %v12815
    %v12976 = vunpack.c.l.b16 %v12816
    %v12977 = vunpack.c.l.b16 %v12817
    %v12978 = vunpack.c.l.b16 %v12818
    %v12979 = vunpack.c.l.b16 %v12819
    %v12980 = vunpack.c.l.b16 %v12820
    %v12981 = vunpack.c.l.b16 %v12821
    %v12982 = vunpack.c.l.b16 %v12822
    %v12983 = vunpack.c.l.b16 %v12823
    %v12984 = vunpack.c.l.b16 %v12824
    %v12985 = vunpack.c.l.b16 %v12825
    %v12986 = vunpack.c.l.b16 %v12826
    %v12987 = vunpack.c.l.b16 %v12827
    %v12988 = vunpack.c.l.b16 %v12828
    %v12989 = vunpack.c.l.b16 %v12829
    %v12990 = vunpack.c.l.b16 %v12830
    %v12991 = vunpack.c.l.b16 %v12831
    %v12992 = vunpack.c.l.b16 %v12832
    %v12993 = vunpack.c.l.b16 %v12833
    %v12994 = vunpack.c.l.b16 %v12834
    %v12995 = vunpack.c.l.b16 %v12835
    %v12996 = vunpack.c.l.b16 %v12836
    %v12997 = vunpack.c.l.b16 %v12837
    %v12998 = vunpack.c.l.b16 %v12838
    %v12999 = vunpack.c.l.b16 %v12839
    %v13000 = vunpack.c.l.b16 %v12840
    %v13001 = vunpack.c.l.b16 %v12841
    %v13002 = vunpack.c.l.b16 %v12842
    %v13003 = vunpack.c.l.b16 %v12843
    %v13004 = vunpack.c.l.b16 %v12844
    %v13005 = vunpack.c.l.b16 %v12845
    %v13006 = vunpack.c.l.b16 %v12846
    %v13007 = vunpack.c.l.b16 %v12847
    %v13008 = vunpack.c.l.b16 %v12848
    %v13009 = vunpack.c.l.b16 %v12849
    %v13010 = vunpack.c.l.b16 %v12850
    %v13011 = vunpack.c.l.b16 %v12851
    %v13012 = vunpack.c.l.b16 %v12852
    %v13013 = vunpack.c.l.b16 %v12853
    %v13014 = vunpack.c.l.b16 %v12854
    %v13015 = vunpack.c.l.b16 %v12855
    %v13016 = vunpack.c.l.b16 %v12856
    %v13017 = vunpack.c.l.b16 %v12857
    %v13018 = vunpack.c.l.b16 %v12858
    %v13019 = vunpack.c.l.b16 %v12859
    %v13020 = vpack.c.b16 %v12957, %v12956
    %v13021 = vpack.c.b16 %v12959, %v12958
    %v13022 = vpack.c.b16 %v12961, %v12960
    %v13023 = vpack.c.b16 %v12963, %v12962
    %v13024 = vpack.c.b16 %v12965, %v12964
    %v13025 = vpack.c.b16 %v12967, %v12966
    %v13026 = vpack.c.b16 %v12969, %v12968
    %v13027 = vpack.c.b16 %v12971, %v12970
    %v13028 = vpack.c.b16 %v12973, %v12972
    %v13029 = vpack.c.b16 %v12975, %v12974
    %v13030 = vpack.c.b16 %v12977, %v12976
    %v13031 = vpack.c.b16 %v12979, %v12978
    %v13032 = vpack.c.b16 %v12981, %v12980
    %v13033 = vpack.c.b16 %v12983, %v12982
    %v13034 = vpack.c.b16 %v12985, %v12984
    %v13035 = vpack.c.b16 %v12987, %v12986
    %v13036 = vpack.c.b16 %v12989, %v12988
    %v13037 = vpack.c.b16 %v12991, %v12990
    %v13038 = vpack.c.b16 %v12993, %v12992
    %v13039 = vpack.c.b16 %v12995, %v12994
    %v13040 = vpack.c.b16 %v12997, %v12996
    %v13041 = vpack.c.b16 %v12999, %v12998
    %v13042 = vpack.c.b16 %v13001, %v13000
    %v13043 = vpack.c.b16 %v13003, %v13002
    %v13044 = vpack.c.b16 %v13005, %v13004
    %v13045 = vpack.c.b16 %v13007, %v13006
    %v13046 = vpack.c.b16 %v13009, %v13008
    %v13047 = vpack.c.b16 %v13011, %v13010
    %v13048 = vpack.c.b16 %v13013, %v13012
    %v13049 = vpack.c.b16 %v13015, %v13014
    %v13050 = vpack.c.b16 %v13017, %v13016
    %v13051 = vpack.c.b16 %v13019, %v13018
    %13084 = vmatprep.subr.bf16.mxu0 0
    %13085 = vmatpush1.bf16.msra.mxu0 %v13027
    %13086 = vmatprep.subr.bf16.mxu0 0
    %13087 = vmatpush1.bf16.msra.mxu0 %v13026
    %13088 = vmatprep.subr.bf16.mxu0 0
    %13089 = vmatpush1.bf16.msra.mxu0 %v13025
    %13090 = vmatprep.subr.bf16.mxu0 0
    %13091 = vmatpush1.bf16.msra.mxu0 %v13024
    %13092 = vmatprep.subr.bf16.mxu0 0
    %13093 = vmatpush1.bf16.msra.mxu0 %v13023
    %13094 = vmatprep.subr.bf16.mxu0 0
    %13095 = vmatpush1.bf16.msra.mxu0 %v13022
    %13096 = vmatprep.subr.bf16.mxu0 0
    %13097 = vmatpush1.bf16.msra.mxu0 %v13021
    %13098 = vmatprep.subr.bf16.mxu0 0
    %13099 = vmatpush1.bf16.msra.mxu0 %v13020
    %13100 = vmatprep.subr.bf16.mxu0 0
    %13101 = vmatpush2.bf16.msra.mxu0 %v13035
    %13102 = vmatprep.subr.bf16.mxu0 0
    %13103 = vmatpush2.bf16.msra.mxu0 %v13034
    %13104 = vmatprep.subr.bf16.mxu0 0
    %13105 = vmatpush2.bf16.msra.mxu0 %v13033
    %13106 = vmatprep.subr.bf16.mxu0 0
    %13107 = vmatpush2.bf16.msra.mxu0 %v13032
    %13108 = vmatprep.subr.bf16.mxu0 0
    %13109 = vmatpush2.bf16.msra.mxu0 %v13031
    %13110 = vmatprep.subr.bf16.mxu0 0
    %13111 = vmatpush2.bf16.msra.mxu0 %v13030
    %13112 = vmatprep.subr.bf16.mxu0 0
    %13113 = vmatpush2.bf16.msra.mxu0 %v13029
    %13114 = vmatprep.subr.bf16.mxu0 0
    %13115 = vmatpush2.bf16.msra.mxu0 %v13028
    %13116 = vmatprep.mubr.bf16.mxu0 %v12885
    %13117 = vmatmul.mubr.bf16.gmra.mxu0 %v12884
    %v13118 = vpop.f32.mrf.mxu0
    %v13119 = vadd.f32 0.0, %v13118
    %v13120 = vpop.f32.mrf.mxu0
    %v13121 = vpop.f32.mrf.mxu0
    %v13122 = vpop.f32.mrf.mxu0
    %13123 = vdwg.mxu0
    %13124 = vmatprep.subr.bf16.mxu0 0
    %13125 = vmatpush1.bf16.msra.mxu0 %v13043
    %13126 = vmatprep.subr.bf16.mxu0 0
    %13127 = vmatpush1.bf16.msra.mxu0 %v13042
    %13128 = vmatprep.subr.bf16.mxu0 0
    %13129 = vmatpush1.bf16.msra.mxu0 %v13041
    %13130 = vmatprep.subr.bf16.mxu0 0
    %13131 = vmatpush1.bf16.msra.mxu0 %v13040
    %13132 = vmatprep.subr.bf16.mxu0 0
    %13133 = vmatpush1.bf16.msra.mxu0 %v13039
    %13134 = vmatprep.subr.bf16.mxu0 0
    %13135 = vmatpush1.bf16.msra.mxu0 %v13038
    %13136 = vmatprep.subr.bf16.mxu0 0
    %13137 = vmatpush1.bf16.msra.mxu0 %v13037
    %13138 = vmatprep.subr.bf16.mxu0 0
    %13139 = vmatpush1.bf16.msra.mxu0 %v13036
    %13140 = vmatprep.subr.bf16.mxu0 0
    %13141 = vmatpush2.bf16.msra.mxu0 %v13051
    %13142 = vmatprep.subr.bf16.mxu0 0
    %13143 = vmatpush2.bf16.msra.mxu0 %v13050
    %13144 = vmatprep.subr.bf16.mxu0 0
    %13145 = vmatpush2.bf16.msra.mxu0 %v13049
    %13146 = vmatprep.subr.bf16.mxu0 0
    %13147 = vmatpush2.bf16.msra.mxu0 %v13048
    %13148 = vmatprep.subr.bf16.mxu0 0
    %13149 = vmatpush2.bf16.msra.mxu0 %v13047
    %13150 = vmatprep.subr.bf16.mxu0 0
    %13151 = vmatpush2.bf16.msra.mxu0 %v13046
    %13152 = vmatprep.subr.bf16.mxu0 0
    %13153 = vmatpush2.bf16.msra.mxu0 %v13045
    %13154 = vmatprep.subr.bf16.mxu0 0
    %13155 = vmatpush2.bf16.msra.mxu0 %v13044
    %13156 = vmatprep.mubr.bf16.mxu0 %v12887
    %13157 = vmatmul.mubr.bf16.gmra.mxu0 %v12886
    %v13158 = vpop.f32.mrf.mxu0
    %v13159 = vadd.f32 %v13119, %v13158
    %v13160 = vpop.f32.mrf.mxu0
    %v13161 = vpop.f32.mrf.mxu0
    %v13162 = vpop.f32.mrf.mxu0
    %13163 = vdwg.mxu0
    %v13164 = vadd.f32 %v12794, %v13159
    %s13165 = scalar_lea.vmem [#allocation11], 1792
    %v13166 = vld [vmem:[%s13165] sm:$0xf]
    %v13167 = vld [vmem:[%s13165 + $0x4] sm:$0xf]
    %v13168 = vld [vmem:[%s13165 + $0x8] sm:$0xf]
    %v13169 = vld [vmem:[%s13165 + $0xc] sm:$0xf]
    %v13170 = vld [vmem:[%s13165 + $0x10] sm:$0xf]
    %v13171 = vld [vmem:[%s13165 + $0x14] sm:$0xf]
    %v13172 = vld [vmem:[%s13165 + $0x18] sm:$0xf]
    %v13173 = vld [vmem:[%s13165 + $0x1c] sm:$0xf]
    %v13174 = vld [vmem:[%s13165 + $0x20] sm:$0xf]
    %v13175 = vld [vmem:[%s13165 + $0x24] sm:$0xf]
    %v13176 = vld [vmem:[%s13165 + $0x28] sm:$0xf]
    %v13177 = vld [vmem:[%s13165 + $0x2c] sm:$0xf]
    %v13178 = vld [vmem:[%s13165 + $0x30] sm:$0xf]
    %v13179 = vld [vmem:[%s13165 + $0x34] sm:$0xf]
    %v13180 = vld [vmem:[%s13165 + $0x38] sm:$0xf]
    %v13181 = vld [vmem:[%s13165 + $0x3c] sm:$0xf]
    %v13182 = vld [vmem:[%s13165 + $0x40] sm:$0xf]
    %v13183 = vld [vmem:[%s13165 + $0x44] sm:$0xf]
    %v13184 = vld [vmem:[%s13165 + $0x48] sm:$0xf]
    %v13185 = vld [vmem:[%s13165 + $0x4c] sm:$0xf]
    %v13186 = vld [vmem:[%s13165 + $0x50] sm:$0xf]
    %v13187 = vld [vmem:[%s13165 + $0x54] sm:$0xf]
    %v13188 = vld [vmem:[%s13165 + $0x58] sm:$0xf]
    %v13189 = vld [vmem:[%s13165 + $0x5c] sm:$0xf]
    %v13190 = vld [vmem:[%s13165 + $0x60] sm:$0xf]
    %v13191 = vld [vmem:[%s13165 + $0x64] sm:$0xf]
    %v13192 = vld [vmem:[%s13165 + $0x68] sm:$0xf]
    %v13193 = vld [vmem:[%s13165 + $0x6c] sm:$0xf]
    %v13194 = vld [vmem:[%s13165 + $0x70] sm:$0xf]
    %v13195 = vld [vmem:[%s13165 + $0x74] sm:$0xf]
    %v13196 = vld [vmem:[%s13165 + $0x78] sm:$0xf]
    %v13197 = vld [vmem:[%s13165 + $0x7c] sm:$0xf]
    %v13198 = vld [vmem:[%s13165 + $0x80] sm:$0xf]
    %v13199 = vld [vmem:[%s13165 + $0x84] sm:$0xf]
    %v13200 = vld [vmem:[%s13165 + $0x88] sm:$0xf]
    %v13201 = vld [vmem:[%s13165 + $0x8c] sm:$0xf]
    %v13202 = vld [vmem:[%s13165 + $0x90] sm:$0xf]
    %v13203 = vld [vmem:[%s13165 + $0x94] sm:$0xf]
    %v13204 = vld [vmem:[%s13165 + $0x98] sm:$0xf]
    %v13205 = vld [vmem:[%s13165 + $0x9c] sm:$0xf]
    %v13206 = vld [vmem:[%s13165 + $0xa0] sm:$0xf]
    %v13207 = vld [vmem:[%s13165 + $0xa4] sm:$0xf]
    %v13208 = vld [vmem:[%s13165 + $0xa8] sm:$0xf]
    %v13209 = vld [vmem:[%s13165 + $0xac] sm:$0xf]
    %v13210 = vld [vmem:[%s13165 + $0xb0] sm:$0xf]
    %v13211 = vld [vmem:[%s13165 + $0xb4] sm:$0xf]
    %v13212 = vld [vmem:[%s13165 + $0xb8] sm:$0xf]
    %v13213 = vld [vmem:[%s13165 + $0xbc] sm:$0xf]
    %v13214 = vld [vmem:[%s13165 + $0xc0] sm:$0xf]
    %v13215 = vld [vmem:[%s13165 + $0xc4] sm:$0xf]
    %v13216 = vld [vmem:[%s13165 + $0xc8] sm:$0xf]
    %v13217 = vld [vmem:[%s13165 + $0xcc] sm:$0xf]
    %v13218 = vld [vmem:[%s13165 + $0xd0] sm:$0xf]
    %v13219 = vld [vmem:[%s13165 + $0xd4] sm:$0xf]
    %v13220 = vld [vmem:[%s13165 + $0xd8] sm:$0xf]
    %v13221 = vld [vmem:[%s13165 + $0xdc] sm:$0xf]
    %v13222 = vld [vmem:[%s13165 + $0xe0] sm:$0xf]
    %v13223 = vld [vmem:[%s13165 + $0xe4] sm:$0xf]
    %v13224 = vld [vmem:[%s13165 + $0xe8] sm:$0xf]
    %v13225 = vld [vmem:[%s13165 + $0xec] sm:$0xf]
    %v13226 = vld [vmem:[%s13165 + $0xf0] sm:$0xf]
    %v13227 = vld [vmem:[%s13165 + $0xf4] sm:$0xf]
    %v13228 = vld [vmem:[%s13165 + $0xf8] sm:$0xf]
    %v13229 = vld [vmem:[%s13165 + $0xfc] sm:$0xf]
    %v13238 = vunpack.c.l.b16 %v10542
    %v13239 = vunpack.c.l.b16 %v10543
    %v13240 = vunpack.c.l.b16 %v10544
    %v13241 = vunpack.c.l.b16 %v10545
    %v13242 = vunpack.c.l.b16 %v10574
    %v13243 = vunpack.c.l.b16 %v10575
    %v13244 = vunpack.c.l.b16 %v10576
    %v13245 = vunpack.c.l.b16 %v10577
    %v13246 = vrot.slane %v13242, 7
    %v13247 = vsel %vm3183, %v13246, %v13238
    %v13248 = vrot.slane %v13243, 7
    %v13249 = vsel %vm3183, %v13248, %v13239
    %v13250 = vrot.slane %v13244, 7
    %v13251 = vsel %vm3183, %v13250, %v13240
    %v13252 = vrot.slane %v13245, 7
    %v13253 = vsel %vm3183, %v13252, %v13241
    %v13254 = vpack.c.b16 %v13247, %v13247
    %v13255 = vpack.c.b16 %v13249, %v13249
    %v13256 = vpack.c.b16 %v13251, %v13251
    %v13257 = vpack.c.b16 %v13253, %v13253
    %v13326 = vunpack.c.l.b16 %v13166
    %v13327 = vunpack.c.l.b16 %v13167
    %v13328 = vunpack.c.l.b16 %v13168
    %v13329 = vunpack.c.l.b16 %v13169
    %v13330 = vunpack.c.l.b16 %v13170
    %v13331 = vunpack.c.l.b16 %v13171
    %v13332 = vunpack.c.l.b16 %v13172
    %v13333 = vunpack.c.l.b16 %v13173
    %v13334 = vunpack.c.l.b16 %v13174
    %v13335 = vunpack.c.l.b16 %v13175
    %v13336 = vunpack.c.l.b16 %v13176
    %v13337 = vunpack.c.l.b16 %v13177
    %v13338 = vunpack.c.l.b16 %v13178
    %v13339 = vunpack.c.l.b16 %v13179
    %v13340 = vunpack.c.l.b16 %v13180
    %v13341 = vunpack.c.l.b16 %v13181
    %v13342 = vunpack.c.l.b16 %v13182
    %v13343 = vunpack.c.l.b16 %v13183
    %v13344 = vunpack.c.l.b16 %v13184
    %v13345 = vunpack.c.l.b16 %v13185
    %v13346 = vunpack.c.l.b16 %v13186
    %v13347 = vunpack.c.l.b16 %v13187
    %v13348 = vunpack.c.l.b16 %v13188
    %v13349 = vunpack.c.l.b16 %v13189
    %v13350 = vunpack.c.l.b16 %v13190
    %v13351 = vunpack.c.l.b16 %v13191
    %v13352 = vunpack.c.l.b16 %v13192
    %v13353 = vunpack.c.l.b16 %v13193
    %v13354 = vunpack.c.l.b16 %v13194
    %v13355 = vunpack.c.l.b16 %v13195
    %v13356 = vunpack.c.l.b16 %v13196
    %v13357 = vunpack.c.l.b16 %v13197
    %v13358 = vunpack.c.l.b16 %v13198
    %v13359 = vunpack.c.l.b16 %v13199
    %v13360 = vunpack.c.l.b16 %v13200
    %v13361 = vunpack.c.l.b16 %v13201
    %v13362 = vunpack.c.l.b16 %v13202
    %v13363 = vunpack.c.l.b16 %v13203
    %v13364 = vunpack.c.l.b16 %v13204
    %v13365 = vunpack.c.l.b16 %v13205
    %v13366 = vunpack.c.l.b16 %v13206
    %v13367 = vunpack.c.l.b16 %v13207
    %v13368 = vunpack.c.l.b16 %v13208
    %v13369 = vunpack.c.l.b16 %v13209
    %v13370 = vunpack.c.l.b16 %v13210
    %v13371 = vunpack.c.l.b16 %v13211
    %v13372 = vunpack.c.l.b16 %v13212
    %v13373 = vunpack.c.l.b16 %v13213
    %v13374 = vunpack.c.l.b16 %v13214
    %v13375 = vunpack.c.l.b16 %v13215
    %v13376 = vunpack.c.l.b16 %v13216
    %v13377 = vunpack.c.l.b16 %v13217
    %v13378 = vunpack.c.l.b16 %v13218
    %v13379 = vunpack.c.l.b16 %v13219
    %v13380 = vunpack.c.l.b16 %v13220
    %v13381 = vunpack.c.l.b16 %v13221
    %v13382 = vunpack.c.l.b16 %v13222
    %v13383 = vunpack.c.l.b16 %v13223
    %v13384 = vunpack.c.l.b16 %v13224
    %v13385 = vunpack.c.l.b16 %v13225
    %v13386 = vunpack.c.l.b16 %v13226
    %v13387 = vunpack.c.l.b16 %v13227
    %v13388 = vunpack.c.l.b16 %v13228
    %v13389 = vunpack.c.l.b16 %v13229
    %v13390 = vpack.c.b16 %v13327, %v13326
    %v13391 = vpack.c.b16 %v13329, %v13328
    %v13392 = vpack.c.b16 %v13331, %v13330
    %v13393 = vpack.c.b16 %v13333, %v13332
    %v13394 = vpack.c.b16 %v13335, %v13334
    %v13395 = vpack.c.b16 %v13337, %v13336
    %v13396 = vpack.c.b16 %v13339, %v13338
    %v13397 = vpack.c.b16 %v13341, %v13340
    %v13398 = vpack.c.b16 %v13343, %v13342
    %v13399 = vpack.c.b16 %v13345, %v13344
    %v13400 = vpack.c.b16 %v13347, %v13346
    %v13401 = vpack.c.b16 %v13349, %v13348
    %v13402 = vpack.c.b16 %v13351, %v13350
    %v13403 = vpack.c.b16 %v13353, %v13352
    %v13404 = vpack.c.b16 %v13355, %v13354
    %v13405 = vpack.c.b16 %v13357, %v13356
    %v13406 = vpack.c.b16 %v13359, %v13358
    %v13407 = vpack.c.b16 %v13361, %v13360
    %v13408 = vpack.c.b16 %v13363, %v13362
    %v13409 = vpack.c.b16 %v13365, %v13364
    %v13410 = vpack.c.b16 %v13367, %v13366
    %v13411 = vpack.c.b16 %v13369, %v13368
    %v13412 = vpack.c.b16 %v13371, %v13370
    %v13413 = vpack.c.b16 %v13373, %v13372
    %v13414 = vpack.c.b16 %v13375, %v13374
    %v13415 = vpack.c.b16 %v13377, %v13376
    %v13416 = vpack.c.b16 %v13379, %v13378
    %v13417 = vpack.c.b16 %v13381, %v13380
    %v13418 = vpack.c.b16 %v13383, %v13382
    %v13419 = vpack.c.b16 %v13385, %v13384
    %v13420 = vpack.c.b16 %v13387, %v13386
    %v13421 = vpack.c.b16 %v13389, %v13388
    %13454 = vmatprep.subr.bf16.mxu0 0
    %13455 = vmatpush1.bf16.msra.mxu0 %v13397
    %13456 = vmatprep.subr.bf16.mxu0 0
    %13457 = vmatpush1.bf16.msra.mxu0 %v13396
    %13458 = vmatprep.subr.bf16.mxu0 0
    %13459 = vmatpush1.bf16.msra.mxu0 %v13395
    %13460 = vmatprep.subr.bf16.mxu0 0
    %13461 = vmatpush1.bf16.msra.mxu0 %v13394
    %13462 = vmatprep.subr.bf16.mxu0 0
    %13463 = vmatpush1.bf16.msra.mxu0 %v13393
    %13464 = vmatprep.subr.bf16.mxu0 0
    %13465 = vmatpush1.bf16.msra.mxu0 %v13392
    %13466 = vmatprep.subr.bf16.mxu0 0
    %13467 = vmatpush1.bf16.msra.mxu0 %v13391
    %13468 = vmatprep.subr.bf16.mxu0 0
    %13469 = vmatpush1.bf16.msra.mxu0 %v13390
    %13470 = vmatprep.subr.bf16.mxu0 0
    %13471 = vmatpush2.bf16.msra.mxu0 %v13405
    %13472 = vmatprep.subr.bf16.mxu0 0
    %13473 = vmatpush2.bf16.msra.mxu0 %v13404
    %13474 = vmatprep.subr.bf16.mxu0 0
    %13475 = vmatpush2.bf16.msra.mxu0 %v13403
    %13476 = vmatprep.subr.bf16.mxu0 0
    %13477 = vmatpush2.bf16.msra.mxu0 %v13402
    %13478 = vmatprep.subr.bf16.mxu0 0
    %13479 = vmatpush2.bf16.msra.mxu0 %v13401
    %13480 = vmatprep.subr.bf16.mxu0 0
    %13481 = vmatpush2.bf16.msra.mxu0 %v13400
    %13482 = vmatprep.subr.bf16.mxu0 0
    %13483 = vmatpush2.bf16.msra.mxu0 %v13399
    %13484 = vmatprep.subr.bf16.mxu0 0
    %13485 = vmatpush2.bf16.msra.mxu0 %v13398
    %13486 = vmatprep.mubr.bf16.mxu0 %v13255
    %13487 = vmatmul.mubr.bf16.gmra.mxu0 %v13254
    %v13488 = vpop.f32.mrf.mxu0
    %v13489 = vadd.f32 0.0, %v13488
    %v13490 = vpop.f32.mrf.mxu0
    %v13491 = vpop.f32.mrf.mxu0
    %v13492 = vpop.f32.mrf.mxu0
    %13493 = vdwg.mxu0
    %13494 = vmatprep.subr.bf16.mxu0 0
    %13495 = vmatpush1.bf16.msra.mxu0 %v13413
    %13496 = vmatprep.subr.bf16.mxu0 0
    %13497 = vmatpush1.bf16.msra.mxu0 %v13412
    %13498 = vmatprep.subr.bf16.mxu0 0
    %13499 = vmatpush1.bf16.msra.mxu0 %v13411
    %13500 = vmatprep.subr.bf16.mxu0 0
    %13501 = vmatpush1.bf16.msra.mxu0 %v13410
    %13502 = vmatprep.subr.bf16.mxu0 0
    %13503 = vmatpush1.bf16.msra.mxu0 %v13409
    %13504 = vmatprep.subr.bf16.mxu0 0
    %13505 = vmatpush1.bf16.msra.mxu0 %v13408
    %13506 = vmatprep.subr.bf16.mxu0 0
    %13507 = vmatpush1.bf16.msra.mxu0 %v13407
    %13508 = vmatprep.subr.bf16.mxu0 0
    %13509 = vmatpush1.bf16.msra.mxu0 %v13406
    %13510 = vmatprep.subr.bf16.mxu0 0
    %13511 = vmatpush2.bf16.msra.mxu0 %v13421
    %13512 = vmatprep.subr.bf16.mxu0 0
    %13513 = vmatpush2.bf16.msra.mxu0 %v13420
    %13514 = vmatprep.subr.bf16.mxu0 0
    %13515 = vmatpush2.bf16.msra.mxu0 %v13419
    %13516 = vmatprep.subr.bf16.mxu0 0
    %13517 = vmatpush2.bf16.msra.mxu0 %v13418
    %13518 = vmatprep.subr.bf16.mxu0 0
    %13519 = vmatpush2.bf16.msra.mxu0 %v13417
    %13520 = vmatprep.subr.bf16.mxu0 0
    %13521 = vmatpush2.bf16.msra.mxu0 %v13416
    %13522 = vmatprep.subr.bf16.mxu0 0
    %13523 = vmatpush2.bf16.msra.mxu0 %v13415
    %13524 = vmatprep.subr.bf16.mxu0 0
    %13525 = vmatpush2.bf16.msra.mxu0 %v13414
    %13526 = vmatprep.mubr.bf16.mxu0 %v13257
    %13527 = vmatmul.mubr.bf16.gmra.mxu0 %v13256
    %v13528 = vpop.f32.mrf.mxu0
    %v13529 = vadd.f32 %v13489, %v13528
    %v13530 = vpop.f32.mrf.mxu0
    %v13531 = vpop.f32.mrf.mxu0
    %v13532 = vpop.f32.mrf.mxu0
    %13533 = vdwg.mxu0
    %v13534 = vadd.f32 %v13164, %v13529
    %v13535 = vld [vmem:[#allocation12] sm:$0x1]
    %v13537 = vlaneseq
    %v13538 = vshrl.u32 %v13537, 7
    %v13539 = vsub.s32 0, %v13538
    %v13540 = vrot.slane %v13535, %v13539
    %v13542 = vadd.f32 %v13534, %v13540
    %v13543 = vmax.f32 %v13542, 0.0
    %v13544 = vpack.c.bf16 %v13543, %v13543
    %v13545 = vld [vmem:[%s7] sm:$0xf]
    %v13546 = vld [vmem:[%s7 + $0x4] sm:$0xf]
    %v13547 = vld [vmem:[%s7 + $0x8] sm:$0xf]
    %v13548 = vld [vmem:[%s7 + $0xc] sm:$0xf]
    %v13549 = vld [vmem:[%s7 + $0x10] sm:$0xf]
    %v13550 = vld [vmem:[%s7 + $0x14] sm:$0xf]
    %v13551 = vld [vmem:[%s7 + $0x18] sm:$0xf]
    %v13552 = vld [vmem:[%s7 + $0x1c] sm:$0xf]
    %v13553 = vld [vmem:[%s7 + $0x20] sm:$0xf]
    %v13554 = vld [vmem:[%s7 + $0x24] sm:$0xf]
    %v13555 = vld [vmem:[%s7 + $0x28] sm:$0xf]
    %v13556 = vld [vmem:[%s7 + $0x2c] sm:$0xf]
    %v13557 = vld [vmem:[%s7 + $0x30] sm:$0xf]
    %v13558 = vld [vmem:[%s7 + $0x34] sm:$0xf]
    %v13559 = vld [vmem:[%s7 + $0x38] sm:$0xf]
    %v13560 = vld [vmem:[%s7 + $0x3c] sm:$0xf]
    %v13561 = vld [vmem:[#allocation14] sm:$0x1]
    %v13563 = vlaneseq
    %v13564 = vshrl.u32 %v13563, 7
    %v13565 = vsub.s32 0, %v13564
    %v13566 = vrot.slane %v13561, %v13565
    %v13584 = vunpack.c.l.b16 %v13545
    %v13585 = vunpack.c.l.b16 %v13546
    %v13586 = vunpack.c.l.b16 %v13547
    %v13587 = vunpack.c.l.b16 %v13548
    %v13588 = vunpack.c.l.b16 %v13549
    %v13589 = vunpack.c.l.b16 %v13550
    %v13590 = vunpack.c.l.b16 %v13551
    %v13591 = vunpack.c.l.b16 %v13552
    %v13592 = vunpack.c.l.b16 %v13553
    %v13593 = vunpack.c.l.b16 %v13554
    %v13594 = vunpack.c.l.b16 %v13555
    %v13595 = vunpack.c.l.b16 %v13556
    %v13596 = vunpack.c.l.b16 %v13557
    %v13597 = vunpack.c.l.b16 %v13558
    %v13598 = vunpack.c.l.b16 %v13559
    %v13599 = vunpack.c.l.b16 %v13560
    %v13600 = vpack.c.b16 %v13585, %v13584
    %v13601 = vpack.c.b16 %v13587, %v13586
    %v13602 = vpack.c.b16 %v13589, %v13588
    %v13603 = vpack.c.b16 %v13591, %v13590
    %v13604 = vpack.c.b16 %v13593, %v13592
    %v13605 = vpack.c.b16 %v13595, %v13594
    %v13606 = vpack.c.b16 %v13597, %v13596
    %v13607 = vpack.c.b16 %v13599, %v13598
    %13616 = vmatprep.subr.bf16.mxu0 0
    %13617 = vmatpush1.bf16.msra.mxu0 %v13607
    %13618 = vmatprep.subr.bf16.mxu0 0
    %13619 = vmatpush1.bf16.msra.mxu0 %v13606
    %13620 = vmatprep.subr.bf16.mxu0 0
    %13621 = vmatpush1.bf16.msra.mxu0 %v13605
    %13622 = vmatprep.subr.bf16.mxu0 0
    %13623 = vmatpush1.bf16.msra.mxu0 %v13604
    %13624 = vmatprep.subr.bf16.mxu0 0
    %13625 = vmatpush1.bf16.msra.mxu0 %v13603
    %13626 = vmatprep.subr.bf16.mxu0 0
    %13627 = vmatpush1.bf16.msra.mxu0 %v13602
    %13628 = vmatprep.subr.bf16.mxu0 0
    %13629 = vmatpush1.bf16.msra.mxu0 %v13601
    %13630 = vmatprep.subr.bf16.mxu0 0
    %13631 = vmatpush1.bf16.msra.mxu0 %v13600
    %13632 = vmatprep.subr.bf16.mxu0 0
    %13633 = vmatpush2.bf16.msra.mxu0 0
    %13634 = vmatprep.subr.bf16.mxu0 0
    %13635 = vmatpush2.bf16.msra.mxu0 0
    %13636 = vmatprep.subr.bf16.mxu0 0
    %13637 = vmatpush2.bf16.msra.mxu0 0
    %13638 = vmatprep.subr.bf16.mxu0 0
    %13639 = vmatpush2.bf16.msra.mxu0 0
    %13640 = vmatprep.subr.bf16.mxu0 0
    %13641 = vmatpush2.bf16.msra.mxu0 0
    %13642 = vmatprep.subr.bf16.mxu0 0
    %13643 = vmatpush2.bf16.msra.mxu0 0
    %13644 = vmatprep.subr.bf16.mxu0 0
    %13645 = vmatpush2.bf16.msra.mxu0 0
    %13646 = vmatprep.subr.bf16.mxu0 0
    %13647 = vmatpush2.bf16.msra.mxu0 0
    %13648 = vmatprep.mubr.bf16.mxu0 0
    %13649 = vmatmul.mubr.bf16.gmra.mxu0 %v13544
    %v13650 = vpop.f32.mrf.mxu0
    %v13651 = vadd.f32 %v13566, %v13650
    %v13652 = vpop.f32.mrf.mxu0
    %v13653 = vpop.f32.mrf.mxu0
    %v13654 = vpop.f32.mrf.mxu0
    %13655 = vdwg.mxu0
    %vm13656 = vcmask 74752
    %13657 = vst.msk [vmem:[#allocation15] sm:$0x3] %vm13656, %v13651
    // Predicated region
    $region66: #{simple_cnn_forward.1} parent=1 // pred_check
      _
    $region67: #{simple_cnn_forward.1} parent=1 // pred_check_branch
      %13659 = sbr.rel (0) target = $region69
    $region68: #{simple_cnn_forward.1} parent=1 // pred_region
      %s13661 = ssub.s32 32, 32
      %13662 = vsyncadd [#allocation5], %s13661
      %s13664 = sshll.u32 [#allocation15], 4
      %s13665 = int_to_ptr.vmem [resolvable:$true] %s13664
      %13667 = dma.vmem_to_hbm [thread:$0]  %s13665, 32, %s9, [#allocation5]
    $region69: #{simple_cnn_forward.1} parent=1 // pred_fallthru
      _
    // Predicated region
    $region70: #{simple_cnn_forward.1} parent=1 // pred_check
      _
    $region71: #{simple_cnn_forward.1} parent=1 // pred_check_branch
      %13669 = sbr.rel (0) target = $region73
    $region72: #{simple_cnn_forward.1} parent=1 // pred_region
      %13670 = dma.done [#allocation5], 32
    $region73: #{simple_cnn_forward.1} parent=1 // pred_fallthru
      _
    %13671 = vsyncpa [#allocation4], 1
    %13672 = vsyncpa [#allocation7], 1
    %13673 = vsyncpa [#allocation10], 1
    %13674 = vsyncpa [#allocation13], 1
    %13675 = vsyncpa [#allocation5], 1

</llo_original>
